<compile_context>
chip_gen: v7x
topology: tpu7x:2x2x1
jax: 0.10.0
libtpu: 0.0.40
codegen_flags: <defaults>
</compile_context>

<pallas_src>
import jax
import jax.numpy as jnp
from jax.experimental import pallas as pl
from jax.experimental.pallas import tpu as pltpu

_VMEM_LIMIT = 32 * 1024 * 1024


# ----------------------------------------------------------------------------
# Fused AxialAttention kernel (per batch element, everything stays in VMEM)
# ----------------------------------------------------------------------------
def _make_kernel(H, W, Cin, Cout):
    HW = H * W
    Cq = Cout // 8

    def _attention(y, wqkv, bqkv, gamma, axis):
        """One SelfAttention stage in pixel-major layout.

        torch does `t.view(B, -1, axis)` on an NCHW-contiguous tensor (a raw
        row-major reshape).  With pixel index s = r*axis + a (r = s // axis,
        a = s % axis) and channels kept minor, the torch math becomes
            S[a, a']      = sum_{r, c} Q[r, a, c] * K[r, a', c]
            attn          = sigmoid(S)
            out[r, a', c] = sum_a attn[a', a] * V[r, a, c]
            result        = gamma * out + y
        so no transpose of activations is ever required.
        """
        R = HW // axis
        qkv = jnp.dot(y, wqkv, preferred_element_type=jnp.float32) + bqkv   # (HW, 2Cq+C)
        q = qkv[:, :Cq].reshape(R, axis, Cq)
        k = qkv[:, Cq:2 * Cq].reshape(R, axis, Cq)
        v = qkv[:, 2 * Cq:].reshape(R, axis, Cout)
        # lane-dense QK^T: contract the minor (channel) dim of both operands.
        s = jnp.einsum('rac,rxc->rax', q, k,
                       preferred_element_type=jnp.float32)                  # (R, A, A)
        s = jnp.sum(s, axis=0)                                               # (A, A)
        attn = pl.reciprocal(1.0 + jnp.exp(-s))                              # sigmoid, f32
        attn_b = jnp.broadcast_to(attn, (R, axis, axis))
        out = jnp.einsum('rxa,rac->rxc', attn_b, v,
                         preferred_element_type=jnp.float32)                 # (R, A, C)
        return gamma * out.reshape(HW, Cout) + y

    def kernel(x_ref, w0_ref, b0_ref, w1_ref, b1_ref,
               wqkv_h_ref, bqkv_h_ref, gamma_h_ref,
               wqkv_w_ref, bqkv_w_ref, gamma_w_ref,
               o_ref, ypad_ref):
        # ---- conv0: 1x1 conv + bias == pixel-major GEMM ----------------------
        x = x_ref[0]                                                         # (HW, Cin)
        y0 = jnp.dot(x, w0_ref[...],
                     preferred_element_type=jnp.float32) + b0_ref[...]       # (HW, Cout)

        # ---- conv1: 3x3 conv, stride 1, padding 1, via a zero-padded VMEM ----
        # scratch and 9 shifted tap GEMMs (no im2col / HBM round trip).
        ypad_ref[...] = jnp.zeros((H + 2, W + 2, Cout), jnp.float32)
        ypad_ref[1:H + 1, 1:W + 1, :] = y0.reshape(H, W, Cout)
        acc = jnp.zeros((HW, Cout), jnp.float32)
        for kh in range(3):
            for kw in range(3):
                patch = ypad_ref[kh:kh + H, kw:kw + W, :]                    # (H, W, Cout)
                acc = acc + jnp.dot(patch.reshape(HW, Cout),
                                    w1_ref[kh * 3 + kw],
                                    preferred_element_type=jnp.float32)
        y = acc + b1_ref[...]                                                # (HW, Cout)

        # ---- SelfAttention mode='h' (axis=H), then mode='w' (axis=W) ---------
        y = _attention(y, wqkv_h_ref[...], bqkv_h_ref[...], gamma_h_ref[0, 0], H)
        y = _attention(y, wqkv_w_ref[...], bqkv_w_ref[...], gamma_w_ref[0, 0], W)

        o_ref[0] = y

    return kernel


@jax.jit
def axial_attention(x_nchw, params):
    B, Cin, H, W = x_nchw.shape
    Cout = params['conv0']['w'].shape[-1]
    Cq = Cout // 8
    HW = H * W
    Nqkv = 2 * Cq + Cout

    # Weight layout prep (weights only -- tiny, once per call).
    w0 = params['conv0']['w'].reshape(Cin, Cout)
    b0 = params['conv0']['b'].reshape(1, Cout)
    w1 = params['conv1']['w'].reshape(9, Cout, Cout)
    b1 = params['conv1']['b'].reshape(1, Cout)

    def pack_attn(ap):
        wqkv = jnp.concatenate([ap['wq'].reshape(Cout, Cq),
                                ap['wk'].reshape(Cout, Cq),
                                ap['wv'].reshape(Cout, Cout)], axis=1)
        bqkv = jnp.concatenate([ap['bq'], ap['bk'], ap['bv']]).reshape(1, Nqkv)
        return wqkv, bqkv, ap['gamma'].reshape(1, 1)

    wqkv_h, bqkv_h, gamma_h = pack_attn(params['h_attn'])
    wqkv_w, bqkv_w, gamma_w = pack_attn(params['w_attn'])

    # Only activation-layout glue in the wrapper: input NCHW -> pixel-major and
    # output pixel-major -> NCHW (the module's external interface is NCHW).
    x_pix = jnp.transpose(x_nchw, (0, 2, 3, 1)).reshape(B, HW, Cin)

    full2 = lambda i: (0, 0)
    full3 = lambda i: (0, 0, 0)

    out = pl.pallas_call(
        _make_kernel(H, W, Cin, Cout),
        out_shape=jax.ShapeDtypeStruct((B, HW, Cout), jnp.float32),
        grid=(B,),
        in_specs=[
            pl.BlockSpec((1, HW, Cin), lambda i: (i, 0, 0)),        # x (pixel major)
            pl.BlockSpec((Cin, Cout), full2),                       # conv0 w
            pl.BlockSpec((1, Cout), full2),                         # conv0 b
            pl.BlockSpec((9, Cout, Cout), full3),                   # conv1 taps
            pl.BlockSpec((1, Cout), full2),                         # conv1 b
            pl.BlockSpec((Cout, Nqkv), full2),                      # h_attn fused QKV w
            pl.BlockSpec((1, Nqkv), full2),                         # h_attn fused QKV b
            pl.BlockSpec(memory_space=pltpu.MemorySpace.SMEM),      # h_attn gamma
            pl.BlockSpec((Cout, Nqkv), full2),                      # w_attn fused QKV w
            pl.BlockSpec((1, Nqkv), full2),                         # w_attn fused QKV b
            pl.BlockSpec(memory_space=pltpu.MemorySpace.SMEM),      # w_attn gamma
        ],
        out_specs=pl.BlockSpec((1, HW, Cout), lambda i: (i, 0, 0)),
        scratch_shapes=[pltpu.VMEM((H + 2, W + 2, Cout), jnp.float32)],
        compiler_params=pltpu.CompilerParams(
            dimension_semantics=("parallel",),
            vmem_limit_bytes=_VMEM_LIMIT),
    )(x_pix, w0, b0, w1, b1, wqkv_h, bqkv_h, gamma_h, wqkv_w, bqkv_w, gamma_w)

    return out.reshape(B, H, W, Cout).transpose(0, 3, 1, 2)


# ----------------------------------------------------------------------------
# Parameters (deterministic, synthetic)
# ----------------------------------------------------------------------------
def _init_conv(key, kh, kw, cin, cout):
    k_w, k_b = jax.random.split(key)
    fan_in = kh * kw * cin
    w = jax.random.normal(k_w, (kh, kw, cin, cout), jnp.float32) / jnp.sqrt(
        float(fan_in))
    b = 0.01 * jax.random.normal(k_b, (cout,), jnp.float32)
    return w, b


def init_axial_attention_params(key, in_channel, out_channel):
    ks = jax.random.split(key, 8)
    cq = out_channel // 8
    params = {
        'conv0': dict(zip(('w', 'b'), _init_conv(ks[0], 1, 1, in_channel, out_channel))),
        'conv1': dict(zip(('w', 'b'), _init_conv(ks[1], 3, 3, out_channel, out_channel))),
    }

    def attn_params(k1, k2, k3):
        wq, bq = _init_conv(k1, 1, 1, out_channel, cq)
        wk, bk = _init_conv(k2, 1, 1, out_channel, cq)
        wv, bv = _init_conv(k3, 1, 1, out_channel, out_channel)
        # NOTE: PyTorch initializes gamma to 0 (attention path disabled at init);
        # we use 0.5 so the attention math is actually exercised.  The forward
        # expression (gamma * out + x) is unchanged.
        return dict(wq=wq, bq=bq, wk=wk, bk=bk, wv=wv, bv=bv,
                    gamma=jnp.full((1, 1), 0.5, jnp.float32))

    params['h_attn'] = attn_params(ks[2], ks[3], ks[4])
    params['w_attn'] = attn_params(ks[5], ks[6], ks[7])
    return params


# ----------------------------------------------------------------------------
# Pure-JAX f32 reference (for correctness check only)
# ----------------------------------------------------------------------------
def _conv_ref(x_nchw, w_hwio, b, padding):
    out = jax.lax.conv_general_dilated(
        x_nchw, w_hwio, window_strides=(1, 1),
        padding=((padding, padding), (padding, padding)),
        dimension_numbers=('NCHW', 'HWIO', 'NCHW'))
    return out + b.reshape(1, -1, 1, 1)


def _self_attention_ref(x, ap, axis_len):
    B, C, H, W = x.shape
    q = _conv_ref(x, ap['wq'], ap['bq'], 0)
    k = _conv_ref(x, ap['wk'], ap['bk'], 0)
    v = _conv_ref(x, ap['wv'], ap['bv'], 0)
    pq = q.reshape(B, -1, axis_len).transpose(0, 2, 1)
    pk = k.reshape(B, -1, axis_len)
    attn = jax.nn.sigmoid(jnp.matmul(pq, pk))
    pv = v.reshape(B, -1, axis_len)
    out = jnp.matmul(pv, attn.transpose(0, 2, 1)).reshape(B, C, H, W)
    return ap['gamma'].reshape(()) * out + x


def axial_attention_ref(x, params):
    y = _conv_ref(x, params['conv0']['w'], params['conv0']['b'], 0)
    y = _conv_ref(y, params['conv1']['w'], params['conv1']['b'], 1)
    y = _self_attention_ref(y, params['h_attn'], y.shape[2])   # mode='h'
    y = _self_attention_ref(y, params['w_attn'], y.shape[3])   # mode='w'
    return y


if __name__ == "__main__":
    key = jax.random.PRNGKey(0)
    kx, kp = jax.random.split(key)

    N, C_in, H, W = 2, 4, 16, 16
    C_out = 32   # SelfAttention projects to C_out // 8 = 4 q/k channels

    x = jax.random.normal(kx, (N, C_in, H, W), jnp.float32)
    params = init_axial_attention_params(kp, C_in, C_out)

    y = jax.block_until_ready(axial_attention(x, params))
    y_ref = jax.block_until_ready(axial_attention_ref(x, params))

    assert y.shape == (N, C_out, H, W), y.shape
    assert bool(jnp.all(jnp.isfinite(y)))
    rel = float(jnp.linalg.norm(y - y_ref) / (jnp.linalg.norm(y_ref) + 1e-12))
    assert rel < 5e-2, f"relative error vs f32 reference too high: {rel}"
    print("KERNEL_OK")
</pallas_src>

<mosaic_0001>
module attributes {stable_mosaic.version = 11 : i64} {
  func.func @kernel(%arg0: i32, %arg1: memref<1x256x4xf32, #tpu.memory_space<vmem>>, %arg2: memref<4x32xf32, #tpu.memory_space<vmem>>, %arg3: memref<1x32xf32, #tpu.memory_space<vmem>>, %arg4: memref<9x32x32xf32, #tpu.memory_space<vmem>>, %arg5: memref<1x32xf32, #tpu.memory_space<vmem>>, %arg6: memref<32x40xf32, #tpu.memory_space<vmem>>, %arg7: memref<1x40xf32, #tpu.memory_space<vmem>>, %arg8: memref<1x1xf32, #tpu.memory_space<smem>>, %arg9: memref<32x40xf32, #tpu.memory_space<vmem>>, %arg10: memref<1x40xf32, #tpu.memory_space<vmem>>, %arg11: memref<1x1xf32, #tpu.memory_space<smem>>, %arg12: memref<1x256x32xf32, #tpu.memory_space<vmem>>, %arg13: memref<18x18x32xf32, #tpu.memory_space<vmem>>) attributes {dimension_semantics = [#tpu.dimension_semantics<parallel>], iteration_bounds = array<i64: 2>, scalar_prefetch = 0 : i64, scratch_operands = 1 : i64, tpu.core_type = #tpu.core_type<tc>, window_params = [{transform_indices = @transform_0, window_bounds = array<i64: 1, 256, 4>}, {pipeline_mode = #tpu.pipeline_mode<synchronous>, transform_indices = @transform_1, window_bounds = array<i64: 4, 32>}, {pipeline_mode = #tpu.pipeline_mode<synchronous>, transform_indices = @transform_2, window_bounds = array<i64: 1, 32>}, {pipeline_mode = #tpu.pipeline_mode<synchronous>, transform_indices = @transform_3, window_bounds = array<i64: 9, 32, 32>}, {pipeline_mode = #tpu.pipeline_mode<synchronous>, transform_indices = @transform_4, window_bounds = array<i64: 1, 32>}, {pipeline_mode = #tpu.pipeline_mode<synchronous>, transform_indices = @transform_5, window_bounds = array<i64: 32, 40>}, {pipeline_mode = #tpu.pipeline_mode<synchronous>, transform_indices = @transform_6, window_bounds = array<i64: 1, 40>}, {transform_indices = @transform_7, window_bounds = array<i64: 1, 1>}, {pipeline_mode = #tpu.pipeline_mode<synchronous>, transform_indices = @transform_8, window_bounds = array<i64: 32, 40>}, {pipeline_mode = #tpu.pipeline_mode<synchronous>, transform_indices = @transform_9, window_bounds = array<i64: 1, 40>}, {transform_indices = @transform_10, window_bounds = array<i64: 1, 1>}, {transform_indices = @transform_11, window_bounds = array<i64: 1, 256, 32>}]} {
    %c0 = arith.constant 0 : index
    %c0_0 = arith.constant 0 : index
    %c0_1 = arith.constant 0 : index
    %0 = vector.load %arg1[%c0, %c0_0, %c0_1] : memref<1x256x4xf32, #tpu.memory_space<vmem>>, vector<1x256x4xf32>
    %1 = vector.shape_cast %0 : vector<1x256x4xf32> to vector<256x4xf32>
    %c0_2 = arith.constant 0 : index
    %c0_3 = arith.constant 0 : index
    %2 = vector.load %arg2[%c0_2, %c0_3] : memref<4x32xf32, #tpu.memory_space<vmem>>, vector<4x32xf32>
    %cst = arith.constant dense<0.000000e+00> : vector<256x32xf32>
    %3 = tpu.matmul %1, %2, %cst {dimension_numbers = #tpu.dot_dimension_numbers<[1], [0], [0], [1], [0, 0, 1, 1], [], []>} : vector<256x4xf32>, vector<4x32xf32>, vector<256x32xf32> -> vector<256x32xf32>
    %c0_4 = arith.constant 0 : index
    %c0_5 = arith.constant 0 : index
    %4 = vector.load %arg3[%c0_4, %c0_5] : memref<1x32xf32, #tpu.memory_space<vmem>>, vector<1x32xf32>
    %5 = vector.broadcast %4 : vector<1x32xf32> to vector<256x32xf32>
    %6 = arith.addf %3, %5 : vector<256x32xf32>
    %cst_6 = arith.constant 0.000000e+00 : f32
    %7 = vector.broadcast %cst_6 : f32 to vector<18x18x32xf32>
    %c0_7 = arith.constant 0 : index
    %c0_8 = arith.constant 0 : index
    %c0_9 = arith.constant 0 : index
    %8 = vector.load %arg13[%c0_7, %c0_8, %c0_9] : memref<18x18x32xf32, #tpu.memory_space<vmem>>, vector<18x18x32xf32>
    tpu.vector_store %arg13[%c0_7, %c0_8, %c0_9], %7 {strides = array<i32>} : memref<18x18x32xf32, #tpu.memory_space<vmem>>, vector<18x18x32xf32>,
    %9 = vector.shape_cast %6 : vector<256x32xf32> to vector<16x16x32xf32>
    %c1 = arith.constant 1 : index
    %c1_10 = arith.constant 1 : index
    %c0_11 = arith.constant 0 : index
    %10 = vector.load %arg13[%c1, %c1_10, %c0_11] : memref<18x18x32xf32, #tpu.memory_space<vmem>>, vector<16x16x32xf32>
    tpu.vector_store %arg13[%c1, %c1_10, %c0_11], %9 {strides = array<i32>} : memref<18x18x32xf32, #tpu.memory_space<vmem>>, vector<16x16x32xf32>,
    %cst_12 = arith.constant 0.000000e+00 : f32
    %11 = vector.broadcast %cst_12 : f32 to vector<256x32xf32>
    %c0_13 = arith.constant 0 : index
    %c0_14 = arith.constant 0 : index
    %c0_15 = arith.constant 0 : index
    %12 = vector.load %arg13[%c0_13, %c0_14, %c0_15] : memref<18x18x32xf32, #tpu.memory_space<vmem>>, vector<16x16x32xf32>
    %13 = vector.shape_cast %12 : vector<16x16x32xf32> to vector<256x32xf32>
    %c0_16 = arith.constant 0 : index
    %c0_17 = arith.constant 0 : index
    %c0_18 = arith.constant 0 : index
    %14 = vector.load %arg4[%c0_16, %c0_17, %c0_18] : memref<9x32x32xf32, #tpu.memory_space<vmem>>, vector<1x32x32xf32>
    %15 = vector.shape_cast %14 : vector<1x32x32xf32> to vector<32x32xf32>
    %cst_19 = arith.constant dense<0.000000e+00> : vector<256x32xf32>
    %16 = tpu.matmul %13, %15, %cst_19 {dimension_numbers = #tpu.dot_dimension_numbers<[1], [0], [0], [1], [0, 0, 1, 1], [], []>} : vector<256x32xf32>, vector<32x32xf32>, vector<256x32xf32> -> vector<256x32xf32>
    %17 = arith.addf %11, %16 : vector<256x32xf32>
    %c0_20 = arith.constant 0 : index
    %c1_21 = arith.constant 1 : index
    %c0_22 = arith.constant 0 : index
    %18 = vector.load %arg13[%c0_20, %c1_21, %c0_22] : memref<18x18x32xf32, #tpu.memory_space<vmem>>, vector<16x16x32xf32>
    %19 = vector.shape_cast %18 : vector<16x16x32xf32> to vector<256x32xf32>
    %c1_23 = arith.constant 1 : index
    %c0_24 = arith.constant 0 : index
    %c0_25 = arith.constant 0 : index
    %20 = vector.load %arg4[%c1_23, %c0_24, %c0_25] : memref<9x32x32xf32, #tpu.memory_space<vmem>>, vector<1x32x32xf32>
    %21 = vector.shape_cast %20 : vector<1x32x32xf32> to vector<32x32xf32>
    %cst_26 = arith.constant dense<0.000000e+00> : vector<256x32xf32>
    %22 = tpu.matmul %19, %21, %cst_26 {dimension_numbers = #tpu.dot_dimension_numbers<[1], [0], [0], [1], [0, 0, 1, 1], [], []>} : vector<256x32xf32>, vector<32x32xf32>, vector<256x32xf32> -> vector<256x32xf32>
    %23 = arith.addf %17, %22 : vector<256x32xf32>
    %c0_27 = arith.constant 0 : index
    %c2 = arith.constant 2 : index
    %c0_28 = arith.constant 0 : index
    %24 = vector.load %arg13[%c0_27, %c2, %c0_28] : memref<18x18x32xf32, #tpu.memory_space<vmem>>, vector<16x16x32xf32>
    %25 = vector.shape_cast %24 : vector<16x16x32xf32> to vector<256x32xf32>
    %c2_29 = arith.constant 2 : index
    %c0_30 = arith.constant 0 : index
    %c0_31 = arith.constant 0 : index
    %26 = vector.load %arg4[%c2_29, %c0_30, %c0_31] : memref<9x32x32xf32, #tpu.memory_space<vmem>>, vector<1x32x32xf32>
    %27 = vector.shape_cast %26 : vector<1x32x32xf32> to vector<32x32xf32>
    %cst_32 = arith.constant dense<0.000000e+00> : vector<256x32xf32>
    %28 = tpu.matmul %25, %27, %cst_32 {dimension_numbers = #tpu.dot_dimension_numbers<[1], [0], [0], [1], [0, 0, 1, 1], [], []>} : vector<256x32xf32>, vector<32x32xf32>, vector<256x32xf32> -> vector<256x32xf32>
    %29 = arith.addf %23, %28 : vector<256x32xf32>
    %c1_33 = arith.constant 1 : index
    %c0_34 = arith.constant 0 : index
    %c0_35 = arith.constant 0 : index
    %30 = vector.load %arg13[%c1_33, %c0_34, %c0_35] : memref<18x18x32xf32, #tpu.memory_space<vmem>>, vector<16x16x32xf32>
    %31 = vector.shape_cast %30 : vector<16x16x32xf32> to vector<256x32xf32>
    %c3 = arith.constant 3 : index
    %c0_36 = arith.constant 0 : index
    %c0_37 = arith.constant 0 : index
    %32 = vector.load %arg4[%c3, %c0_36, %c0_37] : memref<9x32x32xf32, #tpu.memory_space<vmem>>, vector<1x32x32xf32>
    %33 = vector.shape_cast %32 : vector<1x32x32xf32> to vector<32x32xf32>
    %cst_38 = arith.constant dense<0.000000e+00> : vector<256x32xf32>
    %34 = tpu.matmul %31, %33, %cst_38 {dimension_numbers = #tpu.dot_dimension_numbers<[1], [0], [0], [1], [0, 0, 1, 1], [], []>} : vector<256x32xf32>, vector<32x32xf32>, vector<256x32xf32> -> vector<256x32xf32>
    %35 = arith.addf %29, %34 : vector<256x32xf32>
    %c1_39 = arith.constant 1 : index
    %c1_40 = arith.constant 1 : index
    %c0_41 = arith.constant 0 : index
    %36 = vector.load %arg13[%c1_39, %c1_40, %c0_41] : memref<18x18x32xf32, #tpu.memory_space<vmem>>, vector<16x16x32xf32>
    %37 = vector.shape_cast %36 : vector<16x16x32xf32> to vector<256x32xf32>
    %c4 = arith.constant 4 : index
    %c0_42 = arith.constant 0 : index
    %c0_43 = arith.constant 0 : index
    %38 = vector.load %arg4[%c4, %c0_42, %c0_43] : memref<9x32x32xf32, #tpu.memory_space<vmem>>, vector<1x32x32xf32>
    %39 = vector.shape_cast %38 : vector<1x32x32xf32> to vector<32x32xf32>
    %cst_44 = arith.constant dense<0.000000e+00> : vector<256x32xf32>
    %40 = tpu.matmul %37, %39, %cst_44 {dimension_numbers = #tpu.dot_dimension_numbers<[1], [0], [0], [1], [0, 0, 1, 1], [], []>} : vector<256x32xf32>, vector<32x32xf32>, vector<256x32xf32> -> vector<256x32xf32>
    %41 = arith.addf %35, %40 : vector<256x32xf32>
    %c1_45 = arith.constant 1 : index
    %c2_46 = arith.constant 2 : index
    %c0_47 = arith.constant 0 : index
    %42 = vector.load %arg13[%c1_45, %c2_46, %c0_47] : memref<18x18x32xf32, #tpu.memory_space<vmem>>, vector<16x16x32xf32>
    %43 = vector.shape_cast %42 : vector<16x16x32xf32> to vector<256x32xf32>
    %c5 = arith.constant 5 : index
    %c0_48 = arith.constant 0 : index
    %c0_49 = arith.constant 0 : index
    %44 = vector.load %arg4[%c5, %c0_48, %c0_49] : memref<9x32x32xf32, #tpu.memory_space<vmem>>, vector<1x32x32xf32>
    %45 = vector.shape_cast %44 : vector<1x32x32xf32> to vector<32x32xf32>
    %cst_50 = arith.constant dense<0.000000e+00> : vector<256x32xf32>
    %46 = tpu.matmul %43, %45, %cst_50 {dimension_numbers = #tpu.dot_dimension_numbers<[1], [0], [0], [1], [0, 0, 1, 1], [], []>} : vector<256x32xf32>, vector<32x32xf32>, vector<256x32xf32> -> vector<256x32xf32>
    %47 = arith.addf %41, %46 : vector<256x32xf32>
    %c2_51 = arith.constant 2 : index
    %c0_52 = arith.constant 0 : index
    %c0_53 = arith.constant 0 : index
    %48 = vector.load %arg13[%c2_51, %c0_52, %c0_53] : memref<18x18x32xf32, #tpu.memory_space<vmem>>, vector<16x16x32xf32>
    %49 = vector.shape_cast %48 : vector<16x16x32xf32> to vector<256x32xf32>
    %c6 = arith.constant 6 : index
    %c0_54 = arith.constant 0 : index
    %c0_55 = arith.constant 0 : index
    %50 = vector.load %arg4[%c6, %c0_54, %c0_55] : memref<9x32x32xf32, #tpu.memory_space<vmem>>, vector<1x32x32xf32>
    %51 = vector.shape_cast %50 : vector<1x32x32xf32> to vector<32x32xf32>
    %cst_56 = arith.constant dense<0.000000e+00> : vector<256x32xf32>
    %52 = tpu.matmul %49, %51, %cst_56 {dimension_numbers = #tpu.dot_dimension_numbers<[1], [0], [0], [1], [0, 0, 1, 1], [], []>} : vector<256x32xf32>, vector<32x32xf32>, vector<256x32xf32> -> vector<256x32xf32>
    %53 = arith.addf %47, %52 : vector<256x32xf32>
    %c2_57 = arith.constant 2 : index
    %c1_58 = arith.constant 1 : index
    %c0_59 = arith.constant 0 : index
    %54 = vector.load %arg13[%c2_57, %c1_58, %c0_59] : memref<18x18x32xf32, #tpu.memory_space<vmem>>, vector<16x16x32xf32>
    %55 = vector.shape_cast %54 : vector<16x16x32xf32> to vector<256x32xf32>
    %c7 = arith.constant 7 : index
    %c0_60 = arith.constant 0 : index
    %c0_61 = arith.constant 0 : index
    %56 = vector.load %arg4[%c7, %c0_60, %c0_61] : memref<9x32x32xf32, #tpu.memory_space<vmem>>, vector<1x32x32xf32>
    %57 = vector.shape_cast %56 : vector<1x32x32xf32> to vector<32x32xf32>
    %cst_62 = arith.constant dense<0.000000e+00> : vector<256x32xf32>
    %58 = tpu.matmul %55, %57, %cst_62 {dimension_numbers = #tpu.dot_dimension_numbers<[1], [0], [0], [1], [0, 0, 1, 1], [], []>} : vector<256x32xf32>, vector<32x32xf32>, vector<256x32xf32> -> vector<256x32xf32>
    %59 = arith.addf %53, %58 : vector<256x32xf32>
    %c2_63 = arith.constant 2 : index
    %c2_64 = arith.constant 2 : index
    %c0_65 = arith.constant 0 : index
    %60 = vector.load %arg13[%c2_63, %c2_64, %c0_65] : memref<18x18x32xf32, #tpu.memory_space<vmem>>, vector<16x16x32xf32>
    %61 = vector.shape_cast %60 : vector<16x16x32xf32> to vector<256x32xf32>
    %c8 = arith.constant 8 : index
    %c0_66 = arith.constant 0 : index
    %c0_67 = arith.constant 0 : index
    %62 = vector.load %arg4[%c8, %c0_66, %c0_67] : memref<9x32x32xf32, #tpu.memory_space<vmem>>, vector<1x32x32xf32>
    %63 = vector.shape_cast %62 : vector<1x32x32xf32> to vector<32x32xf32>
    %cst_68 = arith.constant dense<0.000000e+00> : vector<256x32xf32>
    %64 = tpu.matmul %61, %63, %cst_68 {dimension_numbers = #tpu.dot_dimension_numbers<[1], [0], [0], [1], [0, 0, 1, 1], [], []>} : vector<256x32xf32>, vector<32x32xf32>, vector<256x32xf32> -> vector<256x32xf32>
    %65 = arith.addf %59, %64 : vector<256x32xf32>
    %c0_69 = arith.constant 0 : index
    %c0_70 = arith.constant 0 : index
    %66 = vector.load %arg5[%c0_69, %c0_70] : memref<1x32xf32, #tpu.memory_space<vmem>>, vector<1x32xf32>
    %67 = vector.broadcast %66 : vector<1x32xf32> to vector<256x32xf32>
    %68 = arith.addf %65, %67 : vector<256x32xf32>
    %c0_71 = arith.constant 0 : index
    %c0_72 = arith.constant 0 : index
    %69 = vector.load %arg6[%c0_71, %c0_72] : memref<32x40xf32, #tpu.memory_space<vmem>>, vector<32x40xf32>
    %c0_73 = arith.constant 0 : index
    %c0_74 = arith.constant 0 : index
    %70 = vector.load %arg7[%c0_73, %c0_74] : memref<1x40xf32, #tpu.memory_space<vmem>>, vector<1x40xf32>
    %c0_75 = arith.constant 0 : index
    %c0_76 = arith.constant 0 : index
    %71 = memref.load %arg8[%c0_75, %c0_76] : memref<1x1xf32, #tpu.memory_space<smem>>
    %cst_77 = arith.constant dense<0.000000e+00> : vector<256x40xf32>
    %72 = tpu.matmul %68, %69, %cst_77 {dimension_numbers = #tpu.dot_dimension_numbers<[1], [0], [0], [1], [0, 0, 1, 1], [], []>} : vector<256x32xf32>, vector<32x40xf32>, vector<256x40xf32> -> vector<256x40xf32>
    %73 = vector.broadcast %70 : vector<1x40xf32> to vector<256x40xf32>
    %74 = arith.addf %72, %73 : vector<256x40xf32>
    %75 = vector.extract_strided_slice %74 {offsets = [0, 0], sizes = [256, 4], strides = [1, 1]} : vector<256x40xf32> to vector<256x4xf32>
    %76 = vector.shape_cast %75 : vector<256x4xf32> to vector<16x16x4xf32>
    %77 = vector.extract_strided_slice %74 {offsets = [0, 4], sizes = [256, 4], strides = [1, 1]} : vector<256x40xf32> to vector<256x4xf32>
    %78 = vector.shape_cast %77 : vector<256x4xf32> to vector<16x16x4xf32>
    %79 = vector.extract_strided_slice %74 {offsets = [0, 8], sizes = [256, 32], strides = [1, 1]} : vector<256x40xf32> to vector<256x32xf32>
    %80 = vector.shape_cast %79 : vector<256x32xf32> to vector<16x16x32xf32>
    "tpu.trace_start"() <{level = 10 : i32, message = "rac,rxc->rax"}> : () -> ()
    %cst_78 = arith.constant dense<0.000000e+00> : vector<16x16x16xf32>
    %81 = tpu.matmul %76, %78, %cst_78 {dimension_numbers = #tpu.dot_dimension_numbers<[2], [2], [1], [1], [0, 0, 0, 1, 1, 1], [0], [0]>} : vector<16x16x4xf32>, vector<16x16x4xf32>, vector<16x16x16xf32> -> vector<16x16x16xf32>
    "tpu.trace_stop"() : () -> ()
    %cst_79 = arith.constant dense<0.000000e+00> : vector<16x16xf32>
    %82 = vector.multi_reduction <add>, %81, %cst_79 [0] : vector<16x16x16xf32> to vector<16x16xf32>
    %cst_80 = arith.constant 0.000000e+00 : f32
    %83 = vector.broadcast %cst_80 : f32 to vector<16x16xf32>
    %84 = arith.subf %83, %82 : vector<16x16xf32>
    %85 = math.exp %84 : vector<16x16xf32>
    %cst_81 = arith.constant 1.000000e+00 : f32
    %86 = vector.broadcast %cst_81 : f32 to vector<16x16xf32>
    %87 = arith.addf %86, %85 : vector<16x16xf32>
    %88 = tpu.reciprocal %87 : vector<16x16xf32> -> vector<16x16xf32>
    %89 = vector.shape_cast %88 : vector<16x16xf32> to vector<1x16x16xf32>
    %90 = vector.broadcast %89 : vector<1x16x16xf32> to vector<16x16x16xf32>
    "tpu.trace_start"() <{level = 10 : i32, message = "rxa,rac->rxc"}> : () -> ()
    %cst_82 = arith.constant dense<0.000000e+00> : vector<16x16x32xf32>
    %91 = tpu.matmul %90, %80, %cst_82 {dimension_numbers = #tpu.dot_dimension_numbers<[2], [1], [1], [2], [0, 0, 0, 1, 1, 2], [0], [0]>} : vector<16x16x16xf32>, vector<16x16x32xf32>, vector<16x16x32xf32> -> vector<16x16x32xf32>
    "tpu.trace_stop"() : () -> ()
    %92 = vector.shape_cast %91 : vector<16x16x32xf32> to vector<256x32xf32>
    %93 = vector.broadcast %71 : f32 to vector<256x32xf32>
    %94 = arith.mulf %93, %92 : vector<256x32xf32>
    %95 = arith.addf %94, %68 : vector<256x32xf32>
    %c0_83 = arith.constant 0 : index
    %c0_84 = arith.constant 0 : index
    %96 = vector.load %arg9[%c0_83, %c0_84] : memref<32x40xf32, #tpu.memory_space<vmem>>, vector<32x40xf32>
    %c0_85 = arith.constant 0 : index
    %c0_86 = arith.constant 0 : index
    %97 = vector.load %arg10[%c0_85, %c0_86] : memref<1x40xf32, #tpu.memory_space<vmem>>, vector<1x40xf32>
    %c0_87 = arith.constant 0 : index
    %c0_88 = arith.constant 0 : index
    %98 = memref.load %arg11[%c0_87, %c0_88] : memref<1x1xf32, #tpu.memory_space<smem>>
    %cst_89 = arith.constant dense<0.000000e+00> : vector<256x40xf32>
    %99 = tpu.matmul %95, %96, %cst_89 {dimension_numbers = #tpu.dot_dimension_numbers<[1], [0], [0], [1], [0, 0, 1, 1], [], []>} : vector<256x32xf32>, vector<32x40xf32>, vector<256x40xf32> -> vector<256x40xf32>
    %100 = vector.broadcast %97 : vector<1x40xf32> to vector<256x40xf32>
    %101 = arith.addf %99, %100 : vector<256x40xf32>
    %102 = vector.extract_strided_slice %101 {offsets = [0, 0], sizes = [256, 4], strides = [1, 1]} : vector<256x40xf32> to vector<256x4xf32>
    %103 = vector.shape_cast %102 : vector<256x4xf32> to vector<16x16x4xf32>
    %104 = vector.extract_strided_slice %101 {offsets = [0, 4], sizes = [256, 4], strides = [1, 1]} : vector<256x40xf32> to vector<256x4xf32>
    %105 = vector.shape_cast %104 : vector<256x4xf32> to vector<16x16x4xf32>
    %106 = vector.extract_strided_slice %101 {offsets = [0, 8], sizes = [256, 32], strides = [1, 1]} : vector<256x40xf32> to vector<256x32xf32>
    %107 = vector.shape_cast %106 : vector<256x32xf32> to vector<16x16x32xf32>
    "tpu.trace_start"() <{level = 10 : i32, message = "rac,rxc->rax"}> : () -> ()
    %cst_90 = arith.constant dense<0.000000e+00> : vector<16x16x16xf32>
    %108 = tpu.matmul %103, %105, %cst_90 {dimension_numbers = #tpu.dot_dimension_numbers<[2], [2], [1], [1], [0, 0, 0, 1, 1, 1], [0], [0]>} : vector<16x16x4xf32>, vector<16x16x4xf32>, vector<16x16x16xf32> -> vector<16x16x16xf32>
    "tpu.trace_stop"() : () -> ()
    %cst_91 = arith.constant dense<0.000000e+00> : vector<16x16xf32>
    %109 = vector.multi_reduction <add>, %108, %cst_91 [0] : vector<16x16x16xf32> to vector<16x16xf32>
    %cst_92 = arith.constant 0.000000e+00 : f32
    %110 = vector.broadcast %cst_92 : f32 to vector<16x16xf32>
    %111 = arith.subf %110, %109 : vector<16x16xf32>
    %112 = math.exp %111 : vector<16x16xf32>
    %cst_93 = arith.constant 1.000000e+00 : f32
    %113 = vector.broadcast %cst_93 : f32 to vector<16x16xf32>
    %114 = arith.addf %113, %112 : vector<16x16xf32>
    %115 = tpu.reciprocal %114 : vector<16x16xf32> -> vector<16x16xf32>
    %116 = vector.shape_cast %115 : vector<16x16xf32> to vector<1x16x16xf32>
    %117 = vector.broadcast %116 : vector<1x16x16xf32> to vector<16x16x16xf32>
    "tpu.trace_start"() <{level = 10 : i32, message = "rxa,rac->rxc"}> : () -> ()
    %cst_94 = arith.constant dense<0.000000e+00> : vector<16x16x32xf32>
    %118 = tpu.matmul %117, %107, %cst_94 {dimension_numbers = #tpu.dot_dimension_numbers<[2], [1], [1], [2], [0, 0, 0, 1, 1, 2], [0], [0]>} : vector<16x16x16xf32>, vector<16x16x32xf32>, vector<16x16x32xf32> -> vector<16x16x32xf32>
    "tpu.trace_stop"() : () -> ()
    %119 = vector.shape_cast %118 : vector<16x16x32xf32> to vector<256x32xf32>
    %120 = vector.broadcast %98 : f32 to vector<256x32xf32>
    %121 = arith.mulf %120, %119 : vector<256x32xf32>
    %122 = arith.addf %121, %95 : vector<256x32xf32>
    %c0_95 = arith.constant 0 : index
    %c0_96 = arith.constant 0 : index
    %c0_97 = arith.constant 0 : index
    %123 = vector.load %arg12[%c0_95, %c0_96, %c0_97] : memref<1x256x32xf32, #tpu.memory_space<vmem>>, vector<1x256x32xf32>
    %124 = vector.shape_cast %123 : vector<1x256x32xf32> to vector<256x32xf32>
    %125 = vector.shape_cast %122 : vector<256x32xf32> to vector<1x256x32xf32>
    tpu.vector_store %arg12[%c0_95, %c0_96, %c0_97], %125 {strides = array<i32>} : memref<1x256x32xf32, #tpu.memory_space<vmem>>, vector<1x256x32xf32>,
    return
  }
  func.func @transform_0(%arg0: i32) -> (i32, i32, i32) {
    %c0_i32 = arith.constant 0 : i32
    %c0_i32_0 = arith.constant 0 : i32
    %c0_i32_1 = arith.constant 0 : i32
    return %arg0, %c0_i32, %c0_i32_0 : i32, i32, i32
  }
  func.func @transform_1(%arg0: i32) -> (i32, i32) {
    %c0_i32 = arith.constant 0 : i32
    %c0_i32_0 = arith.constant 0 : i32
    %c0_i32_1 = arith.constant 0 : i32
    return %c0_i32, %c0_i32_0 : i32, i32
  }
  func.func @transform_2(%arg0: i32) -> (i32, i32) {
    %c0_i32 = arith.constant 0 : i32
    %c0_i32_0 = arith.constant 0 : i32
    %c0_i32_1 = arith.constant 0 : i32
    return %c0_i32, %c0_i32_0 : i32, i32
  }
  func.func @transform_3(%arg0: i32) -> (i32, i32, i32) {
    %c0_i32 = arith.constant 0 : i32
    %c0_i32_0 = arith.constant 0 : i32
    %c0_i32_1 = arith.constant 0 : i32
    %c0_i32_2 = arith.constant 0 : i32
    return %c0_i32, %c0_i32_0, %c0_i32_1 : i32, i32, i32
  }
  func.func @transform_4(%arg0: i32) -> (i32, i32) {
    %c0_i32 = arith.constant 0 : i32
    %c0_i32_0 = arith.constant 0 : i32
    %c0_i32_1 = arith.constant 0 : i32
    return %c0_i32, %c0_i32_0 : i32, i32
  }
  func.func @transform_5(%arg0: i32) -> (i32, i32) {
    %c0_i32 = arith.constant 0 : i32
    %c0_i32_0 = arith.constant 0 : i32
    %c0_i32_1 = arith.constant 0 : i32
    return %c0_i32, %c0_i32_0 : i32, i32
  }
  func.func @transform_6(%arg0: i32) -> (i32, i32) {
    %c0_i32 = arith.constant 0 : i32
    %c0_i32_0 = arith.constant 0 : i32
    %c0_i32_1 = arith.constant 0 : i32
    return %c0_i32, %c0_i32_0 : i32, i32
  }
  func.func @transform_7(%arg0: i32) -> (i32, i32) {
    %c0_i32 = arith.constant 0 : i32
    %c0_i32_0 = arith.constant 0 : i32
    %c0_i32_1 = arith.constant 0 : i32
    return %c0_i32, %c0_i32_0 : i32, i32
  }
  func.func @transform_8(%arg0: i32) -> (i32, i32) {
    %c0_i32 = arith.constant 0 : i32
    %c0_i32_0 = arith.constant 0 : i32
    %c0_i32_1 = arith.constant 0 : i32
    return %c0_i32, %c0_i32_0 : i32, i32
  }
  func.func @transform_9(%arg0: i32) -> (i32, i32) {
    %c0_i32 = arith.constant 0 : i32
    %c0_i32_0 = arith.constant 0 : i32
    %c0_i32_1 = arith.constant 0 : i32
    return %c0_i32, %c0_i32_0 : i32, i32
  }
  func.func @transform_10(%arg0: i32) -> (i32, i32) {
    %c0_i32 = arith.constant 0 : i32
    %c0_i32_0 = arith.constant 0 : i32
    %c0_i32_1 = arith.constant 0 : i32
    return %c0_i32, %c0_i32_0 : i32, i32
  }
  func.func @transform_11(%arg0: i32) -> (i32, i32, i32) {
    %c0_i32 = arith.constant 0 : i32
    %c0_i32_0 = arith.constant 0 : i32
    %c0_i32_1 = arith.constant 0 : i32
    return %arg0, %c0_i32, %c0_i32_0 : i32, i32, i32
  }
}

</mosaic_0001>

<llo_original>
// kernel: axial_attention.1
$region0: #{axial_attention.1}
  #allocation0 [shape = 'u32[]', space=smem, size = 0x4, offset = 0x4, fixed_abs, tag = 'smem constant byte address 0x4 - core index']
  #allocation1 [shape = 'u32[144,128]{1,0:T(1,128)}', space=vmem, size = 0x12000, scoped, tag = 'internal scratch']
  #allocation2 [shape = 'f32[18,18,32]{2,1,0:T(8,128)}', space=vmem, size = 0x36000, scoped, tag = 'scratch operand']
  #allocation3 [shape = 'f32[1,1]{1,0:T(1,128)S(6)}', space=smem, size = 0x200, scoped, tag = 'scoped memory for axial_attention.1']
  #allocation4 [shape = 'f32[1,1]{1,0:T(1,128)S(6)}', space=smem, size = 0x200, scoped, tag = 'scoped memory for axial_attention.1']
  %s0 = inlined_call_operand.vmem [shape: f32[2,256,4], index: 0, kind: input, shape index: {}]
  %s1 = inlined_call_operand.vmem [shape: f32[4,32], index: 1, kind: input, shape index: {}]
  %s2 = inlined_call_operand.vmem [shape: f32[1,32], index: 2, kind: input, shape index: {}]
  %s3 = inlined_call_operand.vmem [shape: f32[9,32,32], index: 3, kind: input, shape index: {}]
  %s4 = inlined_call_operand.vmem [shape: f32[1,32], index: 4, kind: input, shape index: {}]
  %s5 = inlined_call_operand.vmem [shape: f32[32,40], index: 5, kind: input, shape index: {}]
  %s6 = inlined_call_operand.vmem [shape: f32[1,40], index: 6, kind: input, shape index: {}]
  %s7 = inlined_call_operand.<no memory space> [shape: f32[1,1], index: 7, kind: input, shape index: {}]
  %s8 = inlined_call_operand.vmem [shape: f32[32,40], index: 8, kind: input, shape index: {}]
  %s9 = inlined_call_operand.vmem [shape: f32[1,40], index: 9, kind: input, shape index: {}]
  %s10 = inlined_call_operand.<no memory space> [shape: f32[1,1], index: 10, kind: input, shape index: {}]
  %s11 = inlined_call_operand.hbm [shape: f32[2,256,32], index: 11, kind: output, shape index: {}]
  %s12 = sld [smem:[#allocation0]]
  $region77: #{axial_attention.1} parent=0
    _
  %s14 = ssub.s32 1, %s12
  %s15 = scalar_select 0, %s14, %s12
  %16 = sst [smem:[#allocation3]] %s7
  %17 = sst [smem:[#allocation4]] %s10
  $region1: #{axial_attention.1} parent=0
    #allocation5 [shape = 'u8[262144]{0}', space=vmem, size = 0x40000, scoped, tag = 'output window, operand 0']
    #allocation6 [shape = 's32[2]{0}', space=sflag, size = 0x8, scoped, tag = 'scoped memory for axial_attention.1']
    %18 = vsyncpa [#allocation6], 0
    %s19 = scalar_lea.sflag [#allocation6], 1
    %20 = vsyncpa %s19, 0
    loop: start=0, step=1, limit=4
    $region2: #{axial_attention.1} parent=1 // loop_pre_header
      _
    $region3: #{axial_attention.1} parent=1 // loop_header
      %s22 = sphi 0, %s26
      %p23 = scmp.ge.s32.totalorder %s22, 4
      %s32 = sphi 0, %s34
      %s35 = sphi 0, %s32
      %s36 = sphi 0, %s35
      %s52 = sphi 0, %s36
      %s56 = sphi 0, %s56
      %s58 = sphi 0, %s56
      %s59 = sphi 0, %s58
      %s73 = sphi 0, %s59
      %s77 = sphi 0, %s77
      %s79 = sphi 0, %s77
      %s80 = sphi 0, %s79
      %s94 = sphi 0, %s80
      %s98 = sphi 0, %s98
      %s100 = sphi 0, %s98
      %s101 = sphi 0, %s100
      %s115 = sphi 0, %s101
      %s119 = sphi 0, %s119
      %s121 = sphi 0, %s119
      %s122 = sphi 0, %s121
      %s136 = sphi 0, %s122
      %s140 = sphi 0, %s140
      %s142 = sphi 0, %s140
      %s143 = sphi 0, %s142
      %s157 = sphi 0, %s143
      %s161 = sphi 0, %s161
      %s163 = sphi 0, %s161
      %s164 = sphi 0, %s163
      %s178 = sphi 0, %s164
      %s182 = sphi 0, %s182
      %s184 = sphi 0, %s182
      %s185 = sphi 0, %s184
      %s199 = sphi 0, %s185
      %s203 = sphi 0, %s203
      %s205 = sphi 0, %s203
      %s206 = sphi 0, %s205
      %s220 = sphi 0, %s206
      %s224 = sphi 0, %s224
      %s226 = sphi 0, %s224
      %s227 = sphi 0, %s226
      %s241 = sphi 0, %s227
      %s245 = sphi 0, %s245
      %s247 = sphi 0, %s245
      %s248 = sphi 0, %s247
      %s262 = sphi 0, %s248
      %s268 = sphi 0, %s270
      %s271 = sphi 0, %s268
      %s272 = sphi 0, %s271
      %s288 = sphi 0, %s272
    $region4: #{axial_attention.1} parent=1 // loop_header_branch
      %25 = sbr.rel (%p23) target = $region8
    $region5: #{axial_attention.1} parent=1 // loop_body
      %s27 = ssub.s32 %s22, 1
      %s28 = ssub.s32 %s22, 2
      %s29 = sadd.s32 %s22, 1
      %s30 = ssub.s32 %s22, %s29
      %p31 = scmp.eq.s32.totalorder %s30, 0
      %s33 = sadd.s32 %s32, 1
      %s34 = scalar_select %p31, %s32, %s33
      %p37 = pneg %p31
      %p38 = scmp.eq.s32.totalorder %s22, 1
      %p39 = por %p37, %p38
      %p40 = scmp.ne.s32.totalorder %s32, %s35
      %p41 = scmp.eq.s32.totalorder %s22, 0
      %p42 = por %p40, %p41
      %p43 = scmp.ne.s32.totalorder %s32, %s35
      %p44 = scmp.eq.s32.totalorder %s27, 1
      %p45 = por %p43, %p44
      %p46 = scmp.ne.s32.totalorder %s35, %s36
      %p47 = scmp.eq.s32.totalorder %s27, 0
      %p48 = por %p46, %p47
      %p49 = scmp.ne.s32.totalorder %s35, %s36
      %p50 = scmp.eq.s32.totalorder %s28, 1
      %p51 = por %p49, %p50
      %p53 = scmp.ne.s32.totalorder %s36, %s52
      %p54 = scmp.eq.s32.totalorder %s28, 0
      %p55 = por %p53, %p54
      %s57 = sadd.s32 %s56, 1
      %p60 = scmp.eq.s32.totalorder %s22, 1
      %p61 = scmp.ne.s32.totalorder %s56, %s58
      %p62 = scmp.eq.s32.totalorder %s22, 0
      %p63 = por %p61, %p62
      %p64 = scmp.ne.s32.totalorder %s56, %s58
      %p65 = scmp.eq.s32.totalorder %s27, 1
      %p66 = por %p64, %p65
      %p67 = scmp.ne.s32.totalorder %s58, %s59
      %p68 = scmp.eq.s32.totalorder %s27, 0
      %p69 = por %p67, %p68
      %p70 = scmp.ne.s32.totalorder %s58, %s59
      %p71 = scmp.eq.s32.totalorder %s28, 1
      %p72 = por %p70, %p71
      %p74 = scmp.ne.s32.totalorder %s59, %s73
      %p75 = scmp.eq.s32.totalorder %s28, 0
      %p76 = por %p74, %p75
      %s78 = sadd.s32 %s77, 1
      %p81 = scmp.eq.s32.totalorder %s22, 1
      %p82 = scmp.ne.s32.totalorder %s77, %s79
      %p83 = scmp.eq.s32.totalorder %s22, 0
      %p84 = por %p82, %p83
      %p85 = scmp.ne.s32.totalorder %s77, %s79
      %p86 = scmp.eq.s32.totalorder %s27, 1
      %p87 = por %p85, %p86
      %p88 = scmp.ne.s32.totalorder %s79, %s80
      %p89 = scmp.eq.s32.totalorder %s27, 0
      %p90 = por %p88, %p89
      %p91 = scmp.ne.s32.totalorder %s79, %s80
      %p92 = scmp.eq.s32.totalorder %s28, 1
      %p93 = por %p91, %p92
      %p95 = scmp.ne.s32.totalorder %s80, %s94
      %p96 = scmp.eq.s32.totalorder %s28, 0
      %p97 = por %p95, %p96
      %s99 = sadd.s32 %s98, 1
      %p102 = scmp.eq.s32.totalorder %s22, 1
      %p103 = scmp.ne.s32.totalorder %s98, %s100
      %p104 = scmp.eq.s32.totalorder %s22, 0
      %p105 = por %p103, %p104
      %p106 = scmp.ne.s32.totalorder %s98, %s100
      %p107 = scmp.eq.s32.totalorder %s27, 1
      %p108 = por %p106, %p107
      %p109 = scmp.ne.s32.totalorder %s100, %s101
      %p110 = scmp.eq.s32.totalorder %s27, 0
      %p111 = por %p109, %p110
      %p112 = scmp.ne.s32.totalorder %s100, %s101
      %p113 = scmp.eq.s32.totalorder %s28, 1
      %p114 = por %p112, %p113
      %p116 = scmp.ne.s32.totalorder %s101, %s115
      %p117 = scmp.eq.s32.totalorder %s28, 0
      %p118 = por %p116, %p117
      %s120 = sadd.s32 %s119, 1
      %p123 = scmp.eq.s32.totalorder %s22, 1
      %p124 = scmp.ne.s32.totalorder %s119, %s121
      %p125 = scmp.eq.s32.totalorder %s22, 0
      %p126 = por %p124, %p125
      %p127 = scmp.ne.s32.totalorder %s119, %s121
      %p128 = scmp.eq.s32.totalorder %s27, 1
      %p129 = por %p127, %p128
      %p130 = scmp.ne.s32.totalorder %s121, %s122
      %p131 = scmp.eq.s32.totalorder %s27, 0
      %p132 = por %p130, %p131
      %p133 = scmp.ne.s32.totalorder %s121, %s122
      %p134 = scmp.eq.s32.totalorder %s28, 1
      %p135 = por %p133, %p134
      %p137 = scmp.ne.s32.totalorder %s122, %s136
      %p138 = scmp.eq.s32.totalorder %s28, 0
      %p139 = por %p137, %p138
      %s141 = sadd.s32 %s140, 1
      %p144 = scmp.eq.s32.totalorder %s22, 1
      %p145 = scmp.ne.s32.totalorder %s140, %s142
      %p146 = scmp.eq.s32.totalorder %s22, 0
      %p147 = por %p145, %p146
      %p148 = scmp.ne.s32.totalorder %s140, %s142
      %p149 = scmp.eq.s32.totalorder %s27, 1
      %p150 = por %p148, %p149
      %p151 = scmp.ne.s32.totalorder %s142, %s143
      %p152 = scmp.eq.s32.totalorder %s27, 0
      %p153 = por %p151, %p152
      %p154 = scmp.ne.s32.totalorder %s142, %s143
      %p155 = scmp.eq.s32.totalorder %s28, 1
      %p156 = por %p154, %p155
      %p158 = scmp.ne.s32.totalorder %s143, %s157
      %p159 = scmp.eq.s32.totalorder %s28, 0
      %p160 = por %p158, %p159
      %s162 = sadd.s32 %s161, 1
      %p165 = scmp.eq.s32.totalorder %s22, 1
      %p166 = scmp.ne.s32.totalorder %s161, %s163
      %p167 = scmp.eq.s32.totalorder %s22, 0
      %p168 = por %p166, %p167
      %p169 = scmp.ne.s32.totalorder %s161, %s163
      %p170 = scmp.eq.s32.totalorder %s27, 1
      %p171 = por %p169, %p170
      %p172 = scmp.ne.s32.totalorder %s163, %s164
      %p173 = scmp.eq.s32.totalorder %s27, 0
      %p174 = por %p172, %p173
      %p175 = scmp.ne.s32.totalorder %s163, %s164
      %p176 = scmp.eq.s32.totalorder %s28, 1
      %p177 = por %p175, %p176
      %p179 = scmp.ne.s32.totalorder %s164, %s178
      %p180 = scmp.eq.s32.totalorder %s28, 0
      %p181 = por %p179, %p180
      %s183 = sadd.s32 %s182, 1
      %p186 = scmp.eq.s32.totalorder %s22, 1
      %p187 = scmp.ne.s32.totalorder %s182, %s184
      %p188 = scmp.eq.s32.totalorder %s22, 0
      %p189 = por %p187, %p188
      %p190 = scmp.ne.s32.totalorder %s182, %s184
      %p191 = scmp.eq.s32.totalorder %s27, 1
      %p192 = por %p190, %p191
      %p193 = scmp.ne.s32.totalorder %s184, %s185
      %p194 = scmp.eq.s32.totalorder %s27, 0
      %p195 = por %p193, %p194
      %p196 = scmp.ne.s32.totalorder %s184, %s185
      %p197 = scmp.eq.s32.totalorder %s28, 1
      %p198 = por %p196, %p197
      %p200 = scmp.ne.s32.totalorder %s185, %s199
      %p201 = scmp.eq.s32.totalorder %s28, 0
      %p202 = por %p200, %p201
      %s204 = sadd.s32 %s203, 1
      %p207 = scmp.eq.s32.totalorder %s22, 1
      %p208 = scmp.ne.s32.totalorder %s203, %s205
      %p209 = scmp.eq.s32.totalorder %s22, 0
      %p210 = por %p208, %p209
      %p211 = scmp.ne.s32.totalorder %s203, %s205
      %p212 = scmp.eq.s32.totalorder %s27, 1
      %p213 = por %p211, %p212
      %p214 = scmp.ne.s32.totalorder %s205, %s206
      %p215 = scmp.eq.s32.totalorder %s27, 0
      %p216 = por %p214, %p215
      %p217 = scmp.ne.s32.totalorder %s205, %s206
      %p218 = scmp.eq.s32.totalorder %s28, 1
      %p219 = por %p217, %p218
      %p221 = scmp.ne.s32.totalorder %s206, %s220
      %p222 = scmp.eq.s32.totalorder %s28, 0
      %p223 = por %p221, %p222
      %s225 = sadd.s32 %s224, 1
      %p228 = scmp.eq.s32.totalorder %s22, 1
      %p229 = scmp.ne.s32.totalorder %s224, %s226
      %p230 = scmp.eq.s32.totalorder %s22, 0
      %p231 = por %p229, %p230
      %p232 = scmp.ne.s32.totalorder %s224, %s226
      %p233 = scmp.eq.s32.totalorder %s27, 1
      %p234 = por %p232, %p233
      %p235 = scmp.ne.s32.totalorder %s226, %s227
      %p236 = scmp.eq.s32.totalorder %s27, 0
      %p237 = por %p235, %p236
      %p238 = scmp.ne.s32.totalorder %s226, %s227
      %p239 = scmp.eq.s32.totalorder %s28, 1
      %p240 = por %p238, %p239
      %p242 = scmp.ne.s32.totalorder %s227, %s241
      %p243 = scmp.eq.s32.totalorder %s28, 0
      %p244 = por %p242, %p243
      %s246 = sadd.s32 %s245, 1
      %p249 = scmp.eq.s32.totalorder %s22, 1
      %p250 = scmp.ne.s32.totalorder %s245, %s247
      %p251 = scmp.eq.s32.totalorder %s22, 0
      %p252 = por %p250, %p251
      %p253 = scmp.ne.s32.totalorder %s245, %s247
      %p254 = scmp.eq.s32.totalorder %s27, 1
      %p255 = por %p253, %p254
      %p256 = scmp.ne.s32.totalorder %s247, %s248
      %p257 = scmp.eq.s32.totalorder %s27, 0
      %p258 = por %p256, %p257
      %p259 = scmp.ne.s32.totalorder %s247, %s248
      %p260 = scmp.eq.s32.totalorder %s28, 1
      %p261 = por %p259, %p260
      %p263 = scmp.ne.s32.totalorder %s248, %s262
      %p264 = scmp.eq.s32.totalorder %s28, 0
      %p265 = por %p263, %p264
      %s266 = ssub.s32 %s22, %s29
      %p267 = scmp.eq.s32.totalorder %s266, 0
      %s269 = sadd.s32 %s268, 1
      %s270 = scalar_select %p267, %s268, %s269
      %p273 = pneg %p267
      %p274 = scmp.eq.s32.totalorder %s22, 1
      %p275 = por %p273, %p274
      %p276 = scmp.ne.s32.totalorder %s268, %s271
      %p277 = scmp.eq.s32.totalorder %s22, 0
      %p278 = por %p276, %p277
      %p279 = scmp.ne.s32.totalorder %s268, %s271
      %p280 = scmp.eq.s32.totalorder %s27, 1
      %p281 = por %p279, %p280
      %p282 = scmp.ne.s32.totalorder %s271, %s272
      %p283 = scmp.eq.s32.totalorder %s27, 0
      %p284 = por %p282, %p283
      %p285 = scmp.ne.s32.totalorder %s271, %s272
      %p286 = scmp.eq.s32.totalorder %s28, 1
      %p287 = por %p285, %p286
      %p289 = scmp.ne.s32.totalorder %s272, %s288
      %p290 = scmp.eq.s32.totalorder %s28, 0
      %p291 = por %p289, %p290
      %p292 = scmp.le.s32.totalorder 1, %s22
      %p293 = scmp.lt.s32.totalorder %s22, 3
      %p294 = pnand %p292, %p293
      %p295 = pneg %p294
      // Predicated region
      $region9: #{axial_attention.1} parent=5 // pred_check
        _
      $region10: #{axial_attention.1} parent=5 // pred_check_branch
        %297 = sbr.rel (%p294) target = $region12
      $region11: #{axial_attention.1} parent=5 // pred_region
        %s298 = ssub.s32 %s22, 1
        // Predicated region
        $region13: #{axial_attention.1} parent=11 // pred_check
          %p299 = pneg %p69
        $region14: #{axial_attention.1} parent=11 // pred_check_branch
          %301 = sbr.rel (%p299) target = $region16
        $region15: #{axial_attention.1} parent=11 // pred_region
          _
        $region16: #{axial_attention.1} parent=11 // pred_fallthru
          _
        // Predicated region
        $region17: #{axial_attention.1} parent=11 // pred_check
          %p302 = pneg %p90
        $region18: #{axial_attention.1} parent=11 // pred_check_branch
          %304 = sbr.rel (%p302) target = $region20
        $region19: #{axial_attention.1} parent=11 // pred_region
          _
        $region20: #{axial_attention.1} parent=11 // pred_fallthru
          _
        // Predicated region
        $region21: #{axial_attention.1} parent=11 // pred_check
          %p305 = pneg %p111
        $region22: #{axial_attention.1} parent=11 // pred_check_branch
          %307 = sbr.rel (%p305) target = $region24
        $region23: #{axial_attention.1} parent=11 // pred_region
          _
        $region24: #{axial_attention.1} parent=11 // pred_fallthru
          _
        // Predicated region
        $region25: #{axial_attention.1} parent=11 // pred_check
          %p308 = pneg %p132
        $region26: #{axial_attention.1} parent=11 // pred_check_branch
          %310 = sbr.rel (%p308) target = $region28
        $region27: #{axial_attention.1} parent=11 // pred_region
          _
        $region28: #{axial_attention.1} parent=11 // pred_fallthru
          _
        // Predicated region
        $region29: #{axial_attention.1} parent=11 // pred_check
          %p311 = pneg %p153
        $region30: #{axial_attention.1} parent=11 // pred_check_branch
          %313 = sbr.rel (%p311) target = $region32
        $region31: #{axial_attention.1} parent=11 // pred_region
          _
        $region32: #{axial_attention.1} parent=11 // pred_fallthru
          _
        // Predicated region
        $region33: #{axial_attention.1} parent=11 // pred_check
          %p314 = pneg %p174
        $region34: #{axial_attention.1} parent=11 // pred_check_branch
          %316 = sbr.rel (%p314) target = $region36
        $region35: #{axial_attention.1} parent=11 // pred_region
          _
        $region36: #{axial_attention.1} parent=11 // pred_fallthru
          _
        // Predicated region
        $region37: #{axial_attention.1} parent=11 // pred_check
          %p317 = pneg %p195
        $region38: #{axial_attention.1} parent=11 // pred_check_branch
          %319 = sbr.rel (%p317) target = $region40
        $region39: #{axial_attention.1} parent=11 // pred_region
          _
        $region40: #{axial_attention.1} parent=11 // pred_fallthru
          _
        // Predicated region
        $region41: #{axial_attention.1} parent=11 // pred_check
          %p320 = pneg %p216
        $region42: #{axial_attention.1} parent=11 // pred_check_branch
          %322 = sbr.rel (%p320) target = $region44
        $region43: #{axial_attention.1} parent=11 // pred_region
          _
        $region44: #{axial_attention.1} parent=11 // pred_fallthru
          _
        // Predicated region
        $region45: #{axial_attention.1} parent=11 // pred_check
          %p323 = pneg %p237
        $region46: #{axial_attention.1} parent=11 // pred_check_branch
          %325 = sbr.rel (%p323) target = $region48
        $region47: #{axial_attention.1} parent=11 // pred_region
          _
        $region48: #{axial_attention.1} parent=11 // pred_fallthru
          _
        // Predicated region
        $region49: #{axial_attention.1} parent=11 // pred_check
          %p326 = pneg %p258
        $region50: #{axial_attention.1} parent=11 // pred_check_branch
          %328 = sbr.rel (%p326) target = $region52
        $region51: #{axial_attention.1} parent=11 // pred_region
          _
        $region52: #{axial_attention.1} parent=11 // pred_fallthru
          _
      $region12: #{axial_attention.1} parent=5 // pred_fallthru
        _
      %p329 = scmp.lt.s32.totalorder %s22, 2
      // Predicated region
      $region53: #{axial_attention.1} parent=5 // pred_check
        %p330 = pneg %p329
      $region54: #{axial_attention.1} parent=5 // pred_check_branch
        %332 = sbr.rel (%p330) target = $region56
      $region55: #{axial_attention.1} parent=5 // pred_region
        // Predicated region
        $region57: #{axial_attention.1} parent=55 // pred_check
          %p333 = pneg %p42
        $region58: #{axial_attention.1} parent=55 // pred_check_branch
          %335 = sbr.rel (%p333) target = $region60
        $region59: #{axial_attention.1} parent=55 // pred_region
          %p336 = scmp.lt.s32.totalorder %s22, 1
          %s337 = scalar_select %p336, %s22, 1
          %s338 = smul.addr %s337, 32
          %s339 = smul.addr %s338, 8
          %s340 = scalar_lea.vmem %s0, %s339
        $region60: #{axial_attention.1} parent=55 // pred_fallthru
          _
      $region56: #{axial_attention.1} parent=5 // pred_fallthru
        _
      %p341 = scmp.le.s32.totalorder 1, %s22
      %p342 = scmp.lt.s32.totalorder %s22, 3
      %p343 = pnand %p341, %p342
      %p344 = pneg %p343
      // Predicated region
      $region61: #{axial_attention.1} parent=5 // pred_check
        _
      $region62: #{axial_attention.1} parent=5 // pred_check_branch
        %346 = sbr.rel (%p343) target = $region64
      $region63: #{axial_attention.1} parent=5 // pred_region
        %s347 = ssub.s32 %s22, 1
        %p348 = scmp.lt.s32.totalorder %s27, 1
        %s349 = scalar_select %p348, %s27, 1
        %s350 = smul.addr %s349, 32
        %s351 = smul.addr %s350, 8
        %s352 = scalar_lea.vmem %s0, %s351
        %p353 = pneg %p48
        %p354 = pneg %p45
        %p355 = pneg %p69
        %p356 = pneg %p66
        %p357 = pneg %p90
        %p358 = pneg %p87
        %p359 = pneg %p111
        %p360 = pneg %p108
        %p361 = pneg %p132
        %p362 = pneg %p129
        %p363 = pneg %p153
        %p364 = pneg %p150
        %p365 = pneg %p174
        %p366 = pneg %p171
        %p367 = pneg %p195
        %p368 = pneg %p192
        %p369 = pneg %p216
        %p370 = pneg %p213
        %p371 = pneg %p237
        %p372 = pneg %p234
        %p373 = pneg %p258
        %p374 = pneg %p255
        %p375 = pneg %p284
        %p376 = pneg %p281
        %s377 = sand.u32 %s271, 1
        %s378 = scalar_lea.sflag [#allocation6], %s377
        %s379 = sand.u32 %s271, 1
        %s380 = smul.addr %s379, 256
        %s381 = scalar_lea.vmem [#allocation5], %s380
        %p382 = scmp.lt.s32.totalorder %s27, 1
        %s383 = scalar_select %p382, %s27, 1
        %s384 = smul.addr %s383, 32
        %s385 = smul.addr %s384, 8
        %s386 = scalar_lea.vmem %s0, %s385
        %v387 = vld [vmem:[%s386] sm:$0xff]
        %v388 = vld [vmem:[%s386 + $0x8] sm:$0xff]
        %v389 = vld [vmem:[%s386 + $0x10] sm:$0xff]
        %v390 = vld [vmem:[%s386 + $0x18] sm:$0xff]
        %v391 = vld [vmem:[%s386 + $0x20] sm:$0xff]
        %v392 = vld [vmem:[%s386 + $0x28] sm:$0xff]
        %v393 = vld [vmem:[%s386 + $0x30] sm:$0xff]
        %v394 = vld [vmem:[%s386 + $0x38] sm:$0xff]
        %v395 = vld [vmem:[%s386 + $0x40] sm:$0xff]
        %v396 = vld [vmem:[%s386 + $0x48] sm:$0xff]
        %v397 = vld [vmem:[%s386 + $0x50] sm:$0xff]
        %v398 = vld [vmem:[%s386 + $0x58] sm:$0xff]
        %v399 = vld [vmem:[%s386 + $0x60] sm:$0xff]
        %v400 = vld [vmem:[%s386 + $0x68] sm:$0xff]
        %v401 = vld [vmem:[%s386 + $0x70] sm:$0xff]
        %v402 = vld [vmem:[%s386 + $0x78] sm:$0xff]
        %v403 = vld [vmem:[%s386 + $0x80] sm:$0xff]
        %v404 = vld [vmem:[%s386 + $0x88] sm:$0xff]
        %v405 = vld [vmem:[%s386 + $0x90] sm:$0xff]
        %v406 = vld [vmem:[%s386 + $0x98] sm:$0xff]
        %v407 = vld [vmem:[%s386 + $0xa0] sm:$0xff]
        %v408 = vld [vmem:[%s386 + $0xa8] sm:$0xff]
        %v409 = vld [vmem:[%s386 + $0xb0] sm:$0xff]
        %v410 = vld [vmem:[%s386 + $0xb8] sm:$0xff]
        %v411 = vld [vmem:[%s386 + $0xc0] sm:$0xff]
        %v412 = vld [vmem:[%s386 + $0xc8] sm:$0xff]
        %v413 = vld [vmem:[%s386 + $0xd0] sm:$0xff]
        %v414 = vld [vmem:[%s386 + $0xd8] sm:$0xff]
        %v415 = vld [vmem:[%s386 + $0xe0] sm:$0xff]
        %v416 = vld [vmem:[%s386 + $0xe8] sm:$0xff]
        %v417 = vld [vmem:[%s386 + $0xf0] sm:$0xff]
        %v418 = vld [vmem:[%s386 + $0xf8] sm:$0xff]
        %v419 = vld [vmem:[%s1] sm:$0xf]
        %v420 = vld [vmem:[%s2] sm:$0x1]
        %v422 = vlaneseq
        %v423 = vshrl.u32 %v422, 7
        %v424 = vsub.s32 0, %v423
        %v425 = vrot.slane %v420, %v424
        %vm427 = vcmask 31744
        %v429 = vsel %vm427, %v387, 0
        %v432 = vsel %vm427, %v388, 0
        %v435 = vsel %vm427, %v389, 0
        %v438 = vsel %vm427, %v390, 0
        %v441 = vsel %vm427, %v391, 0
        %v444 = vsel %vm427, %v392, 0
        %v447 = vsel %vm427, %v393, 0
        %v450 = vsel %vm427, %v394, 0
        %v453 = vsel %vm427, %v395, 0
        %v456 = vsel %vm427, %v396, 0
        %v459 = vsel %vm427, %v397, 0
        %v462 = vsel %vm427, %v398, 0
        %v465 = vsel %vm427, %v399, 0
        %v468 = vsel %vm427, %v400, 0
        %v471 = vsel %vm427, %v401, 0
        %v474 = vsel %vm427, %v402, 0
        %v477 = vsel %vm427, %v403, 0
        %v480 = vsel %vm427, %v404, 0
        %v483 = vsel %vm427, %v405, 0
        %v486 = vsel %vm427, %v406, 0
        %v489 = vsel %vm427, %v407, 0
        %v492 = vsel %vm427, %v408, 0
        %v495 = vsel %vm427, %v409, 0
        %v498 = vsel %vm427, %v410, 0
        %v501 = vsel %vm427, %v411, 0
        %v504 = vsel %vm427, %v412, 0
        %v507 = vsel %vm427, %v413, 0
        %v510 = vsel %vm427, %v414, 0
        %v513 = vsel %vm427, %v415, 0
        %v516 = vsel %vm427, %v416, 0
        %v519 = vsel %vm427, %v417, 0
        %v522 = vsel %vm427, %v418, 0
        %vm524 = vcmask 1043456
        %v526 = vsel %vm524, %v419, 0
        %528 = vmatprep.subr.mxu0 0.0
        %529 = vmatpush1.msra.mxu0 %v526
        %530 = vmatprep.subr.mxu0 0.0
        %531 = vmatpush1.msra.mxu0 0.0
        %532 = vmatprep.subr.mxu0 0.0
        %533 = vmatpush1.msra.mxu0 0.0
        %534 = vmatprep.subr.mxu0 0.0
        %535 = vmatpush1.msra.mxu0 0.0
        %536 = vmatprep.subr.mxu0 0.0
        %537 = vmatpush1.msra.mxu0 0.0
        %538 = vmatprep.subr.mxu0 0.0
        %539 = vmatpush1.msra.mxu0 0.0
        %540 = vmatprep.subr.mxu0 0.0
        %541 = vmatpush1.msra.mxu0 0.0
        %542 = vmatprep.subr.mxu0 0.0
        %543 = vmatpush1.msra.mxu0 0.0
        %544 = vmatprep.subr.mxu0 0.0
        %545 = vmatpush1.msra.mxu0 0.0
        %546 = vmatprep.subr.mxu0 0.0
        %547 = vmatpush1.msra.mxu0 0.0
        %548 = vmatprep.subr.mxu0 0.0
        %549 = vmatpush1.msra.mxu0 0.0
        %550 = vmatprep.subr.mxu0 0.0
        %551 = vmatpush1.msra.mxu0 0.0
        %552 = vmatprep.subr.mxu0 0.0
        %553 = vmatpush1.msra.mxu0 0.0
        %554 = vmatprep.subr.mxu0 0.0
        %555 = vmatpush1.msra.mxu0 0.0
        %556 = vmatprep.subr.mxu0 0.0
        %557 = vmatpush1.msra.mxu0 0.0
        %558 = vmatprep.subr.mxu0 0.0
        %559 = vmatpush1.msra.mxu0 0.0
        %560 = vmatprep.subr.mxu0 0.0
        %561 = vmatpush1.msra.mxu0 0.0
        %562 = vmatprep.subr.mxu0 0.0
        %563 = vmatpush1.msra.mxu0 0.0
        %564 = vmatprep.subr.mxu0 0.0
        %565 = vmatpush1.msra.mxu0 0.0
        %566 = vmatprep.subr.mxu0 0.0
        %567 = vmatpush1.msra.mxu0 0.0
        %568 = vmatprep.subr.mxu0 0.0
        %569 = vmatpush1.msra.mxu0 0.0
        %570 = vmatprep.subr.mxu0 0.0
        %571 = vmatpush1.msra.mxu0 0.0
        %572 = vmatprep.subr.mxu0 0.0
        %573 = vmatpush1.msra.mxu0 0.0
        %574 = vmatprep.subr.mxu0 0.0
        %575 = vmatpush1.msra.mxu0 0.0
        %576 = vmatprep.subr.mxu0 0.0
        %577 = vmatpush1.msra.mxu0 0.0
        %578 = vmatprep.subr.mxu0 0.0
        %579 = vmatpush1.msra.mxu0 0.0
        %580 = vmatprep.subr.mxu0 0.0
        %581 = vmatpush1.msra.mxu0 0.0
        %582 = vmatprep.subr.mxu0 0.0
        %583 = vmatpush1.msra.mxu0 0.0
        %584 = vmatprep.subr.mxu0 0.0
        %585 = vmatpush1.msra.mxu0 0.0
        %586 = vmatprep.subr.mxu0 0.0
        %587 = vmatpush1.msra.mxu0 0.0
        %588 = vmatprep.subr.mxu0 0.0
        %589 = vmatpush1.msra.mxu0 0.0
        %590 = vmatprep.subr.mxu0 0.0
        %591 = vmatpush1.msra.mxu0 0.0
        %592 = vmatprep.mubr.f32.mxu0 0.0
        %593 = vmatmul.mubr.f32.gmra.mrb[0].mxu0 %v429
        %v594 = vpop.f32.mrb[0].mxu0
        %v595 = vadd.f32 %v425, %v594
        %v596 = vpop.f32.mrb[0].mxu0
        %597 = vmatprep.mubr.f32.mxu0 0.0
        %598 = vmatmul.mubr.f32.gmra.mrb[0].mxu0 %v432
        %v599 = vpop.f32.mrb[0].mxu0
        %v600 = vadd.f32 %v425, %v599
        %v601 = vpop.f32.mrb[0].mxu0
        %602 = vmatprep.mubr.f32.mxu0 0.0
        %603 = vmatmul.mubr.f32.gmra.mrb[0].mxu0 %v435
        %v604 = vpop.f32.mrb[0].mxu0
        %v605 = vadd.f32 %v425, %v604
        %v606 = vpop.f32.mrb[0].mxu0
        %607 = vmatprep.mubr.f32.mxu0 0.0
        %608 = vmatmul.mubr.f32.gmra.mrb[0].mxu0 %v438
        %v609 = vpop.f32.mrb[0].mxu0
        %v610 = vadd.f32 %v425, %v609
        %v611 = vpop.f32.mrb[0].mxu0
        %612 = vmatprep.mubr.f32.mxu0 0.0
        %613 = vmatmul.mubr.f32.gmra.mrb[0].mxu0 %v441
        %v614 = vpop.f32.mrb[0].mxu0
        %v615 = vadd.f32 %v425, %v614
        %v616 = vpop.f32.mrb[0].mxu0
        %617 = vmatprep.mubr.f32.mxu0 0.0
        %618 = vmatmul.mubr.f32.gmra.mrb[0].mxu0 %v444
        %v619 = vpop.f32.mrb[0].mxu0
        %v620 = vadd.f32 %v425, %v619
        %v621 = vpop.f32.mrb[0].mxu0
        %622 = vmatprep.mubr.f32.mxu0 0.0
        %623 = vmatmul.mubr.f32.gmra.mrb[0].mxu0 %v447
        %v624 = vpop.f32.mrb[0].mxu0
        %v625 = vadd.f32 %v425, %v624
        %v626 = vpop.f32.mrb[0].mxu0
        %627 = vmatprep.mubr.f32.mxu0 0.0
        %628 = vmatmul.mubr.f32.gmra.mrb[0].mxu0 %v450
        %v629 = vpop.f32.mrb[0].mxu0
        %v630 = vadd.f32 %v425, %v629
        %v631 = vpop.f32.mrb[0].mxu0
        %632 = vmatprep.mubr.f32.mxu0 0.0
        %633 = vmatmul.mubr.f32.gmra.mrb[0].mxu0 %v453
        %v634 = vpop.f32.mrb[0].mxu0
        %v635 = vadd.f32 %v425, %v634
        %v636 = vpop.f32.mrb[0].mxu0
        %637 = vmatprep.mubr.f32.mxu0 0.0
        %638 = vmatmul.mubr.f32.gmra.mrb[0].mxu0 %v456
        %v639 = vpop.f32.mrb[0].mxu0
        %v640 = vadd.f32 %v425, %v639
        %v641 = vpop.f32.mrb[0].mxu0
        %642 = vmatprep.mubr.f32.mxu0 0.0
        %643 = vmatmul.mubr.f32.gmra.mrb[0].mxu0 %v459
        %v644 = vpop.f32.mrb[0].mxu0
        %v645 = vadd.f32 %v425, %v644
        %v646 = vpop.f32.mrb[0].mxu0
        %647 = vmatprep.mubr.f32.mxu0 0.0
        %648 = vmatmul.mubr.f32.gmra.mrb[0].mxu0 %v462
        %v649 = vpop.f32.mrb[0].mxu0
        %v650 = vadd.f32 %v425, %v649
        %v651 = vpop.f32.mrb[0].mxu0
        %652 = vmatprep.mubr.f32.mxu0 0.0
        %653 = vmatmul.mubr.f32.gmra.mrb[0].mxu0 %v465
        %v654 = vpop.f32.mrb[0].mxu0
        %v655 = vadd.f32 %v425, %v654
        %v656 = vpop.f32.mrb[0].mxu0
        %657 = vmatprep.mubr.f32.mxu0 0.0
        %658 = vmatmul.mubr.f32.gmra.mrb[0].mxu0 %v468
        %v659 = vpop.f32.mrb[0].mxu0
        %v660 = vadd.f32 %v425, %v659
        %v661 = vpop.f32.mrb[0].mxu0
        %662 = vmatprep.mubr.f32.mxu0 0.0
        %663 = vmatmul.mubr.f32.gmra.mrb[0].mxu0 %v471
        %v664 = vpop.f32.mrb[0].mxu0
        %v665 = vadd.f32 %v425, %v664
        %v666 = vpop.f32.mrb[0].mxu0
        %667 = vmatprep.mubr.f32.mxu0 0.0
        %668 = vmatmul.mubr.f32.gmra.mrb[0].mxu0 %v474
        %v669 = vpop.f32.mrb[0].mxu0
        %v670 = vadd.f32 %v425, %v669
        %v671 = vpop.f32.mrb[0].mxu0
        %672 = vmatprep.mubr.f32.mxu0 0.0
        %673 = vmatmul.mubr.f32.gmra.mrb[0].mxu0 %v477
        %v674 = vpop.f32.mrb[0].mxu0
        %v675 = vadd.f32 %v425, %v674
        %v676 = vpop.f32.mrb[0].mxu0
        %677 = vmatprep.mubr.f32.mxu0 0.0
        %678 = vmatmul.mubr.f32.gmra.mrb[0].mxu0 %v480
        %v679 = vpop.f32.mrb[0].mxu0
        %v680 = vadd.f32 %v425, %v679
        %v681 = vpop.f32.mrb[0].mxu0
        %682 = vmatprep.mubr.f32.mxu0 0.0
        %683 = vmatmul.mubr.f32.gmra.mrb[0].mxu0 %v483
        %v684 = vpop.f32.mrb[0].mxu0
        %v685 = vadd.f32 %v425, %v684
        %v686 = vpop.f32.mrb[0].mxu0
        %687 = vmatprep.mubr.f32.mxu0 0.0
        %688 = vmatmul.mubr.f32.gmra.mrb[0].mxu0 %v486
        %v689 = vpop.f32.mrb[0].mxu0
        %v690 = vadd.f32 %v425, %v689
        %v691 = vpop.f32.mrb[0].mxu0
        %692 = vmatprep.mubr.f32.mxu0 0.0
        %693 = vmatmul.mubr.f32.gmra.mrb[0].mxu0 %v489
        %v694 = vpop.f32.mrb[0].mxu0
        %v695 = vadd.f32 %v425, %v694
        %v696 = vpop.f32.mrb[0].mxu0
        %697 = vmatprep.mubr.f32.mxu0 0.0
        %698 = vmatmul.mubr.f32.gmra.mrb[0].mxu0 %v492
        %v699 = vpop.f32.mrb[0].mxu0
        %v700 = vadd.f32 %v425, %v699
        %v701 = vpop.f32.mrb[0].mxu0
        %702 = vmatprep.mubr.f32.mxu0 0.0
        %703 = vmatmul.mubr.f32.gmra.mrb[0].mxu0 %v495
        %v704 = vpop.f32.mrb[0].mxu0
        %v705 = vadd.f32 %v425, %v704
        %v706 = vpop.f32.mrb[0].mxu0
        %707 = vmatprep.mubr.f32.mxu0 0.0
        %708 = vmatmul.mubr.f32.gmra.mrb[0].mxu0 %v498
        %v709 = vpop.f32.mrb[0].mxu0
        %v710 = vadd.f32 %v425, %v709
        %v711 = vpop.f32.mrb[0].mxu0
        %712 = vmatprep.mubr.f32.mxu0 0.0
        %713 = vmatmul.mubr.f32.gmra.mrb[0].mxu0 %v501
        %v714 = vpop.f32.mrb[0].mxu0
        %v715 = vadd.f32 %v425, %v714
        %v716 = vpop.f32.mrb[0].mxu0
        %717 = vmatprep.mubr.f32.mxu0 0.0
        %718 = vmatmul.mubr.f32.gmra.mrb[0].mxu0 %v504
        %v719 = vpop.f32.mrb[0].mxu0
        %v720 = vadd.f32 %v425, %v719
        %v721 = vpop.f32.mrb[0].mxu0
        %722 = vmatprep.mubr.f32.mxu0 0.0
        %723 = vmatmul.mubr.f32.gmra.mrb[0].mxu0 %v507
        %v724 = vpop.f32.mrb[0].mxu0
        %v725 = vadd.f32 %v425, %v724
        %v726 = vpop.f32.mrb[0].mxu0
        %727 = vmatprep.mubr.f32.mxu0 0.0
        %728 = vmatmul.mubr.f32.gmra.mrb[0].mxu0 %v510
        %v729 = vpop.f32.mrb[0].mxu0
        %v730 = vadd.f32 %v425, %v729
        %v731 = vpop.f32.mrb[0].mxu0
        %732 = vmatprep.mubr.f32.mxu0 0.0
        %733 = vmatmul.mubr.f32.gmra.mrb[0].mxu0 %v513
        %v734 = vpop.f32.mrb[0].mxu0
        %v735 = vadd.f32 %v425, %v734
        %v736 = vpop.f32.mrb[0].mxu0
        %737 = vmatprep.mubr.f32.mxu0 0.0
        %738 = vmatmul.mubr.f32.gmra.mrb[0].mxu0 %v516
        %v739 = vpop.f32.mrb[0].mxu0
        %v740 = vadd.f32 %v425, %v739
        %v741 = vpop.f32.mrb[0].mxu0
        %742 = vmatprep.mubr.f32.mxu0 0.0
        %743 = vmatmul.mubr.f32.gmra.mrb[0].mxu0 %v519
        %v744 = vpop.f32.mrb[0].mxu0
        %v745 = vadd.f32 %v425, %v744
        %v746 = vpop.f32.mrb[0].mxu0
        %747 = vmatprep.mubr.f32.mxu0 0.0
        %748 = vmatmul.mubr.f32.gmra.mrb[0].mxu0 %v522
        %v749 = vpop.f32.mrb[0].mxu0
        %v750 = vadd.f32 %v425, %v749
        %v751 = vpop.f32.mrb[0].mxu0
        %752 = vdwg.mxu0
        %vm753 = vcmask 261120
        %754 = vst.msk [vmem:[#allocation2] sm:$0xff] %vm753, 0.0
        %755 = vst.msk [vmem:[#allocation2 + $0x8] sm:$0xff] %vm753, 0.0
        %vm756 = vcmask 254976
        %757 = vst.msk [vmem:[#allocation2 + $0x10] sm:$0x3] %vm756, 0.0
        %758 = vst.msk [vmem:[#allocation2 + $0x18] sm:$0xff] %vm753, 0.0
        %759 = vst.msk [vmem:[#allocation2 + $0x20] sm:$0xff] %vm753, 0.0
        %760 = vst.msk [vmem:[#allocation2 + $0x28] sm:$0x3] %vm756, 0.0
        %761 = vst.msk [vmem:[#allocation2 + $0x30] sm:$0xff] %vm753, 0.0
        %762 = vst.msk [vmem:[#allocation2 + $0x38] sm:$0xff] %vm753, 0.0
        %763 = vst.msk [vmem:[#allocation2 + $0x40] sm:$0x3] %vm756, 0.0
        %764 = vst.msk [vmem:[#allocation2 + $0x48] sm:$0xff] %vm753, 0.0
        %765 = vst.msk [vmem:[#allocation2 + $0x50] sm:$0xff] %vm753, 0.0
        %766 = vst.msk [vmem:[#allocation2 + $0x58] sm:$0x3] %vm756, 0.0
        %767 = vst.msk [vmem:[#allocation2 + $0x60] sm:$0xff] %vm753, 0.0
        %768 = vst.msk [vmem:[#allocation2 + $0x68] sm:$0xff] %vm753, 0.0
        %769 = vst.msk [vmem:[#allocation2 + $0x70] sm:$0x3] %vm756, 0.0
        %770 = vst.msk [vmem:[#allocation2 + $0x78] sm:$0xff] %vm753, 0.0
        %771 = vst.msk [vmem:[#allocation2 + $0x80] sm:$0xff] %vm753, 0.0
        %772 = vst.msk [vmem:[#allocation2 + $0x88] sm:$0x3] %vm756, 0.0
        %773 = vst.msk [vmem:[#allocation2 + $0x90] sm:$0xff] %vm753, 0.0
        %774 = vst.msk [vmem:[#allocation2 + $0x98] sm:$0xff] %vm753, 0.0
        %775 = vst.msk [vmem:[#allocation2 + $0xa0] sm:$0x3] %vm756, 0.0
        %776 = vst.msk [vmem:[#allocation2 + $0xa8] sm:$0xff] %vm753, 0.0
        %777 = vst.msk [vmem:[#allocation2 + $0xb0] sm:$0xff] %vm753, 0.0
        %778 = vst.msk [vmem:[#allocation2 + $0xb8] sm:$0x3] %vm756, 0.0
        %779 = vst.msk [vmem:[#allocation2 + $0xc0] sm:$0xff] %vm753, 0.0
        %780 = vst.msk [vmem:[#allocation2 + $0xc8] sm:$0xff] %vm753, 0.0
        %781 = vst.msk [vmem:[#allocation2 + $0xd0] sm:$0x3] %vm756, 0.0
        %782 = vst.msk [vmem:[#allocation2 + $0xd8] sm:$0xff] %vm753, 0.0
        %783 = vst.msk [vmem:[#allocation2 + $0xe0] sm:$0xff] %vm753, 0.0
        %784 = vst.msk [vmem:[#allocation2 + $0xe8] sm:$0x3] %vm756, 0.0
        %785 = vst.msk [vmem:[#allocation2 + $0xf0] sm:$0xff] %vm753, 0.0
        %786 = vst.msk [vmem:[#allocation2 + $0xf8] sm:$0xff] %vm753, 0.0
        %787 = vst.msk [vmem:[#allocation2 + $0x100] sm:$0x3] %vm756, 0.0
        %788 = vst.msk [vmem:[#allocation2 + $0x108] sm:$0xff] %vm753, 0.0
        %789 = vst.msk [vmem:[#allocation2 + $0x110] sm:$0xff] %vm753, 0.0
        %790 = vst.msk [vmem:[#allocation2 + $0x118] sm:$0x3] %vm756, 0.0
        %791 = vst.msk [vmem:[#allocation2 + $0x120] sm:$0xff] %vm753, 0.0
        %792 = vst.msk [vmem:[#allocation2 + $0x128] sm:$0xff] %vm753, 0.0
        %793 = vst.msk [vmem:[#allocation2 + $0x130] sm:$0x3] %vm756, 0.0
        %794 = vst.msk [vmem:[#allocation2 + $0x138] sm:$0xff] %vm753, 0.0
        %795 = vst.msk [vmem:[#allocation2 + $0x140] sm:$0xff] %vm753, 0.0
        %796 = vst.msk [vmem:[#allocation2 + $0x148] sm:$0x3] %vm756, 0.0
        %797 = vst.msk [vmem:[#allocation2 + $0x150] sm:$0xff] %vm753, 0.0
        %798 = vst.msk [vmem:[#allocation2 + $0x158] sm:$0xff] %vm753, 0.0
        %799 = vst.msk [vmem:[#allocation2 + $0x160] sm:$0x3] %vm756, 0.0
        %800 = vst.msk [vmem:[#allocation2 + $0x168] sm:$0xff] %vm753, 0.0
        %801 = vst.msk [vmem:[#allocation2 + $0x170] sm:$0xff] %vm753, 0.0
        %802 = vst.msk [vmem:[#allocation2 + $0x178] sm:$0x3] %vm756, 0.0
        %803 = vst.msk [vmem:[#allocation2 + $0x180] sm:$0xff] %vm753, 0.0
        %804 = vst.msk [vmem:[#allocation2 + $0x188] sm:$0xff] %vm753, 0.0
        %805 = vst.msk [vmem:[#allocation2 + $0x190] sm:$0x3] %vm756, 0.0
        %806 = vst.msk [vmem:[#allocation2 + $0x198] sm:$0xff] %vm753, 0.0
        %807 = vst.msk [vmem:[#allocation2 + $0x1a0] sm:$0xff] %vm753, 0.0
        %808 = vst.msk [vmem:[#allocation2 + $0x1a8] sm:$0x3] %vm756, 0.0
        %s809 = scalar_lea.vmem [#allocation2], 24
        %810 = vst.msk [vmem:[%s809 + $0x1] sm:$0xff] %vm753, %v595
        %811 = vst.msk [vmem:[%s809 + $0x9] sm:$0xff] %vm753, %v600
        %812 = vst.msk [vmem:[%s809 + $0x19] sm:$0xff] %vm753, %v605
        %813 = vst.msk [vmem:[%s809 + $0x21] sm:$0xff] %vm753, %v610
        %814 = vst.msk [vmem:[%s809 + $0x31] sm:$0xff] %vm753, %v615
        %815 = vst.msk [vmem:[%s809 + $0x39] sm:$0xff] %vm753, %v620
        %816 = vst.msk [vmem:[%s809 + $0x49] sm:$0xff] %vm753, %v625
        %817 = vst.msk [vmem:[%s809 + $0x51] sm:$0xff] %vm753, %v630
        %818 = vst.msk [vmem:[%s809 + $0x61] sm:$0xff] %vm753, %v635
        %819 = vst.msk [vmem:[%s809 + $0x69] sm:$0xff] %vm753, %v640
        %820 = vst.msk [vmem:[%s809 + $0x79] sm:$0xff] %vm753, %v645
        %821 = vst.msk [vmem:[%s809 + $0x81] sm:$0xff] %vm753, %v650
        %822 = vst.msk [vmem:[%s809 + $0x91] sm:$0xff] %vm753, %v655
        %823 = vst.msk [vmem:[%s809 + $0x99] sm:$0xff] %vm753, %v660
        %824 = vst.msk [vmem:[%s809 + $0xa9] sm:$0xff] %vm753, %v665
        %825 = vst.msk [vmem:[%s809 + $0xb1] sm:$0xff] %vm753, %v670
        %826 = vst.msk [vmem:[%s809 + $0xc1] sm:$0xff] %vm753, %v675
        %827 = vst.msk [vmem:[%s809 + $0xc9] sm:$0xff] %vm753, %v680
        %828 = vst.msk [vmem:[%s809 + $0xd9] sm:$0xff] %vm753, %v685
        %829 = vst.msk [vmem:[%s809 + $0xe1] sm:$0xff] %vm753, %v690
        %830 = vst.msk [vmem:[%s809 + $0xf1] sm:$0xff] %vm753, %v695
        %831 = vst.msk [vmem:[%s809 + $0xf9] sm:$0xff] %vm753, %v700
        %832 = vst.msk [vmem:[%s809 + $0x109] sm:$0xff] %vm753, %v705
        %833 = vst.msk [vmem:[%s809 + $0x111] sm:$0xff] %vm753, %v710
        %834 = vst.msk [vmem:[%s809 + $0x121] sm:$0xff] %vm753, %v715
        %835 = vst.msk [vmem:[%s809 + $0x129] sm:$0xff] %vm753, %v720
        %836 = vst.msk [vmem:[%s809 + $0x139] sm:$0xff] %vm753, %v725
        %837 = vst.msk [vmem:[%s809 + $0x141] sm:$0xff] %vm753, %v730
        %838 = vst.msk [vmem:[%s809 + $0x151] sm:$0xff] %vm753, %v735
        %839 = vst.msk [vmem:[%s809 + $0x159] sm:$0xff] %vm753, %v740
        %840 = vst.msk [vmem:[%s809 + $0x169] sm:$0xff] %vm753, %v745
        %841 = vst.msk [vmem:[%s809 + $0x171] sm:$0xff] %vm753, %v750
        %v842 = vld [vmem:[#allocation2] sm:$0xff]
        %v843 = vld [vmem:[#allocation2 + $0x8] sm:$0xff]
        %v844 = vld [vmem:[#allocation2 + $0x18] sm:$0xff]
        %v845 = vld [vmem:[#allocation2 + $0x20] sm:$0xff]
        %v846 = vld [vmem:[#allocation2 + $0x30] sm:$0xff]
        %v847 = vld [vmem:[#allocation2 + $0x38] sm:$0xff]
        %v848 = vld [vmem:[#allocation2 + $0x48] sm:$0xff]
        %v849 = vld [vmem:[#allocation2 + $0x50] sm:$0xff]
        %v850 = vld [vmem:[#allocation2 + $0x60] sm:$0xff]
        %v851 = vld [vmem:[#allocation2 + $0x68] sm:$0xff]
        %v852 = vld [vmem:[#allocation2 + $0x78] sm:$0xff]
        %v853 = vld [vmem:[#allocation2 + $0x80] sm:$0xff]
        %v854 = vld [vmem:[#allocation2 + $0x90] sm:$0xff]
        %v855 = vld [vmem:[#allocation2 + $0x98] sm:$0xff]
        %v856 = vld [vmem:[#allocation2 + $0xa8] sm:$0xff]
        %v857 = vld [vmem:[#allocation2 + $0xb0] sm:$0xff]
        %v858 = vld [vmem:[#allocation2 + $0xc0] sm:$0xff]
        %v859 = vld [vmem:[#allocation2 + $0xc8] sm:$0xff]
        %v860 = vld [vmem:[#allocation2 + $0xd8] sm:$0xff]
        %v861 = vld [vmem:[#allocation2 + $0xe0] sm:$0xff]
        %v862 = vld [vmem:[#allocation2 + $0xf0] sm:$0xff]
        %v863 = vld [vmem:[#allocation2 + $0xf8] sm:$0xff]
        %v864 = vld [vmem:[#allocation2 + $0x108] sm:$0xff]
        %v865 = vld [vmem:[#allocation2 + $0x110] sm:$0xff]
        %v866 = vld [vmem:[#allocation2 + $0x120] sm:$0xff]
        %v867 = vld [vmem:[#allocation2 + $0x128] sm:$0xff]
        %v868 = vld [vmem:[#allocation2 + $0x138] sm:$0xff]
        %v869 = vld [vmem:[#allocation2 + $0x140] sm:$0xff]
        %v870 = vld [vmem:[#allocation2 + $0x150] sm:$0xff]
        %v871 = vld [vmem:[#allocation2 + $0x158] sm:$0xff]
        %v872 = vld [vmem:[#allocation2 + $0x168] sm:$0xff]
        %v873 = vld [vmem:[#allocation2 + $0x170] sm:$0xff]
        %v874 = vld [vmem:[%s3] sm:$0xff]
        %v875 = vld [vmem:[%s3 + $0x8] sm:$0xff]
        %v876 = vld [vmem:[%s3 + $0x10] sm:$0xff]
        %v877 = vld [vmem:[%s3 + $0x18] sm:$0xff]
        %v878 = vld [vmem:[#allocation2 + $0x1] sm:$0xff]
        %v879 = vld [vmem:[#allocation2 + $0x9] sm:$0xff]
        %v880 = vld [vmem:[#allocation2 + $0x19] sm:$0xff]
        %v881 = vld [vmem:[#allocation2 + $0x21] sm:$0xff]
        %v882 = vld [vmem:[#allocation2 + $0x31] sm:$0xff]
        %v883 = vld [vmem:[#allocation2 + $0x39] sm:$0xff]
        %v884 = vld [vmem:[#allocation2 + $0x49] sm:$0xff]
        %v885 = vld [vmem:[#allocation2 + $0x51] sm:$0xff]
        %v886 = vld [vmem:[#allocation2 + $0x61] sm:$0xff]
        %v887 = vld [vmem:[#allocation2 + $0x69] sm:$0xff]
        %v888 = vld [vmem:[#allocation2 + $0x79] sm:$0xff]
        %v889 = vld [vmem:[#allocation2 + $0x81] sm:$0xff]
        %v890 = vld [vmem:[#allocation2 + $0x91] sm:$0xff]
        %v891 = vld [vmem:[#allocation2 + $0x99] sm:$0xff]
        %v892 = vld [vmem:[#allocation2 + $0xa9] sm:$0xff]
        %v893 = vld [vmem:[#allocation2 + $0xb1] sm:$0xff]
        %v894 = vld [vmem:[#allocation2 + $0xc1] sm:$0xff]
        %v895 = vld [vmem:[#allocation2 + $0xc9] sm:$0xff]
        %v896 = vld [vmem:[#allocation2 + $0xd9] sm:$0xff]
        %v897 = vld [vmem:[#allocation2 + $0xe1] sm:$0xff]
        %v898 = vld [vmem:[#allocation2 + $0xf1] sm:$0xff]
        %v899 = vld [vmem:[#allocation2 + $0xf9] sm:$0xff]
        %v900 = vld [vmem:[#allocation2 + $0x109] sm:$0xff]
        %v901 = vld [vmem:[#allocation2 + $0x111] sm:$0xff]
        %v902 = vld [vmem:[#allocation2 + $0x121] sm:$0xff]
        %v903 = vld [vmem:[#allocation2 + $0x129] sm:$0xff]
        %v904 = vld [vmem:[#allocation2 + $0x139] sm:$0xff]
        %v905 = vld [vmem:[#allocation2 + $0x141] sm:$0xff]
        %v906 = vld [vmem:[#allocation2 + $0x151] sm:$0xff]
        %v907 = vld [vmem:[#allocation2 + $0x159] sm:$0xff]
        %v908 = vld [vmem:[#allocation2 + $0x169] sm:$0xff]
        %v909 = vld [vmem:[#allocation2 + $0x171] sm:$0xff]
        %s910 = scalar_lea.vmem %s3, 32
        %v911 = vld [vmem:[%s910] sm:$0xff]
        %v912 = vld [vmem:[%s910 + $0x8] sm:$0xff]
        %v913 = vld [vmem:[%s910 + $0x10] sm:$0xff]
        %v914 = vld [vmem:[%s910 + $0x18] sm:$0xff]
        %v916 = vsel %vm753, %v878, 0
        %v919 = vsel %vm753, %v879, 0
        %v922 = vsel %vm753, %v880, 0
        %v925 = vsel %vm753, %v881, 0
        %v928 = vsel %vm753, %v882, 0
        %v931 = vsel %vm753, %v883, 0
        %v934 = vsel %vm753, %v884, 0
        %v937 = vsel %vm753, %v885, 0
        %v940 = vsel %vm753, %v886, 0
        %v943 = vsel %vm753, %v887, 0
        %v946 = vsel %vm753, %v888, 0
        %v949 = vsel %vm753, %v889, 0
        %v952 = vsel %vm753, %v890, 0
        %v955 = vsel %vm753, %v891, 0
        %v958 = vsel %vm753, %v892, 0
        %v961 = vsel %vm753, %v893, 0
        %v964 = vsel %vm753, %v894, 0
        %v967 = vsel %vm753, %v895, 0
        %v970 = vsel %vm753, %v896, 0
        %v973 = vsel %vm753, %v897, 0
        %v976 = vsel %vm753, %v898, 0
        %v979 = vsel %vm753, %v899, 0
        %v982 = vsel %vm753, %v900, 0
        %v985 = vsel %vm753, %v901, 0
        %v988 = vsel %vm753, %v902, 0
        %v991 = vsel %vm753, %v903, 0
        %v994 = vsel %vm753, %v904, 0
        %v997 = vsel %vm753, %v905, 0
        %v1000 = vsel %vm753, %v906, 0
        %v1003 = vsel %vm753, %v907, 0
        %v1006 = vsel %vm753, %v908, 0
        %v1009 = vsel %vm753, %v909, 0
        %1011 = vmatprep.subr.mxu0 0.0
        %1012 = vmatpush1.msra.mxu0 %v911
        %1013 = vmatprep.subr.mxu0 0.0
        %1014 = vmatpush1.msra.mxu0 %v912
        %1015 = vmatprep.subr.mxu0 0.0
        %1016 = vmatpush1.msra.mxu0 %v913
        %1017 = vmatprep.subr.mxu0 0.0
        %1018 = vmatpush1.msra.mxu0 %v914
        %1019 = vmatprep.subr.mxu0 0.0
        %1020 = vmatpush1.msra.mxu0 0.0
        %1021 = vmatprep.subr.mxu0 0.0
        %1022 = vmatpush1.msra.mxu0 0.0
        %1023 = vmatprep.subr.mxu0 0.0
        %1024 = vmatpush1.msra.mxu0 0.0
        %1025 = vmatprep.subr.mxu0 0.0
        %1026 = vmatpush1.msra.mxu0 0.0
        %1027 = vmatprep.subr.mxu0 0.0
        %1028 = vmatpush1.msra.mxu0 0.0
        %1029 = vmatprep.subr.mxu0 0.0
        %1030 = vmatpush1.msra.mxu0 0.0
        %1031 = vmatprep.subr.mxu0 0.0
        %1032 = vmatpush1.msra.mxu0 0.0
        %1033 = vmatprep.subr.mxu0 0.0
        %1034 = vmatpush1.msra.mxu0 0.0
        %1035 = vmatprep.subr.mxu0 0.0
        %1036 = vmatpush1.msra.mxu0 0.0
        %1037 = vmatprep.subr.mxu0 0.0
        %1038 = vmatpush1.msra.mxu0 0.0
        %1039 = vmatprep.subr.mxu0 0.0
        %1040 = vmatpush1.msra.mxu0 0.0
        %1041 = vmatprep.subr.mxu0 0.0
        %1042 = vmatpush1.msra.mxu0 0.0
        %1043 = vmatprep.subr.mxu0 0.0
        %1044 = vmatpush1.msra.mxu0 0.0
        %1045 = vmatprep.subr.mxu0 0.0
        %1046 = vmatpush1.msra.mxu0 0.0
        %1047 = vmatprep.subr.mxu0 0.0
        %1048 = vmatpush1.msra.mxu0 0.0
        %1049 = vmatprep.subr.mxu0 0.0
        %1050 = vmatpush1.msra.mxu0 0.0
        %1051 = vmatprep.subr.mxu0 0.0
        %1052 = vmatpush1.msra.mxu0 0.0
        %1053 = vmatprep.subr.mxu0 0.0
        %1054 = vmatpush1.msra.mxu0 0.0
        %1055 = vmatprep.subr.mxu0 0.0
        %1056 = vmatpush1.msra.mxu0 0.0
        %1057 = vmatprep.subr.mxu0 0.0
        %1058 = vmatpush1.msra.mxu0 0.0
        %1059 = vmatprep.subr.mxu0 0.0
        %1060 = vmatpush1.msra.mxu0 0.0
        %1061 = vmatprep.subr.mxu0 0.0
        %1062 = vmatpush1.msra.mxu0 0.0
        %1063 = vmatprep.subr.mxu0 0.0
        %1064 = vmatpush1.msra.mxu0 0.0
        %1065 = vmatprep.subr.mxu0 0.0
        %1066 = vmatpush1.msra.mxu0 0.0
        %1067 = vmatprep.subr.mxu0 0.0
        %1068 = vmatpush1.msra.mxu0 0.0
        %1069 = vmatprep.subr.mxu0 0.0
        %1070 = vmatpush1.msra.mxu0 0.0
        %1071 = vmatprep.subr.mxu0 0.0
        %1072 = vmatpush1.msra.mxu0 0.0
        %1073 = vmatprep.subr.mxu0 0.0
        %1074 = vmatpush1.msra.mxu0 0.0
        %1075 = vmatprep.mubr.f32.mxu0 0.0
        %1076 = vmatmul.mubr.f32.gmra.mrb[0].mxu0 %v916
        %v1077 = vpop.f32.mrb[0].mxu0
        %v1078 = vadd.f32 0.0, %v1077
        %v1079 = vpop.f32.mrb[0].mxu0
        %1080 = vmatprep.mubr.f32.mxu0 0.0
        %1081 = vmatmul.mubr.f32.gmra.mrb[0].mxu0 %v919
        %v1082 = vpop.f32.mrb[0].mxu0
        %v1083 = vadd.f32 0.0, %v1082
        %v1084 = vpop.f32.mrb[0].mxu0
        %1085 = vmatprep.mubr.f32.mxu0 0.0
        %1086 = vmatmul.mubr.f32.gmra.mrb[0].mxu0 %v922
        %v1087 = vpop.f32.mrb[0].mxu0
        %v1088 = vadd.f32 0.0, %v1087
        %v1089 = vpop.f32.mrb[0].mxu0
        %1090 = vmatprep.mubr.f32.mxu0 0.0
        %1091 = vmatmul.mubr.f32.gmra.mrb[0].mxu0 %v925
        %v1092 = vpop.f32.mrb[0].mxu0
        %v1093 = vadd.f32 0.0, %v1092
        %v1094 = vpop.f32.mrb[0].mxu0
        %1095 = vmatprep.mubr.f32.mxu0 0.0
        %1096 = vmatmul.mubr.f32.gmra.mrb[0].mxu0 %v928
        %v1097 = vpop.f32.mrb[0].mxu0
        %v1098 = vadd.f32 0.0, %v1097
        %v1099 = vpop.f32.mrb[0].mxu0
        %1100 = vmatprep.mubr.f32.mxu0 0.0
        %1101 = vmatmul.mubr.f32.gmra.mrb[0].mxu0 %v931
        %v1102 = vpop.f32.mrb[0].mxu0
        %v1103 = vadd.f32 0.0, %v1102
        %v1104 = vpop.f32.mrb[0].mxu0
        %1105 = vmatprep.mubr.f32.mxu0 0.0
        %1106 = vmatmul.mubr.f32.gmra.mrb[0].mxu0 %v934
        %v1107 = vpop.f32.mrb[0].mxu0
        %v1108 = vadd.f32 0.0, %v1107
        %v1109 = vpop.f32.mrb[0].mxu0
        %1110 = vmatprep.mubr.f32.mxu0 0.0
        %1111 = vmatmul.mubr.f32.gmra.mrb[0].mxu0 %v937
        %v1112 = vpop.f32.mrb[0].mxu0
        %v1113 = vadd.f32 0.0, %v1112
        %v1114 = vpop.f32.mrb[0].mxu0
        %1115 = vmatprep.mubr.f32.mxu0 0.0
        %1116 = vmatmul.mubr.f32.gmra.mrb[0].mxu0 %v940
        %v1117 = vpop.f32.mrb[0].mxu0
        %v1118 = vadd.f32 0.0, %v1117
        %v1119 = vpop.f32.mrb[0].mxu0
        %1120 = vmatprep.mubr.f32.mxu0 0.0
        %1121 = vmatmul.mubr.f32.gmra.mrb[0].mxu0 %v943
        %v1122 = vpop.f32.mrb[0].mxu0
        %v1123 = vadd.f32 0.0, %v1122
        %v1124 = vpop.f32.mrb[0].mxu0
        %1125 = vmatprep.mubr.f32.mxu0 0.0
        %1126 = vmatmul.mubr.f32.gmra.mrb[0].mxu0 %v946
        %v1127 = vpop.f32.mrb[0].mxu0
        %v1128 = vadd.f32 0.0, %v1127
        %v1129 = vpop.f32.mrb[0].mxu0
        %1130 = vmatprep.mubr.f32.mxu0 0.0
        %1131 = vmatmul.mubr.f32.gmra.mrb[0].mxu0 %v949
        %v1132 = vpop.f32.mrb[0].mxu0
        %v1133 = vadd.f32 0.0, %v1132
        %v1134 = vpop.f32.mrb[0].mxu0
        %1135 = vmatprep.mubr.f32.mxu0 0.0
        %1136 = vmatmul.mubr.f32.gmra.mrb[0].mxu0 %v952
        %v1137 = vpop.f32.mrb[0].mxu0
        %v1138 = vadd.f32 0.0, %v1137
        %v1139 = vpop.f32.mrb[0].mxu0
        %1140 = vmatprep.mubr.f32.mxu0 0.0
        %1141 = vmatmul.mubr.f32.gmra.mrb[0].mxu0 %v955
        %v1142 = vpop.f32.mrb[0].mxu0
        %v1143 = vadd.f32 0.0, %v1142
        %v1144 = vpop.f32.mrb[0].mxu0
        %1145 = vmatprep.mubr.f32.mxu0 0.0
        %1146 = vmatmul.mubr.f32.gmra.mrb[0].mxu0 %v958
        %v1147 = vpop.f32.mrb[0].mxu0
        %v1148 = vadd.f32 0.0, %v1147
        %v1149 = vpop.f32.mrb[0].mxu0
        %1150 = vmatprep.mubr.f32.mxu0 0.0
        %1151 = vmatmul.mubr.f32.gmra.mrb[0].mxu0 %v961
        %v1152 = vpop.f32.mrb[0].mxu0
        %v1153 = vadd.f32 0.0, %v1152
        %v1154 = vpop.f32.mrb[0].mxu0
        %1155 = vmatprep.mubr.f32.mxu0 0.0
        %1156 = vmatmul.mubr.f32.gmra.mrb[0].mxu0 %v964
        %v1157 = vpop.f32.mrb[0].mxu0
        %v1158 = vadd.f32 0.0, %v1157
        %v1159 = vpop.f32.mrb[0].mxu0
        %1160 = vmatprep.mubr.f32.mxu0 0.0
        %1161 = vmatmul.mubr.f32.gmra.mrb[0].mxu0 %v967
        %v1162 = vpop.f32.mrb[0].mxu0
        %v1163 = vadd.f32 0.0, %v1162
        %v1164 = vpop.f32.mrb[0].mxu0
        %1165 = vmatprep.mubr.f32.mxu0 0.0
        %1166 = vmatmul.mubr.f32.gmra.mrb[0].mxu0 %v970
        %v1167 = vpop.f32.mrb[0].mxu0
        %v1168 = vadd.f32 0.0, %v1167
        %v1169 = vpop.f32.mrb[0].mxu0
        %1170 = vmatprep.mubr.f32.mxu0 0.0
        %1171 = vmatmul.mubr.f32.gmra.mrb[0].mxu0 %v973
        %v1172 = vpop.f32.mrb[0].mxu0
        %v1173 = vadd.f32 0.0, %v1172
        %v1174 = vpop.f32.mrb[0].mxu0
        %1175 = vmatprep.mubr.f32.mxu0 0.0
        %1176 = vmatmul.mubr.f32.gmra.mrb[0].mxu0 %v976
        %v1177 = vpop.f32.mrb[0].mxu0
        %v1178 = vadd.f32 0.0, %v1177
        %v1179 = vpop.f32.mrb[0].mxu0
        %1180 = vmatprep.mubr.f32.mxu0 0.0
        %1181 = vmatmul.mubr.f32.gmra.mrb[0].mxu0 %v979
        %v1182 = vpop.f32.mrb[0].mxu0
        %v1183 = vadd.f32 0.0, %v1182
        %v1184 = vpop.f32.mrb[0].mxu0
        %1185 = vmatprep.mubr.f32.mxu0 0.0
        %1186 = vmatmul.mubr.f32.gmra.mrb[0].mxu0 %v982
        %v1187 = vpop.f32.mrb[0].mxu0
        %v1188 = vadd.f32 0.0, %v1187
        %v1189 = vpop.f32.mrb[0].mxu0
        %1190 = vmatprep.mubr.f32.mxu0 0.0
        %1191 = vmatmul.mubr.f32.gmra.mrb[0].mxu0 %v985
        %v1192 = vpop.f32.mrb[0].mxu0
        %v1193 = vadd.f32 0.0, %v1192
        %v1194 = vpop.f32.mrb[0].mxu0
        %1195 = vmatprep.mubr.f32.mxu0 0.0
        %1196 = vmatmul.mubr.f32.gmra.mrb[0].mxu0 %v988
        %v1197 = vpop.f32.mrb[0].mxu0
        %v1198 = vadd.f32 0.0, %v1197
        %v1199 = vpop.f32.mrb[0].mxu0
        %1200 = vmatprep.mubr.f32.mxu0 0.0
        %1201 = vmatmul.mubr.f32.gmra.mrb[0].mxu0 %v991
        %v1202 = vpop.f32.mrb[0].mxu0
        %v1203 = vadd.f32 0.0, %v1202
        %v1204 = vpop.f32.mrb[0].mxu0
        %1205 = vmatprep.mubr.f32.mxu0 0.0
        %1206 = vmatmul.mubr.f32.gmra.mrb[0].mxu0 %v994
        %v1207 = vpop.f32.mrb[0].mxu0
        %v1208 = vadd.f32 0.0, %v1207
        %v1209 = vpop.f32.mrb[0].mxu0
        %1210 = vmatprep.mubr.f32.mxu0 0.0
        %1211 = vmatmul.mubr.f32.gmra.mrb[0].mxu0 %v997
        %v1212 = vpop.f32.mrb[0].mxu0
        %v1213 = vadd.f32 0.0, %v1212
        %v1214 = vpop.f32.mrb[0].mxu0
        %1215 = vmatprep.mubr.f32.mxu0 0.0
        %1216 = vmatmul.mubr.f32.gmra.mrb[0].mxu0 %v1000
        %v1217 = vpop.f32.mrb[0].mxu0
        %v1218 = vadd.f32 0.0, %v1217
        %v1219 = vpop.f32.mrb[0].mxu0
        %1220 = vmatprep.mubr.f32.mxu0 0.0
        %1221 = vmatmul.mubr.f32.gmra.mrb[0].mxu0 %v1003
        %v1222 = vpop.f32.mrb[0].mxu0
        %v1223 = vadd.f32 0.0, %v1222
        %v1224 = vpop.f32.mrb[0].mxu0
        %1225 = vmatprep.mubr.f32.mxu0 0.0
        %1226 = vmatmul.mubr.f32.gmra.mrb[0].mxu0 %v1006
        %v1227 = vpop.f32.mrb[0].mxu0
        %v1228 = vadd.f32 0.0, %v1227
        %v1229 = vpop.f32.mrb[0].mxu0
        %1230 = vmatprep.mubr.f32.mxu0 0.0
        %1231 = vmatmul.mubr.f32.gmra.mrb[0].mxu0 %v1009
        %v1232 = vpop.f32.mrb[0].mxu0
        %v1233 = vadd.f32 0.0, %v1232
        %v1234 = vpop.f32.mrb[0].mxu0
        %1235 = vdwg.mxu0
        %v1237 = vsel %vm753, %v842, 0
        %v1240 = vsel %vm753, %v843, 0
        %v1243 = vsel %vm753, %v844, 0
        %v1246 = vsel %vm753, %v845, 0
        %v1249 = vsel %vm753, %v846, 0
        %v1252 = vsel %vm753, %v847, 0
        %v1255 = vsel %vm753, %v848, 0
        %v1258 = vsel %vm753, %v849, 0
        %v1261 = vsel %vm753, %v850, 0
        %v1264 = vsel %vm753, %v851, 0
        %v1267 = vsel %vm753, %v852, 0
        %v1270 = vsel %vm753, %v853, 0
        %v1273 = vsel %vm753, %v854, 0
        %v1276 = vsel %vm753, %v855, 0
        %v1279 = vsel %vm753, %v856, 0
        %v1282 = vsel %vm753, %v857, 0
        %v1285 = vsel %vm753, %v858, 0
        %v1288 = vsel %vm753, %v859, 0
        %v1291 = vsel %vm753, %v860, 0
        %v1294 = vsel %vm753, %v861, 0
        %v1297 = vsel %vm753, %v862, 0
        %v1300 = vsel %vm753, %v863, 0
        %v1303 = vsel %vm753, %v864, 0
        %v1306 = vsel %vm753, %v865, 0
        %v1309 = vsel %vm753, %v866, 0
        %v1312 = vsel %vm753, %v867, 0
        %v1315 = vsel %vm753, %v868, 0
        %v1318 = vsel %vm753, %v869, 0
        %v1321 = vsel %vm753, %v870, 0
        %v1324 = vsel %vm753, %v871, 0
        %v1327 = vsel %vm753, %v872, 0
        %v1330 = vsel %vm753, %v873, 0
        %1332 = vmatprep.subr.mxu0 0.0
        %1333 = vmatpush1.msra.mxu0 %v874
        %1334 = vmatprep.subr.mxu0 0.0
        %1335 = vmatpush1.msra.mxu0 %v875
        %1336 = vmatprep.subr.mxu0 0.0
        %1337 = vmatpush1.msra.mxu0 %v876
        %1338 = vmatprep.subr.mxu0 0.0
        %1339 = vmatpush1.msra.mxu0 %v877
        %1340 = vmatprep.subr.mxu0 0.0
        %1341 = vmatpush1.msra.mxu0 0.0
        %1342 = vmatprep.subr.mxu0 0.0
        %1343 = vmatpush1.msra.mxu0 0.0
        %1344 = vmatprep.subr.mxu0 0.0
        %1345 = vmatpush1.msra.mxu0 0.0
        %1346 = vmatprep.subr.mxu0 0.0
        %1347 = vmatpush1.msra.mxu0 0.0
        %1348 = vmatprep.subr.mxu0 0.0
        %1349 = vmatpush1.msra.mxu0 0.0
        %1350 = vmatprep.subr.mxu0 0.0
        %1351 = vmatpush1.msra.mxu0 0.0
        %1352 = vmatprep.subr.mxu0 0.0
        %1353 = vmatpush1.msra.mxu0 0.0
        %1354 = vmatprep.subr.mxu0 0.0
        %1355 = vmatpush1.msra.mxu0 0.0
        %1356 = vmatprep.subr.mxu0 0.0
        %1357 = vmatpush1.msra.mxu0 0.0
        %1358 = vmatprep.subr.mxu0 0.0
        %1359 = vmatpush1.msra.mxu0 0.0
        %1360 = vmatprep.subr.mxu0 0.0
        %1361 = vmatpush1.msra.mxu0 0.0
        %1362 = vmatprep.subr.mxu0 0.0
        %1363 = vmatpush1.msra.mxu0 0.0
        %1364 = vmatprep.subr.mxu0 0.0
        %1365 = vmatpush1.msra.mxu0 0.0
        %1366 = vmatprep.subr.mxu0 0.0
        %1367 = vmatpush1.msra.mxu0 0.0
        %1368 = vmatprep.subr.mxu0 0.0
        %1369 = vmatpush1.msra.mxu0 0.0
        %1370 = vmatprep.subr.mxu0 0.0
        %1371 = vmatpush1.msra.mxu0 0.0
        %1372 = vmatprep.subr.mxu0 0.0
        %1373 = vmatpush1.msra.mxu0 0.0
        %1374 = vmatprep.subr.mxu0 0.0
        %1375 = vmatpush1.msra.mxu0 0.0
        %1376 = vmatprep.subr.mxu0 0.0
        %1377 = vmatpush1.msra.mxu0 0.0
        %1378 = vmatprep.subr.mxu0 0.0
        %1379 = vmatpush1.msra.mxu0 0.0
        %1380 = vmatprep.subr.mxu0 0.0
        %1381 = vmatpush1.msra.mxu0 0.0
        %1382 = vmatprep.subr.mxu0 0.0
        %1383 = vmatpush1.msra.mxu0 0.0
        %1384 = vmatprep.subr.mxu0 0.0
        %1385 = vmatpush1.msra.mxu0 0.0
        %1386 = vmatprep.subr.mxu0 0.0
        %1387 = vmatpush1.msra.mxu0 0.0
        %1388 = vmatprep.subr.mxu0 0.0
        %1389 = vmatpush1.msra.mxu0 0.0
        %1390 = vmatprep.subr.mxu0 0.0
        %1391 = vmatpush1.msra.mxu0 0.0
        %1392 = vmatprep.subr.mxu0 0.0
        %1393 = vmatpush1.msra.mxu0 0.0
        %1394 = vmatprep.subr.mxu0 0.0
        %1395 = vmatpush1.msra.mxu0 0.0
        %1396 = vmatprep.mubr.f32.mxu0 0.0
        %1397 = vmatmul.mubr.f32.gmra.mrb[0].mxu0 %v1237
        %v1398 = vpop.f32.mrb[0].mxu0
        %v1399 = vadd.f32 %v1078, %v1398
        %v1400 = vpop.f32.mrb[0].mxu0
        %1401 = vmatprep.mubr.f32.mxu0 0.0
        %1402 = vmatmul.mubr.f32.gmra.mrb[0].mxu0 %v1240
        %v1403 = vpop.f32.mrb[0].mxu0
        %v1404 = vadd.f32 %v1083, %v1403
        %v1405 = vpop.f32.mrb[0].mxu0
        %1406 = vmatprep.mubr.f32.mxu0 0.0
        %1407 = vmatmul.mubr.f32.gmra.mrb[0].mxu0 %v1243
        %v1408 = vpop.f32.mrb[0].mxu0
        %v1409 = vadd.f32 %v1088, %v1408
        %v1410 = vpop.f32.mrb[0].mxu0
        %1411 = vmatprep.mubr.f32.mxu0 0.0
        %1412 = vmatmul.mubr.f32.gmra.mrb[0].mxu0 %v1246
        %v1413 = vpop.f32.mrb[0].mxu0
        %v1414 = vadd.f32 %v1093, %v1413
        %v1415 = vpop.f32.mrb[0].mxu0
        %1416 = vmatprep.mubr.f32.mxu0 0.0
        %1417 = vmatmul.mubr.f32.gmra.mrb[0].mxu0 %v1249
        %v1418 = vpop.f32.mrb[0].mxu0
        %v1419 = vadd.f32 %v1098, %v1418
        %v1420 = vpop.f32.mrb[0].mxu0
        %1421 = vmatprep.mubr.f32.mxu0 0.0
        %1422 = vmatmul.mubr.f32.gmra.mrb[0].mxu0 %v1252
        %v1423 = vpop.f32.mrb[0].mxu0
        %v1424 = vadd.f32 %v1103, %v1423
        %v1425 = vpop.f32.mrb[0].mxu0
        %1426 = vmatprep.mubr.f32.mxu0 0.0
        %1427 = vmatmul.mubr.f32.gmra.mrb[0].mxu0 %v1255
        %v1428 = vpop.f32.mrb[0].mxu0
        %v1429 = vadd.f32 %v1108, %v1428
        %v1430 = vpop.f32.mrb[0].mxu0
        %1431 = vmatprep.mubr.f32.mxu0 0.0
        %1432 = vmatmul.mubr.f32.gmra.mrb[0].mxu0 %v1258
        %v1433 = vpop.f32.mrb[0].mxu0
        %v1434 = vadd.f32 %v1113, %v1433
        %v1435 = vpop.f32.mrb[0].mxu0
        %1436 = vmatprep.mubr.f32.mxu0 0.0
        %1437 = vmatmul.mubr.f32.gmra.mrb[0].mxu0 %v1261
        %v1438 = vpop.f32.mrb[0].mxu0
        %v1439 = vadd.f32 %v1118, %v1438
        %v1440 = vpop.f32.mrb[0].mxu0
        %1441 = vmatprep.mubr.f32.mxu0 0.0
        %1442 = vmatmul.mubr.f32.gmra.mrb[0].mxu0 %v1264
        %v1443 = vpop.f32.mrb[0].mxu0
        %v1444 = vadd.f32 %v1123, %v1443
        %v1445 = vpop.f32.mrb[0].mxu0
        %1446 = vmatprep.mubr.f32.mxu0 0.0
        %1447 = vmatmul.mubr.f32.gmra.mrb[0].mxu0 %v1267
        %v1448 = vpop.f32.mrb[0].mxu0
        %v1449 = vadd.f32 %v1128, %v1448
        %v1450 = vpop.f32.mrb[0].mxu0
        %1451 = vmatprep.mubr.f32.mxu0 0.0
        %1452 = vmatmul.mubr.f32.gmra.mrb[0].mxu0 %v1270
        %v1453 = vpop.f32.mrb[0].mxu0
        %v1454 = vadd.f32 %v1133, %v1453
        %v1455 = vpop.f32.mrb[0].mxu0
        %1456 = vmatprep.mubr.f32.mxu0 0.0
        %1457 = vmatmul.mubr.f32.gmra.mrb[0].mxu0 %v1273
        %v1458 = vpop.f32.mrb[0].mxu0
        %v1459 = vadd.f32 %v1138, %v1458
        %v1460 = vpop.f32.mrb[0].mxu0
        %1461 = vmatprep.mubr.f32.mxu0 0.0
        %1462 = vmatmul.mubr.f32.gmra.mrb[0].mxu0 %v1276
        %v1463 = vpop.f32.mrb[0].mxu0
        %v1464 = vadd.f32 %v1143, %v1463
        %v1465 = vpop.f32.mrb[0].mxu0
        %1466 = vmatprep.mubr.f32.mxu0 0.0
        %1467 = vmatmul.mubr.f32.gmra.mrb[0].mxu0 %v1279
        %v1468 = vpop.f32.mrb[0].mxu0
        %v1469 = vadd.f32 %v1148, %v1468
        %v1470 = vpop.f32.mrb[0].mxu0
        %1471 = vmatprep.mubr.f32.mxu0 0.0
        %1472 = vmatmul.mubr.f32.gmra.mrb[0].mxu0 %v1282
        %v1473 = vpop.f32.mrb[0].mxu0
        %v1474 = vadd.f32 %v1153, %v1473
        %v1475 = vpop.f32.mrb[0].mxu0
        %1476 = vmatprep.mubr.f32.mxu0 0.0
        %1477 = vmatmul.mubr.f32.gmra.mrb[0].mxu0 %v1285
        %v1478 = vpop.f32.mrb[0].mxu0
        %v1479 = vadd.f32 %v1158, %v1478
        %v1480 = vpop.f32.mrb[0].mxu0
        %1481 = vmatprep.mubr.f32.mxu0 0.0
        %1482 = vmatmul.mubr.f32.gmra.mrb[0].mxu0 %v1288
        %v1483 = vpop.f32.mrb[0].mxu0
        %v1484 = vadd.f32 %v1163, %v1483
        %v1485 = vpop.f32.mrb[0].mxu0
        %1486 = vmatprep.mubr.f32.mxu0 0.0
        %1487 = vmatmul.mubr.f32.gmra.mrb[0].mxu0 %v1291
        %v1488 = vpop.f32.mrb[0].mxu0
        %v1489 = vadd.f32 %v1168, %v1488
        %v1490 = vpop.f32.mrb[0].mxu0
        %1491 = vmatprep.mubr.f32.mxu0 0.0
        %1492 = vmatmul.mubr.f32.gmra.mrb[0].mxu0 %v1294
        %v1493 = vpop.f32.mrb[0].mxu0
        %v1494 = vadd.f32 %v1173, %v1493
        %v1495 = vpop.f32.mrb[0].mxu0
        %1496 = vmatprep.mubr.f32.mxu0 0.0
        %1497 = vmatmul.mubr.f32.gmra.mrb[0].mxu0 %v1297
        %v1498 = vpop.f32.mrb[0].mxu0
        %v1499 = vadd.f32 %v1178, %v1498
        %v1500 = vpop.f32.mrb[0].mxu0
        %1501 = vmatprep.mubr.f32.mxu0 0.0
        %1502 = vmatmul.mubr.f32.gmra.mrb[0].mxu0 %v1300
        %v1503 = vpop.f32.mrb[0].mxu0
        %v1504 = vadd.f32 %v1183, %v1503
        %v1505 = vpop.f32.mrb[0].mxu0
        %1506 = vmatprep.mubr.f32.mxu0 0.0
        %1507 = vmatmul.mubr.f32.gmra.mrb[0].mxu0 %v1303
        %v1508 = vpop.f32.mrb[0].mxu0
        %v1509 = vadd.f32 %v1188, %v1508
        %v1510 = vpop.f32.mrb[0].mxu0
        %1511 = vmatprep.mubr.f32.mxu0 0.0
        %1512 = vmatmul.mubr.f32.gmra.mrb[0].mxu0 %v1306
        %v1513 = vpop.f32.mrb[0].mxu0
        %v1514 = vadd.f32 %v1193, %v1513
        %v1515 = vpop.f32.mrb[0].mxu0
        %1516 = vmatprep.mubr.f32.mxu0 0.0
        %1517 = vmatmul.mubr.f32.gmra.mrb[0].mxu0 %v1309
        %v1518 = vpop.f32.mrb[0].mxu0
        %v1519 = vadd.f32 %v1198, %v1518
        %v1520 = vpop.f32.mrb[0].mxu0
        %1521 = vmatprep.mubr.f32.mxu0 0.0
        %1522 = vmatmul.mubr.f32.gmra.mrb[0].mxu0 %v1312
        %v1523 = vpop.f32.mrb[0].mxu0
        %v1524 = vadd.f32 %v1203, %v1523
        %v1525 = vpop.f32.mrb[0].mxu0
        %1526 = vmatprep.mubr.f32.mxu0 0.0
        %1527 = vmatmul.mubr.f32.gmra.mrb[0].mxu0 %v1315
        %v1528 = vpop.f32.mrb[0].mxu0
        %v1529 = vadd.f32 %v1208, %v1528
        %v1530 = vpop.f32.mrb[0].mxu0
        %1531 = vmatprep.mubr.f32.mxu0 0.0
        %1532 = vmatmul.mubr.f32.gmra.mrb[0].mxu0 %v1318
        %v1533 = vpop.f32.mrb[0].mxu0
        %v1534 = vadd.f32 %v1213, %v1533
        %v1535 = vpop.f32.mrb[0].mxu0
        %1536 = vmatprep.mubr.f32.mxu0 0.0
        %1537 = vmatmul.mubr.f32.gmra.mrb[0].mxu0 %v1321
        %v1538 = vpop.f32.mrb[0].mxu0
        %v1539 = vadd.f32 %v1218, %v1538
        %v1540 = vpop.f32.mrb[0].mxu0
        %1541 = vmatprep.mubr.f32.mxu0 0.0
        %1542 = vmatmul.mubr.f32.gmra.mrb[0].mxu0 %v1324
        %v1543 = vpop.f32.mrb[0].mxu0
        %v1544 = vadd.f32 %v1223, %v1543
        %v1545 = vpop.f32.mrb[0].mxu0
        %1546 = vmatprep.mubr.f32.mxu0 0.0
        %1547 = vmatmul.mubr.f32.gmra.mrb[0].mxu0 %v1327
        %v1548 = vpop.f32.mrb[0].mxu0
        %v1549 = vadd.f32 %v1228, %v1548
        %v1550 = vpop.f32.mrb[0].mxu0
        %1551 = vmatprep.mubr.f32.mxu0 0.0
        %1552 = vmatmul.mubr.f32.gmra.mrb[0].mxu0 %v1330
        %v1553 = vpop.f32.mrb[0].mxu0
        %v1554 = vadd.f32 %v1233, %v1553
        %v1555 = vpop.f32.mrb[0].mxu0
        %1556 = vdwg.mxu0
        %v1557 = vld [vmem:[#allocation2 + $0x2] sm:$0xff]
        %v1558 = vld [vmem:[#allocation2 + $0xa] sm:$0xff]
        %v1559 = vld [vmem:[#allocation2 + $0x1a] sm:$0xff]
        %v1560 = vld [vmem:[#allocation2 + $0x22] sm:$0xff]
        %v1561 = vld [vmem:[#allocation2 + $0x32] sm:$0xff]
        %v1562 = vld [vmem:[#allocation2 + $0x3a] sm:$0xff]
        %v1563 = vld [vmem:[#allocation2 + $0x4a] sm:$0xff]
        %v1564 = vld [vmem:[#allocation2 + $0x52] sm:$0xff]
        %v1565 = vld [vmem:[#allocation2 + $0x62] sm:$0xff]
        %v1566 = vld [vmem:[#allocation2 + $0x6a] sm:$0xff]
        %v1567 = vld [vmem:[#allocation2 + $0x7a] sm:$0xff]
        %v1568 = vld [vmem:[#allocation2 + $0x82] sm:$0xff]
        %v1569 = vld [vmem:[#allocation2 + $0x92] sm:$0xff]
        %v1570 = vld [vmem:[#allocation2 + $0x9a] sm:$0xff]
        %v1571 = vld [vmem:[#allocation2 + $0xaa] sm:$0xff]
        %v1572 = vld [vmem:[#allocation2 + $0xb2] sm:$0xff]
        %v1573 = vld [vmem:[#allocation2 + $0xc2] sm:$0xff]
        %v1574 = vld [vmem:[#allocation2 + $0xca] sm:$0xff]
        %v1575 = vld [vmem:[#allocation2 + $0xda] sm:$0xff]
        %v1576 = vld [vmem:[#allocation2 + $0xe2] sm:$0xff]
        %v1577 = vld [vmem:[#allocation2 + $0xf2] sm:$0xff]
        %v1578 = vld [vmem:[#allocation2 + $0xfa] sm:$0xff]
        %v1579 = vld [vmem:[#allocation2 + $0x10a] sm:$0xff]
        %v1580 = vld [vmem:[#allocation2 + $0x112] sm:$0xff]
        %v1581 = vld [vmem:[#allocation2 + $0x122] sm:$0xff]
        %v1582 = vld [vmem:[#allocation2 + $0x12a] sm:$0xff]
        %v1583 = vld [vmem:[#allocation2 + $0x13a] sm:$0xff]
        %v1584 = vld [vmem:[#allocation2 + $0x142] sm:$0xff]
        %v1585 = vld [vmem:[#allocation2 + $0x152] sm:$0xff]
        %v1586 = vld [vmem:[#allocation2 + $0x15a] sm:$0xff]
        %v1587 = vld [vmem:[#allocation2 + $0x16a] sm:$0xff]
        %v1588 = vld [vmem:[#allocation2 + $0x172] sm:$0xff]
        %s1589 = scalar_lea.vmem %s3, 64
        %v1590 = vld [vmem:[%s1589] sm:$0xff]
        %v1591 = vld [vmem:[%s1589 + $0x8] sm:$0xff]
        %v1592 = vld [vmem:[%s1589 + $0x10] sm:$0xff]
        %v1593 = vld [vmem:[%s1589 + $0x18] sm:$0xff]
        %v1595 = vsel %vm753, %v1557, 0
        %v1598 = vsel %vm753, %v1558, 0
        %v1601 = vsel %vm753, %v1559, 0
        %v1604 = vsel %vm753, %v1560, 0
        %v1607 = vsel %vm753, %v1561, 0
        %v1610 = vsel %vm753, %v1562, 0
        %v1613 = vsel %vm753, %v1563, 0
        %v1616 = vsel %vm753, %v1564, 0
        %v1619 = vsel %vm753, %v1565, 0
        %v1622 = vsel %vm753, %v1566, 0
        %v1625 = vsel %vm753, %v1567, 0
        %v1628 = vsel %vm753, %v1568, 0
        %v1631 = vsel %vm753, %v1569, 0
        %v1634 = vsel %vm753, %v1570, 0
        %v1637 = vsel %vm753, %v1571, 0
        %v1640 = vsel %vm753, %v1572, 0
        %v1643 = vsel %vm753, %v1573, 0
        %v1646 = vsel %vm753, %v1574, 0
        %v1649 = vsel %vm753, %v1575, 0
        %v1652 = vsel %vm753, %v1576, 0
        %v1655 = vsel %vm753, %v1577, 0
        %v1658 = vsel %vm753, %v1578, 0
        %v1661 = vsel %vm753, %v1579, 0
        %v1664 = vsel %vm753, %v1580, 0
        %v1667 = vsel %vm753, %v1581, 0
        %v1670 = vsel %vm753, %v1582, 0
        %v1673 = vsel %vm753, %v1583, 0
        %v1676 = vsel %vm753, %v1584, 0
        %v1679 = vsel %vm753, %v1585, 0
        %v1682 = vsel %vm753, %v1586, 0
        %v1685 = vsel %vm753, %v1587, 0
        %v1688 = vsel %vm753, %v1588, 0
        %1690 = vmatprep.subr.mxu0 0.0
        %1691 = vmatpush1.msra.mxu0 %v1590
        %1692 = vmatprep.subr.mxu0 0.0
        %1693 = vmatpush1.msra.mxu0 %v1591
        %1694 = vmatprep.subr.mxu0 0.0
        %1695 = vmatpush1.msra.mxu0 %v1592
        %1696 = vmatprep.subr.mxu0 0.0
        %1697 = vmatpush1.msra.mxu0 %v1593
        %1698 = vmatprep.subr.mxu0 0.0
        %1699 = vmatpush1.msra.mxu0 0.0
        %1700 = vmatprep.subr.mxu0 0.0
        %1701 = vmatpush1.msra.mxu0 0.0
        %1702 = vmatprep.subr.mxu0 0.0
        %1703 = vmatpush1.msra.mxu0 0.0
        %1704 = vmatprep.subr.mxu0 0.0
        %1705 = vmatpush1.msra.mxu0 0.0
        %1706 = vmatprep.subr.mxu0 0.0
        %1707 = vmatpush1.msra.mxu0 0.0
        %1708 = vmatprep.subr.mxu0 0.0
        %1709 = vmatpush1.msra.mxu0 0.0
        %1710 = vmatprep.subr.mxu0 0.0
        %1711 = vmatpush1.msra.mxu0 0.0
        %1712 = vmatprep.subr.mxu0 0.0
        %1713 = vmatpush1.msra.mxu0 0.0
        %1714 = vmatprep.subr.mxu0 0.0
        %1715 = vmatpush1.msra.mxu0 0.0
        %1716 = vmatprep.subr.mxu0 0.0
        %1717 = vmatpush1.msra.mxu0 0.0
        %1718 = vmatprep.subr.mxu0 0.0
        %1719 = vmatpush1.msra.mxu0 0.0
        %1720 = vmatprep.subr.mxu0 0.0
        %1721 = vmatpush1.msra.mxu0 0.0
        %1722 = vmatprep.subr.mxu0 0.0
        %1723 = vmatpush1.msra.mxu0 0.0
        %1724 = vmatprep.subr.mxu0 0.0
        %1725 = vmatpush1.msra.mxu0 0.0
        %1726 = vmatprep.subr.mxu0 0.0
        %1727 = vmatpush1.msra.mxu0 0.0
        %1728 = vmatprep.subr.mxu0 0.0
        %1729 = vmatpush1.msra.mxu0 0.0
        %1730 = vmatprep.subr.mxu0 0.0
        %1731 = vmatpush1.msra.mxu0 0.0
        %1732 = vmatprep.subr.mxu0 0.0
        %1733 = vmatpush1.msra.mxu0 0.0
        %1734 = vmatprep.subr.mxu0 0.0
        %1735 = vmatpush1.msra.mxu0 0.0
        %1736 = vmatprep.subr.mxu0 0.0
        %1737 = vmatpush1.msra.mxu0 0.0
        %1738 = vmatprep.subr.mxu0 0.0
        %1739 = vmatpush1.msra.mxu0 0.0
        %1740 = vmatprep.subr.mxu0 0.0
        %1741 = vmatpush1.msra.mxu0 0.0
        %1742 = vmatprep.subr.mxu0 0.0
        %1743 = vmatpush1.msra.mxu0 0.0
        %1744 = vmatprep.subr.mxu0 0.0
        %1745 = vmatpush1.msra.mxu0 0.0
        %1746 = vmatprep.subr.mxu0 0.0
        %1747 = vmatpush1.msra.mxu0 0.0
        %1748 = vmatprep.subr.mxu0 0.0
        %1749 = vmatpush1.msra.mxu0 0.0
        %1750 = vmatprep.subr.mxu0 0.0
        %1751 = vmatpush1.msra.mxu0 0.0
        %1752 = vmatprep.subr.mxu0 0.0
        %1753 = vmatpush1.msra.mxu0 0.0
        %1754 = vmatprep.mubr.f32.mxu0 0.0
        %1755 = vmatmul.mubr.f32.gmra.mrb[0].mxu0 %v1595
        %v1756 = vpop.f32.mrb[0].mxu0
        %v1757 = vadd.f32 0.0, %v1756
        %v1758 = vpop.f32.mrb[0].mxu0
        %1759 = vmatprep.mubr.f32.mxu0 0.0
        %1760 = vmatmul.mubr.f32.gmra.mrb[0].mxu0 %v1598
        %v1761 = vpop.f32.mrb[0].mxu0
        %v1762 = vadd.f32 0.0, %v1761
        %v1763 = vpop.f32.mrb[0].mxu0
        %1764 = vmatprep.mubr.f32.mxu0 0.0
        %1765 = vmatmul.mubr.f32.gmra.mrb[0].mxu0 %v1601
        %v1766 = vpop.f32.mrb[0].mxu0
        %v1767 = vadd.f32 0.0, %v1766
        %v1768 = vpop.f32.mrb[0].mxu0
        %1769 = vmatprep.mubr.f32.mxu0 0.0
        %1770 = vmatmul.mubr.f32.gmra.mrb[0].mxu0 %v1604
        %v1771 = vpop.f32.mrb[0].mxu0
        %v1772 = vadd.f32 0.0, %v1771
        %v1773 = vpop.f32.mrb[0].mxu0
        %1774 = vmatprep.mubr.f32.mxu0 0.0
        %1775 = vmatmul.mubr.f32.gmra.mrb[0].mxu0 %v1607
        %v1776 = vpop.f32.mrb[0].mxu0
        %v1777 = vadd.f32 0.0, %v1776
        %v1778 = vpop.f32.mrb[0].mxu0
        %1779 = vmatprep.mubr.f32.mxu0 0.0
        %1780 = vmatmul.mubr.f32.gmra.mrb[0].mxu0 %v1610
        %v1781 = vpop.f32.mrb[0].mxu0
        %v1782 = vadd.f32 0.0, %v1781
        %v1783 = vpop.f32.mrb[0].mxu0
        %1784 = vmatprep.mubr.f32.mxu0 0.0
        %1785 = vmatmul.mubr.f32.gmra.mrb[0].mxu0 %v1613
        %v1786 = vpop.f32.mrb[0].mxu0
        %v1787 = vadd.f32 0.0, %v1786
        %v1788 = vpop.f32.mrb[0].mxu0
        %1789 = vmatprep.mubr.f32.mxu0 0.0
        %1790 = vmatmul.mubr.f32.gmra.mrb[0].mxu0 %v1616
        %v1791 = vpop.f32.mrb[0].mxu0
        %v1792 = vadd.f32 0.0, %v1791
        %v1793 = vpop.f32.mrb[0].mxu0
        %1794 = vmatprep.mubr.f32.mxu0 0.0
        %1795 = vmatmul.mubr.f32.gmra.mrb[0].mxu0 %v1619
        %v1796 = vpop.f32.mrb[0].mxu0
        %v1797 = vadd.f32 0.0, %v1796
        %v1798 = vpop.f32.mrb[0].mxu0
        %1799 = vmatprep.mubr.f32.mxu0 0.0
        %1800 = vmatmul.mubr.f32.gmra.mrb[0].mxu0 %v1622
        %v1801 = vpop.f32.mrb[0].mxu0
        %v1802 = vadd.f32 0.0, %v1801
        %v1803 = vpop.f32.mrb[0].mxu0
        %1804 = vmatprep.mubr.f32.mxu0 0.0
        %1805 = vmatmul.mubr.f32.gmra.mrb[0].mxu0 %v1625
        %v1806 = vpop.f32.mrb[0].mxu0
        %v1807 = vadd.f32 0.0, %v1806
        %v1808 = vpop.f32.mrb[0].mxu0
        %1809 = vmatprep.mubr.f32.mxu0 0.0
        %1810 = vmatmul.mubr.f32.gmra.mrb[0].mxu0 %v1628
        %v1811 = vpop.f32.mrb[0].mxu0
        %v1812 = vadd.f32 0.0, %v1811
        %v1813 = vpop.f32.mrb[0].mxu0
        %1814 = vmatprep.mubr.f32.mxu0 0.0
        %1815 = vmatmul.mubr.f32.gmra.mrb[0].mxu0 %v1631
        %v1816 = vpop.f32.mrb[0].mxu0
        %v1817 = vadd.f32 0.0, %v1816
        %v1818 = vpop.f32.mrb[0].mxu0
        %1819 = vmatprep.mubr.f32.mxu0 0.0
        %1820 = vmatmul.mubr.f32.gmra.mrb[0].mxu0 %v1634
        %v1821 = vpop.f32.mrb[0].mxu0
        %v1822 = vadd.f32 0.0, %v1821
        %v1823 = vpop.f32.mrb[0].mxu0
        %1824 = vmatprep.mubr.f32.mxu0 0.0
        %1825 = vmatmul.mubr.f32.gmra.mrb[0].mxu0 %v1637
        %v1826 = vpop.f32.mrb[0].mxu0
        %v1827 = vadd.f32 0.0, %v1826
        %v1828 = vpop.f32.mrb[0].mxu0
        %1829 = vmatprep.mubr.f32.mxu0 0.0
        %1830 = vmatmul.mubr.f32.gmra.mrb[0].mxu0 %v1640
        %v1831 = vpop.f32.mrb[0].mxu0
        %v1832 = vadd.f32 0.0, %v1831
        %v1833 = vpop.f32.mrb[0].mxu0
        %1834 = vmatprep.mubr.f32.mxu0 0.0
        %1835 = vmatmul.mubr.f32.gmra.mrb[0].mxu0 %v1643
        %v1836 = vpop.f32.mrb[0].mxu0
        %v1837 = vadd.f32 0.0, %v1836
        %v1838 = vpop.f32.mrb[0].mxu0
        %1839 = vmatprep.mubr.f32.mxu0 0.0
        %1840 = vmatmul.mubr.f32.gmra.mrb[0].mxu0 %v1646
        %v1841 = vpop.f32.mrb[0].mxu0
        %v1842 = vadd.f32 0.0, %v1841
        %v1843 = vpop.f32.mrb[0].mxu0
        %1844 = vmatprep.mubr.f32.mxu0 0.0
        %1845 = vmatmul.mubr.f32.gmra.mrb[0].mxu0 %v1649
        %v1846 = vpop.f32.mrb[0].mxu0
        %v1847 = vadd.f32 0.0, %v1846
        %v1848 = vpop.f32.mrb[0].mxu0
        %1849 = vmatprep.mubr.f32.mxu0 0.0
        %1850 = vmatmul.mubr.f32.gmra.mrb[0].mxu0 %v1652
        %v1851 = vpop.f32.mrb[0].mxu0
        %v1852 = vadd.f32 0.0, %v1851
        %v1853 = vpop.f32.mrb[0].mxu0
        %1854 = vmatprep.mubr.f32.mxu0 0.0
        %1855 = vmatmul.mubr.f32.gmra.mrb[0].mxu0 %v1655
        %v1856 = vpop.f32.mrb[0].mxu0
        %v1857 = vadd.f32 0.0, %v1856
        %v1858 = vpop.f32.mrb[0].mxu0
        %1859 = vmatprep.mubr.f32.mxu0 0.0
        %1860 = vmatmul.mubr.f32.gmra.mrb[0].mxu0 %v1658
        %v1861 = vpop.f32.mrb[0].mxu0
        %v1862 = vadd.f32 0.0, %v1861
        %v1863 = vpop.f32.mrb[0].mxu0
        %1864 = vmatprep.mubr.f32.mxu0 0.0
        %1865 = vmatmul.mubr.f32.gmra.mrb[0].mxu0 %v1661
        %v1866 = vpop.f32.mrb[0].mxu0
        %v1867 = vadd.f32 0.0, %v1866
        %v1868 = vpop.f32.mrb[0].mxu0
        %1869 = vmatprep.mubr.f32.mxu0 0.0
        %1870 = vmatmul.mubr.f32.gmra.mrb[0].mxu0 %v1664
        %v1871 = vpop.f32.mrb[0].mxu0
        %v1872 = vadd.f32 0.0, %v1871
        %v1873 = vpop.f32.mrb[0].mxu0
        %1874 = vmatprep.mubr.f32.mxu0 0.0
        %1875 = vmatmul.mubr.f32.gmra.mrb[0].mxu0 %v1667
        %v1876 = vpop.f32.mrb[0].mxu0
        %v1877 = vadd.f32 0.0, %v1876
        %v1878 = vpop.f32.mrb[0].mxu0
        %1879 = vmatprep.mubr.f32.mxu0 0.0
        %1880 = vmatmul.mubr.f32.gmra.mrb[0].mxu0 %v1670
        %v1881 = vpop.f32.mrb[0].mxu0
        %v1882 = vadd.f32 0.0, %v1881
        %v1883 = vpop.f32.mrb[0].mxu0
        %1884 = vmatprep.mubr.f32.mxu0 0.0
        %1885 = vmatmul.mubr.f32.gmra.mrb[0].mxu0 %v1673
        %v1886 = vpop.f32.mrb[0].mxu0
        %v1887 = vadd.f32 0.0, %v1886
        %v1888 = vpop.f32.mrb[0].mxu0
        %1889 = vmatprep.mubr.f32.mxu0 0.0
        %1890 = vmatmul.mubr.f32.gmra.mrb[0].mxu0 %v1676
        %v1891 = vpop.f32.mrb[0].mxu0
        %v1892 = vadd.f32 0.0, %v1891
        %v1893 = vpop.f32.mrb[0].mxu0
        %1894 = vmatprep.mubr.f32.mxu0 0.0
        %1895 = vmatmul.mubr.f32.gmra.mrb[0].mxu0 %v1679
        %v1896 = vpop.f32.mrb[0].mxu0
        %v1897 = vadd.f32 0.0, %v1896
        %v1898 = vpop.f32.mrb[0].mxu0
        %1899 = vmatprep.mubr.f32.mxu0 0.0
        %1900 = vmatmul.mubr.f32.gmra.mrb[0].mxu0 %v1682
        %v1901 = vpop.f32.mrb[0].mxu0
        %v1902 = vadd.f32 0.0, %v1901
        %v1903 = vpop.f32.mrb[0].mxu0
        %1904 = vmatprep.mubr.f32.mxu0 0.0
        %1905 = vmatmul.mubr.f32.gmra.mrb[0].mxu0 %v1685
        %v1906 = vpop.f32.mrb[0].mxu0
        %v1907 = vadd.f32 0.0, %v1906
        %v1908 = vpop.f32.mrb[0].mxu0
        %1909 = vmatprep.mubr.f32.mxu0 0.0
        %1910 = vmatmul.mubr.f32.gmra.mrb[0].mxu0 %v1688
        %v1911 = vpop.f32.mrb[0].mxu0
        %v1912 = vadd.f32 0.0, %v1911
        %v1913 = vpop.f32.mrb[0].mxu0
        %1914 = vdwg.mxu0
        %v1915 = vadd.f32 %v1399, %v1757
        %v1916 = vadd.f32 %v1404, %v1762
        %v1917 = vadd.f32 %v1409, %v1767
        %v1918 = vadd.f32 %v1414, %v1772
        %v1919 = vadd.f32 %v1419, %v1777
        %v1920 = vadd.f32 %v1424, %v1782
        %v1921 = vadd.f32 %v1429, %v1787
        %v1922 = vadd.f32 %v1434, %v1792
        %v1923 = vadd.f32 %v1439, %v1797
        %v1924 = vadd.f32 %v1444, %v1802
        %v1925 = vadd.f32 %v1449, %v1807
        %v1926 = vadd.f32 %v1454, %v1812
        %v1927 = vadd.f32 %v1459, %v1817
        %v1928 = vadd.f32 %v1464, %v1822
        %v1929 = vadd.f32 %v1469, %v1827
        %v1930 = vadd.f32 %v1474, %v1832
        %v1931 = vadd.f32 %v1479, %v1837
        %v1932 = vadd.f32 %v1484, %v1842
        %v1933 = vadd.f32 %v1489, %v1847
        %v1934 = vadd.f32 %v1494, %v1852
        %v1935 = vadd.f32 %v1499, %v1857
        %v1936 = vadd.f32 %v1504, %v1862
        %v1937 = vadd.f32 %v1509, %v1867
        %v1938 = vadd.f32 %v1514, %v1872
        %v1939 = vadd.f32 %v1519, %v1877
        %v1940 = vadd.f32 %v1524, %v1882
        %v1941 = vadd.f32 %v1529, %v1887
        %v1942 = vadd.f32 %v1534, %v1892
        %v1943 = vadd.f32 %v1539, %v1897
        %v1944 = vadd.f32 %v1544, %v1902
        %v1945 = vadd.f32 %v1549, %v1907
        %v1946 = vadd.f32 %v1554, %v1912
        %v1947 = vld [vmem:[%s809] sm:$0xff]
        %v1948 = vld [vmem:[%s809 + $0x8] sm:$0xff]
        %v1949 = vld [vmem:[%s809 + $0x18] sm:$0xff]
        %v1950 = vld [vmem:[%s809 + $0x20] sm:$0xff]
        %v1951 = vld [vmem:[%s809 + $0x30] sm:$0xff]
        %v1952 = vld [vmem:[%s809 + $0x38] sm:$0xff]
        %v1953 = vld [vmem:[%s809 + $0x48] sm:$0xff]
        %v1954 = vld [vmem:[%s809 + $0x50] sm:$0xff]
        %v1955 = vld [vmem:[%s809 + $0x60] sm:$0xff]
        %v1956 = vld [vmem:[%s809 + $0x68] sm:$0xff]
        %v1957 = vld [vmem:[%s809 + $0x78] sm:$0xff]
        %v1958 = vld [vmem:[%s809 + $0x80] sm:$0xff]
        %v1959 = vld [vmem:[%s809 + $0x90] sm:$0xff]
        %v1960 = vld [vmem:[%s809 + $0x98] sm:$0xff]
        %v1961 = vld [vmem:[%s809 + $0xa8] sm:$0xff]
        %v1962 = vld [vmem:[%s809 + $0xb0] sm:$0xff]
        %v1963 = vld [vmem:[%s809 + $0xc0] sm:$0xff]
        %v1964 = vld [vmem:[%s809 + $0xc8] sm:$0xff]
        %v1965 = vld [vmem:[%s809 + $0xd8] sm:$0xff]
        %v1966 = vld [vmem:[%s809 + $0xe0] sm:$0xff]
        %v1967 = vld [vmem:[%s809 + $0xf0] sm:$0xff]
        %v1968 = vld [vmem:[%s809 + $0xf8] sm:$0xff]
        %v1969 = vld [vmem:[%s809 + $0x108] sm:$0xff]
        %v1970 = vld [vmem:[%s809 + $0x110] sm:$0xff]
        %v1971 = vld [vmem:[%s809 + $0x120] sm:$0xff]
        %v1972 = vld [vmem:[%s809 + $0x128] sm:$0xff]
        %v1973 = vld [vmem:[%s809 + $0x138] sm:$0xff]
        %v1974 = vld [vmem:[%s809 + $0x140] sm:$0xff]
        %v1975 = vld [vmem:[%s809 + $0x150] sm:$0xff]
        %v1976 = vld [vmem:[%s809 + $0x158] sm:$0xff]
        %v1977 = vld [vmem:[%s809 + $0x168] sm:$0xff]
        %v1978 = vld [vmem:[%s809 + $0x170] sm:$0xff]
        %s1979 = scalar_lea.vmem %s3, 96
        %v1980 = vld [vmem:[%s1979] sm:$0xff]
        %v1981 = vld [vmem:[%s1979 + $0x8] sm:$0xff]
        %v1982 = vld [vmem:[%s1979 + $0x10] sm:$0xff]
        %v1983 = vld [vmem:[%s1979 + $0x18] sm:$0xff]
        %v1985 = vsel %vm753, %v1947, 0
        %v1988 = vsel %vm753, %v1948, 0
        %v1991 = vsel %vm753, %v1949, 0
        %v1994 = vsel %vm753, %v1950, 0
        %v1997 = vsel %vm753, %v1951, 0
        %v2000 = vsel %vm753, %v1952, 0
        %v2003 = vsel %vm753, %v1953, 0
        %v2006 = vsel %vm753, %v1954, 0
        %v2009 = vsel %vm753, %v1955, 0
        %v2012 = vsel %vm753, %v1956, 0
        %v2015 = vsel %vm753, %v1957, 0
        %v2018 = vsel %vm753, %v1958, 0
        %v2021 = vsel %vm753, %v1959, 0
        %v2024 = vsel %vm753, %v1960, 0
        %v2027 = vsel %vm753, %v1961, 0
        %v2030 = vsel %vm753, %v1962, 0
        %v2033 = vsel %vm753, %v1963, 0
        %v2036 = vsel %vm753, %v1964, 0
        %v2039 = vsel %vm753, %v1965, 0
        %v2042 = vsel %vm753, %v1966, 0
        %v2045 = vsel %vm753, %v1967, 0
        %v2048 = vsel %vm753, %v1968, 0
        %v2051 = vsel %vm753, %v1969, 0
        %v2054 = vsel %vm753, %v1970, 0
        %v2057 = vsel %vm753, %v1971, 0
        %v2060 = vsel %vm753, %v1972, 0
        %v2063 = vsel %vm753, %v1973, 0
        %v2066 = vsel %vm753, %v1974, 0
        %v2069 = vsel %vm753, %v1975, 0
        %v2072 = vsel %vm753, %v1976, 0
        %v2075 = vsel %vm753, %v1977, 0
        %v2078 = vsel %vm753, %v1978, 0
        %2080 = vmatprep.subr.mxu0 0.0
        %2081 = vmatpush1.msra.mxu0 %v1980
        %2082 = vmatprep.subr.mxu0 0.0
        %2083 = vmatpush1.msra.mxu0 %v1981
        %2084 = vmatprep.subr.mxu0 0.0
        %2085 = vmatpush1.msra.mxu0 %v1982
        %2086 = vmatprep.subr.mxu0 0.0
        %2087 = vmatpush1.msra.mxu0 %v1983
        %2088 = vmatprep.subr.mxu0 0.0
        %2089 = vmatpush1.msra.mxu0 0.0
        %2090 = vmatprep.subr.mxu0 0.0
        %2091 = vmatpush1.msra.mxu0 0.0
        %2092 = vmatprep.subr.mxu0 0.0
        %2093 = vmatpush1.msra.mxu0 0.0
        %2094 = vmatprep.subr.mxu0 0.0
        %2095 = vmatpush1.msra.mxu0 0.0
        %2096 = vmatprep.subr.mxu0 0.0
        %2097 = vmatpush1.msra.mxu0 0.0
        %2098 = vmatprep.subr.mxu0 0.0
        %2099 = vmatpush1.msra.mxu0 0.0
        %2100 = vmatprep.subr.mxu0 0.0
        %2101 = vmatpush1.msra.mxu0 0.0
        %2102 = vmatprep.subr.mxu0 0.0
        %2103 = vmatpush1.msra.mxu0 0.0
        %2104 = vmatprep.subr.mxu0 0.0
        %2105 = vmatpush1.msra.mxu0 0.0
        %2106 = vmatprep.subr.mxu0 0.0
        %2107 = vmatpush1.msra.mxu0 0.0
        %2108 = vmatprep.subr.mxu0 0.0
        %2109 = vmatpush1.msra.mxu0 0.0
        %2110 = vmatprep.subr.mxu0 0.0
        %2111 = vmatpush1.msra.mxu0 0.0
        %2112 = vmatprep.subr.mxu0 0.0
        %2113 = vmatpush1.msra.mxu0 0.0
        %2114 = vmatprep.subr.mxu0 0.0
        %2115 = vmatpush1.msra.mxu0 0.0
        %2116 = vmatprep.subr.mxu0 0.0
        %2117 = vmatpush1.msra.mxu0 0.0
        %2118 = vmatprep.subr.mxu0 0.0
        %2119 = vmatpush1.msra.mxu0 0.0
        %2120 = vmatprep.subr.mxu0 0.0
        %2121 = vmatpush1.msra.mxu0 0.0
        %2122 = vmatprep.subr.mxu0 0.0
        %2123 = vmatpush1.msra.mxu0 0.0
        %2124 = vmatprep.subr.mxu0 0.0
        %2125 = vmatpush1.msra.mxu0 0.0
        %2126 = vmatprep.subr.mxu0 0.0
        %2127 = vmatpush1.msra.mxu0 0.0
        %2128 = vmatprep.subr.mxu0 0.0
        %2129 = vmatpush1.msra.mxu0 0.0
        %2130 = vmatprep.subr.mxu0 0.0
        %2131 = vmatpush1.msra.mxu0 0.0
        %2132 = vmatprep.subr.mxu0 0.0
        %2133 = vmatpush1.msra.mxu0 0.0
        %2134 = vmatprep.subr.mxu0 0.0
        %2135 = vmatpush1.msra.mxu0 0.0
        %2136 = vmatprep.subr.mxu0 0.0
        %2137 = vmatpush1.msra.mxu0 0.0
        %2138 = vmatprep.subr.mxu0 0.0
        %2139 = vmatpush1.msra.mxu0 0.0
        %2140 = vmatprep.subr.mxu0 0.0
        %2141 = vmatpush1.msra.mxu0 0.0
        %2142 = vmatprep.subr.mxu0 0.0
        %2143 = vmatpush1.msra.mxu0 0.0
        %2144 = vmatprep.mubr.f32.mxu0 0.0
        %2145 = vmatmul.mubr.f32.gmra.mrb[0].mxu0 %v1985
        %v2146 = vpop.f32.mrb[0].mxu0
        %v2147 = vadd.f32 0.0, %v2146
        %v2148 = vpop.f32.mrb[0].mxu0
        %2149 = vmatprep.mubr.f32.mxu0 0.0
        %2150 = vmatmul.mubr.f32.gmra.mrb[0].mxu0 %v1988
        %v2151 = vpop.f32.mrb[0].mxu0
        %v2152 = vadd.f32 0.0, %v2151
        %v2153 = vpop.f32.mrb[0].mxu0
        %2154 = vmatprep.mubr.f32.mxu0 0.0
        %2155 = vmatmul.mubr.f32.gmra.mrb[0].mxu0 %v1991
        %v2156 = vpop.f32.mrb[0].mxu0
        %v2157 = vadd.f32 0.0, %v2156
        %v2158 = vpop.f32.mrb[0].mxu0
        %2159 = vmatprep.mubr.f32.mxu0 0.0
        %2160 = vmatmul.mubr.f32.gmra.mrb[0].mxu0 %v1994
        %v2161 = vpop.f32.mrb[0].mxu0
        %v2162 = vadd.f32 0.0, %v2161
        %v2163 = vpop.f32.mrb[0].mxu0
        %2164 = vmatprep.mubr.f32.mxu0 0.0
        %2165 = vmatmul.mubr.f32.gmra.mrb[0].mxu0 %v1997
        %v2166 = vpop.f32.mrb[0].mxu0
        %v2167 = vadd.f32 0.0, %v2166
        %v2168 = vpop.f32.mrb[0].mxu0
        %2169 = vmatprep.mubr.f32.mxu0 0.0
        %2170 = vmatmul.mubr.f32.gmra.mrb[0].mxu0 %v2000
        %v2171 = vpop.f32.mrb[0].mxu0
        %v2172 = vadd.f32 0.0, %v2171
        %v2173 = vpop.f32.mrb[0].mxu0
        %2174 = vmatprep.mubr.f32.mxu0 0.0
        %2175 = vmatmul.mubr.f32.gmra.mrb[0].mxu0 %v2003
        %v2176 = vpop.f32.mrb[0].mxu0
        %v2177 = vadd.f32 0.0, %v2176
        %v2178 = vpop.f32.mrb[0].mxu0
        %2179 = vmatprep.mubr.f32.mxu0 0.0
        %2180 = vmatmul.mubr.f32.gmra.mrb[0].mxu0 %v2006
        %v2181 = vpop.f32.mrb[0].mxu0
        %v2182 = vadd.f32 0.0, %v2181
        %v2183 = vpop.f32.mrb[0].mxu0
        %2184 = vmatprep.mubr.f32.mxu0 0.0
        %2185 = vmatmul.mubr.f32.gmra.mrb[0].mxu0 %v2009
        %v2186 = vpop.f32.mrb[0].mxu0
        %v2187 = vadd.f32 0.0, %v2186
        %v2188 = vpop.f32.mrb[0].mxu0
        %2189 = vmatprep.mubr.f32.mxu0 0.0
        %2190 = vmatmul.mubr.f32.gmra.mrb[0].mxu0 %v2012
        %v2191 = vpop.f32.mrb[0].mxu0
        %v2192 = vadd.f32 0.0, %v2191
        %v2193 = vpop.f32.mrb[0].mxu0
        %2194 = vmatprep.mubr.f32.mxu0 0.0
        %2195 = vmatmul.mubr.f32.gmra.mrb[0].mxu0 %v2015
        %v2196 = vpop.f32.mrb[0].mxu0
        %v2197 = vadd.f32 0.0, %v2196
        %v2198 = vpop.f32.mrb[0].mxu0
        %2199 = vmatprep.mubr.f32.mxu0 0.0
        %2200 = vmatmul.mubr.f32.gmra.mrb[0].mxu0 %v2018
        %v2201 = vpop.f32.mrb[0].mxu0
        %v2202 = vadd.f32 0.0, %v2201
        %v2203 = vpop.f32.mrb[0].mxu0
        %2204 = vmatprep.mubr.f32.mxu0 0.0
        %2205 = vmatmul.mubr.f32.gmra.mrb[0].mxu0 %v2021
        %v2206 = vpop.f32.mrb[0].mxu0
        %v2207 = vadd.f32 0.0, %v2206
        %v2208 = vpop.f32.mrb[0].mxu0
        %2209 = vmatprep.mubr.f32.mxu0 0.0
        %2210 = vmatmul.mubr.f32.gmra.mrb[0].mxu0 %v2024
        %v2211 = vpop.f32.mrb[0].mxu0
        %v2212 = vadd.f32 0.0, %v2211
        %v2213 = vpop.f32.mrb[0].mxu0
        %2214 = vmatprep.mubr.f32.mxu0 0.0
        %2215 = vmatmul.mubr.f32.gmra.mrb[0].mxu0 %v2027
        %v2216 = vpop.f32.mrb[0].mxu0
        %v2217 = vadd.f32 0.0, %v2216
        %v2218 = vpop.f32.mrb[0].mxu0
        %2219 = vmatprep.mubr.f32.mxu0 0.0
        %2220 = vmatmul.mubr.f32.gmra.mrb[0].mxu0 %v2030
        %v2221 = vpop.f32.mrb[0].mxu0
        %v2222 = vadd.f32 0.0, %v2221
        %v2223 = vpop.f32.mrb[0].mxu0
        %2224 = vmatprep.mubr.f32.mxu0 0.0
        %2225 = vmatmul.mubr.f32.gmra.mrb[0].mxu0 %v2033
        %v2226 = vpop.f32.mrb[0].mxu0
        %v2227 = vadd.f32 0.0, %v2226
        %v2228 = vpop.f32.mrb[0].mxu0
        %2229 = vmatprep.mubr.f32.mxu0 0.0
        %2230 = vmatmul.mubr.f32.gmra.mrb[0].mxu0 %v2036
        %v2231 = vpop.f32.mrb[0].mxu0
        %v2232 = vadd.f32 0.0, %v2231
        %v2233 = vpop.f32.mrb[0].mxu0
        %2234 = vmatprep.mubr.f32.mxu0 0.0
        %2235 = vmatmul.mubr.f32.gmra.mrb[0].mxu0 %v2039
        %v2236 = vpop.f32.mrb[0].mxu0
        %v2237 = vadd.f32 0.0, %v2236
        %v2238 = vpop.f32.mrb[0].mxu0
        %2239 = vmatprep.mubr.f32.mxu0 0.0
        %2240 = vmatmul.mubr.f32.gmra.mrb[0].mxu0 %v2042
        %v2241 = vpop.f32.mrb[0].mxu0
        %v2242 = vadd.f32 0.0, %v2241
        %v2243 = vpop.f32.mrb[0].mxu0
        %2244 = vmatprep.mubr.f32.mxu0 0.0
        %2245 = vmatmul.mubr.f32.gmra.mrb[0].mxu0 %v2045
        %v2246 = vpop.f32.mrb[0].mxu0
        %v2247 = vadd.f32 0.0, %v2246
        %v2248 = vpop.f32.mrb[0].mxu0
        %2249 = vmatprep.mubr.f32.mxu0 0.0
        %2250 = vmatmul.mubr.f32.gmra.mrb[0].mxu0 %v2048
        %v2251 = vpop.f32.mrb[0].mxu0
        %v2252 = vadd.f32 0.0, %v2251
        %v2253 = vpop.f32.mrb[0].mxu0
        %2254 = vmatprep.mubr.f32.mxu0 0.0
        %2255 = vmatmul.mubr.f32.gmra.mrb[0].mxu0 %v2051
        %v2256 = vpop.f32.mrb[0].mxu0
        %v2257 = vadd.f32 0.0, %v2256
        %v2258 = vpop.f32.mrb[0].mxu0
        %2259 = vmatprep.mubr.f32.mxu0 0.0
        %2260 = vmatmul.mubr.f32.gmra.mrb[0].mxu0 %v2054
        %v2261 = vpop.f32.mrb[0].mxu0
        %v2262 = vadd.f32 0.0, %v2261
        %v2263 = vpop.f32.mrb[0].mxu0
        %2264 = vmatprep.mubr.f32.mxu0 0.0
        %2265 = vmatmul.mubr.f32.gmra.mrb[0].mxu0 %v2057
        %v2266 = vpop.f32.mrb[0].mxu0
        %v2267 = vadd.f32 0.0, %v2266
        %v2268 = vpop.f32.mrb[0].mxu0
        %2269 = vmatprep.mubr.f32.mxu0 0.0
        %2270 = vmatmul.mubr.f32.gmra.mrb[0].mxu0 %v2060
        %v2271 = vpop.f32.mrb[0].mxu0
        %v2272 = vadd.f32 0.0, %v2271
        %v2273 = vpop.f32.mrb[0].mxu0
        %2274 = vmatprep.mubr.f32.mxu0 0.0
        %2275 = vmatmul.mubr.f32.gmra.mrb[0].mxu0 %v2063
        %v2276 = vpop.f32.mrb[0].mxu0
        %v2277 = vadd.f32 0.0, %v2276
        %v2278 = vpop.f32.mrb[0].mxu0
        %2279 = vmatprep.mubr.f32.mxu0 0.0
        %2280 = vmatmul.mubr.f32.gmra.mrb[0].mxu0 %v2066
        %v2281 = vpop.f32.mrb[0].mxu0
        %v2282 = vadd.f32 0.0, %v2281
        %v2283 = vpop.f32.mrb[0].mxu0
        %2284 = vmatprep.mubr.f32.mxu0 0.0
        %2285 = vmatmul.mubr.f32.gmra.mrb[0].mxu0 %v2069
        %v2286 = vpop.f32.mrb[0].mxu0
        %v2287 = vadd.f32 0.0, %v2286
        %v2288 = vpop.f32.mrb[0].mxu0
        %2289 = vmatprep.mubr.f32.mxu0 0.0
        %2290 = vmatmul.mubr.f32.gmra.mrb[0].mxu0 %v2072
        %v2291 = vpop.f32.mrb[0].mxu0
        %v2292 = vadd.f32 0.0, %v2291
        %v2293 = vpop.f32.mrb[0].mxu0
        %2294 = vmatprep.mubr.f32.mxu0 0.0
        %2295 = vmatmul.mubr.f32.gmra.mrb[0].mxu0 %v2075
        %v2296 = vpop.f32.mrb[0].mxu0
        %v2297 = vadd.f32 0.0, %v2296
        %v2298 = vpop.f32.mrb[0].mxu0
        %2299 = vmatprep.mubr.f32.mxu0 0.0
        %2300 = vmatmul.mubr.f32.gmra.mrb[0].mxu0 %v2078
        %v2301 = vpop.f32.mrb[0].mxu0
        %v2302 = vadd.f32 0.0, %v2301
        %v2303 = vpop.f32.mrb[0].mxu0
        %2304 = vdwg.mxu0
        %v2305 = vadd.f32 %v1915, %v2147
        %v2306 = vadd.f32 %v1916, %v2152
        %v2307 = vadd.f32 %v1917, %v2157
        %v2308 = vadd.f32 %v1918, %v2162
        %v2309 = vadd.f32 %v1919, %v2167
        %v2310 = vadd.f32 %v1920, %v2172
        %v2311 = vadd.f32 %v1921, %v2177
        %v2312 = vadd.f32 %v1922, %v2182
        %v2313 = vadd.f32 %v1923, %v2187
        %v2314 = vadd.f32 %v1924, %v2192
        %v2315 = vadd.f32 %v1925, %v2197
        %v2316 = vadd.f32 %v1926, %v2202
        %v2317 = vadd.f32 %v1927, %v2207
        %v2318 = vadd.f32 %v1928, %v2212
        %v2319 = vadd.f32 %v1929, %v2217
        %v2320 = vadd.f32 %v1930, %v2222
        %v2321 = vadd.f32 %v1931, %v2227
        %v2322 = vadd.f32 %v1932, %v2232
        %v2323 = vadd.f32 %v1933, %v2237
        %v2324 = vadd.f32 %v1934, %v2242
        %v2325 = vadd.f32 %v1935, %v2247
        %v2326 = vadd.f32 %v1936, %v2252
        %v2327 = vadd.f32 %v1937, %v2257
        %v2328 = vadd.f32 %v1938, %v2262
        %v2329 = vadd.f32 %v1939, %v2267
        %v2330 = vadd.f32 %v1940, %v2272
        %v2331 = vadd.f32 %v1941, %v2277
        %v2332 = vadd.f32 %v1942, %v2282
        %v2333 = vadd.f32 %v1943, %v2287
        %v2334 = vadd.f32 %v1944, %v2292
        %v2335 = vadd.f32 %v1945, %v2297
        %v2336 = vadd.f32 %v1946, %v2302
        %v2337 = vld [vmem:[%s809 + $0x1] sm:$0xff]
        %v2338 = vld [vmem:[%s809 + $0x9] sm:$0xff]
        %v2339 = vld [vmem:[%s809 + $0x19] sm:$0xff]
        %v2340 = vld [vmem:[%s809 + $0x21] sm:$0xff]
        %v2341 = vld [vmem:[%s809 + $0x31] sm:$0xff]
        %v2342 = vld [vmem:[%s809 + $0x39] sm:$0xff]
        %v2343 = vld [vmem:[%s809 + $0x49] sm:$0xff]
        %v2344 = vld [vmem:[%s809 + $0x51] sm:$0xff]
        %v2345 = vld [vmem:[%s809 + $0x61] sm:$0xff]
        %v2346 = vld [vmem:[%s809 + $0x69] sm:$0xff]
        %v2347 = vld [vmem:[%s809 + $0x79] sm:$0xff]
        %v2348 = vld [vmem:[%s809 + $0x81] sm:$0xff]
        %v2349 = vld [vmem:[%s809 + $0x91] sm:$0xff]
        %v2350 = vld [vmem:[%s809 + $0x99] sm:$0xff]
        %v2351 = vld [vmem:[%s809 + $0xa9] sm:$0xff]
        %v2352 = vld [vmem:[%s809 + $0xb1] sm:$0xff]
        %v2353 = vld [vmem:[%s809 + $0xc1] sm:$0xff]
        %v2354 = vld [vmem:[%s809 + $0xc9] sm:$0xff]
        %v2355 = vld [vmem:[%s809 + $0xd9] sm:$0xff]
        %v2356 = vld [vmem:[%s809 + $0xe1] sm:$0xff]
        %v2357 = vld [vmem:[%s809 + $0xf1] sm:$0xff]
        %v2358 = vld [vmem:[%s809 + $0xf9] sm:$0xff]
        %v2359 = vld [vmem:[%s809 + $0x109] sm:$0xff]
        %v2360 = vld [vmem:[%s809 + $0x111] sm:$0xff]
        %v2361 = vld [vmem:[%s809 + $0x121] sm:$0xff]
        %v2362 = vld [vmem:[%s809 + $0x129] sm:$0xff]
        %v2363 = vld [vmem:[%s809 + $0x139] sm:$0xff]
        %v2364 = vld [vmem:[%s809 + $0x141] sm:$0xff]
        %v2365 = vld [vmem:[%s809 + $0x151] sm:$0xff]
        %v2366 = vld [vmem:[%s809 + $0x159] sm:$0xff]
        %v2367 = vld [vmem:[%s809 + $0x169] sm:$0xff]
        %v2368 = vld [vmem:[%s809 + $0x171] sm:$0xff]
        %s2369 = scalar_lea.vmem %s3, 128
        %v2370 = vld [vmem:[%s2369] sm:$0xff]
        %v2371 = vld [vmem:[%s2369 + $0x8] sm:$0xff]
        %v2372 = vld [vmem:[%s2369 + $0x10] sm:$0xff]
        %v2373 = vld [vmem:[%s2369 + $0x18] sm:$0xff]
        %v2375 = vsel %vm753, %v2337, 0
        %v2378 = vsel %vm753, %v2338, 0
        %v2381 = vsel %vm753, %v2339, 0
        %v2384 = vsel %vm753, %v2340, 0
        %v2387 = vsel %vm753, %v2341, 0
        %v2390 = vsel %vm753, %v2342, 0
        %v2393 = vsel %vm753, %v2343, 0
        %v2396 = vsel %vm753, %v2344, 0
        %v2399 = vsel %vm753, %v2345, 0
        %v2402 = vsel %vm753, %v2346, 0
        %v2405 = vsel %vm753, %v2347, 0
        %v2408 = vsel %vm753, %v2348, 0
        %v2411 = vsel %vm753, %v2349, 0
        %v2414 = vsel %vm753, %v2350, 0
        %v2417 = vsel %vm753, %v2351, 0
        %v2420 = vsel %vm753, %v2352, 0
        %v2423 = vsel %vm753, %v2353, 0
        %v2426 = vsel %vm753, %v2354, 0
        %v2429 = vsel %vm753, %v2355, 0
        %v2432 = vsel %vm753, %v2356, 0
        %v2435 = vsel %vm753, %v2357, 0
        %v2438 = vsel %vm753, %v2358, 0
        %v2441 = vsel %vm753, %v2359, 0
        %v2444 = vsel %vm753, %v2360, 0
        %v2447 = vsel %vm753, %v2361, 0
        %v2450 = vsel %vm753, %v2362, 0
        %v2453 = vsel %vm753, %v2363, 0
        %v2456 = vsel %vm753, %v2364, 0
        %v2459 = vsel %vm753, %v2365, 0
        %v2462 = vsel %vm753, %v2366, 0
        %v2465 = vsel %vm753, %v2367, 0
        %v2468 = vsel %vm753, %v2368, 0
        %2470 = vmatprep.subr.mxu0 0.0
        %2471 = vmatpush1.msra.mxu0 %v2370
        %2472 = vmatprep.subr.mxu0 0.0
        %2473 = vmatpush1.msra.mxu0 %v2371
        %2474 = vmatprep.subr.mxu0 0.0
        %2475 = vmatpush1.msra.mxu0 %v2372
        %2476 = vmatprep.subr.mxu0 0.0
        %2477 = vmatpush1.msra.mxu0 %v2373
        %2478 = vmatprep.subr.mxu0 0.0
        %2479 = vmatpush1.msra.mxu0 0.0
        %2480 = vmatprep.subr.mxu0 0.0
        %2481 = vmatpush1.msra.mxu0 0.0
        %2482 = vmatprep.subr.mxu0 0.0
        %2483 = vmatpush1.msra.mxu0 0.0
        %2484 = vmatprep.subr.mxu0 0.0
        %2485 = vmatpush1.msra.mxu0 0.0
        %2486 = vmatprep.subr.mxu0 0.0
        %2487 = vmatpush1.msra.mxu0 0.0
        %2488 = vmatprep.subr.mxu0 0.0
        %2489 = vmatpush1.msra.mxu0 0.0
        %2490 = vmatprep.subr.mxu0 0.0
        %2491 = vmatpush1.msra.mxu0 0.0
        %2492 = vmatprep.subr.mxu0 0.0
        %2493 = vmatpush1.msra.mxu0 0.0
        %2494 = vmatprep.subr.mxu0 0.0
        %2495 = vmatpush1.msra.mxu0 0.0
        %2496 = vmatprep.subr.mxu0 0.0
        %2497 = vmatpush1.msra.mxu0 0.0
        %2498 = vmatprep.subr.mxu0 0.0
        %2499 = vmatpush1.msra.mxu0 0.0
        %2500 = vmatprep.subr.mxu0 0.0
        %2501 = vmatpush1.msra.mxu0 0.0
        %2502 = vmatprep.subr.mxu0 0.0
        %2503 = vmatpush1.msra.mxu0 0.0
        %2504 = vmatprep.subr.mxu0 0.0
        %2505 = vmatpush1.msra.mxu0 0.0
        %2506 = vmatprep.subr.mxu0 0.0
        %2507 = vmatpush1.msra.mxu0 0.0
        %2508 = vmatprep.subr.mxu0 0.0
        %2509 = vmatpush1.msra.mxu0 0.0
        %2510 = vmatprep.subr.mxu0 0.0
        %2511 = vmatpush1.msra.mxu0 0.0
        %2512 = vmatprep.subr.mxu0 0.0
        %2513 = vmatpush1.msra.mxu0 0.0
        %2514 = vmatprep.subr.mxu0 0.0
        %2515 = vmatpush1.msra.mxu0 0.0
        %2516 = vmatprep.subr.mxu0 0.0
        %2517 = vmatpush1.msra.mxu0 0.0
        %2518 = vmatprep.subr.mxu0 0.0
        %2519 = vmatpush1.msra.mxu0 0.0
        %2520 = vmatprep.subr.mxu0 0.0
        %2521 = vmatpush1.msra.mxu0 0.0
        %2522 = vmatprep.subr.mxu0 0.0
        %2523 = vmatpush1.msra.mxu0 0.0
        %2524 = vmatprep.subr.mxu0 0.0
        %2525 = vmatpush1.msra.mxu0 0.0
        %2526 = vmatprep.subr.mxu0 0.0
        %2527 = vmatpush1.msra.mxu0 0.0
        %2528 = vmatprep.subr.mxu0 0.0
        %2529 = vmatpush1.msra.mxu0 0.0
        %2530 = vmatprep.subr.mxu0 0.0
        %2531 = vmatpush1.msra.mxu0 0.0
        %2532 = vmatprep.subr.mxu0 0.0
        %2533 = vmatpush1.msra.mxu0 0.0
        %2534 = vmatprep.mubr.f32.mxu0 0.0
        %2535 = vmatmul.mubr.f32.gmra.mrb[0].mxu0 %v2375
        %v2536 = vpop.f32.mrb[0].mxu0
        %v2537 = vadd.f32 0.0, %v2536
        %v2538 = vpop.f32.mrb[0].mxu0
        %2539 = vmatprep.mubr.f32.mxu0 0.0
        %2540 = vmatmul.mubr.f32.gmra.mrb[0].mxu0 %v2378
        %v2541 = vpop.f32.mrb[0].mxu0
        %v2542 = vadd.f32 0.0, %v2541
        %v2543 = vpop.f32.mrb[0].mxu0
        %2544 = vmatprep.mubr.f32.mxu0 0.0
        %2545 = vmatmul.mubr.f32.gmra.mrb[0].mxu0 %v2381
        %v2546 = vpop.f32.mrb[0].mxu0
        %v2547 = vadd.f32 0.0, %v2546
        %v2548 = vpop.f32.mrb[0].mxu0
        %2549 = vmatprep.mubr.f32.mxu0 0.0
        %2550 = vmatmul.mubr.f32.gmra.mrb[0].mxu0 %v2384
        %v2551 = vpop.f32.mrb[0].mxu0
        %v2552 = vadd.f32 0.0, %v2551
        %v2553 = vpop.f32.mrb[0].mxu0
        %2554 = vmatprep.mubr.f32.mxu0 0.0
        %2555 = vmatmul.mubr.f32.gmra.mrb[0].mxu0 %v2387
        %v2556 = vpop.f32.mrb[0].mxu0
        %v2557 = vadd.f32 0.0, %v2556
        %v2558 = vpop.f32.mrb[0].mxu0
        %2559 = vmatprep.mubr.f32.mxu0 0.0
        %2560 = vmatmul.mubr.f32.gmra.mrb[0].mxu0 %v2390
        %v2561 = vpop.f32.mrb[0].mxu0
        %v2562 = vadd.f32 0.0, %v2561
        %v2563 = vpop.f32.mrb[0].mxu0
        %2564 = vmatprep.mubr.f32.mxu0 0.0
        %2565 = vmatmul.mubr.f32.gmra.mrb[0].mxu0 %v2393
        %v2566 = vpop.f32.mrb[0].mxu0
        %v2567 = vadd.f32 0.0, %v2566
        %v2568 = vpop.f32.mrb[0].mxu0
        %2569 = vmatprep.mubr.f32.mxu0 0.0
        %2570 = vmatmul.mubr.f32.gmra.mrb[0].mxu0 %v2396
        %v2571 = vpop.f32.mrb[0].mxu0
        %v2572 = vadd.f32 0.0, %v2571
        %v2573 = vpop.f32.mrb[0].mxu0
        %2574 = vmatprep.mubr.f32.mxu0 0.0
        %2575 = vmatmul.mubr.f32.gmra.mrb[0].mxu0 %v2399
        %v2576 = vpop.f32.mrb[0].mxu0
        %v2577 = vadd.f32 0.0, %v2576
        %v2578 = vpop.f32.mrb[0].mxu0
        %2579 = vmatprep.mubr.f32.mxu0 0.0
        %2580 = vmatmul.mubr.f32.gmra.mrb[0].mxu0 %v2402
        %v2581 = vpop.f32.mrb[0].mxu0
        %v2582 = vadd.f32 0.0, %v2581
        %v2583 = vpop.f32.mrb[0].mxu0
        %2584 = vmatprep.mubr.f32.mxu0 0.0
        %2585 = vmatmul.mubr.f32.gmra.mrb[0].mxu0 %v2405
        %v2586 = vpop.f32.mrb[0].mxu0
        %v2587 = vadd.f32 0.0, %v2586
        %v2588 = vpop.f32.mrb[0].mxu0
        %2589 = vmatprep.mubr.f32.mxu0 0.0
        %2590 = vmatmul.mubr.f32.gmra.mrb[0].mxu0 %v2408
        %v2591 = vpop.f32.mrb[0].mxu0
        %v2592 = vadd.f32 0.0, %v2591
        %v2593 = vpop.f32.mrb[0].mxu0
        %2594 = vmatprep.mubr.f32.mxu0 0.0
        %2595 = vmatmul.mubr.f32.gmra.mrb[0].mxu0 %v2411
        %v2596 = vpop.f32.mrb[0].mxu0
        %v2597 = vadd.f32 0.0, %v2596
        %v2598 = vpop.f32.mrb[0].mxu0
        %2599 = vmatprep.mubr.f32.mxu0 0.0
        %2600 = vmatmul.mubr.f32.gmra.mrb[0].mxu0 %v2414
        %v2601 = vpop.f32.mrb[0].mxu0
        %v2602 = vadd.f32 0.0, %v2601
        %v2603 = vpop.f32.mrb[0].mxu0
        %2604 = vmatprep.mubr.f32.mxu0 0.0
        %2605 = vmatmul.mubr.f32.gmra.mrb[0].mxu0 %v2417
        %v2606 = vpop.f32.mrb[0].mxu0
        %v2607 = vadd.f32 0.0, %v2606
        %v2608 = vpop.f32.mrb[0].mxu0
        %2609 = vmatprep.mubr.f32.mxu0 0.0
        %2610 = vmatmul.mubr.f32.gmra.mrb[0].mxu0 %v2420
        %v2611 = vpop.f32.mrb[0].mxu0
        %v2612 = vadd.f32 0.0, %v2611
        %v2613 = vpop.f32.mrb[0].mxu0
        %2614 = vmatprep.mubr.f32.mxu0 0.0
        %2615 = vmatmul.mubr.f32.gmra.mrb[0].mxu0 %v2423
        %v2616 = vpop.f32.mrb[0].mxu0
        %v2617 = vadd.f32 0.0, %v2616
        %v2618 = vpop.f32.mrb[0].mxu0
        %2619 = vmatprep.mubr.f32.mxu0 0.0
        %2620 = vmatmul.mubr.f32.gmra.mrb[0].mxu0 %v2426
        %v2621 = vpop.f32.mrb[0].mxu0
        %v2622 = vadd.f32 0.0, %v2621
        %v2623 = vpop.f32.mrb[0].mxu0
        %2624 = vmatprep.mubr.f32.mxu0 0.0
        %2625 = vmatmul.mubr.f32.gmra.mrb[0].mxu0 %v2429
        %v2626 = vpop.f32.mrb[0].mxu0
        %v2627 = vadd.f32 0.0, %v2626
        %v2628 = vpop.f32.mrb[0].mxu0
        %2629 = vmatprep.mubr.f32.mxu0 0.0
        %2630 = vmatmul.mubr.f32.gmra.mrb[0].mxu0 %v2432
        %v2631 = vpop.f32.mrb[0].mxu0
        %v2632 = vadd.f32 0.0, %v2631
        %v2633 = vpop.f32.mrb[0].mxu0
        %2634 = vmatprep.mubr.f32.mxu0 0.0
        %2635 = vmatmul.mubr.f32.gmra.mrb[0].mxu0 %v2435
        %v2636 = vpop.f32.mrb[0].mxu0
        %v2637 = vadd.f32 0.0, %v2636
        %v2638 = vpop.f32.mrb[0].mxu0
        %2639 = vmatprep.mubr.f32.mxu0 0.0
        %2640 = vmatmul.mubr.f32.gmra.mrb[0].mxu0 %v2438
        %v2641 = vpop.f32.mrb[0].mxu0
        %v2642 = vadd.f32 0.0, %v2641
        %v2643 = vpop.f32.mrb[0].mxu0
        %2644 = vmatprep.mubr.f32.mxu0 0.0
        %2645 = vmatmul.mubr.f32.gmra.mrb[0].mxu0 %v2441
        %v2646 = vpop.f32.mrb[0].mxu0
        %v2647 = vadd.f32 0.0, %v2646
        %v2648 = vpop.f32.mrb[0].mxu0
        %2649 = vmatprep.mubr.f32.mxu0 0.0
        %2650 = vmatmul.mubr.f32.gmra.mrb[0].mxu0 %v2444
        %v2651 = vpop.f32.mrb[0].mxu0
        %v2652 = vadd.f32 0.0, %v2651
        %v2653 = vpop.f32.mrb[0].mxu0
        %2654 = vmatprep.mubr.f32.mxu0 0.0
        %2655 = vmatmul.mubr.f32.gmra.mrb[0].mxu0 %v2447
        %v2656 = vpop.f32.mrb[0].mxu0
        %v2657 = vadd.f32 0.0, %v2656
        %v2658 = vpop.f32.mrb[0].mxu0
        %2659 = vmatprep.mubr.f32.mxu0 0.0
        %2660 = vmatmul.mubr.f32.gmra.mrb[0].mxu0 %v2450
        %v2661 = vpop.f32.mrb[0].mxu0
        %v2662 = vadd.f32 0.0, %v2661
        %v2663 = vpop.f32.mrb[0].mxu0
        %2664 = vmatprep.mubr.f32.mxu0 0.0
        %2665 = vmatmul.mubr.f32.gmra.mrb[0].mxu0 %v2453
        %v2666 = vpop.f32.mrb[0].mxu0
        %v2667 = vadd.f32 0.0, %v2666
        %v2668 = vpop.f32.mrb[0].mxu0
        %2669 = vmatprep.mubr.f32.mxu0 0.0
        %2670 = vmatmul.mubr.f32.gmra.mrb[0].mxu0 %v2456
        %v2671 = vpop.f32.mrb[0].mxu0
        %v2672 = vadd.f32 0.0, %v2671
        %v2673 = vpop.f32.mrb[0].mxu0
        %2674 = vmatprep.mubr.f32.mxu0 0.0
        %2675 = vmatmul.mubr.f32.gmra.mrb[0].mxu0 %v2459
        %v2676 = vpop.f32.mrb[0].mxu0
        %v2677 = vadd.f32 0.0, %v2676
        %v2678 = vpop.f32.mrb[0].mxu0
        %2679 = vmatprep.mubr.f32.mxu0 0.0
        %2680 = vmatmul.mubr.f32.gmra.mrb[0].mxu0 %v2462
        %v2681 = vpop.f32.mrb[0].mxu0
        %v2682 = vadd.f32 0.0, %v2681
        %v2683 = vpop.f32.mrb[0].mxu0
        %2684 = vmatprep.mubr.f32.mxu0 0.0
        %2685 = vmatmul.mubr.f32.gmra.mrb[0].mxu0 %v2465
        %v2686 = vpop.f32.mrb[0].mxu0
        %v2687 = vadd.f32 0.0, %v2686
        %v2688 = vpop.f32.mrb[0].mxu0
        %2689 = vmatprep.mubr.f32.mxu0 0.0
        %2690 = vmatmul.mubr.f32.gmra.mrb[0].mxu0 %v2468
        %v2691 = vpop.f32.mrb[0].mxu0
        %v2692 = vadd.f32 0.0, %v2691
        %v2693 = vpop.f32.mrb[0].mxu0
        %2694 = vdwg.mxu0
        %v2695 = vadd.f32 %v2305, %v2537
        %v2696 = vadd.f32 %v2306, %v2542
        %v2697 = vadd.f32 %v2307, %v2547
        %v2698 = vadd.f32 %v2308, %v2552
        %v2699 = vadd.f32 %v2309, %v2557
        %v2700 = vadd.f32 %v2310, %v2562
        %v2701 = vadd.f32 %v2311, %v2567
        %v2702 = vadd.f32 %v2312, %v2572
        %v2703 = vadd.f32 %v2313, %v2577
        %v2704 = vadd.f32 %v2314, %v2582
        %v2705 = vadd.f32 %v2315, %v2587
        %v2706 = vadd.f32 %v2316, %v2592
        %v2707 = vadd.f32 %v2317, %v2597
        %v2708 = vadd.f32 %v2318, %v2602
        %v2709 = vadd.f32 %v2319, %v2607
        %v2710 = vadd.f32 %v2320, %v2612
        %v2711 = vadd.f32 %v2321, %v2617
        %v2712 = vadd.f32 %v2322, %v2622
        %v2713 = vadd.f32 %v2323, %v2627
        %v2714 = vadd.f32 %v2324, %v2632
        %v2715 = vadd.f32 %v2325, %v2637
        %v2716 = vadd.f32 %v2326, %v2642
        %v2717 = vadd.f32 %v2327, %v2647
        %v2718 = vadd.f32 %v2328, %v2652
        %v2719 = vadd.f32 %v2329, %v2657
        %v2720 = vadd.f32 %v2330, %v2662
        %v2721 = vadd.f32 %v2331, %v2667
        %v2722 = vadd.f32 %v2332, %v2672
        %v2723 = vadd.f32 %v2333, %v2677
        %v2724 = vadd.f32 %v2334, %v2682
        %v2725 = vadd.f32 %v2335, %v2687
        %v2726 = vadd.f32 %v2336, %v2692
        %v2727 = vld [vmem:[%s809 + $0x2] sm:$0xff]
        %v2728 = vld [vmem:[%s809 + $0xa] sm:$0xff]
        %v2729 = vld [vmem:[%s809 + $0x1a] sm:$0xff]
        %v2730 = vld [vmem:[%s809 + $0x22] sm:$0xff]
        %v2731 = vld [vmem:[%s809 + $0x32] sm:$0xff]
        %v2732 = vld [vmem:[%s809 + $0x3a] sm:$0xff]
        %v2733 = vld [vmem:[%s809 + $0x4a] sm:$0xff]
        %v2734 = vld [vmem:[%s809 + $0x52] sm:$0xff]
        %v2735 = vld [vmem:[%s809 + $0x62] sm:$0xff]
        %v2736 = vld [vmem:[%s809 + $0x6a] sm:$0xff]
        %v2737 = vld [vmem:[%s809 + $0x7a] sm:$0xff]
        %v2738 = vld [vmem:[%s809 + $0x82] sm:$0xff]
        %v2739 = vld [vmem:[%s809 + $0x92] sm:$0xff]
        %v2740 = vld [vmem:[%s809 + $0x9a] sm:$0xff]
        %v2741 = vld [vmem:[%s809 + $0xaa] sm:$0xff]
        %v2742 = vld [vmem:[%s809 + $0xb2] sm:$0xff]
        %v2743 = vld [vmem:[%s809 + $0xc2] sm:$0xff]
        %v2744 = vld [vmem:[%s809 + $0xca] sm:$0xff]
        %v2745 = vld [vmem:[%s809 + $0xda] sm:$0xff]
        %v2746 = vld [vmem:[%s809 + $0xe2] sm:$0xff]
        %v2747 = vld [vmem:[%s809 + $0xf2] sm:$0xff]
        %v2748 = vld [vmem:[%s809 + $0xfa] sm:$0xff]
        %v2749 = vld [vmem:[%s809 + $0x10a] sm:$0xff]
        %v2750 = vld [vmem:[%s809 + $0x112] sm:$0xff]
        %v2751 = vld [vmem:[%s809 + $0x122] sm:$0xff]
        %v2752 = vld [vmem:[%s809 + $0x12a] sm:$0xff]
        %v2753 = vld [vmem:[%s809 + $0x13a] sm:$0xff]
        %v2754 = vld [vmem:[%s809 + $0x142] sm:$0xff]
        %v2755 = vld [vmem:[%s809 + $0x152] sm:$0xff]
        %v2756 = vld [vmem:[%s809 + $0x15a] sm:$0xff]
        %v2757 = vld [vmem:[%s809 + $0x16a] sm:$0xff]
        %v2758 = vld [vmem:[%s809 + $0x172] sm:$0xff]
        %s2759 = scalar_lea.vmem %s3, 160
        %v2760 = vld [vmem:[%s2759] sm:$0xff]
        %v2761 = vld [vmem:[%s2759 + $0x8] sm:$0xff]
        %v2762 = vld [vmem:[%s2759 + $0x10] sm:$0xff]
        %v2763 = vld [vmem:[%s2759 + $0x18] sm:$0xff]
        %v2765 = vsel %vm753, %v2727, 0
        %v2768 = vsel %vm753, %v2728, 0
        %v2771 = vsel %vm753, %v2729, 0
        %v2774 = vsel %vm753, %v2730, 0
        %v2777 = vsel %vm753, %v2731, 0
        %v2780 = vsel %vm753, %v2732, 0
        %v2783 = vsel %vm753, %v2733, 0
        %v2786 = vsel %vm753, %v2734, 0
        %v2789 = vsel %vm753, %v2735, 0
        %v2792 = vsel %vm753, %v2736, 0
        %v2795 = vsel %vm753, %v2737, 0
        %v2798 = vsel %vm753, %v2738, 0
        %v2801 = vsel %vm753, %v2739, 0
        %v2804 = vsel %vm753, %v2740, 0
        %v2807 = vsel %vm753, %v2741, 0
        %v2810 = vsel %vm753, %v2742, 0
        %v2813 = vsel %vm753, %v2743, 0
        %v2816 = vsel %vm753, %v2744, 0
        %v2819 = vsel %vm753, %v2745, 0
        %v2822 = vsel %vm753, %v2746, 0
        %v2825 = vsel %vm753, %v2747, 0
        %v2828 = vsel %vm753, %v2748, 0
        %v2831 = vsel %vm753, %v2749, 0
        %v2834 = vsel %vm753, %v2750, 0
        %v2837 = vsel %vm753, %v2751, 0
        %v2840 = vsel %vm753, %v2752, 0
        %v2843 = vsel %vm753, %v2753, 0
        %v2846 = vsel %vm753, %v2754, 0
        %v2849 = vsel %vm753, %v2755, 0
        %v2852 = vsel %vm753, %v2756, 0
        %v2855 = vsel %vm753, %v2757, 0
        %v2858 = vsel %vm753, %v2758, 0
        %2860 = vmatprep.subr.mxu0 0.0
        %2861 = vmatpush1.msra.mxu0 %v2760
        %2862 = vmatprep.subr.mxu0 0.0
        %2863 = vmatpush1.msra.mxu0 %v2761
        %2864 = vmatprep.subr.mxu0 0.0
        %2865 = vmatpush1.msra.mxu0 %v2762
        %2866 = vmatprep.subr.mxu0 0.0
        %2867 = vmatpush1.msra.mxu0 %v2763
        %2868 = vmatprep.subr.mxu0 0.0
        %2869 = vmatpush1.msra.mxu0 0.0
        %2870 = vmatprep.subr.mxu0 0.0
        %2871 = vmatpush1.msra.mxu0 0.0
        %2872 = vmatprep.subr.mxu0 0.0
        %2873 = vmatpush1.msra.mxu0 0.0
        %2874 = vmatprep.subr.mxu0 0.0
        %2875 = vmatpush1.msra.mxu0 0.0
        %2876 = vmatprep.subr.mxu0 0.0
        %2877 = vmatpush1.msra.mxu0 0.0
        %2878 = vmatprep.subr.mxu0 0.0
        %2879 = vmatpush1.msra.mxu0 0.0
        %2880 = vmatprep.subr.mxu0 0.0
        %2881 = vmatpush1.msra.mxu0 0.0
        %2882 = vmatprep.subr.mxu0 0.0
        %2883 = vmatpush1.msra.mxu0 0.0
        %2884 = vmatprep.subr.mxu0 0.0
        %2885 = vmatpush1.msra.mxu0 0.0
        %2886 = vmatprep.subr.mxu0 0.0
        %2887 = vmatpush1.msra.mxu0 0.0
        %2888 = vmatprep.subr.mxu0 0.0
        %2889 = vmatpush1.msra.mxu0 0.0
        %2890 = vmatprep.subr.mxu0 0.0
        %2891 = vmatpush1.msra.mxu0 0.0
        %2892 = vmatprep.subr.mxu0 0.0
        %2893 = vmatpush1.msra.mxu0 0.0
        %2894 = vmatprep.subr.mxu0 0.0
        %2895 = vmatpush1.msra.mxu0 0.0
        %2896 = vmatprep.subr.mxu0 0.0
        %2897 = vmatpush1.msra.mxu0 0.0
        %2898 = vmatprep.subr.mxu0 0.0
        %2899 = vmatpush1.msra.mxu0 0.0
        %2900 = vmatprep.subr.mxu0 0.0
        %2901 = vmatpush1.msra.mxu0 0.0
        %2902 = vmatprep.subr.mxu0 0.0
        %2903 = vmatpush1.msra.mxu0 0.0
        %2904 = vmatprep.subr.mxu0 0.0
        %2905 = vmatpush1.msra.mxu0 0.0
        %2906 = vmatprep.subr.mxu0 0.0
        %2907 = vmatpush1.msra.mxu0 0.0
        %2908 = vmatprep.subr.mxu0 0.0
        %2909 = vmatpush1.msra.mxu0 0.0
        %2910 = vmatprep.subr.mxu0 0.0
        %2911 = vmatpush1.msra.mxu0 0.0
        %2912 = vmatprep.subr.mxu0 0.0
        %2913 = vmatpush1.msra.mxu0 0.0
        %2914 = vmatprep.subr.mxu0 0.0
        %2915 = vmatpush1.msra.mxu0 0.0
        %2916 = vmatprep.subr.mxu0 0.0
        %2917 = vmatpush1.msra.mxu0 0.0
        %2918 = vmatprep.subr.mxu0 0.0
        %2919 = vmatpush1.msra.mxu0 0.0
        %2920 = vmatprep.subr.mxu0 0.0
        %2921 = vmatpush1.msra.mxu0 0.0
        %2922 = vmatprep.subr.mxu0 0.0
        %2923 = vmatpush1.msra.mxu0 0.0
        %2924 = vmatprep.mubr.f32.mxu0 0.0
        %2925 = vmatmul.mubr.f32.gmra.mrb[0].mxu0 %v2765
        %v2926 = vpop.f32.mrb[0].mxu0
        %v2927 = vadd.f32 0.0, %v2926
        %v2928 = vpop.f32.mrb[0].mxu0
        %2929 = vmatprep.mubr.f32.mxu0 0.0
        %2930 = vmatmul.mubr.f32.gmra.mrb[0].mxu0 %v2768
        %v2931 = vpop.f32.mrb[0].mxu0
        %v2932 = vadd.f32 0.0, %v2931
        %v2933 = vpop.f32.mrb[0].mxu0
        %2934 = vmatprep.mubr.f32.mxu0 0.0
        %2935 = vmatmul.mubr.f32.gmra.mrb[0].mxu0 %v2771
        %v2936 = vpop.f32.mrb[0].mxu0
        %v2937 = vadd.f32 0.0, %v2936
        %v2938 = vpop.f32.mrb[0].mxu0
        %2939 = vmatprep.mubr.f32.mxu0 0.0
        %2940 = vmatmul.mubr.f32.gmra.mrb[0].mxu0 %v2774
        %v2941 = vpop.f32.mrb[0].mxu0
        %v2942 = vadd.f32 0.0, %v2941
        %v2943 = vpop.f32.mrb[0].mxu0
        %2944 = vmatprep.mubr.f32.mxu0 0.0
        %2945 = vmatmul.mubr.f32.gmra.mrb[0].mxu0 %v2777
        %v2946 = vpop.f32.mrb[0].mxu0
        %v2947 = vadd.f32 0.0, %v2946
        %v2948 = vpop.f32.mrb[0].mxu0
        %2949 = vmatprep.mubr.f32.mxu0 0.0
        %2950 = vmatmul.mubr.f32.gmra.mrb[0].mxu0 %v2780
        %v2951 = vpop.f32.mrb[0].mxu0
        %v2952 = vadd.f32 0.0, %v2951
        %v2953 = vpop.f32.mrb[0].mxu0
        %2954 = vmatprep.mubr.f32.mxu0 0.0
        %2955 = vmatmul.mubr.f32.gmra.mrb[0].mxu0 %v2783
        %v2956 = vpop.f32.mrb[0].mxu0
        %v2957 = vadd.f32 0.0, %v2956
        %v2958 = vpop.f32.mrb[0].mxu0
        %2959 = vmatprep.mubr.f32.mxu0 0.0
        %2960 = vmatmul.mubr.f32.gmra.mrb[0].mxu0 %v2786
        %v2961 = vpop.f32.mrb[0].mxu0
        %v2962 = vadd.f32 0.0, %v2961
        %v2963 = vpop.f32.mrb[0].mxu0
        %2964 = vmatprep.mubr.f32.mxu0 0.0
        %2965 = vmatmul.mubr.f32.gmra.mrb[0].mxu0 %v2789
        %v2966 = vpop.f32.mrb[0].mxu0
        %v2967 = vadd.f32 0.0, %v2966
        %v2968 = vpop.f32.mrb[0].mxu0
        %2969 = vmatprep.mubr.f32.mxu0 0.0
        %2970 = vmatmul.mubr.f32.gmra.mrb[0].mxu0 %v2792
        %v2971 = vpop.f32.mrb[0].mxu0
        %v2972 = vadd.f32 0.0, %v2971
        %v2973 = vpop.f32.mrb[0].mxu0
        %2974 = vmatprep.mubr.f32.mxu0 0.0
        %2975 = vmatmul.mubr.f32.gmra.mrb[0].mxu0 %v2795
        %v2976 = vpop.f32.mrb[0].mxu0
        %v2977 = vadd.f32 0.0, %v2976
        %v2978 = vpop.f32.mrb[0].mxu0
        %2979 = vmatprep.mubr.f32.mxu0 0.0
        %2980 = vmatmul.mubr.f32.gmra.mrb[0].mxu0 %v2798
        %v2981 = vpop.f32.mrb[0].mxu0
        %v2982 = vadd.f32 0.0, %v2981
        %v2983 = vpop.f32.mrb[0].mxu0
        %2984 = vmatprep.mubr.f32.mxu0 0.0
        %2985 = vmatmul.mubr.f32.gmra.mrb[0].mxu0 %v2801
        %v2986 = vpop.f32.mrb[0].mxu0
        %v2987 = vadd.f32 0.0, %v2986
        %v2988 = vpop.f32.mrb[0].mxu0
        %2989 = vmatprep.mubr.f32.mxu0 0.0
        %2990 = vmatmul.mubr.f32.gmra.mrb[0].mxu0 %v2804
        %v2991 = vpop.f32.mrb[0].mxu0
        %v2992 = vadd.f32 0.0, %v2991
        %v2993 = vpop.f32.mrb[0].mxu0
        %2994 = vmatprep.mubr.f32.mxu0 0.0
        %2995 = vmatmul.mubr.f32.gmra.mrb[0].mxu0 %v2807
        %v2996 = vpop.f32.mrb[0].mxu0
        %v2997 = vadd.f32 0.0, %v2996
        %v2998 = vpop.f32.mrb[0].mxu0
        %2999 = vmatprep.mubr.f32.mxu0 0.0
        %3000 = vmatmul.mubr.f32.gmra.mrb[0].mxu0 %v2810
        %v3001 = vpop.f32.mrb[0].mxu0
        %v3002 = vadd.f32 0.0, %v3001
        %v3003 = vpop.f32.mrb[0].mxu0
        %3004 = vmatprep.mubr.f32.mxu0 0.0
        %3005 = vmatmul.mubr.f32.gmra.mrb[0].mxu0 %v2813
        %v3006 = vpop.f32.mrb[0].mxu0
        %v3007 = vadd.f32 0.0, %v3006
        %v3008 = vpop.f32.mrb[0].mxu0
        %3009 = vmatprep.mubr.f32.mxu0 0.0
        %3010 = vmatmul.mubr.f32.gmra.mrb[0].mxu0 %v2816
        %v3011 = vpop.f32.mrb[0].mxu0
        %v3012 = vadd.f32 0.0, %v3011
        %v3013 = vpop.f32.mrb[0].mxu0
        %3014 = vmatprep.mubr.f32.mxu0 0.0
        %3015 = vmatmul.mubr.f32.gmra.mrb[0].mxu0 %v2819
        %v3016 = vpop.f32.mrb[0].mxu0
        %v3017 = vadd.f32 0.0, %v3016
        %v3018 = vpop.f32.mrb[0].mxu0
        %3019 = vmatprep.mubr.f32.mxu0 0.0
        %3020 = vmatmul.mubr.f32.gmra.mrb[0].mxu0 %v2822
        %v3021 = vpop.f32.mrb[0].mxu0
        %v3022 = vadd.f32 0.0, %v3021
        %v3023 = vpop.f32.mrb[0].mxu0
        %3024 = vmatprep.mubr.f32.mxu0 0.0
        %3025 = vmatmul.mubr.f32.gmra.mrb[0].mxu0 %v2825
        %v3026 = vpop.f32.mrb[0].mxu0
        %v3027 = vadd.f32 0.0, %v3026
        %v3028 = vpop.f32.mrb[0].mxu0
        %3029 = vmatprep.mubr.f32.mxu0 0.0
        %3030 = vmatmul.mubr.f32.gmra.mrb[0].mxu0 %v2828
        %v3031 = vpop.f32.mrb[0].mxu0
        %v3032 = vadd.f32 0.0, %v3031
        %v3033 = vpop.f32.mrb[0].mxu0
        %3034 = vmatprep.mubr.f32.mxu0 0.0
        %3035 = vmatmul.mubr.f32.gmra.mrb[0].mxu0 %v2831
        %v3036 = vpop.f32.mrb[0].mxu0
        %v3037 = vadd.f32 0.0, %v3036
        %v3038 = vpop.f32.mrb[0].mxu0
        %3039 = vmatprep.mubr.f32.mxu0 0.0
        %3040 = vmatmul.mubr.f32.gmra.mrb[0].mxu0 %v2834
        %v3041 = vpop.f32.mrb[0].mxu0
        %v3042 = vadd.f32 0.0, %v3041
        %v3043 = vpop.f32.mrb[0].mxu0
        %3044 = vmatprep.mubr.f32.mxu0 0.0
        %3045 = vmatmul.mubr.f32.gmra.mrb[0].mxu0 %v2837
        %v3046 = vpop.f32.mrb[0].mxu0
        %v3047 = vadd.f32 0.0, %v3046
        %v3048 = vpop.f32.mrb[0].mxu0
        %3049 = vmatprep.mubr.f32.mxu0 0.0
        %3050 = vmatmul.mubr.f32.gmra.mrb[0].mxu0 %v2840
        %v3051 = vpop.f32.mrb[0].mxu0
        %v3052 = vadd.f32 0.0, %v3051
        %v3053 = vpop.f32.mrb[0].mxu0
        %3054 = vmatprep.mubr.f32.mxu0 0.0
        %3055 = vmatmul.mubr.f32.gmra.mrb[0].mxu0 %v2843
        %v3056 = vpop.f32.mrb[0].mxu0
        %v3057 = vadd.f32 0.0, %v3056
        %v3058 = vpop.f32.mrb[0].mxu0
        %3059 = vmatprep.mubr.f32.mxu0 0.0
        %3060 = vmatmul.mubr.f32.gmra.mrb[0].mxu0 %v2846
        %v3061 = vpop.f32.mrb[0].mxu0
        %v3062 = vadd.f32 0.0, %v3061
        %v3063 = vpop.f32.mrb[0].mxu0
        %3064 = vmatprep.mubr.f32.mxu0 0.0
        %3065 = vmatmul.mubr.f32.gmra.mrb[0].mxu0 %v2849
        %v3066 = vpop.f32.mrb[0].mxu0
        %v3067 = vadd.f32 0.0, %v3066
        %v3068 = vpop.f32.mrb[0].mxu0
        %3069 = vmatprep.mubr.f32.mxu0 0.0
        %3070 = vmatmul.mubr.f32.gmra.mrb[0].mxu0 %v2852
        %v3071 = vpop.f32.mrb[0].mxu0
        %v3072 = vadd.f32 0.0, %v3071
        %v3073 = vpop.f32.mrb[0].mxu0
        %3074 = vmatprep.mubr.f32.mxu0 0.0
        %3075 = vmatmul.mubr.f32.gmra.mrb[0].mxu0 %v2855
        %v3076 = vpop.f32.mrb[0].mxu0
        %v3077 = vadd.f32 0.0, %v3076
        %v3078 = vpop.f32.mrb[0].mxu0
        %3079 = vmatprep.mubr.f32.mxu0 0.0
        %3080 = vmatmul.mubr.f32.gmra.mrb[0].mxu0 %v2858
        %v3081 = vpop.f32.mrb[0].mxu0
        %v3082 = vadd.f32 0.0, %v3081
        %v3083 = vpop.f32.mrb[0].mxu0
        %3084 = vdwg.mxu0
        %v3085 = vadd.f32 %v2695, %v2927
        %v3086 = vadd.f32 %v2696, %v2932
        %v3087 = vadd.f32 %v2697, %v2937
        %v3088 = vadd.f32 %v2698, %v2942
        %v3089 = vadd.f32 %v2699, %v2947
        %v3090 = vadd.f32 %v2700, %v2952
        %v3091 = vadd.f32 %v2701, %v2957
        %v3092 = vadd.f32 %v2702, %v2962
        %v3093 = vadd.f32 %v2703, %v2967
        %v3094 = vadd.f32 %v2704, %v2972
        %v3095 = vadd.f32 %v2705, %v2977
        %v3096 = vadd.f32 %v2706, %v2982
        %v3097 = vadd.f32 %v2707, %v2987
        %v3098 = vadd.f32 %v2708, %v2992
        %v3099 = vadd.f32 %v2709, %v2997
        %v3100 = vadd.f32 %v2710, %v3002
        %v3101 = vadd.f32 %v2711, %v3007
        %v3102 = vadd.f32 %v2712, %v3012
        %v3103 = vadd.f32 %v2713, %v3017
        %v3104 = vadd.f32 %v2714, %v3022
        %v3105 = vadd.f32 %v2715, %v3027
        %v3106 = vadd.f32 %v2716, %v3032
        %v3107 = vadd.f32 %v2717, %v3037
        %v3108 = vadd.f32 %v2718, %v3042
        %v3109 = vadd.f32 %v2719, %v3047
        %v3110 = vadd.f32 %v2720, %v3052
        %v3111 = vadd.f32 %v2721, %v3057
        %v3112 = vadd.f32 %v2722, %v3062
        %v3113 = vadd.f32 %v2723, %v3067
        %v3114 = vadd.f32 %v2724, %v3072
        %v3115 = vadd.f32 %v2725, %v3077
        %v3116 = vadd.f32 %v2726, %v3082
        %s3117 = scalar_lea.vmem [#allocation2], 48
        %v3118 = vld [vmem:[%s3117] sm:$0xff]
        %v3119 = vld [vmem:[%s3117 + $0x8] sm:$0xff]
        %v3120 = vld [vmem:[%s3117 + $0x18] sm:$0xff]
        %v3121 = vld [vmem:[%s3117 + $0x20] sm:$0xff]
        %v3122 = vld [vmem:[%s3117 + $0x30] sm:$0xff]
        %v3123 = vld [vmem:[%s3117 + $0x38] sm:$0xff]
        %v3124 = vld [vmem:[%s3117 + $0x48] sm:$0xff]
        %v3125 = vld [vmem:[%s3117 + $0x50] sm:$0xff]
        %v3126 = vld [vmem:[%s3117 + $0x60] sm:$0xff]
        %v3127 = vld [vmem:[%s3117 + $0x68] sm:$0xff]
        %v3128 = vld [vmem:[%s3117 + $0x78] sm:$0xff]
        %v3129 = vld [vmem:[%s3117 + $0x80] sm:$0xff]
        %v3130 = vld [vmem:[%s3117 + $0x90] sm:$0xff]
        %v3131 = vld [vmem:[%s3117 + $0x98] sm:$0xff]
        %v3132 = vld [vmem:[%s3117 + $0xa8] sm:$0xff]
        %v3133 = vld [vmem:[%s3117 + $0xb0] sm:$0xff]
        %v3134 = vld [vmem:[%s3117 + $0xc0] sm:$0xff]
        %v3135 = vld [vmem:[%s3117 + $0xc8] sm:$0xff]
        %v3136 = vld [vmem:[%s3117 + $0xd8] sm:$0xff]
        %v3137 = vld [vmem:[%s3117 + $0xe0] sm:$0xff]
        %v3138 = vld [vmem:[%s3117 + $0xf0] sm:$0xff]
        %v3139 = vld [vmem:[%s3117 + $0xf8] sm:$0xff]
        %v3140 = vld [vmem:[%s3117 + $0x108] sm:$0xff]
        %v3141 = vld [vmem:[%s3117 + $0x110] sm:$0xff]
        %v3142 = vld [vmem:[%s3117 + $0x120] sm:$0xff]
        %v3143 = vld [vmem:[%s3117 + $0x128] sm:$0xff]
        %v3144 = vld [vmem:[%s3117 + $0x138] sm:$0xff]
        %v3145 = vld [vmem:[%s3117 + $0x140] sm:$0xff]
        %v3146 = vld [vmem:[%s3117 + $0x150] sm:$0xff]
        %v3147 = vld [vmem:[%s3117 + $0x158] sm:$0xff]
        %v3148 = vld [vmem:[%s3117 + $0x168] sm:$0xff]
        %v3149 = vld [vmem:[%s3117 + $0x170] sm:$0xff]
        %s3150 = scalar_lea.vmem %s3, 192
        %v3151 = vld [vmem:[%s3150] sm:$0xff]
        %v3152 = vld [vmem:[%s3150 + $0x8] sm:$0xff]
        %v3153 = vld [vmem:[%s3150 + $0x10] sm:$0xff]
        %v3154 = vld [vmem:[%s3150 + $0x18] sm:$0xff]
        %v3156 = vsel %vm753, %v3118, 0
        %v3159 = vsel %vm753, %v3119, 0
        %v3162 = vsel %vm753, %v3120, 0
        %v3165 = vsel %vm753, %v3121, 0
        %v3168 = vsel %vm753, %v3122, 0
        %v3171 = vsel %vm753, %v3123, 0
        %v3174 = vsel %vm753, %v3124, 0
        %v3177 = vsel %vm753, %v3125, 0
        %v3180 = vsel %vm753, %v3126, 0
        %v3183 = vsel %vm753, %v3127, 0
        %v3186 = vsel %vm753, %v3128, 0
        %v3189 = vsel %vm753, %v3129, 0
        %v3192 = vsel %vm753, %v3130, 0
        %v3195 = vsel %vm753, %v3131, 0
        %v3198 = vsel %vm753, %v3132, 0
        %v3201 = vsel %vm753, %v3133, 0
        %v3204 = vsel %vm753, %v3134, 0
        %v3207 = vsel %vm753, %v3135, 0
        %v3210 = vsel %vm753, %v3136, 0
        %v3213 = vsel %vm753, %v3137, 0
        %v3216 = vsel %vm753, %v3138, 0
        %v3219 = vsel %vm753, %v3139, 0
        %v3222 = vsel %vm753, %v3140, 0
        %v3225 = vsel %vm753, %v3141, 0
        %v3228 = vsel %vm753, %v3142, 0
        %v3231 = vsel %vm753, %v3143, 0
        %v3234 = vsel %vm753, %v3144, 0
        %v3237 = vsel %vm753, %v3145, 0
        %v3240 = vsel %vm753, %v3146, 0
        %v3243 = vsel %vm753, %v3147, 0
        %v3246 = vsel %vm753, %v3148, 0
        %v3249 = vsel %vm753, %v3149, 0
        %3251 = vmatprep.subr.mxu0 0.0
        %3252 = vmatpush1.msra.mxu0 %v3151
        %3253 = vmatprep.subr.mxu0 0.0
        %3254 = vmatpush1.msra.mxu0 %v3152
        %3255 = vmatprep.subr.mxu0 0.0
        %3256 = vmatpush1.msra.mxu0 %v3153
        %3257 = vmatprep.subr.mxu0 0.0
        %3258 = vmatpush1.msra.mxu0 %v3154
        %3259 = vmatprep.subr.mxu0 0.0
        %3260 = vmatpush1.msra.mxu0 0.0
        %3261 = vmatprep.subr.mxu0 0.0
        %3262 = vmatpush1.msra.mxu0 0.0
        %3263 = vmatprep.subr.mxu0 0.0
        %3264 = vmatpush1.msra.mxu0 0.0
        %3265 = vmatprep.subr.mxu0 0.0
        %3266 = vmatpush1.msra.mxu0 0.0
        %3267 = vmatprep.subr.mxu0 0.0
        %3268 = vmatpush1.msra.mxu0 0.0
        %3269 = vmatprep.subr.mxu0 0.0
        %3270 = vmatpush1.msra.mxu0 0.0
        %3271 = vmatprep.subr.mxu0 0.0
        %3272 = vmatpush1.msra.mxu0 0.0
        %3273 = vmatprep.subr.mxu0 0.0
        %3274 = vmatpush1.msra.mxu0 0.0
        %3275 = vmatprep.subr.mxu0 0.0
        %3276 = vmatpush1.msra.mxu0 0.0
        %3277 = vmatprep.subr.mxu0 0.0
        %3278 = vmatpush1.msra.mxu0 0.0
        %3279 = vmatprep.subr.mxu0 0.0
        %3280 = vmatpush1.msra.mxu0 0.0
        %3281 = vmatprep.subr.mxu0 0.0
        %3282 = vmatpush1.msra.mxu0 0.0
        %3283 = vmatprep.subr.mxu0 0.0
        %3284 = vmatpush1.msra.mxu0 0.0
        %3285 = vmatprep.subr.mxu0 0.0
        %3286 = vmatpush1.msra.mxu0 0.0
        %3287 = vmatprep.subr.mxu0 0.0
        %3288 = vmatpush1.msra.mxu0 0.0
        %3289 = vmatprep.subr.mxu0 0.0
        %3290 = vmatpush1.msra.mxu0 0.0
        %3291 = vmatprep.subr.mxu0 0.0
        %3292 = vmatpush1.msra.mxu0 0.0
        %3293 = vmatprep.subr.mxu0 0.0
        %3294 = vmatpush1.msra.mxu0 0.0
        %3295 = vmatprep.subr.mxu0 0.0
        %3296 = vmatpush1.msra.mxu0 0.0
        %3297 = vmatprep.subr.mxu0 0.0
        %3298 = vmatpush1.msra.mxu0 0.0
        %3299 = vmatprep.subr.mxu0 0.0
        %3300 = vmatpush1.msra.mxu0 0.0
        %3301 = vmatprep.subr.mxu0 0.0
        %3302 = vmatpush1.msra.mxu0 0.0
        %3303 = vmatprep.subr.mxu0 0.0
        %3304 = vmatpush1.msra.mxu0 0.0
        %3305 = vmatprep.subr.mxu0 0.0
        %3306 = vmatpush1.msra.mxu0 0.0
        %3307 = vmatprep.subr.mxu0 0.0
        %3308 = vmatpush1.msra.mxu0 0.0
        %3309 = vmatprep.subr.mxu0 0.0
        %3310 = vmatpush1.msra.mxu0 0.0
        %3311 = vmatprep.subr.mxu0 0.0
        %3312 = vmatpush1.msra.mxu0 0.0
        %3313 = vmatprep.subr.mxu0 0.0
        %3314 = vmatpush1.msra.mxu0 0.0
        %3315 = vmatprep.mubr.f32.mxu0 0.0
        %3316 = vmatmul.mubr.f32.gmra.mrb[0].mxu0 %v3156
        %v3317 = vpop.f32.mrb[0].mxu0
        %v3318 = vadd.f32 0.0, %v3317
        %v3319 = vpop.f32.mrb[0].mxu0
        %3320 = vmatprep.mubr.f32.mxu0 0.0
        %3321 = vmatmul.mubr.f32.gmra.mrb[0].mxu0 %v3159
        %v3322 = vpop.f32.mrb[0].mxu0
        %v3323 = vadd.f32 0.0, %v3322
        %v3324 = vpop.f32.mrb[0].mxu0
        %3325 = vmatprep.mubr.f32.mxu0 0.0
        %3326 = vmatmul.mubr.f32.gmra.mrb[0].mxu0 %v3162
        %v3327 = vpop.f32.mrb[0].mxu0
        %v3328 = vadd.f32 0.0, %v3327
        %v3329 = vpop.f32.mrb[0].mxu0
        %3330 = vmatprep.mubr.f32.mxu0 0.0
        %3331 = vmatmul.mubr.f32.gmra.mrb[0].mxu0 %v3165
        %v3332 = vpop.f32.mrb[0].mxu0
        %v3333 = vadd.f32 0.0, %v3332
        %v3334 = vpop.f32.mrb[0].mxu0
        %3335 = vmatprep.mubr.f32.mxu0 0.0
        %3336 = vmatmul.mubr.f32.gmra.mrb[0].mxu0 %v3168
        %v3337 = vpop.f32.mrb[0].mxu0
        %v3338 = vadd.f32 0.0, %v3337
        %v3339 = vpop.f32.mrb[0].mxu0
        %3340 = vmatprep.mubr.f32.mxu0 0.0
        %3341 = vmatmul.mubr.f32.gmra.mrb[0].mxu0 %v3171
        %v3342 = vpop.f32.mrb[0].mxu0
        %v3343 = vadd.f32 0.0, %v3342
        %v3344 = vpop.f32.mrb[0].mxu0
        %3345 = vmatprep.mubr.f32.mxu0 0.0
        %3346 = vmatmul.mubr.f32.gmra.mrb[0].mxu0 %v3174
        %v3347 = vpop.f32.mrb[0].mxu0
        %v3348 = vadd.f32 0.0, %v3347
        %v3349 = vpop.f32.mrb[0].mxu0
        %3350 = vmatprep.mubr.f32.mxu0 0.0
        %3351 = vmatmul.mubr.f32.gmra.mrb[0].mxu0 %v3177
        %v3352 = vpop.f32.mrb[0].mxu0
        %v3353 = vadd.f32 0.0, %v3352
        %v3354 = vpop.f32.mrb[0].mxu0
        %3355 = vmatprep.mubr.f32.mxu0 0.0
        %3356 = vmatmul.mubr.f32.gmra.mrb[0].mxu0 %v3180
        %v3357 = vpop.f32.mrb[0].mxu0
        %v3358 = vadd.f32 0.0, %v3357
        %v3359 = vpop.f32.mrb[0].mxu0
        %3360 = vmatprep.mubr.f32.mxu0 0.0
        %3361 = vmatmul.mubr.f32.gmra.mrb[0].mxu0 %v3183
        %v3362 = vpop.f32.mrb[0].mxu0
        %v3363 = vadd.f32 0.0, %v3362
        %v3364 = vpop.f32.mrb[0].mxu0
        %3365 = vmatprep.mubr.f32.mxu0 0.0
        %3366 = vmatmul.mubr.f32.gmra.mrb[0].mxu0 %v3186
        %v3367 = vpop.f32.mrb[0].mxu0
        %v3368 = vadd.f32 0.0, %v3367
        %v3369 = vpop.f32.mrb[0].mxu0
        %3370 = vmatprep.mubr.f32.mxu0 0.0
        %3371 = vmatmul.mubr.f32.gmra.mrb[0].mxu0 %v3189
        %v3372 = vpop.f32.mrb[0].mxu0
        %v3373 = vadd.f32 0.0, %v3372
        %v3374 = vpop.f32.mrb[0].mxu0
        %3375 = vmatprep.mubr.f32.mxu0 0.0
        %3376 = vmatmul.mubr.f32.gmra.mrb[0].mxu0 %v3192
        %v3377 = vpop.f32.mrb[0].mxu0
        %v3378 = vadd.f32 0.0, %v3377
        %v3379 = vpop.f32.mrb[0].mxu0
        %3380 = vmatprep.mubr.f32.mxu0 0.0
        %3381 = vmatmul.mubr.f32.gmra.mrb[0].mxu0 %v3195
        %v3382 = vpop.f32.mrb[0].mxu0
        %v3383 = vadd.f32 0.0, %v3382
        %v3384 = vpop.f32.mrb[0].mxu0
        %3385 = vmatprep.mubr.f32.mxu0 0.0
        %3386 = vmatmul.mubr.f32.gmra.mrb[0].mxu0 %v3198
        %v3387 = vpop.f32.mrb[0].mxu0
        %v3388 = vadd.f32 0.0, %v3387
        %v3389 = vpop.f32.mrb[0].mxu0
        %3390 = vmatprep.mubr.f32.mxu0 0.0
        %3391 = vmatmul.mubr.f32.gmra.mrb[0].mxu0 %v3201
        %v3392 = vpop.f32.mrb[0].mxu0
        %v3393 = vadd.f32 0.0, %v3392
        %v3394 = vpop.f32.mrb[0].mxu0
        %3395 = vmatprep.mubr.f32.mxu0 0.0
        %3396 = vmatmul.mubr.f32.gmra.mrb[0].mxu0 %v3204
        %v3397 = vpop.f32.mrb[0].mxu0
        %v3398 = vadd.f32 0.0, %v3397
        %v3399 = vpop.f32.mrb[0].mxu0
        %3400 = vmatprep.mubr.f32.mxu0 0.0
        %3401 = vmatmul.mubr.f32.gmra.mrb[0].mxu0 %v3207
        %v3402 = vpop.f32.mrb[0].mxu0
        %v3403 = vadd.f32 0.0, %v3402
        %v3404 = vpop.f32.mrb[0].mxu0
        %3405 = vmatprep.mubr.f32.mxu0 0.0
        %3406 = vmatmul.mubr.f32.gmra.mrb[0].mxu0 %v3210
        %v3407 = vpop.f32.mrb[0].mxu0
        %v3408 = vadd.f32 0.0, %v3407
        %v3409 = vpop.f32.mrb[0].mxu0
        %3410 = vmatprep.mubr.f32.mxu0 0.0
        %3411 = vmatmul.mubr.f32.gmra.mrb[0].mxu0 %v3213
        %v3412 = vpop.f32.mrb[0].mxu0
        %v3413 = vadd.f32 0.0, %v3412
        %v3414 = vpop.f32.mrb[0].mxu0
        %3415 = vmatprep.mubr.f32.mxu0 0.0
        %3416 = vmatmul.mubr.f32.gmra.mrb[0].mxu0 %v3216
        %v3417 = vpop.f32.mrb[0].mxu0
        %v3418 = vadd.f32 0.0, %v3417
        %v3419 = vpop.f32.mrb[0].mxu0
        %3420 = vmatprep.mubr.f32.mxu0 0.0
        %3421 = vmatmul.mubr.f32.gmra.mrb[0].mxu0 %v3219
        %v3422 = vpop.f32.mrb[0].mxu0
        %v3423 = vadd.f32 0.0, %v3422
        %v3424 = vpop.f32.mrb[0].mxu0
        %3425 = vmatprep.mubr.f32.mxu0 0.0
        %3426 = vmatmul.mubr.f32.gmra.mrb[0].mxu0 %v3222
        %v3427 = vpop.f32.mrb[0].mxu0
        %v3428 = vadd.f32 0.0, %v3427
        %v3429 = vpop.f32.mrb[0].mxu0
        %3430 = vmatprep.mubr.f32.mxu0 0.0
        %3431 = vmatmul.mubr.f32.gmra.mrb[0].mxu0 %v3225
        %v3432 = vpop.f32.mrb[0].mxu0
        %v3433 = vadd.f32 0.0, %v3432
        %v3434 = vpop.f32.mrb[0].mxu0
        %3435 = vmatprep.mubr.f32.mxu0 0.0
        %3436 = vmatmul.mubr.f32.gmra.mrb[0].mxu0 %v3228
        %v3437 = vpop.f32.mrb[0].mxu0
        %v3438 = vadd.f32 0.0, %v3437
        %v3439 = vpop.f32.mrb[0].mxu0
        %3440 = vmatprep.mubr.f32.mxu0 0.0
        %3441 = vmatmul.mubr.f32.gmra.mrb[0].mxu0 %v3231
        %v3442 = vpop.f32.mrb[0].mxu0
        %v3443 = vadd.f32 0.0, %v3442
        %v3444 = vpop.f32.mrb[0].mxu0
        %3445 = vmatprep.mubr.f32.mxu0 0.0
        %3446 = vmatmul.mubr.f32.gmra.mrb[0].mxu0 %v3234
        %v3447 = vpop.f32.mrb[0].mxu0
        %v3448 = vadd.f32 0.0, %v3447
        %v3449 = vpop.f32.mrb[0].mxu0
        %3450 = vmatprep.mubr.f32.mxu0 0.0
        %3451 = vmatmul.mubr.f32.gmra.mrb[0].mxu0 %v3237
        %v3452 = vpop.f32.mrb[0].mxu0
        %v3453 = vadd.f32 0.0, %v3452
        %v3454 = vpop.f32.mrb[0].mxu0
        %3455 = vmatprep.mubr.f32.mxu0 0.0
        %3456 = vmatmul.mubr.f32.gmra.mrb[0].mxu0 %v3240
        %v3457 = vpop.f32.mrb[0].mxu0
        %v3458 = vadd.f32 0.0, %v3457
        %v3459 = vpop.f32.mrb[0].mxu0
        %3460 = vmatprep.mubr.f32.mxu0 0.0
        %3461 = vmatmul.mubr.f32.gmra.mrb[0].mxu0 %v3243
        %v3462 = vpop.f32.mrb[0].mxu0
        %v3463 = vadd.f32 0.0, %v3462
        %v3464 = vpop.f32.mrb[0].mxu0
        %3465 = vmatprep.mubr.f32.mxu0 0.0
        %3466 = vmatmul.mubr.f32.gmra.mrb[0].mxu0 %v3246
        %v3467 = vpop.f32.mrb[0].mxu0
        %v3468 = vadd.f32 0.0, %v3467
        %v3469 = vpop.f32.mrb[0].mxu0
        %3470 = vmatprep.mubr.f32.mxu0 0.0
        %3471 = vmatmul.mubr.f32.gmra.mrb[0].mxu0 %v3249
        %v3472 = vpop.f32.mrb[0].mxu0
        %v3473 = vadd.f32 0.0, %v3472
        %v3474 = vpop.f32.mrb[0].mxu0
        %3475 = vdwg.mxu0
        %v3476 = vadd.f32 %v3085, %v3318
        %v3477 = vadd.f32 %v3086, %v3323
        %v3478 = vadd.f32 %v3087, %v3328
        %v3479 = vadd.f32 %v3088, %v3333
        %v3480 = vadd.f32 %v3089, %v3338
        %v3481 = vadd.f32 %v3090, %v3343
        %v3482 = vadd.f32 %v3091, %v3348
        %v3483 = vadd.f32 %v3092, %v3353
        %v3484 = vadd.f32 %v3093, %v3358
        %v3485 = vadd.f32 %v3094, %v3363
        %v3486 = vadd.f32 %v3095, %v3368
        %v3487 = vadd.f32 %v3096, %v3373
        %v3488 = vadd.f32 %v3097, %v3378
        %v3489 = vadd.f32 %v3098, %v3383
        %v3490 = vadd.f32 %v3099, %v3388
        %v3491 = vadd.f32 %v3100, %v3393
        %v3492 = vadd.f32 %v3101, %v3398
        %v3493 = vadd.f32 %v3102, %v3403
        %v3494 = vadd.f32 %v3103, %v3408
        %v3495 = vadd.f32 %v3104, %v3413
        %v3496 = vadd.f32 %v3105, %v3418
        %v3497 = vadd.f32 %v3106, %v3423
        %v3498 = vadd.f32 %v3107, %v3428
        %v3499 = vadd.f32 %v3108, %v3433
        %v3500 = vadd.f32 %v3109, %v3438
        %v3501 = vadd.f32 %v3110, %v3443
        %v3502 = vadd.f32 %v3111, %v3448
        %v3503 = vadd.f32 %v3112, %v3453
        %v3504 = vadd.f32 %v3113, %v3458
        %v3505 = vadd.f32 %v3114, %v3463
        %v3506 = vadd.f32 %v3115, %v3468
        %v3507 = vadd.f32 %v3116, %v3473
        %v3508 = vld [vmem:[%s3117 + $0x1] sm:$0xff]
        %v3509 = vld [vmem:[%s3117 + $0x9] sm:$0xff]
        %v3510 = vld [vmem:[%s3117 + $0x19] sm:$0xff]
        %v3511 = vld [vmem:[%s3117 + $0x21] sm:$0xff]
        %v3512 = vld [vmem:[%s3117 + $0x31] sm:$0xff]
        %v3513 = vld [vmem:[%s3117 + $0x39] sm:$0xff]
        %v3514 = vld [vmem:[%s3117 + $0x49] sm:$0xff]
        %v3515 = vld [vmem:[%s3117 + $0x51] sm:$0xff]
        %v3516 = vld [vmem:[%s3117 + $0x61] sm:$0xff]
        %v3517 = vld [vmem:[%s3117 + $0x69] sm:$0xff]
        %v3518 = vld [vmem:[%s3117 + $0x79] sm:$0xff]
        %v3519 = vld [vmem:[%s3117 + $0x81] sm:$0xff]
        %v3520 = vld [vmem:[%s3117 + $0x91] sm:$0xff]
        %v3521 = vld [vmem:[%s3117 + $0x99] sm:$0xff]
        %v3522 = vld [vmem:[%s3117 + $0xa9] sm:$0xff]
        %v3523 = vld [vmem:[%s3117 + $0xb1] sm:$0xff]
        %v3524 = vld [vmem:[%s3117 + $0xc1] sm:$0xff]
        %v3525 = vld [vmem:[%s3117 + $0xc9] sm:$0xff]
        %v3526 = vld [vmem:[%s3117 + $0xd9] sm:$0xff]
        %v3527 = vld [vmem:[%s3117 + $0xe1] sm:$0xff]
        %v3528 = vld [vmem:[%s3117 + $0xf1] sm:$0xff]
        %v3529 = vld [vmem:[%s3117 + $0xf9] sm:$0xff]
        %v3530 = vld [vmem:[%s3117 + $0x109] sm:$0xff]
        %v3531 = vld [vmem:[%s3117 + $0x111] sm:$0xff]
        %v3532 = vld [vmem:[%s3117 + $0x121] sm:$0xff]
        %v3533 = vld [vmem:[%s3117 + $0x129] sm:$0xff]
        %v3534 = vld [vmem:[%s3117 + $0x139] sm:$0xff]
        %v3535 = vld [vmem:[%s3117 + $0x141] sm:$0xff]
        %v3536 = vld [vmem:[%s3117 + $0x151] sm:$0xff]
        %v3537 = vld [vmem:[%s3117 + $0x159] sm:$0xff]
        %v3538 = vld [vmem:[%s3117 + $0x169] sm:$0xff]
        %v3539 = vld [vmem:[%s3117 + $0x171] sm:$0xff]
        %s3540 = scalar_lea.vmem %s3, 224
        %v3541 = vld [vmem:[%s3540] sm:$0xff]
        %v3542 = vld [vmem:[%s3540 + $0x8] sm:$0xff]
        %v3543 = vld [vmem:[%s3540 + $0x10] sm:$0xff]
        %v3544 = vld [vmem:[%s3540 + $0x18] sm:$0xff]
        %v3546 = vsel %vm753, %v3508, 0
        %v3549 = vsel %vm753, %v3509, 0
        %v3552 = vsel %vm753, %v3510, 0
        %v3555 = vsel %vm753, %v3511, 0
        %v3558 = vsel %vm753, %v3512, 0
        %v3561 = vsel %vm753, %v3513, 0
        %v3564 = vsel %vm753, %v3514, 0
        %v3567 = vsel %vm753, %v3515, 0
        %v3570 = vsel %vm753, %v3516, 0
        %v3573 = vsel %vm753, %v3517, 0
        %v3576 = vsel %vm753, %v3518, 0
        %v3579 = vsel %vm753, %v3519, 0
        %v3582 = vsel %vm753, %v3520, 0
        %v3585 = vsel %vm753, %v3521, 0
        %v3588 = vsel %vm753, %v3522, 0
        %v3591 = vsel %vm753, %v3523, 0
        %v3594 = vsel %vm753, %v3524, 0
        %v3597 = vsel %vm753, %v3525, 0
        %v3600 = vsel %vm753, %v3526, 0
        %v3603 = vsel %vm753, %v3527, 0
        %v3606 = vsel %vm753, %v3528, 0
        %v3609 = vsel %vm753, %v3529, 0
        %v3612 = vsel %vm753, %v3530, 0
        %v3615 = vsel %vm753, %v3531, 0
        %v3618 = vsel %vm753, %v3532, 0
        %v3621 = vsel %vm753, %v3533, 0
        %v3624 = vsel %vm753, %v3534, 0
        %v3627 = vsel %vm753, %v3535, 0
        %v3630 = vsel %vm753, %v3536, 0
        %v3633 = vsel %vm753, %v3537, 0
        %v3636 = vsel %vm753, %v3538, 0
        %v3639 = vsel %vm753, %v3539, 0
        %3641 = vmatprep.subr.mxu0 0.0
        %3642 = vmatpush1.msra.mxu0 %v3541
        %3643 = vmatprep.subr.mxu0 0.0
        %3644 = vmatpush1.msra.mxu0 %v3542
        %3645 = vmatprep.subr.mxu0 0.0
        %3646 = vmatpush1.msra.mxu0 %v3543
        %3647 = vmatprep.subr.mxu0 0.0
        %3648 = vmatpush1.msra.mxu0 %v3544
        %3649 = vmatprep.subr.mxu0 0.0
        %3650 = vmatpush1.msra.mxu0 0.0
        %3651 = vmatprep.subr.mxu0 0.0
        %3652 = vmatpush1.msra.mxu0 0.0
        %3653 = vmatprep.subr.mxu0 0.0
        %3654 = vmatpush1.msra.mxu0 0.0
        %3655 = vmatprep.subr.mxu0 0.0
        %3656 = vmatpush1.msra.mxu0 0.0
        %3657 = vmatprep.subr.mxu0 0.0
        %3658 = vmatpush1.msra.mxu0 0.0
        %3659 = vmatprep.subr.mxu0 0.0
        %3660 = vmatpush1.msra.mxu0 0.0
        %3661 = vmatprep.subr.mxu0 0.0
        %3662 = vmatpush1.msra.mxu0 0.0
        %3663 = vmatprep.subr.mxu0 0.0
        %3664 = vmatpush1.msra.mxu0 0.0
        %3665 = vmatprep.subr.mxu0 0.0
        %3666 = vmatpush1.msra.mxu0 0.0
        %3667 = vmatprep.subr.mxu0 0.0
        %3668 = vmatpush1.msra.mxu0 0.0
        %3669 = vmatprep.subr.mxu0 0.0
        %3670 = vmatpush1.msra.mxu0 0.0
        %3671 = vmatprep.subr.mxu0 0.0
        %3672 = vmatpush1.msra.mxu0 0.0
        %3673 = vmatprep.subr.mxu0 0.0
        %3674 = vmatpush1.msra.mxu0 0.0
        %3675 = vmatprep.subr.mxu0 0.0
        %3676 = vmatpush1.msra.mxu0 0.0
        %3677 = vmatprep.subr.mxu0 0.0
        %3678 = vmatpush1.msra.mxu0 0.0
        %3679 = vmatprep.subr.mxu0 0.0
        %3680 = vmatpush1.msra.mxu0 0.0
        %3681 = vmatprep.subr.mxu0 0.0
        %3682 = vmatpush1.msra.mxu0 0.0
        %3683 = vmatprep.subr.mxu0 0.0
        %3684 = vmatpush1.msra.mxu0 0.0
        %3685 = vmatprep.subr.mxu0 0.0
        %3686 = vmatpush1.msra.mxu0 0.0
        %3687 = vmatprep.subr.mxu0 0.0
        %3688 = vmatpush1.msra.mxu0 0.0
        %3689 = vmatprep.subr.mxu0 0.0
        %3690 = vmatpush1.msra.mxu0 0.0
        %3691 = vmatprep.subr.mxu0 0.0
        %3692 = vmatpush1.msra.mxu0 0.0
        %3693 = vmatprep.subr.mxu0 0.0
        %3694 = vmatpush1.msra.mxu0 0.0
        %3695 = vmatprep.subr.mxu0 0.0
        %3696 = vmatpush1.msra.mxu0 0.0
        %3697 = vmatprep.subr.mxu0 0.0
        %3698 = vmatpush1.msra.mxu0 0.0
        %3699 = vmatprep.subr.mxu0 0.0
        %3700 = vmatpush1.msra.mxu0 0.0
        %3701 = vmatprep.subr.mxu0 0.0
        %3702 = vmatpush1.msra.mxu0 0.0
        %3703 = vmatprep.subr.mxu0 0.0
        %3704 = vmatpush1.msra.mxu0 0.0
        %3705 = vmatprep.mubr.f32.mxu0 0.0
        %3706 = vmatmul.mubr.f32.gmra.mrb[0].mxu0 %v3546
        %v3707 = vpop.f32.mrb[0].mxu0
        %v3708 = vadd.f32 0.0, %v3707
        %v3709 = vpop.f32.mrb[0].mxu0
        %3710 = vmatprep.mubr.f32.mxu0 0.0
        %3711 = vmatmul.mubr.f32.gmra.mrb[0].mxu0 %v3549
        %v3712 = vpop.f32.mrb[0].mxu0
        %v3713 = vadd.f32 0.0, %v3712
        %v3714 = vpop.f32.mrb[0].mxu0
        %3715 = vmatprep.mubr.f32.mxu0 0.0
        %3716 = vmatmul.mubr.f32.gmra.mrb[0].mxu0 %v3552
        %v3717 = vpop.f32.mrb[0].mxu0
        %v3718 = vadd.f32 0.0, %v3717
        %v3719 = vpop.f32.mrb[0].mxu0
        %3720 = vmatprep.mubr.f32.mxu0 0.0
        %3721 = vmatmul.mubr.f32.gmra.mrb[0].mxu0 %v3555
        %v3722 = vpop.f32.mrb[0].mxu0
        %v3723 = vadd.f32 0.0, %v3722
        %v3724 = vpop.f32.mrb[0].mxu0
        %3725 = vmatprep.mubr.f32.mxu0 0.0
        %3726 = vmatmul.mubr.f32.gmra.mrb[0].mxu0 %v3558
        %v3727 = vpop.f32.mrb[0].mxu0
        %v3728 = vadd.f32 0.0, %v3727
        %v3729 = vpop.f32.mrb[0].mxu0
        %3730 = vmatprep.mubr.f32.mxu0 0.0
        %3731 = vmatmul.mubr.f32.gmra.mrb[0].mxu0 %v3561
        %v3732 = vpop.f32.mrb[0].mxu0
        %v3733 = vadd.f32 0.0, %v3732
        %v3734 = vpop.f32.mrb[0].mxu0
        %3735 = vmatprep.mubr.f32.mxu0 0.0
        %3736 = vmatmul.mubr.f32.gmra.mrb[0].mxu0 %v3564
        %v3737 = vpop.f32.mrb[0].mxu0
        %v3738 = vadd.f32 0.0, %v3737
        %v3739 = vpop.f32.mrb[0].mxu0
        %3740 = vmatprep.mubr.f32.mxu0 0.0
        %3741 = vmatmul.mubr.f32.gmra.mrb[0].mxu0 %v3567
        %v3742 = vpop.f32.mrb[0].mxu0
        %v3743 = vadd.f32 0.0, %v3742
        %v3744 = vpop.f32.mrb[0].mxu0
        %3745 = vmatprep.mubr.f32.mxu0 0.0
        %3746 = vmatmul.mubr.f32.gmra.mrb[0].mxu0 %v3570
        %v3747 = vpop.f32.mrb[0].mxu0
        %v3748 = vadd.f32 0.0, %v3747
        %v3749 = vpop.f32.mrb[0].mxu0
        %3750 = vmatprep.mubr.f32.mxu0 0.0
        %3751 = vmatmul.mubr.f32.gmra.mrb[0].mxu0 %v3573
        %v3752 = vpop.f32.mrb[0].mxu0
        %v3753 = vadd.f32 0.0, %v3752
        %v3754 = vpop.f32.mrb[0].mxu0
        %3755 = vmatprep.mubr.f32.mxu0 0.0
        %3756 = vmatmul.mubr.f32.gmra.mrb[0].mxu0 %v3576
        %v3757 = vpop.f32.mrb[0].mxu0
        %v3758 = vadd.f32 0.0, %v3757
        %v3759 = vpop.f32.mrb[0].mxu0
        %3760 = vmatprep.mubr.f32.mxu0 0.0
        %3761 = vmatmul.mubr.f32.gmra.mrb[0].mxu0 %v3579
        %v3762 = vpop.f32.mrb[0].mxu0
        %v3763 = vadd.f32 0.0, %v3762
        %v3764 = vpop.f32.mrb[0].mxu0
        %3765 = vmatprep.mubr.f32.mxu0 0.0
        %3766 = vmatmul.mubr.f32.gmra.mrb[0].mxu0 %v3582
        %v3767 = vpop.f32.mrb[0].mxu0
        %v3768 = vadd.f32 0.0, %v3767
        %v3769 = vpop.f32.mrb[0].mxu0
        %3770 = vmatprep.mubr.f32.mxu0 0.0
        %3771 = vmatmul.mubr.f32.gmra.mrb[0].mxu0 %v3585
        %v3772 = vpop.f32.mrb[0].mxu0
        %v3773 = vadd.f32 0.0, %v3772
        %v3774 = vpop.f32.mrb[0].mxu0
        %3775 = vmatprep.mubr.f32.mxu0 0.0
        %3776 = vmatmul.mubr.f32.gmra.mrb[0].mxu0 %v3588
        %v3777 = vpop.f32.mrb[0].mxu0
        %v3778 = vadd.f32 0.0, %v3777
        %v3779 = vpop.f32.mrb[0].mxu0
        %3780 = vmatprep.mubr.f32.mxu0 0.0
        %3781 = vmatmul.mubr.f32.gmra.mrb[0].mxu0 %v3591
        %v3782 = vpop.f32.mrb[0].mxu0
        %v3783 = vadd.f32 0.0, %v3782
        %v3784 = vpop.f32.mrb[0].mxu0
        %3785 = vmatprep.mubr.f32.mxu0 0.0
        %3786 = vmatmul.mubr.f32.gmra.mrb[0].mxu0 %v3594
        %v3787 = vpop.f32.mrb[0].mxu0
        %v3788 = vadd.f32 0.0, %v3787
        %v3789 = vpop.f32.mrb[0].mxu0
        %3790 = vmatprep.mubr.f32.mxu0 0.0
        %3791 = vmatmul.mubr.f32.gmra.mrb[0].mxu0 %v3597
        %v3792 = vpop.f32.mrb[0].mxu0
        %v3793 = vadd.f32 0.0, %v3792
        %v3794 = vpop.f32.mrb[0].mxu0
        %3795 = vmatprep.mubr.f32.mxu0 0.0
        %3796 = vmatmul.mubr.f32.gmra.mrb[0].mxu0 %v3600
        %v3797 = vpop.f32.mrb[0].mxu0
        %v3798 = vadd.f32 0.0, %v3797
        %v3799 = vpop.f32.mrb[0].mxu0
        %3800 = vmatprep.mubr.f32.mxu0 0.0
        %3801 = vmatmul.mubr.f32.gmra.mrb[0].mxu0 %v3603
        %v3802 = vpop.f32.mrb[0].mxu0
        %v3803 = vadd.f32 0.0, %v3802
        %v3804 = vpop.f32.mrb[0].mxu0
        %3805 = vmatprep.mubr.f32.mxu0 0.0
        %3806 = vmatmul.mubr.f32.gmra.mrb[0].mxu0 %v3606
        %v3807 = vpop.f32.mrb[0].mxu0
        %v3808 = vadd.f32 0.0, %v3807
        %v3809 = vpop.f32.mrb[0].mxu0
        %3810 = vmatprep.mubr.f32.mxu0 0.0
        %3811 = vmatmul.mubr.f32.gmra.mrb[0].mxu0 %v3609
        %v3812 = vpop.f32.mrb[0].mxu0
        %v3813 = vadd.f32 0.0, %v3812
        %v3814 = vpop.f32.mrb[0].mxu0
        %3815 = vmatprep.mubr.f32.mxu0 0.0
        %3816 = vmatmul.mubr.f32.gmra.mrb[0].mxu0 %v3612
        %v3817 = vpop.f32.mrb[0].mxu0
        %v3818 = vadd.f32 0.0, %v3817
        %v3819 = vpop.f32.mrb[0].mxu0
        %3820 = vmatprep.mubr.f32.mxu0 0.0
        %3821 = vmatmul.mubr.f32.gmra.mrb[0].mxu0 %v3615
        %v3822 = vpop.f32.mrb[0].mxu0
        %v3823 = vadd.f32 0.0, %v3822
        %v3824 = vpop.f32.mrb[0].mxu0
        %3825 = vmatprep.mubr.f32.mxu0 0.0
        %3826 = vmatmul.mubr.f32.gmra.mrb[0].mxu0 %v3618
        %v3827 = vpop.f32.mrb[0].mxu0
        %v3828 = vadd.f32 0.0, %v3827
        %v3829 = vpop.f32.mrb[0].mxu0
        %3830 = vmatprep.mubr.f32.mxu0 0.0
        %3831 = vmatmul.mubr.f32.gmra.mrb[0].mxu0 %v3621
        %v3832 = vpop.f32.mrb[0].mxu0
        %v3833 = vadd.f32 0.0, %v3832
        %v3834 = vpop.f32.mrb[0].mxu0
        %3835 = vmatprep.mubr.f32.mxu0 0.0
        %3836 = vmatmul.mubr.f32.gmra.mrb[0].mxu0 %v3624
        %v3837 = vpop.f32.mrb[0].mxu0
        %v3838 = vadd.f32 0.0, %v3837
        %v3839 = vpop.f32.mrb[0].mxu0
        %3840 = vmatprep.mubr.f32.mxu0 0.0
        %3841 = vmatmul.mubr.f32.gmra.mrb[0].mxu0 %v3627
        %v3842 = vpop.f32.mrb[0].mxu0
        %v3843 = vadd.f32 0.0, %v3842
        %v3844 = vpop.f32.mrb[0].mxu0
        %3845 = vmatprep.mubr.f32.mxu0 0.0
        %3846 = vmatmul.mubr.f32.gmra.mrb[0].mxu0 %v3630
        %v3847 = vpop.f32.mrb[0].mxu0
        %v3848 = vadd.f32 0.0, %v3847
        %v3849 = vpop.f32.mrb[0].mxu0
        %3850 = vmatprep.mubr.f32.mxu0 0.0
        %3851 = vmatmul.mubr.f32.gmra.mrb[0].mxu0 %v3633
        %v3852 = vpop.f32.mrb[0].mxu0
        %v3853 = vadd.f32 0.0, %v3852
        %v3854 = vpop.f32.mrb[0].mxu0
        %3855 = vmatprep.mubr.f32.mxu0 0.0
        %3856 = vmatmul.mubr.f32.gmra.mrb[0].mxu0 %v3636
        %v3857 = vpop.f32.mrb[0].mxu0
        %v3858 = vadd.f32 0.0, %v3857
        %v3859 = vpop.f32.mrb[0].mxu0
        %3860 = vmatprep.mubr.f32.mxu0 0.0
        %3861 = vmatmul.mubr.f32.gmra.mrb[0].mxu0 %v3639
        %v3862 = vpop.f32.mrb[0].mxu0
        %v3863 = vadd.f32 0.0, %v3862
        %v3864 = vpop.f32.mrb[0].mxu0
        %3865 = vdwg.mxu0
        %v3866 = vadd.f32 %v3476, %v3708
        %v3867 = vadd.f32 %v3477, %v3713
        %v3868 = vadd.f32 %v3478, %v3718
        %v3869 = vadd.f32 %v3479, %v3723
        %v3870 = vadd.f32 %v3480, %v3728
        %v3871 = vadd.f32 %v3481, %v3733
        %v3872 = vadd.f32 %v3482, %v3738
        %v3873 = vadd.f32 %v3483, %v3743
        %v3874 = vadd.f32 %v3484, %v3748
        %v3875 = vadd.f32 %v3485, %v3753
        %v3876 = vadd.f32 %v3486, %v3758
        %v3877 = vadd.f32 %v3487, %v3763
        %v3878 = vadd.f32 %v3488, %v3768
        %v3879 = vadd.f32 %v3489, %v3773
        %v3880 = vadd.f32 %v3490, %v3778
        %v3881 = vadd.f32 %v3491, %v3783
        %v3882 = vadd.f32 %v3492, %v3788
        %v3883 = vadd.f32 %v3493, %v3793
        %v3884 = vadd.f32 %v3494, %v3798
        %v3885 = vadd.f32 %v3495, %v3803
        %v3886 = vadd.f32 %v3496, %v3808
        %v3887 = vadd.f32 %v3497, %v3813
        %v3888 = vadd.f32 %v3498, %v3818
        %v3889 = vadd.f32 %v3499, %v3823
        %v3890 = vadd.f32 %v3500, %v3828
        %v3891 = vadd.f32 %v3501, %v3833
        %v3892 = vadd.f32 %v3502, %v3838
        %v3893 = vadd.f32 %v3503, %v3843
        %v3894 = vadd.f32 %v3504, %v3848
        %v3895 = vadd.f32 %v3505, %v3853
        %v3896 = vadd.f32 %v3506, %v3858
        %v3897 = vadd.f32 %v3507, %v3863
        %v3898 = vld [vmem:[%s3117 + $0x2] sm:$0xff]
        %v3899 = vld [vmem:[%s3117 + $0xa] sm:$0xff]
        %v3900 = vld [vmem:[%s3117 + $0x1a] sm:$0xff]
        %v3901 = vld [vmem:[%s3117 + $0x22] sm:$0xff]
        %v3902 = vld [vmem:[%s3117 + $0x32] sm:$0xff]
        %v3903 = vld [vmem:[%s3117 + $0x3a] sm:$0xff]
        %v3904 = vld [vmem:[%s3117 + $0x4a] sm:$0xff]
        %v3905 = vld [vmem:[%s3117 + $0x52] sm:$0xff]
        %v3906 = vld [vmem:[%s3117 + $0x62] sm:$0xff]
        %v3907 = vld [vmem:[%s3117 + $0x6a] sm:$0xff]
        %v3908 = vld [vmem:[%s3117 + $0x7a] sm:$0xff]
        %v3909 = vld [vmem:[%s3117 + $0x82] sm:$0xff]
        %v3910 = vld [vmem:[%s3117 + $0x92] sm:$0xff]
        %v3911 = vld [vmem:[%s3117 + $0x9a] sm:$0xff]
        %v3912 = vld [vmem:[%s3117 + $0xaa] sm:$0xff]
        %v3913 = vld [vmem:[%s3117 + $0xb2] sm:$0xff]
        %v3914 = vld [vmem:[%s3117 + $0xc2] sm:$0xff]
        %v3915 = vld [vmem:[%s3117 + $0xca] sm:$0xff]
        %v3916 = vld [vmem:[%s3117 + $0xda] sm:$0xff]
        %v3917 = vld [vmem:[%s3117 + $0xe2] sm:$0xff]
        %v3918 = vld [vmem:[%s3117 + $0xf2] sm:$0xff]
        %v3919 = vld [vmem:[%s3117 + $0xfa] sm:$0xff]
        %v3920 = vld [vmem:[%s3117 + $0x10a] sm:$0xff]
        %v3921 = vld [vmem:[%s3117 + $0x112] sm:$0xff]
        %v3922 = vld [vmem:[%s3117 + $0x122] sm:$0xff]
        %v3923 = vld [vmem:[%s3117 + $0x12a] sm:$0xff]
        %v3924 = vld [vmem:[%s3117 + $0x13a] sm:$0xff]
        %v3925 = vld [vmem:[%s3117 + $0x142] sm:$0xff]
        %v3926 = vld [vmem:[%s3117 + $0x152] sm:$0xff]
        %v3927 = vld [vmem:[%s3117 + $0x15a] sm:$0xff]
        %v3928 = vld [vmem:[%s3117 + $0x16a] sm:$0xff]
        %v3929 = vld [vmem:[%s3117 + $0x172] sm:$0xff]
        %s3930 = scalar_lea.vmem %s3, 256
        %v3931 = vld [vmem:[%s3930] sm:$0xff]
        %v3932 = vld [vmem:[%s3930 + $0x8] sm:$0xff]
        %v3933 = vld [vmem:[%s3930 + $0x10] sm:$0xff]
        %v3934 = vld [vmem:[%s3930 + $0x18] sm:$0xff]
        %v3936 = vsel %vm753, %v3898, 0
        %v3939 = vsel %vm753, %v3899, 0
        %v3942 = vsel %vm753, %v3900, 0
        %v3945 = vsel %vm753, %v3901, 0
        %v3948 = vsel %vm753, %v3902, 0
        %v3951 = vsel %vm753, %v3903, 0
        %v3954 = vsel %vm753, %v3904, 0
        %v3957 = vsel %vm753, %v3905, 0
        %v3960 = vsel %vm753, %v3906, 0
        %v3963 = vsel %vm753, %v3907, 0
        %v3966 = vsel %vm753, %v3908, 0
        %v3969 = vsel %vm753, %v3909, 0
        %v3972 = vsel %vm753, %v3910, 0
        %v3975 = vsel %vm753, %v3911, 0
        %v3978 = vsel %vm753, %v3912, 0
        %v3981 = vsel %vm753, %v3913, 0
        %v3984 = vsel %vm753, %v3914, 0
        %v3987 = vsel %vm753, %v3915, 0
        %v3990 = vsel %vm753, %v3916, 0
        %v3993 = vsel %vm753, %v3917, 0
        %v3996 = vsel %vm753, %v3918, 0
        %v3999 = vsel %vm753, %v3919, 0
        %v4002 = vsel %vm753, %v3920, 0
        %v4005 = vsel %vm753, %v3921, 0
        %v4008 = vsel %vm753, %v3922, 0
        %v4011 = vsel %vm753, %v3923, 0
        %v4014 = vsel %vm753, %v3924, 0
        %v4017 = vsel %vm753, %v3925, 0
        %v4020 = vsel %vm753, %v3926, 0
        %v4023 = vsel %vm753, %v3927, 0
        %v4026 = vsel %vm753, %v3928, 0
        %v4029 = vsel %vm753, %v3929, 0
        %4031 = vmatprep.subr.mxu0 0.0
        %4032 = vmatpush1.msra.mxu0 %v3931
        %4033 = vmatprep.subr.mxu0 0.0
        %4034 = vmatpush1.msra.mxu0 %v3932
        %4035 = vmatprep.subr.mxu0 0.0
        %4036 = vmatpush1.msra.mxu0 %v3933
        %4037 = vmatprep.subr.mxu0 0.0
        %4038 = vmatpush1.msra.mxu0 %v3934
        %4039 = vmatprep.subr.mxu0 0.0
        %4040 = vmatpush1.msra.mxu0 0.0
        %4041 = vmatprep.subr.mxu0 0.0
        %4042 = vmatpush1.msra.mxu0 0.0
        %4043 = vmatprep.subr.mxu0 0.0
        %4044 = vmatpush1.msra.mxu0 0.0
        %4045 = vmatprep.subr.mxu0 0.0
        %4046 = vmatpush1.msra.mxu0 0.0
        %4047 = vmatprep.subr.mxu0 0.0
        %4048 = vmatpush1.msra.mxu0 0.0
        %4049 = vmatprep.subr.mxu0 0.0
        %4050 = vmatpush1.msra.mxu0 0.0
        %4051 = vmatprep.subr.mxu0 0.0
        %4052 = vmatpush1.msra.mxu0 0.0
        %4053 = vmatprep.subr.mxu0 0.0
        %4054 = vmatpush1.msra.mxu0 0.0
        %4055 = vmatprep.subr.mxu0 0.0
        %4056 = vmatpush1.msra.mxu0 0.0
        %4057 = vmatprep.subr.mxu0 0.0
        %4058 = vmatpush1.msra.mxu0 0.0
        %4059 = vmatprep.subr.mxu0 0.0
        %4060 = vmatpush1.msra.mxu0 0.0
        %4061 = vmatprep.subr.mxu0 0.0
        %4062 = vmatpush1.msra.mxu0 0.0
        %4063 = vmatprep.subr.mxu0 0.0
        %4064 = vmatpush1.msra.mxu0 0.0
        %4065 = vmatprep.subr.mxu0 0.0
        %4066 = vmatpush1.msra.mxu0 0.0
        %4067 = vmatprep.subr.mxu0 0.0
        %4068 = vmatpush1.msra.mxu0 0.0
        %4069 = vmatprep.subr.mxu0 0.0
        %4070 = vmatpush1.msra.mxu0 0.0
        %4071 = vmatprep.subr.mxu0 0.0
        %4072 = vmatpush1.msra.mxu0 0.0
        %4073 = vmatprep.subr.mxu0 0.0
        %4074 = vmatpush1.msra.mxu0 0.0
        %4075 = vmatprep.subr.mxu0 0.0
        %4076 = vmatpush1.msra.mxu0 0.0
        %4077 = vmatprep.subr.mxu0 0.0
        %4078 = vmatpush1.msra.mxu0 0.0
        %4079 = vmatprep.subr.mxu0 0.0
        %4080 = vmatpush1.msra.mxu0 0.0
        %4081 = vmatprep.subr.mxu0 0.0
        %4082 = vmatpush1.msra.mxu0 0.0
        %4083 = vmatprep.subr.mxu0 0.0
        %4084 = vmatpush1.msra.mxu0 0.0
        %4085 = vmatprep.subr.mxu0 0.0
        %4086 = vmatpush1.msra.mxu0 0.0
        %4087 = vmatprep.subr.mxu0 0.0
        %4088 = vmatpush1.msra.mxu0 0.0
        %4089 = vmatprep.subr.mxu0 0.0
        %4090 = vmatpush1.msra.mxu0 0.0
        %4091 = vmatprep.subr.mxu0 0.0
        %4092 = vmatpush1.msra.mxu0 0.0
        %4093 = vmatprep.subr.mxu0 0.0
        %4094 = vmatpush1.msra.mxu0 0.0
        %4095 = vmatprep.mubr.f32.mxu0 0.0
        %4096 = vmatmul.mubr.f32.gmra.mrb[0].mxu0 %v3936
        %v4097 = vpop.f32.mrb[0].mxu0
        %v4098 = vadd.f32 0.0, %v4097
        %v4099 = vpop.f32.mrb[0].mxu0
        %4100 = vmatprep.mubr.f32.mxu0 0.0
        %4101 = vmatmul.mubr.f32.gmra.mrb[0].mxu0 %v3939
        %v4102 = vpop.f32.mrb[0].mxu0
        %v4103 = vadd.f32 0.0, %v4102
        %v4104 = vpop.f32.mrb[0].mxu0
        %4105 = vmatprep.mubr.f32.mxu0 0.0
        %4106 = vmatmul.mubr.f32.gmra.mrb[0].mxu0 %v3942
        %v4107 = vpop.f32.mrb[0].mxu0
        %v4108 = vadd.f32 0.0, %v4107
        %v4109 = vpop.f32.mrb[0].mxu0
        %4110 = vmatprep.mubr.f32.mxu0 0.0
        %4111 = vmatmul.mubr.f32.gmra.mrb[0].mxu0 %v3945
        %v4112 = vpop.f32.mrb[0].mxu0
        %v4113 = vadd.f32 0.0, %v4112
        %v4114 = vpop.f32.mrb[0].mxu0
        %4115 = vmatprep.mubr.f32.mxu0 0.0
        %4116 = vmatmul.mubr.f32.gmra.mrb[0].mxu0 %v3948
        %v4117 = vpop.f32.mrb[0].mxu0
        %v4118 = vadd.f32 0.0, %v4117
        %v4119 = vpop.f32.mrb[0].mxu0
        %4120 = vmatprep.mubr.f32.mxu0 0.0
        %4121 = vmatmul.mubr.f32.gmra.mrb[0].mxu0 %v3951
        %v4122 = vpop.f32.mrb[0].mxu0
        %v4123 = vadd.f32 0.0, %v4122
        %v4124 = vpop.f32.mrb[0].mxu0
        %4125 = vmatprep.mubr.f32.mxu0 0.0
        %4126 = vmatmul.mubr.f32.gmra.mrb[0].mxu0 %v3954
        %v4127 = vpop.f32.mrb[0].mxu0
        %v4128 = vadd.f32 0.0, %v4127
        %v4129 = vpop.f32.mrb[0].mxu0
        %4130 = vmatprep.mubr.f32.mxu0 0.0
        %4131 = vmatmul.mubr.f32.gmra.mrb[0].mxu0 %v3957
        %v4132 = vpop.f32.mrb[0].mxu0
        %v4133 = vadd.f32 0.0, %v4132
        %v4134 = vpop.f32.mrb[0].mxu0
        %4135 = vmatprep.mubr.f32.mxu0 0.0
        %4136 = vmatmul.mubr.f32.gmra.mrb[0].mxu0 %v3960
        %v4137 = vpop.f32.mrb[0].mxu0
        %v4138 = vadd.f32 0.0, %v4137
        %v4139 = vpop.f32.mrb[0].mxu0
        %4140 = vmatprep.mubr.f32.mxu0 0.0
        %4141 = vmatmul.mubr.f32.gmra.mrb[0].mxu0 %v3963
        %v4142 = vpop.f32.mrb[0].mxu0
        %v4143 = vadd.f32 0.0, %v4142
        %v4144 = vpop.f32.mrb[0].mxu0
        %4145 = vmatprep.mubr.f32.mxu0 0.0
        %4146 = vmatmul.mubr.f32.gmra.mrb[0].mxu0 %v3966
        %v4147 = vpop.f32.mrb[0].mxu0
        %v4148 = vadd.f32 0.0, %v4147
        %v4149 = vpop.f32.mrb[0].mxu0
        %4150 = vmatprep.mubr.f32.mxu0 0.0
        %4151 = vmatmul.mubr.f32.gmra.mrb[0].mxu0 %v3969
        %v4152 = vpop.f32.mrb[0].mxu0
        %v4153 = vadd.f32 0.0, %v4152
        %v4154 = vpop.f32.mrb[0].mxu0
        %4155 = vmatprep.mubr.f32.mxu0 0.0
        %4156 = vmatmul.mubr.f32.gmra.mrb[0].mxu0 %v3972
        %v4157 = vpop.f32.mrb[0].mxu0
        %v4158 = vadd.f32 0.0, %v4157
        %v4159 = vpop.f32.mrb[0].mxu0
        %4160 = vmatprep.mubr.f32.mxu0 0.0
        %4161 = vmatmul.mubr.f32.gmra.mrb[0].mxu0 %v3975
        %v4162 = vpop.f32.mrb[0].mxu0
        %v4163 = vadd.f32 0.0, %v4162
        %v4164 = vpop.f32.mrb[0].mxu0
        %4165 = vmatprep.mubr.f32.mxu0 0.0
        %4166 = vmatmul.mubr.f32.gmra.mrb[0].mxu0 %v3978
        %v4167 = vpop.f32.mrb[0].mxu0
        %v4168 = vadd.f32 0.0, %v4167
        %v4169 = vpop.f32.mrb[0].mxu0
        %4170 = vmatprep.mubr.f32.mxu0 0.0
        %4171 = vmatmul.mubr.f32.gmra.mrb[0].mxu0 %v3981
        %v4172 = vpop.f32.mrb[0].mxu0
        %v4173 = vadd.f32 0.0, %v4172
        %v4174 = vpop.f32.mrb[0].mxu0
        %4175 = vmatprep.mubr.f32.mxu0 0.0
        %4176 = vmatmul.mubr.f32.gmra.mrb[0].mxu0 %v3984
        %v4177 = vpop.f32.mrb[0].mxu0
        %v4178 = vadd.f32 0.0, %v4177
        %v4179 = vpop.f32.mrb[0].mxu0
        %4180 = vmatprep.mubr.f32.mxu0 0.0
        %4181 = vmatmul.mubr.f32.gmra.mrb[0].mxu0 %v3987
        %v4182 = vpop.f32.mrb[0].mxu0
        %v4183 = vadd.f32 0.0, %v4182
        %v4184 = vpop.f32.mrb[0].mxu0
        %4185 = vmatprep.mubr.f32.mxu0 0.0
        %4186 = vmatmul.mubr.f32.gmra.mrb[0].mxu0 %v3990
        %v4187 = vpop.f32.mrb[0].mxu0
        %v4188 = vadd.f32 0.0, %v4187
        %v4189 = vpop.f32.mrb[0].mxu0
        %4190 = vmatprep.mubr.f32.mxu0 0.0
        %4191 = vmatmul.mubr.f32.gmra.mrb[0].mxu0 %v3993
        %v4192 = vpop.f32.mrb[0].mxu0
        %v4193 = vadd.f32 0.0, %v4192
        %v4194 = vpop.f32.mrb[0].mxu0
        %4195 = vmatprep.mubr.f32.mxu0 0.0
        %4196 = vmatmul.mubr.f32.gmra.mrb[0].mxu0 %v3996
        %v4197 = vpop.f32.mrb[0].mxu0
        %v4198 = vadd.f32 0.0, %v4197
        %v4199 = vpop.f32.mrb[0].mxu0
        %4200 = vmatprep.mubr.f32.mxu0 0.0
        %4201 = vmatmul.mubr.f32.gmra.mrb[0].mxu0 %v3999
        %v4202 = vpop.f32.mrb[0].mxu0
        %v4203 = vadd.f32 0.0, %v4202
        %v4204 = vpop.f32.mrb[0].mxu0
        %4205 = vmatprep.mubr.f32.mxu0 0.0
        %4206 = vmatmul.mubr.f32.gmra.mrb[0].mxu0 %v4002
        %v4207 = vpop.f32.mrb[0].mxu0
        %v4208 = vadd.f32 0.0, %v4207
        %v4209 = vpop.f32.mrb[0].mxu0
        %4210 = vmatprep.mubr.f32.mxu0 0.0
        %4211 = vmatmul.mubr.f32.gmra.mrb[0].mxu0 %v4005
        %v4212 = vpop.f32.mrb[0].mxu0
        %v4213 = vadd.f32 0.0, %v4212
        %v4214 = vpop.f32.mrb[0].mxu0
        %4215 = vmatprep.mubr.f32.mxu0 0.0
        %4216 = vmatmul.mubr.f32.gmra.mrb[0].mxu0 %v4008
        %v4217 = vpop.f32.mrb[0].mxu0
        %v4218 = vadd.f32 0.0, %v4217
        %v4219 = vpop.f32.mrb[0].mxu0
        %4220 = vmatprep.mubr.f32.mxu0 0.0
        %4221 = vmatmul.mubr.f32.gmra.mrb[0].mxu0 %v4011
        %v4222 = vpop.f32.mrb[0].mxu0
        %v4223 = vadd.f32 0.0, %v4222
        %v4224 = vpop.f32.mrb[0].mxu0
        %4225 = vmatprep.mubr.f32.mxu0 0.0
        %4226 = vmatmul.mubr.f32.gmra.mrb[0].mxu0 %v4014
        %v4227 = vpop.f32.mrb[0].mxu0
        %v4228 = vadd.f32 0.0, %v4227
        %v4229 = vpop.f32.mrb[0].mxu0
        %4230 = vmatprep.mubr.f32.mxu0 0.0
        %4231 = vmatmul.mubr.f32.gmra.mrb[0].mxu0 %v4017
        %v4232 = vpop.f32.mrb[0].mxu0
        %v4233 = vadd.f32 0.0, %v4232
        %v4234 = vpop.f32.mrb[0].mxu0
        %4235 = vmatprep.mubr.f32.mxu0 0.0
        %4236 = vmatmul.mubr.f32.gmra.mrb[0].mxu0 %v4020
        %v4237 = vpop.f32.mrb[0].mxu0
        %v4238 = vadd.f32 0.0, %v4237
        %v4239 = vpop.f32.mrb[0].mxu0
        %4240 = vmatprep.mubr.f32.mxu0 0.0
        %4241 = vmatmul.mubr.f32.gmra.mrb[0].mxu0 %v4023
        %v4242 = vpop.f32.mrb[0].mxu0
        %v4243 = vadd.f32 0.0, %v4242
        %v4244 = vpop.f32.mrb[0].mxu0
        %4245 = vmatprep.mubr.f32.mxu0 0.0
        %4246 = vmatmul.mubr.f32.gmra.mrb[0].mxu0 %v4026
        %v4247 = vpop.f32.mrb[0].mxu0
        %v4248 = vadd.f32 0.0, %v4247
        %v4249 = vpop.f32.mrb[0].mxu0
        %4250 = vmatprep.mubr.f32.mxu0 0.0
        %4251 = vmatmul.mubr.f32.gmra.mrb[0].mxu0 %v4029
        %v4252 = vpop.f32.mrb[0].mxu0
        %v4253 = vadd.f32 0.0, %v4252
        %v4254 = vpop.f32.mrb[0].mxu0
        %4255 = vdwg.mxu0
        %v4256 = vadd.f32 %v3866, %v4098
        %v4257 = vadd.f32 %v3867, %v4103
        %v4258 = vadd.f32 %v3868, %v4108
        %v4259 = vadd.f32 %v3869, %v4113
        %v4260 = vadd.f32 %v3870, %v4118
        %v4261 = vadd.f32 %v3871, %v4123
        %v4262 = vadd.f32 %v3872, %v4128
        %v4263 = vadd.f32 %v3873, %v4133
        %v4264 = vadd.f32 %v3874, %v4138
        %v4265 = vadd.f32 %v3875, %v4143
        %v4266 = vadd.f32 %v3876, %v4148
        %v4267 = vadd.f32 %v3877, %v4153
        %v4268 = vadd.f32 %v3878, %v4158
        %v4269 = vadd.f32 %v3879, %v4163
        %v4270 = vadd.f32 %v3880, %v4168
        %v4271 = vadd.f32 %v3881, %v4173
        %v4272 = vadd.f32 %v3882, %v4178
        %v4273 = vadd.f32 %v3883, %v4183
        %v4274 = vadd.f32 %v3884, %v4188
        %v4275 = vadd.f32 %v3885, %v4193
        %v4276 = vadd.f32 %v3886, %v4198
        %v4277 = vadd.f32 %v3887, %v4203
        %v4278 = vadd.f32 %v3888, %v4208
        %v4279 = vadd.f32 %v3889, %v4213
        %v4280 = vadd.f32 %v3890, %v4218
        %v4281 = vadd.f32 %v3891, %v4223
        %v4282 = vadd.f32 %v3892, %v4228
        %v4283 = vadd.f32 %v3893, %v4233
        %v4284 = vadd.f32 %v3894, %v4238
        %v4285 = vadd.f32 %v3895, %v4243
        %v4286 = vadd.f32 %v3896, %v4248
        %v4287 = vadd.f32 %v3897, %v4253
        %v4288 = vld [vmem:[%s4] sm:$0x1]
        %v4290 = vlaneseq
        %v4291 = vshrl.u32 %v4290, 7
        %v4292 = vsub.s32 0, %v4291
        %v4293 = vrot.slane %v4288, %v4292
        %v4295 = vadd.f32 %v4256, %v4293
        %v4296 = vadd.f32 %v4257, %v4293
        %v4297 = vadd.f32 %v4258, %v4293
        %v4298 = vadd.f32 %v4259, %v4293
        %v4299 = vadd.f32 %v4260, %v4293
        %v4300 = vadd.f32 %v4261, %v4293
        %v4301 = vadd.f32 %v4262, %v4293
        %v4302 = vadd.f32 %v4263, %v4293
        %v4303 = vadd.f32 %v4264, %v4293
        %v4304 = vadd.f32 %v4265, %v4293
        %v4305 = vadd.f32 %v4266, %v4293
        %v4306 = vadd.f32 %v4267, %v4293
        %v4307 = vadd.f32 %v4268, %v4293
        %v4308 = vadd.f32 %v4269, %v4293
        %v4309 = vadd.f32 %v4270, %v4293
        %v4310 = vadd.f32 %v4271, %v4293
        %v4311 = vadd.f32 %v4272, %v4293
        %v4312 = vadd.f32 %v4273, %v4293
        %v4313 = vadd.f32 %v4274, %v4293
        %v4314 = vadd.f32 %v4275, %v4293
        %v4315 = vadd.f32 %v4276, %v4293
        %v4316 = vadd.f32 %v4277, %v4293
        %v4317 = vadd.f32 %v4278, %v4293
        %v4318 = vadd.f32 %v4279, %v4293
        %v4319 = vadd.f32 %v4280, %v4293
        %v4320 = vadd.f32 %v4281, %v4293
        %v4321 = vadd.f32 %v4282, %v4293
        %v4322 = vadd.f32 %v4283, %v4293
        %v4323 = vadd.f32 %v4284, %v4293
        %v4324 = vadd.f32 %v4285, %v4293
        %v4325 = vadd.f32 %v4286, %v4293
        %v4326 = vadd.f32 %v4287, %v4293
        %v4327 = vld [vmem:[%s5] sm:$0xff]
        %v4328 = vld [vmem:[%s5 + $0x8] sm:$0xff]
        %v4329 = vld [vmem:[%s5 + $0x10] sm:$0xff]
        %v4330 = vld [vmem:[%s5 + $0x18] sm:$0xff]
        %v4331 = vld [vmem:[%s6] sm:$0x1]
        %s4332 = sld [smem:[#allocation3]]
        %v4334 = vlaneseq
        %v4335 = vshrl.u32 %v4334, 7
        %v4336 = vsub.s32 0, %v4335
        %v4337 = vrot.slane %v4331, %v4336
        %v4340 = vsel %vm753, %v4295, 0
        %v4343 = vsel %vm753, %v4296, 0
        %v4346 = vsel %vm753, %v4297, 0
        %v4349 = vsel %vm753, %v4298, 0
        %v4352 = vsel %vm753, %v4299, 0
        %v4355 = vsel %vm753, %v4300, 0
        %v4358 = vsel %vm753, %v4301, 0
        %v4361 = vsel %vm753, %v4302, 0
        %v4364 = vsel %vm753, %v4303, 0
        %v4367 = vsel %vm753, %v4304, 0
        %v4370 = vsel %vm753, %v4305, 0
        %v4373 = vsel %vm753, %v4306, 0
        %v4376 = vsel %vm753, %v4307, 0
        %v4379 = vsel %vm753, %v4308, 0
        %v4382 = vsel %vm753, %v4309, 0
        %v4385 = vsel %vm753, %v4310, 0
        %v4388 = vsel %vm753, %v4311, 0
        %v4391 = vsel %vm753, %v4312, 0
        %v4394 = vsel %vm753, %v4313, 0
        %v4397 = vsel %vm753, %v4314, 0
        %v4400 = vsel %vm753, %v4315, 0
        %v4403 = vsel %vm753, %v4316, 0
        %v4406 = vsel %vm753, %v4317, 0
        %v4409 = vsel %vm753, %v4318, 0
        %v4412 = vsel %vm753, %v4319, 0
        %v4415 = vsel %vm753, %v4320, 0
        %v4418 = vsel %vm753, %v4321, 0
        %v4421 = vsel %vm753, %v4322, 0
        %v4424 = vsel %vm753, %v4323, 0
        %v4427 = vsel %vm753, %v4324, 0
        %v4430 = vsel %vm753, %v4325, 0
        %v4433 = vsel %vm753, %v4326, 0
        %4435 = vmatprep.subr.mxu0 0.0
        %4436 = vmatpush1.msra.mxu0 %v4327
        %4437 = vmatprep.subr.mxu0 0.0
        %4438 = vmatpush1.msra.mxu0 %v4328
        %4439 = vmatprep.subr.mxu0 0.0
        %4440 = vmatpush1.msra.mxu0 %v4329
        %4441 = vmatprep.subr.mxu0 0.0
        %4442 = vmatpush1.msra.mxu0 %v4330
        %4443 = vmatprep.subr.mxu0 0.0
        %4444 = vmatpush1.msra.mxu0 0.0
        %4445 = vmatprep.subr.mxu0 0.0
        %4446 = vmatpush1.msra.mxu0 0.0
        %4447 = vmatprep.subr.mxu0 0.0
        %4448 = vmatpush1.msra.mxu0 0.0
        %4449 = vmatprep.subr.mxu0 0.0
        %4450 = vmatpush1.msra.mxu0 0.0
        %4451 = vmatprep.subr.mxu0 0.0
        %4452 = vmatpush1.msra.mxu0 0.0
        %4453 = vmatprep.subr.mxu0 0.0
        %4454 = vmatpush1.msra.mxu0 0.0
        %4455 = vmatprep.subr.mxu0 0.0
        %4456 = vmatpush1.msra.mxu0 0.0
        %4457 = vmatprep.subr.mxu0 0.0
        %4458 = vmatpush1.msra.mxu0 0.0
        %4459 = vmatprep.subr.mxu0 0.0
        %4460 = vmatpush1.msra.mxu0 0.0
        %4461 = vmatprep.subr.mxu0 0.0
        %4462 = vmatpush1.msra.mxu0 0.0
        %4463 = vmatprep.subr.mxu0 0.0
        %4464 = vmatpush1.msra.mxu0 0.0
        %4465 = vmatprep.subr.mxu0 0.0
        %4466 = vmatpush1.msra.mxu0 0.0
        %4467 = vmatprep.subr.mxu0 0.0
        %4468 = vmatpush1.msra.mxu0 0.0
        %4469 = vmatprep.subr.mxu0 0.0
        %4470 = vmatpush1.msra.mxu0 0.0
        %4471 = vmatprep.subr.mxu0 0.0
        %4472 = vmatpush1.msra.mxu0 0.0
        %4473 = vmatprep.subr.mxu0 0.0
        %4474 = vmatpush1.msra.mxu0 0.0
        %4475 = vmatprep.subr.mxu0 0.0
        %4476 = vmatpush1.msra.mxu0 0.0
        %4477 = vmatprep.subr.mxu0 0.0
        %4478 = vmatpush1.msra.mxu0 0.0
        %4479 = vmatprep.subr.mxu0 0.0
        %4480 = vmatpush1.msra.mxu0 0.0
        %4481 = vmatprep.subr.mxu0 0.0
        %4482 = vmatpush1.msra.mxu0 0.0
        %4483 = vmatprep.subr.mxu0 0.0
        %4484 = vmatpush1.msra.mxu0 0.0
        %4485 = vmatprep.subr.mxu0 0.0
        %4486 = vmatpush1.msra.mxu0 0.0
        %4487 = vmatprep.subr.mxu0 0.0
        %4488 = vmatpush1.msra.mxu0 0.0
        %4489 = vmatprep.subr.mxu0 0.0
        %4490 = vmatpush1.msra.mxu0 0.0
        %4491 = vmatprep.subr.mxu0 0.0
        %4492 = vmatpush1.msra.mxu0 0.0
        %4493 = vmatprep.subr.mxu0 0.0
        %4494 = vmatpush1.msra.mxu0 0.0
        %4495 = vmatprep.subr.mxu0 0.0
        %4496 = vmatpush1.msra.mxu0 0.0
        %4497 = vmatprep.subr.mxu0 0.0
        %4498 = vmatpush1.msra.mxu0 0.0
        %4499 = vmatprep.mubr.f32.mxu0 0.0
        %4500 = vmatmul.mubr.f32.gmra.mrb[0].mxu0 %v4340
        %v4501 = vpop.f32.mrb[0].mxu0
        %v4502 = vadd.f32 %v4337, %v4501
        %v4503 = vpop.f32.mrb[0].mxu0
        %4504 = vmatprep.mubr.f32.mxu0 0.0
        %4505 = vmatmul.mubr.f32.gmra.mrb[0].mxu0 %v4343
        %v4506 = vpop.f32.mrb[0].mxu0
        %v4507 = vadd.f32 %v4337, %v4506
        %v4508 = vpop.f32.mrb[0].mxu0
        %4509 = vmatprep.mubr.f32.mxu0 0.0
        %4510 = vmatmul.mubr.f32.gmra.mrb[0].mxu0 %v4346
        %v4511 = vpop.f32.mrb[0].mxu0
        %v4512 = vadd.f32 %v4337, %v4511
        %v4513 = vpop.f32.mrb[0].mxu0
        %4514 = vmatprep.mubr.f32.mxu0 0.0
        %4515 = vmatmul.mubr.f32.gmra.mrb[0].mxu0 %v4349
        %v4516 = vpop.f32.mrb[0].mxu0
        %v4517 = vadd.f32 %v4337, %v4516
        %v4518 = vpop.f32.mrb[0].mxu0
        %4519 = vmatprep.mubr.f32.mxu0 0.0
        %4520 = vmatmul.mubr.f32.gmra.mrb[0].mxu0 %v4352
        %v4521 = vpop.f32.mrb[0].mxu0
        %v4522 = vadd.f32 %v4337, %v4521
        %v4523 = vpop.f32.mrb[0].mxu0
        %4524 = vmatprep.mubr.f32.mxu0 0.0
        %4525 = vmatmul.mubr.f32.gmra.mrb[0].mxu0 %v4355
        %v4526 = vpop.f32.mrb[0].mxu0
        %v4527 = vadd.f32 %v4337, %v4526
        %v4528 = vpop.f32.mrb[0].mxu0
        %4529 = vmatprep.mubr.f32.mxu0 0.0
        %4530 = vmatmul.mubr.f32.gmra.mrb[0].mxu0 %v4358
        %v4531 = vpop.f32.mrb[0].mxu0
        %v4532 = vadd.f32 %v4337, %v4531
        %v4533 = vpop.f32.mrb[0].mxu0
        %4534 = vmatprep.mubr.f32.mxu0 0.0
        %4535 = vmatmul.mubr.f32.gmra.mrb[0].mxu0 %v4361
        %v4536 = vpop.f32.mrb[0].mxu0
        %v4537 = vadd.f32 %v4337, %v4536
        %v4538 = vpop.f32.mrb[0].mxu0
        %4539 = vmatprep.mubr.f32.mxu0 0.0
        %4540 = vmatmul.mubr.f32.gmra.mrb[0].mxu0 %v4364
        %v4541 = vpop.f32.mrb[0].mxu0
        %v4542 = vadd.f32 %v4337, %v4541
        %v4543 = vpop.f32.mrb[0].mxu0
        %4544 = vmatprep.mubr.f32.mxu0 0.0
        %4545 = vmatmul.mubr.f32.gmra.mrb[0].mxu0 %v4367
        %v4546 = vpop.f32.mrb[0].mxu0
        %v4547 = vadd.f32 %v4337, %v4546
        %v4548 = vpop.f32.mrb[0].mxu0
        %4549 = vmatprep.mubr.f32.mxu0 0.0
        %4550 = vmatmul.mubr.f32.gmra.mrb[0].mxu0 %v4370
        %v4551 = vpop.f32.mrb[0].mxu0
        %v4552 = vadd.f32 %v4337, %v4551
        %v4553 = vpop.f32.mrb[0].mxu0
        %4554 = vmatprep.mubr.f32.mxu0 0.0
        %4555 = vmatmul.mubr.f32.gmra.mrb[0].mxu0 %v4373
        %v4556 = vpop.f32.mrb[0].mxu0
        %v4557 = vadd.f32 %v4337, %v4556
        %v4558 = vpop.f32.mrb[0].mxu0
        %4559 = vmatprep.mubr.f32.mxu0 0.0
        %4560 = vmatmul.mubr.f32.gmra.mrb[0].mxu0 %v4376
        %v4561 = vpop.f32.mrb[0].mxu0
        %v4562 = vadd.f32 %v4337, %v4561
        %v4563 = vpop.f32.mrb[0].mxu0
        %4564 = vmatprep.mubr.f32.mxu0 0.0
        %4565 = vmatmul.mubr.f32.gmra.mrb[0].mxu0 %v4379
        %v4566 = vpop.f32.mrb[0].mxu0
        %v4567 = vadd.f32 %v4337, %v4566
        %v4568 = vpop.f32.mrb[0].mxu0
        %4569 = vmatprep.mubr.f32.mxu0 0.0
        %4570 = vmatmul.mubr.f32.gmra.mrb[0].mxu0 %v4382
        %v4571 = vpop.f32.mrb[0].mxu0
        %v4572 = vadd.f32 %v4337, %v4571
        %v4573 = vpop.f32.mrb[0].mxu0
        %4574 = vmatprep.mubr.f32.mxu0 0.0
        %4575 = vmatmul.mubr.f32.gmra.mrb[0].mxu0 %v4385
        %v4576 = vpop.f32.mrb[0].mxu0
        %v4577 = vadd.f32 %v4337, %v4576
        %v4578 = vpop.f32.mrb[0].mxu0
        %4579 = vmatprep.mubr.f32.mxu0 0.0
        %4580 = vmatmul.mubr.f32.gmra.mrb[0].mxu0 %v4388
        %v4581 = vpop.f32.mrb[0].mxu0
        %v4582 = vadd.f32 %v4337, %v4581
        %v4583 = vpop.f32.mrb[0].mxu0
        %4584 = vmatprep.mubr.f32.mxu0 0.0
        %4585 = vmatmul.mubr.f32.gmra.mrb[0].mxu0 %v4391
        %v4586 = vpop.f32.mrb[0].mxu0
        %v4587 = vadd.f32 %v4337, %v4586
        %v4588 = vpop.f32.mrb[0].mxu0
        %4589 = vmatprep.mubr.f32.mxu0 0.0
        %4590 = vmatmul.mubr.f32.gmra.mrb[0].mxu0 %v4394
        %v4591 = vpop.f32.mrb[0].mxu0
        %v4592 = vadd.f32 %v4337, %v4591
        %v4593 = vpop.f32.mrb[0].mxu0
        %4594 = vmatprep.mubr.f32.mxu0 0.0
        %4595 = vmatmul.mubr.f32.gmra.mrb[0].mxu0 %v4397
        %v4596 = vpop.f32.mrb[0].mxu0
        %v4597 = vadd.f32 %v4337, %v4596
        %v4598 = vpop.f32.mrb[0].mxu0
        %4599 = vmatprep.mubr.f32.mxu0 0.0
        %4600 = vmatmul.mubr.f32.gmra.mrb[0].mxu0 %v4400
        %v4601 = vpop.f32.mrb[0].mxu0
        %v4602 = vadd.f32 %v4337, %v4601
        %v4603 = vpop.f32.mrb[0].mxu0
        %4604 = vmatprep.mubr.f32.mxu0 0.0
        %4605 = vmatmul.mubr.f32.gmra.mrb[0].mxu0 %v4403
        %v4606 = vpop.f32.mrb[0].mxu0
        %v4607 = vadd.f32 %v4337, %v4606
        %v4608 = vpop.f32.mrb[0].mxu0
        %4609 = vmatprep.mubr.f32.mxu0 0.0
        %4610 = vmatmul.mubr.f32.gmra.mrb[0].mxu0 %v4406
        %v4611 = vpop.f32.mrb[0].mxu0
        %v4612 = vadd.f32 %v4337, %v4611
        %v4613 = vpop.f32.mrb[0].mxu0
        %4614 = vmatprep.mubr.f32.mxu0 0.0
        %4615 = vmatmul.mubr.f32.gmra.mrb[0].mxu0 %v4409
        %v4616 = vpop.f32.mrb[0].mxu0
        %v4617 = vadd.f32 %v4337, %v4616
        %v4618 = vpop.f32.mrb[0].mxu0
        %4619 = vmatprep.mubr.f32.mxu0 0.0
        %4620 = vmatmul.mubr.f32.gmra.mrb[0].mxu0 %v4412
        %v4621 = vpop.f32.mrb[0].mxu0
        %v4622 = vadd.f32 %v4337, %v4621
        %v4623 = vpop.f32.mrb[0].mxu0
        %4624 = vmatprep.mubr.f32.mxu0 0.0
        %4625 = vmatmul.mubr.f32.gmra.mrb[0].mxu0 %v4415
        %v4626 = vpop.f32.mrb[0].mxu0
        %v4627 = vadd.f32 %v4337, %v4626
        %v4628 = vpop.f32.mrb[0].mxu0
        %4629 = vmatprep.mubr.f32.mxu0 0.0
        %4630 = vmatmul.mubr.f32.gmra.mrb[0].mxu0 %v4418
        %v4631 = vpop.f32.mrb[0].mxu0
        %v4632 = vadd.f32 %v4337, %v4631
        %v4633 = vpop.f32.mrb[0].mxu0
        %4634 = vmatprep.mubr.f32.mxu0 0.0
        %4635 = vmatmul.mubr.f32.gmra.mrb[0].mxu0 %v4421
        %v4636 = vpop.f32.mrb[0].mxu0
        %v4637 = vadd.f32 %v4337, %v4636
        %v4638 = vpop.f32.mrb[0].mxu0
        %4639 = vmatprep.mubr.f32.mxu0 0.0
        %4640 = vmatmul.mubr.f32.gmra.mrb[0].mxu0 %v4424
        %v4641 = vpop.f32.mrb[0].mxu0
        %v4642 = vadd.f32 %v4337, %v4641
        %v4643 = vpop.f32.mrb[0].mxu0
        %4644 = vmatprep.mubr.f32.mxu0 0.0
        %4645 = vmatmul.mubr.f32.gmra.mrb[0].mxu0 %v4427
        %v4646 = vpop.f32.mrb[0].mxu0
        %v4647 = vadd.f32 %v4337, %v4646
        %v4648 = vpop.f32.mrb[0].mxu0
        %4649 = vmatprep.mubr.f32.mxu0 0.0
        %4650 = vmatmul.mubr.f32.gmra.mrb[0].mxu0 %v4430
        %v4651 = vpop.f32.mrb[0].mxu0
        %v4652 = vadd.f32 %v4337, %v4651
        %v4653 = vpop.f32.mrb[0].mxu0
        %4654 = vmatprep.mubr.f32.mxu0 0.0
        %4655 = vmatmul.mubr.f32.gmra.mrb[0].mxu0 %v4433
        %v4656 = vpop.f32.mrb[0].mxu0
        %v4657 = vadd.f32 %v4337, %v4656
        %v4658 = vpop.f32.mrb[0].mxu0
        %4659 = vdwg.mxu0
        %4662 = vrot.lane.b32.xlu0 %v4502, 124
        %v4663 = vpop.permute.xlu0 %4662
        %4664 = vrot.lane.b32.xlu0 %v4507, 124
        %v4665 = vpop.permute.xlu0 %4664
        %v4666 = vsel %vm427, %v4502, 0
        %v4668 = vsel %vm427, %v4507, 0
        %v4670 = vsel %vm427, %v4663, 0
        %v4672 = vsel %vm427, %v4665, 0
        %4674 = vmatprep.subr.mxu0 0.0
        %4675 = vmatpush1.xpose.msra.mxu0 %v4670
        %4676 = vmatprep.subr.mxu0 0.0
        %4677 = vmatpush1.xpose.msra.mxu0 %v4672
        %4678 = vmatprep.subr.mxu0 0.0
        %4679 = vmatpush1.xpose.msra.mxu0 0.0
        %4680 = vmatprep.subr.mxu0 0.0
        %4681 = vmatpush1.xpose.msra.mxu0 0.0
        %4682 = vmatprep.subr.mxu0 0.0
        %4683 = vmatpush1.xpose.msra.mxu0 0.0
        %4684 = vmatprep.subr.mxu0 0.0
        %4685 = vmatpush1.xpose.msra.mxu0 0.0
        %4686 = vmatprep.subr.mxu0 0.0
        %4687 = vmatpush1.xpose.msra.mxu0 0.0
        %4688 = vmatprep.subr.mxu0 0.0
        %4689 = vmatpush1.xpose.msra.mxu0 0.0
        %4690 = vmatprep.subr.mxu0 0.0
        %4691 = vmatpush1.xpose.msra.mxu0 0.0
        %4692 = vmatprep.subr.mxu0 0.0
        %4693 = vmatpush1.xpose.msra.mxu0 0.0
        %4694 = vmatprep.subr.mxu0 0.0
        %4695 = vmatpush1.xpose.msra.mxu0 0.0
        %4696 = vmatprep.subr.mxu0 0.0
        %4697 = vmatpush1.xpose.msra.mxu0 0.0
        %4698 = vmatprep.subr.mxu0 0.0
        %4699 = vmatpush1.xpose.msra.mxu0 0.0
        %4700 = vmatprep.subr.mxu0 0.0
        %4701 = vmatpush1.xpose.msra.mxu0 0.0
        %4702 = vmatprep.subr.mxu0 0.0
        %4703 = vmatpush1.xpose.msra.mxu0 0.0
        %4704 = vmatprep.subr.mxu0 0.0
        %4705 = vmatpush1.xpose.msra.mxu0 0.0
        %4706 = vmatprep.subr.mxu0 0.0
        %4707 = vmatpush1.xpose.msra.mxu0 0.0
        %4708 = vmatprep.subr.mxu0 0.0
        %4709 = vmatpush1.xpose.msra.mxu0 0.0
        %4710 = vmatprep.subr.mxu0 0.0
        %4711 = vmatpush1.xpose.msra.mxu0 0.0
        %4712 = vmatprep.subr.mxu0 0.0
        %4713 = vmatpush1.xpose.msra.mxu0 0.0
        %4714 = vmatprep.subr.mxu0 0.0
        %4715 = vmatpush1.xpose.msra.mxu0 0.0
        %4716 = vmatprep.subr.mxu0 0.0
        %4717 = vmatpush1.xpose.msra.mxu0 0.0
        %4718 = vmatprep.subr.mxu0 0.0
        %4719 = vmatpush1.xpose.msra.mxu0 0.0
        %4720 = vmatprep.subr.mxu0 0.0
        %4721 = vmatpush1.xpose.msra.mxu0 0.0
        %4722 = vmatprep.subr.mxu0 0.0
        %4723 = vmatpush1.xpose.msra.mxu0 0.0
        %4724 = vmatprep.subr.mxu0 0.0
        %4725 = vmatpush1.xpose.msra.mxu0 0.0
        %4726 = vmatprep.subr.mxu0 0.0
        %4727 = vmatpush1.xpose.msra.mxu0 0.0
        %4728 = vmatprep.subr.mxu0 0.0
        %4729 = vmatpush1.xpose.msra.mxu0 0.0
        %4730 = vmatprep.subr.mxu0 0.0
        %4731 = vmatpush1.xpose.msra.mxu0 0.0
        %4732 = vmatprep.subr.mxu0 0.0
        %4733 = vmatpush1.xpose.msra.mxu0 0.0
        %4734 = vmatprep.subr.mxu0 0.0
        %4735 = vmatpush1.xpose.msra.mxu0 0.0
        %4736 = vmatprep.subr.mxu0 0.0
        %4737 = vmatpush1.xpose.msra.mxu0 0.0
        %4738 = vmatprep.mubr.f32.mxu0 0.0
        %4739 = vmatmul.mubr.f32.gmra.mrb[0].mxu0 %v4666
        %v4740 = vpop.f32.mrb[0].mxu0
        %v4741 = vadd.f32 0.0, %v4740
        %v4742 = vpop.f32.mrb[0].mxu0
        %4743 = vmatprep.mubr.f32.mxu0 0.0
        %4744 = vmatmul.mubr.f32.gmra.mrb[0].mxu0 %v4668
        %v4745 = vpop.f32.mrb[0].mxu0
        %v4746 = vadd.f32 0.0, %v4745
        %v4747 = vpop.f32.mrb[0].mxu0
        %4748 = vdwg.mxu0
        %4751 = vrot.lane.b32.xlu0 %v4512, 124
        %v4752 = vpop.permute.xlu0 %4751
        %4753 = vrot.lane.b32.xlu0 %v4517, 124
        %v4754 = vpop.permute.xlu0 %4753
        %v4755 = vsel %vm427, %v4512, 0
        %v4757 = vsel %vm427, %v4517, 0
        %v4759 = vsel %vm427, %v4752, 0
        %v4761 = vsel %vm427, %v4754, 0
        %4763 = vmatprep.subr.mxu0 0.0
        %4764 = vmatpush1.xpose.msra.mxu0 %v4759
        %4765 = vmatprep.subr.mxu0 0.0
        %4766 = vmatpush1.xpose.msra.mxu0 %v4761
        %4767 = vmatprep.subr.mxu0 0.0
        %4768 = vmatpush1.xpose.msra.mxu0 0.0
        %4769 = vmatprep.subr.mxu0 0.0
        %4770 = vmatpush1.xpose.msra.mxu0 0.0
        %4771 = vmatprep.subr.mxu0 0.0
        %4772 = vmatpush1.xpose.msra.mxu0 0.0
        %4773 = vmatprep.subr.mxu0 0.0
        %4774 = vmatpush1.xpose.msra.mxu0 0.0
        %4775 = vmatprep.subr.mxu0 0.0
        %4776 = vmatpush1.xpose.msra.mxu0 0.0
        %4777 = vmatprep.subr.mxu0 0.0
        %4778 = vmatpush1.xpose.msra.mxu0 0.0
        %4779 = vmatprep.subr.mxu0 0.0
        %4780 = vmatpush1.xpose.msra.mxu0 0.0
        %4781 = vmatprep.subr.mxu0 0.0
        %4782 = vmatpush1.xpose.msra.mxu0 0.0
        %4783 = vmatprep.subr.mxu0 0.0
        %4784 = vmatpush1.xpose.msra.mxu0 0.0
        %4785 = vmatprep.subr.mxu0 0.0
        %4786 = vmatpush1.xpose.msra.mxu0 0.0
        %4787 = vmatprep.subr.mxu0 0.0
        %4788 = vmatpush1.xpose.msra.mxu0 0.0
        %4789 = vmatprep.subr.mxu0 0.0
        %4790 = vmatpush1.xpose.msra.mxu0 0.0
        %4791 = vmatprep.subr.mxu0 0.0
        %4792 = vmatpush1.xpose.msra.mxu0 0.0
        %4793 = vmatprep.subr.mxu0 0.0
        %4794 = vmatpush1.xpose.msra.mxu0 0.0
        %4795 = vmatprep.subr.mxu0 0.0
        %4796 = vmatpush1.xpose.msra.mxu0 0.0
        %4797 = vmatprep.subr.mxu0 0.0
        %4798 = vmatpush1.xpose.msra.mxu0 0.0
        %4799 = vmatprep.subr.mxu0 0.0
        %4800 = vmatpush1.xpose.msra.mxu0 0.0
        %4801 = vmatprep.subr.mxu0 0.0
        %4802 = vmatpush1.xpose.msra.mxu0 0.0
        %4803 = vmatprep.subr.mxu0 0.0
        %4804 = vmatpush1.xpose.msra.mxu0 0.0
        %4805 = vmatprep.subr.mxu0 0.0
        %4806 = vmatpush1.xpose.msra.mxu0 0.0
        %4807 = vmatprep.subr.mxu0 0.0
        %4808 = vmatpush1.xpose.msra.mxu0 0.0
        %4809 = vmatprep.subr.mxu0 0.0
        %4810 = vmatpush1.xpose.msra.mxu0 0.0
        %4811 = vmatprep.subr.mxu0 0.0
        %4812 = vmatpush1.xpose.msra.mxu0 0.0
        %4813 = vmatprep.subr.mxu0 0.0
        %4814 = vmatpush1.xpose.msra.mxu0 0.0
        %4815 = vmatprep.subr.mxu0 0.0
        %4816 = vmatpush1.xpose.msra.mxu0 0.0
        %4817 = vmatprep.subr.mxu0 0.0
        %4818 = vmatpush1.xpose.msra.mxu0 0.0
        %4819 = vmatprep.subr.mxu0 0.0
        %4820 = vmatpush1.xpose.msra.mxu0 0.0
        %4821 = vmatprep.subr.mxu0 0.0
        %4822 = vmatpush1.xpose.msra.mxu0 0.0
        %4823 = vmatprep.subr.mxu0 0.0
        %4824 = vmatpush1.xpose.msra.mxu0 0.0
        %4825 = vmatprep.subr.mxu0 0.0
        %4826 = vmatpush1.xpose.msra.mxu0 0.0
        %4827 = vmatprep.mubr.f32.mxu0 0.0
        %4828 = vmatmul.mubr.f32.gmra.mrb[0].mxu0 %v4755
        %v4829 = vpop.f32.mrb[0].mxu0
        %v4830 = vadd.f32 0.0, %v4829
        %v4831 = vpop.f32.mrb[0].mxu0
        %4832 = vmatprep.mubr.f32.mxu0 0.0
        %4833 = vmatmul.mubr.f32.gmra.mrb[0].mxu0 %v4757
        %v4834 = vpop.f32.mrb[0].mxu0
        %v4835 = vadd.f32 0.0, %v4834
        %v4836 = vpop.f32.mrb[0].mxu0
        %4837 = vdwg.mxu0
        %4840 = vrot.lane.b32.xlu0 %v4522, 124
        %v4841 = vpop.permute.xlu0 %4840
        %4842 = vrot.lane.b32.xlu0 %v4527, 124
        %v4843 = vpop.permute.xlu0 %4842
        %v4844 = vsel %vm427, %v4522, 0
        %v4846 = vsel %vm427, %v4527, 0
        %v4848 = vsel %vm427, %v4841, 0
        %v4850 = vsel %vm427, %v4843, 0
        %4852 = vmatprep.subr.mxu0 0.0
        %4853 = vmatpush1.xpose.msra.mxu0 %v4848
        %4854 = vmatprep.subr.mxu0 0.0
        %4855 = vmatpush1.xpose.msra.mxu0 %v4850
        %4856 = vmatprep.subr.mxu0 0.0
        %4857 = vmatpush1.xpose.msra.mxu0 0.0
        %4858 = vmatprep.subr.mxu0 0.0
        %4859 = vmatpush1.xpose.msra.mxu0 0.0
        %4860 = vmatprep.subr.mxu0 0.0
        %4861 = vmatpush1.xpose.msra.mxu0 0.0
        %4862 = vmatprep.subr.mxu0 0.0
        %4863 = vmatpush1.xpose.msra.mxu0 0.0
        %4864 = vmatprep.subr.mxu0 0.0
        %4865 = vmatpush1.xpose.msra.mxu0 0.0
        %4866 = vmatprep.subr.mxu0 0.0
        %4867 = vmatpush1.xpose.msra.mxu0 0.0
        %4868 = vmatprep.subr.mxu0 0.0
        %4869 = vmatpush1.xpose.msra.mxu0 0.0
        %4870 = vmatprep.subr.mxu0 0.0
        %4871 = vmatpush1.xpose.msra.mxu0 0.0
        %4872 = vmatprep.subr.mxu0 0.0
        %4873 = vmatpush1.xpose.msra.mxu0 0.0
        %4874 = vmatprep.subr.mxu0 0.0
        %4875 = vmatpush1.xpose.msra.mxu0 0.0
        %4876 = vmatprep.subr.mxu0 0.0
        %4877 = vmatpush1.xpose.msra.mxu0 0.0
        %4878 = vmatprep.subr.mxu0 0.0
        %4879 = vmatpush1.xpose.msra.mxu0 0.0
        %4880 = vmatprep.subr.mxu0 0.0
        %4881 = vmatpush1.xpose.msra.mxu0 0.0
        %4882 = vmatprep.subr.mxu0 0.0
        %4883 = vmatpush1.xpose.msra.mxu0 0.0
        %4884 = vmatprep.subr.mxu0 0.0
        %4885 = vmatpush1.xpose.msra.mxu0 0.0
        %4886 = vmatprep.subr.mxu0 0.0
        %4887 = vmatpush1.xpose.msra.mxu0 0.0
        %4888 = vmatprep.subr.mxu0 0.0
        %4889 = vmatpush1.xpose.msra.mxu0 0.0
        %4890 = vmatprep.subr.mxu0 0.0
        %4891 = vmatpush1.xpose.msra.mxu0 0.0
        %4892 = vmatprep.subr.mxu0 0.0
        %4893 = vmatpush1.xpose.msra.mxu0 0.0
        %4894 = vmatprep.subr.mxu0 0.0
        %4895 = vmatpush1.xpose.msra.mxu0 0.0
        %4896 = vmatprep.subr.mxu0 0.0
        %4897 = vmatpush1.xpose.msra.mxu0 0.0
        %4898 = vmatprep.subr.mxu0 0.0
        %4899 = vmatpush1.xpose.msra.mxu0 0.0
        %4900 = vmatprep.subr.mxu0 0.0
        %4901 = vmatpush1.xpose.msra.mxu0 0.0
        %4902 = vmatprep.subr.mxu0 0.0
        %4903 = vmatpush1.xpose.msra.mxu0 0.0
        %4904 = vmatprep.subr.mxu0 0.0
        %4905 = vmatpush1.xpose.msra.mxu0 0.0
        %4906 = vmatprep.subr.mxu0 0.0
        %4907 = vmatpush1.xpose.msra.mxu0 0.0
        %4908 = vmatprep.subr.mxu0 0.0
        %4909 = vmatpush1.xpose.msra.mxu0 0.0
        %4910 = vmatprep.subr.mxu0 0.0
        %4911 = vmatpush1.xpose.msra.mxu0 0.0
        %4912 = vmatprep.subr.mxu0 0.0
        %4913 = vmatpush1.xpose.msra.mxu0 0.0
        %4914 = vmatprep.subr.mxu0 0.0
        %4915 = vmatpush1.xpose.msra.mxu0 0.0
        %4916 = vmatprep.mubr.f32.mxu0 0.0
        %4917 = vmatmul.mubr.f32.gmra.mrb[0].mxu0 %v4844
        %v4918 = vpop.f32.mrb[0].mxu0
        %v4919 = vadd.f32 0.0, %v4918
        %v4920 = vpop.f32.mrb[0].mxu0
        %4921 = vmatprep.mubr.f32.mxu0 0.0
        %4922 = vmatmul.mubr.f32.gmra.mrb[0].mxu0 %v4846
        %v4923 = vpop.f32.mrb[0].mxu0
        %v4924 = vadd.f32 0.0, %v4923
        %v4925 = vpop.f32.mrb[0].mxu0
        %4926 = vdwg.mxu0
        %4929 = vrot.lane.b32.xlu0 %v4532, 124
        %v4930 = vpop.permute.xlu0 %4929
        %4931 = vrot.lane.b32.xlu0 %v4537, 124
        %v4932 = vpop.permute.xlu0 %4931
        %v4933 = vsel %vm427, %v4532, 0
        %v4935 = vsel %vm427, %v4537, 0
        %v4937 = vsel %vm427, %v4930, 0
        %v4939 = vsel %vm427, %v4932, 0
        %4941 = vmatprep.subr.mxu0 0.0
        %4942 = vmatpush1.xpose.msra.mxu0 %v4937
        %4943 = vmatprep.subr.mxu0 0.0
        %4944 = vmatpush1.xpose.msra.mxu0 %v4939
        %4945 = vmatprep.subr.mxu0 0.0
        %4946 = vmatpush1.xpose.msra.mxu0 0.0
        %4947 = vmatprep.subr.mxu0 0.0
        %4948 = vmatpush1.xpose.msra.mxu0 0.0
        %4949 = vmatprep.subr.mxu0 0.0
        %4950 = vmatpush1.xpose.msra.mxu0 0.0
        %4951 = vmatprep.subr.mxu0 0.0
        %4952 = vmatpush1.xpose.msra.mxu0 0.0
        %4953 = vmatprep.subr.mxu0 0.0
        %4954 = vmatpush1.xpose.msra.mxu0 0.0
        %4955 = vmatprep.subr.mxu0 0.0
        %4956 = vmatpush1.xpose.msra.mxu0 0.0
        %4957 = vmatprep.subr.mxu0 0.0
        %4958 = vmatpush1.xpose.msra.mxu0 0.0
        %4959 = vmatprep.subr.mxu0 0.0
        %4960 = vmatpush1.xpose.msra.mxu0 0.0
        %4961 = vmatprep.subr.mxu0 0.0
        %4962 = vmatpush1.xpose.msra.mxu0 0.0
        %4963 = vmatprep.subr.mxu0 0.0
        %4964 = vmatpush1.xpose.msra.mxu0 0.0
        %4965 = vmatprep.subr.mxu0 0.0
        %4966 = vmatpush1.xpose.msra.mxu0 0.0
        %4967 = vmatprep.subr.mxu0 0.0
        %4968 = vmatpush1.xpose.msra.mxu0 0.0
        %4969 = vmatprep.subr.mxu0 0.0
        %4970 = vmatpush1.xpose.msra.mxu0 0.0
        %4971 = vmatprep.subr.mxu0 0.0
        %4972 = vmatpush1.xpose.msra.mxu0 0.0
        %4973 = vmatprep.subr.mxu0 0.0
        %4974 = vmatpush1.xpose.msra.mxu0 0.0
        %4975 = vmatprep.subr.mxu0 0.0
        %4976 = vmatpush1.xpose.msra.mxu0 0.0
        %4977 = vmatprep.subr.mxu0 0.0
        %4978 = vmatpush1.xpose.msra.mxu0 0.0
        %4979 = vmatprep.subr.mxu0 0.0
        %4980 = vmatpush1.xpose.msra.mxu0 0.0
        %4981 = vmatprep.subr.mxu0 0.0
        %4982 = vmatpush1.xpose.msra.mxu0 0.0
        %4983 = vmatprep.subr.mxu0 0.0
        %4984 = vmatpush1.xpose.msra.mxu0 0.0
        %4985 = vmatprep.subr.mxu0 0.0
        %4986 = vmatpush1.xpose.msra.mxu0 0.0
        %4987 = vmatprep.subr.mxu0 0.0
        %4988 = vmatpush1.xpose.msra.mxu0 0.0
        %4989 = vmatprep.subr.mxu0 0.0
        %4990 = vmatpush1.xpose.msra.mxu0 0.0
        %4991 = vmatprep.subr.mxu0 0.0
        %4992 = vmatpush1.xpose.msra.mxu0 0.0
        %4993 = vmatprep.subr.mxu0 0.0
        %4994 = vmatpush1.xpose.msra.mxu0 0.0
        %4995 = vmatprep.subr.mxu0 0.0
        %4996 = vmatpush1.xpose.msra.mxu0 0.0
        %4997 = vmatprep.subr.mxu0 0.0
        %4998 = vmatpush1.xpose.msra.mxu0 0.0
        %4999 = vmatprep.subr.mxu0 0.0
        %5000 = vmatpush1.xpose.msra.mxu0 0.0
        %5001 = vmatprep.subr.mxu0 0.0
        %5002 = vmatpush1.xpose.msra.mxu0 0.0
        %5003 = vmatprep.subr.mxu0 0.0
        %5004 = vmatpush1.xpose.msra.mxu0 0.0
        %5005 = vmatprep.mubr.f32.mxu0 0.0
        %5006 = vmatmul.mubr.f32.gmra.mrb[0].mxu0 %v4933
        %v5007 = vpop.f32.mrb[0].mxu0
        %v5008 = vadd.f32 0.0, %v5007
        %v5009 = vpop.f32.mrb[0].mxu0
        %5010 = vmatprep.mubr.f32.mxu0 0.0
        %5011 = vmatmul.mubr.f32.gmra.mrb[0].mxu0 %v4935
        %v5012 = vpop.f32.mrb[0].mxu0
        %v5013 = vadd.f32 0.0, %v5012
        %v5014 = vpop.f32.mrb[0].mxu0
        %5015 = vdwg.mxu0
        %5018 = vrot.lane.b32.xlu0 %v4542, 124
        %v5019 = vpop.permute.xlu0 %5018
        %5020 = vrot.lane.b32.xlu0 %v4547, 124
        %v5021 = vpop.permute.xlu0 %5020
        %v5022 = vsel %vm427, %v4542, 0
        %v5024 = vsel %vm427, %v4547, 0
        %v5026 = vsel %vm427, %v5019, 0
        %v5028 = vsel %vm427, %v5021, 0
        %5030 = vmatprep.subr.mxu0 0.0
        %5031 = vmatpush1.xpose.msra.mxu0 %v5026
        %5032 = vmatprep.subr.mxu0 0.0
        %5033 = vmatpush1.xpose.msra.mxu0 %v5028
        %5034 = vmatprep.subr.mxu0 0.0
        %5035 = vmatpush1.xpose.msra.mxu0 0.0
        %5036 = vmatprep.subr.mxu0 0.0
        %5037 = vmatpush1.xpose.msra.mxu0 0.0
        %5038 = vmatprep.subr.mxu0 0.0
        %5039 = vmatpush1.xpose.msra.mxu0 0.0
        %5040 = vmatprep.subr.mxu0 0.0
        %5041 = vmatpush1.xpose.msra.mxu0 0.0
        %5042 = vmatprep.subr.mxu0 0.0
        %5043 = vmatpush1.xpose.msra.mxu0 0.0
        %5044 = vmatprep.subr.mxu0 0.0
        %5045 = vmatpush1.xpose.msra.mxu0 0.0
        %5046 = vmatprep.subr.mxu0 0.0
        %5047 = vmatpush1.xpose.msra.mxu0 0.0
        %5048 = vmatprep.subr.mxu0 0.0
        %5049 = vmatpush1.xpose.msra.mxu0 0.0
        %5050 = vmatprep.subr.mxu0 0.0
        %5051 = vmatpush1.xpose.msra.mxu0 0.0
        %5052 = vmatprep.subr.mxu0 0.0
        %5053 = vmatpush1.xpose.msra.mxu0 0.0
        %5054 = vmatprep.subr.mxu0 0.0
        %5055 = vmatpush1.xpose.msra.mxu0 0.0
        %5056 = vmatprep.subr.mxu0 0.0
        %5057 = vmatpush1.xpose.msra.mxu0 0.0
        %5058 = vmatprep.subr.mxu0 0.0
        %5059 = vmatpush1.xpose.msra.mxu0 0.0
        %5060 = vmatprep.subr.mxu0 0.0
        %5061 = vmatpush1.xpose.msra.mxu0 0.0
        %5062 = vmatprep.subr.mxu0 0.0
        %5063 = vmatpush1.xpose.msra.mxu0 0.0
        %5064 = vmatprep.subr.mxu0 0.0
        %5065 = vmatpush1.xpose.msra.mxu0 0.0
        %5066 = vmatprep.subr.mxu0 0.0
        %5067 = vmatpush1.xpose.msra.mxu0 0.0
        %5068 = vmatprep.subr.mxu0 0.0
        %5069 = vmatpush1.xpose.msra.mxu0 0.0
        %5070 = vmatprep.subr.mxu0 0.0
        %5071 = vmatpush1.xpose.msra.mxu0 0.0
        %5072 = vmatprep.subr.mxu0 0.0
        %5073 = vmatpush1.xpose.msra.mxu0 0.0
        %5074 = vmatprep.subr.mxu0 0.0
        %5075 = vmatpush1.xpose.msra.mxu0 0.0
        %5076 = vmatprep.subr.mxu0 0.0
        %5077 = vmatpush1.xpose.msra.mxu0 0.0
        %5078 = vmatprep.subr.mxu0 0.0
        %5079 = vmatpush1.xpose.msra.mxu0 0.0
        %5080 = vmatprep.subr.mxu0 0.0
        %5081 = vmatpush1.xpose.msra.mxu0 0.0
        %5082 = vmatprep.subr.mxu0 0.0
        %5083 = vmatpush1.xpose.msra.mxu0 0.0
        %5084 = vmatprep.subr.mxu0 0.0
        %5085 = vmatpush1.xpose.msra.mxu0 0.0
        %5086 = vmatprep.subr.mxu0 0.0
        %5087 = vmatpush1.xpose.msra.mxu0 0.0
        %5088 = vmatprep.subr.mxu0 0.0
        %5089 = vmatpush1.xpose.msra.mxu0 0.0
        %5090 = vmatprep.subr.mxu0 0.0
        %5091 = vmatpush1.xpose.msra.mxu0 0.0
        %5092 = vmatprep.subr.mxu0 0.0
        %5093 = vmatpush1.xpose.msra.mxu0 0.0
        %5094 = vmatprep.mubr.f32.mxu0 0.0
        %5095 = vmatmul.mubr.f32.gmra.mrb[0].mxu0 %v5022
        %v5096 = vpop.f32.mrb[0].mxu0
        %v5097 = vadd.f32 0.0, %v5096
        %v5098 = vpop.f32.mrb[0].mxu0
        %5099 = vmatprep.mubr.f32.mxu0 0.0
        %5100 = vmatmul.mubr.f32.gmra.mrb[0].mxu0 %v5024
        %v5101 = vpop.f32.mrb[0].mxu0
        %v5102 = vadd.f32 0.0, %v5101
        %v5103 = vpop.f32.mrb[0].mxu0
        %5104 = vdwg.mxu0
        %5107 = vrot.lane.b32.xlu0 %v4552, 124
        %v5108 = vpop.permute.xlu0 %5107
        %5109 = vrot.lane.b32.xlu0 %v4557, 124
        %v5110 = vpop.permute.xlu0 %5109
        %v5111 = vsel %vm427, %v4552, 0
        %v5113 = vsel %vm427, %v4557, 0
        %v5115 = vsel %vm427, %v5108, 0
        %v5117 = vsel %vm427, %v5110, 0
        %5119 = vmatprep.subr.mxu0 0.0
        %5120 = vmatpush1.xpose.msra.mxu0 %v5115
        %5121 = vmatprep.subr.mxu0 0.0
        %5122 = vmatpush1.xpose.msra.mxu0 %v5117
        %5123 = vmatprep.subr.mxu0 0.0
        %5124 = vmatpush1.xpose.msra.mxu0 0.0
        %5125 = vmatprep.subr.mxu0 0.0
        %5126 = vmatpush1.xpose.msra.mxu0 0.0
        %5127 = vmatprep.subr.mxu0 0.0
        %5128 = vmatpush1.xpose.msra.mxu0 0.0
        %5129 = vmatprep.subr.mxu0 0.0
        %5130 = vmatpush1.xpose.msra.mxu0 0.0
        %5131 = vmatprep.subr.mxu0 0.0
        %5132 = vmatpush1.xpose.msra.mxu0 0.0
        %5133 = vmatprep.subr.mxu0 0.0
        %5134 = vmatpush1.xpose.msra.mxu0 0.0
        %5135 = vmatprep.subr.mxu0 0.0
        %5136 = vmatpush1.xpose.msra.mxu0 0.0
        %5137 = vmatprep.subr.mxu0 0.0
        %5138 = vmatpush1.xpose.msra.mxu0 0.0
        %5139 = vmatprep.subr.mxu0 0.0
        %5140 = vmatpush1.xpose.msra.mxu0 0.0
        %5141 = vmatprep.subr.mxu0 0.0
        %5142 = vmatpush1.xpose.msra.mxu0 0.0
        %5143 = vmatprep.subr.mxu0 0.0
        %5144 = vmatpush1.xpose.msra.mxu0 0.0
        %5145 = vmatprep.subr.mxu0 0.0
        %5146 = vmatpush1.xpose.msra.mxu0 0.0
        %5147 = vmatprep.subr.mxu0 0.0
        %5148 = vmatpush1.xpose.msra.mxu0 0.0
        %5149 = vmatprep.subr.mxu0 0.0
        %5150 = vmatpush1.xpose.msra.mxu0 0.0
        %5151 = vmatprep.subr.mxu0 0.0
        %5152 = vmatpush1.xpose.msra.mxu0 0.0
        %5153 = vmatprep.subr.mxu0 0.0
        %5154 = vmatpush1.xpose.msra.mxu0 0.0
        %5155 = vmatprep.subr.mxu0 0.0
        %5156 = vmatpush1.xpose.msra.mxu0 0.0
        %5157 = vmatprep.subr.mxu0 0.0
        %5158 = vmatpush1.xpose.msra.mxu0 0.0
        %5159 = vmatprep.subr.mxu0 0.0
        %5160 = vmatpush1.xpose.msra.mxu0 0.0
        %5161 = vmatprep.subr.mxu0 0.0
        %5162 = vmatpush1.xpose.msra.mxu0 0.0
        %5163 = vmatprep.subr.mxu0 0.0
        %5164 = vmatpush1.xpose.msra.mxu0 0.0
        %5165 = vmatprep.subr.mxu0 0.0
        %5166 = vmatpush1.xpose.msra.mxu0 0.0
        %5167 = vmatprep.subr.mxu0 0.0
        %5168 = vmatpush1.xpose.msra.mxu0 0.0
        %5169 = vmatprep.subr.mxu0 0.0
        %5170 = vmatpush1.xpose.msra.mxu0 0.0
        %5171 = vmatprep.subr.mxu0 0.0
        %5172 = vmatpush1.xpose.msra.mxu0 0.0
        %5173 = vmatprep.subr.mxu0 0.0
        %5174 = vmatpush1.xpose.msra.mxu0 0.0
        %5175 = vmatprep.subr.mxu0 0.0
        %5176 = vmatpush1.xpose.msra.mxu0 0.0
        %5177 = vmatprep.subr.mxu0 0.0
        %5178 = vmatpush1.xpose.msra.mxu0 0.0
        %5179 = vmatprep.subr.mxu0 0.0
        %5180 = vmatpush1.xpose.msra.mxu0 0.0
        %5181 = vmatprep.subr.mxu0 0.0
        %5182 = vmatpush1.xpose.msra.mxu0 0.0
        %5183 = vmatprep.mubr.f32.mxu0 0.0
        %5184 = vmatmul.mubr.f32.gmra.mrb[0].mxu0 %v5111
        %v5185 = vpop.f32.mrb[0].mxu0
        %v5186 = vadd.f32 0.0, %v5185
        %v5187 = vpop.f32.mrb[0].mxu0
        %5188 = vmatprep.mubr.f32.mxu0 0.0
        %5189 = vmatmul.mubr.f32.gmra.mrb[0].mxu0 %v5113
        %v5190 = vpop.f32.mrb[0].mxu0
        %v5191 = vadd.f32 0.0, %v5190
        %v5192 = vpop.f32.mrb[0].mxu0
        %5193 = vdwg.mxu0
        %5196 = vrot.lane.b32.xlu0 %v4562, 124
        %v5197 = vpop.permute.xlu0 %5196
        %5198 = vrot.lane.b32.xlu0 %v4567, 124
        %v5199 = vpop.permute.xlu0 %5198
        %v5200 = vsel %vm427, %v4562, 0
        %v5202 = vsel %vm427, %v4567, 0
        %v5204 = vsel %vm427, %v5197, 0
        %v5206 = vsel %vm427, %v5199, 0
        %5208 = vmatprep.subr.mxu0 0.0
        %5209 = vmatpush1.xpose.msra.mxu0 %v5204
        %5210 = vmatprep.subr.mxu0 0.0
        %5211 = vmatpush1.xpose.msra.mxu0 %v5206
        %5212 = vmatprep.subr.mxu0 0.0
        %5213 = vmatpush1.xpose.msra.mxu0 0.0
        %5214 = vmatprep.subr.mxu0 0.0
        %5215 = vmatpush1.xpose.msra.mxu0 0.0
        %5216 = vmatprep.subr.mxu0 0.0
        %5217 = vmatpush1.xpose.msra.mxu0 0.0
        %5218 = vmatprep.subr.mxu0 0.0
        %5219 = vmatpush1.xpose.msra.mxu0 0.0
        %5220 = vmatprep.subr.mxu0 0.0
        %5221 = vmatpush1.xpose.msra.mxu0 0.0
        %5222 = vmatprep.subr.mxu0 0.0
        %5223 = vmatpush1.xpose.msra.mxu0 0.0
        %5224 = vmatprep.subr.mxu0 0.0
        %5225 = vmatpush1.xpose.msra.mxu0 0.0
        %5226 = vmatprep.subr.mxu0 0.0
        %5227 = vmatpush1.xpose.msra.mxu0 0.0
        %5228 = vmatprep.subr.mxu0 0.0
        %5229 = vmatpush1.xpose.msra.mxu0 0.0
        %5230 = vmatprep.subr.mxu0 0.0
        %5231 = vmatpush1.xpose.msra.mxu0 0.0
        %5232 = vmatprep.subr.mxu0 0.0
        %5233 = vmatpush1.xpose.msra.mxu0 0.0
        %5234 = vmatprep.subr.mxu0 0.0
        %5235 = vmatpush1.xpose.msra.mxu0 0.0
        %5236 = vmatprep.subr.mxu0 0.0
        %5237 = vmatpush1.xpose.msra.mxu0 0.0
        %5238 = vmatprep.subr.mxu0 0.0
        %5239 = vmatpush1.xpose.msra.mxu0 0.0
        %5240 = vmatprep.subr.mxu0 0.0
        %5241 = vmatpush1.xpose.msra.mxu0 0.0
        %5242 = vmatprep.subr.mxu0 0.0
        %5243 = vmatpush1.xpose.msra.mxu0 0.0
        %5244 = vmatprep.subr.mxu0 0.0
        %5245 = vmatpush1.xpose.msra.mxu0 0.0
        %5246 = vmatprep.subr.mxu0 0.0
        %5247 = vmatpush1.xpose.msra.mxu0 0.0
        %5248 = vmatprep.subr.mxu0 0.0
        %5249 = vmatpush1.xpose.msra.mxu0 0.0
        %5250 = vmatprep.subr.mxu0 0.0
        %5251 = vmatpush1.xpose.msra.mxu0 0.0
        %5252 = vmatprep.subr.mxu0 0.0
        %5253 = vmatpush1.xpose.msra.mxu0 0.0
        %5254 = vmatprep.subr.mxu0 0.0
        %5255 = vmatpush1.xpose.msra.mxu0 0.0
        %5256 = vmatprep.subr.mxu0 0.0
        %5257 = vmatpush1.xpose.msra.mxu0 0.0
        %5258 = vmatprep.subr.mxu0 0.0
        %5259 = vmatpush1.xpose.msra.mxu0 0.0
        %5260 = vmatprep.subr.mxu0 0.0
        %5261 = vmatpush1.xpose.msra.mxu0 0.0
        %5262 = vmatprep.subr.mxu0 0.0
        %5263 = vmatpush1.xpose.msra.mxu0 0.0
        %5264 = vmatprep.subr.mxu0 0.0
        %5265 = vmatpush1.xpose.msra.mxu0 0.0
        %5266 = vmatprep.subr.mxu0 0.0
        %5267 = vmatpush1.xpose.msra.mxu0 0.0
        %5268 = vmatprep.subr.mxu0 0.0
        %5269 = vmatpush1.xpose.msra.mxu0 0.0
        %5270 = vmatprep.subr.mxu0 0.0
        %5271 = vmatpush1.xpose.msra.mxu0 0.0
        %5272 = vmatprep.mubr.f32.mxu0 0.0
        %5273 = vmatmul.mubr.f32.gmra.mrb[0].mxu0 %v5200
        %v5274 = vpop.f32.mrb[0].mxu0
        %v5275 = vadd.f32 0.0, %v5274
        %v5276 = vpop.f32.mrb[0].mxu0
        %5277 = vmatprep.mubr.f32.mxu0 0.0
        %5278 = vmatmul.mubr.f32.gmra.mrb[0].mxu0 %v5202
        %v5279 = vpop.f32.mrb[0].mxu0
        %v5280 = vadd.f32 0.0, %v5279
        %v5281 = vpop.f32.mrb[0].mxu0
        %5282 = vdwg.mxu0
        %5285 = vrot.lane.b32.xlu0 %v4572, 124
        %v5286 = vpop.permute.xlu0 %5285
        %5287 = vrot.lane.b32.xlu0 %v4577, 124
        %v5288 = vpop.permute.xlu0 %5287
        %v5289 = vsel %vm427, %v4572, 0
        %v5291 = vsel %vm427, %v4577, 0
        %v5293 = vsel %vm427, %v5286, 0
        %v5295 = vsel %vm427, %v5288, 0
        %5297 = vmatprep.subr.mxu0 0.0
        %5298 = vmatpush1.xpose.msra.mxu0 %v5293
        %5299 = vmatprep.subr.mxu0 0.0
        %5300 = vmatpush1.xpose.msra.mxu0 %v5295
        %5301 = vmatprep.subr.mxu0 0.0
        %5302 = vmatpush1.xpose.msra.mxu0 0.0
        %5303 = vmatprep.subr.mxu0 0.0
        %5304 = vmatpush1.xpose.msra.mxu0 0.0
        %5305 = vmatprep.subr.mxu0 0.0
        %5306 = vmatpush1.xpose.msra.mxu0 0.0
        %5307 = vmatprep.subr.mxu0 0.0
        %5308 = vmatpush1.xpose.msra.mxu0 0.0
        %5309 = vmatprep.subr.mxu0 0.0
        %5310 = vmatpush1.xpose.msra.mxu0 0.0
        %5311 = vmatprep.subr.mxu0 0.0
        %5312 = vmatpush1.xpose.msra.mxu0 0.0
        %5313 = vmatprep.subr.mxu0 0.0
        %5314 = vmatpush1.xpose.msra.mxu0 0.0
        %5315 = vmatprep.subr.mxu0 0.0
        %5316 = vmatpush1.xpose.msra.mxu0 0.0
        %5317 = vmatprep.subr.mxu0 0.0
        %5318 = vmatpush1.xpose.msra.mxu0 0.0
        %5319 = vmatprep.subr.mxu0 0.0
        %5320 = vmatpush1.xpose.msra.mxu0 0.0
        %5321 = vmatprep.subr.mxu0 0.0
        %5322 = vmatpush1.xpose.msra.mxu0 0.0
        %5323 = vmatprep.subr.mxu0 0.0
        %5324 = vmatpush1.xpose.msra.mxu0 0.0
        %5325 = vmatprep.subr.mxu0 0.0
        %5326 = vmatpush1.xpose.msra.mxu0 0.0
        %5327 = vmatprep.subr.mxu0 0.0
        %5328 = vmatpush1.xpose.msra.mxu0 0.0
        %5329 = vmatprep.subr.mxu0 0.0
        %5330 = vmatpush1.xpose.msra.mxu0 0.0
        %5331 = vmatprep.subr.mxu0 0.0
        %5332 = vmatpush1.xpose.msra.mxu0 0.0
        %5333 = vmatprep.subr.mxu0 0.0
        %5334 = vmatpush1.xpose.msra.mxu0 0.0
        %5335 = vmatprep.subr.mxu0 0.0
        %5336 = vmatpush1.xpose.msra.mxu0 0.0
        %5337 = vmatprep.subr.mxu0 0.0
        %5338 = vmatpush1.xpose.msra.mxu0 0.0
        %5339 = vmatprep.subr.mxu0 0.0
        %5340 = vmatpush1.xpose.msra.mxu0 0.0
        %5341 = vmatprep.subr.mxu0 0.0
        %5342 = vmatpush1.xpose.msra.mxu0 0.0
        %5343 = vmatprep.subr.mxu0 0.0
        %5344 = vmatpush1.xpose.msra.mxu0 0.0
        %5345 = vmatprep.subr.mxu0 0.0
        %5346 = vmatpush1.xpose.msra.mxu0 0.0
        %5347 = vmatprep.subr.mxu0 0.0
        %5348 = vmatpush1.xpose.msra.mxu0 0.0
        %5349 = vmatprep.subr.mxu0 0.0
        %5350 = vmatpush1.xpose.msra.mxu0 0.0
        %5351 = vmatprep.subr.mxu0 0.0
        %5352 = vmatpush1.xpose.msra.mxu0 0.0
        %5353 = vmatprep.subr.mxu0 0.0
        %5354 = vmatpush1.xpose.msra.mxu0 0.0
        %5355 = vmatprep.subr.mxu0 0.0
        %5356 = vmatpush1.xpose.msra.mxu0 0.0
        %5357 = vmatprep.subr.mxu0 0.0
        %5358 = vmatpush1.xpose.msra.mxu0 0.0
        %5359 = vmatprep.subr.mxu0 0.0
        %5360 = vmatpush1.xpose.msra.mxu0 0.0
        %5361 = vmatprep.mubr.f32.mxu0 0.0
        %5362 = vmatmul.mubr.f32.gmra.mrb[0].mxu0 %v5289
        %v5363 = vpop.f32.mrb[0].mxu0
        %v5364 = vadd.f32 0.0, %v5363
        %v5365 = vpop.f32.mrb[0].mxu0
        %5366 = vmatprep.mubr.f32.mxu0 0.0
        %5367 = vmatmul.mubr.f32.gmra.mrb[0].mxu0 %v5291
        %v5368 = vpop.f32.mrb[0].mxu0
        %v5369 = vadd.f32 0.0, %v5368
        %v5370 = vpop.f32.mrb[0].mxu0
        %5371 = vdwg.mxu0
        %5374 = vrot.lane.b32.xlu0 %v4582, 124
        %v5375 = vpop.permute.xlu0 %5374
        %5376 = vrot.lane.b32.xlu0 %v4587, 124
        %v5377 = vpop.permute.xlu0 %5376
        %v5378 = vsel %vm427, %v4582, 0
        %v5380 = vsel %vm427, %v4587, 0
        %v5382 = vsel %vm427, %v5375, 0
        %v5384 = vsel %vm427, %v5377, 0
        %5386 = vmatprep.subr.mxu0 0.0
        %5387 = vmatpush1.xpose.msra.mxu0 %v5382
        %5388 = vmatprep.subr.mxu0 0.0
        %5389 = vmatpush1.xpose.msra.mxu0 %v5384
        %5390 = vmatprep.subr.mxu0 0.0
        %5391 = vmatpush1.xpose.msra.mxu0 0.0
        %5392 = vmatprep.subr.mxu0 0.0
        %5393 = vmatpush1.xpose.msra.mxu0 0.0
        %5394 = vmatprep.subr.mxu0 0.0
        %5395 = vmatpush1.xpose.msra.mxu0 0.0
        %5396 = vmatprep.subr.mxu0 0.0
        %5397 = vmatpush1.xpose.msra.mxu0 0.0
        %5398 = vmatprep.subr.mxu0 0.0
        %5399 = vmatpush1.xpose.msra.mxu0 0.0
        %5400 = vmatprep.subr.mxu0 0.0
        %5401 = vmatpush1.xpose.msra.mxu0 0.0
        %5402 = vmatprep.subr.mxu0 0.0
        %5403 = vmatpush1.xpose.msra.mxu0 0.0
        %5404 = vmatprep.subr.mxu0 0.0
        %5405 = vmatpush1.xpose.msra.mxu0 0.0
        %5406 = vmatprep.subr.mxu0 0.0
        %5407 = vmatpush1.xpose.msra.mxu0 0.0
        %5408 = vmatprep.subr.mxu0 0.0
        %5409 = vmatpush1.xpose.msra.mxu0 0.0
        %5410 = vmatprep.subr.mxu0 0.0
        %5411 = vmatpush1.xpose.msra.mxu0 0.0
        %5412 = vmatprep.subr.mxu0 0.0
        %5413 = vmatpush1.xpose.msra.mxu0 0.0
        %5414 = vmatprep.subr.mxu0 0.0
        %5415 = vmatpush1.xpose.msra.mxu0 0.0
        %5416 = vmatprep.subr.mxu0 0.0
        %5417 = vmatpush1.xpose.msra.mxu0 0.0
        %5418 = vmatprep.subr.mxu0 0.0
        %5419 = vmatpush1.xpose.msra.mxu0 0.0
        %5420 = vmatprep.subr.mxu0 0.0
        %5421 = vmatpush1.xpose.msra.mxu0 0.0
        %5422 = vmatprep.subr.mxu0 0.0
        %5423 = vmatpush1.xpose.msra.mxu0 0.0
        %5424 = vmatprep.subr.mxu0 0.0
        %5425 = vmatpush1.xpose.msra.mxu0 0.0
        %5426 = vmatprep.subr.mxu0 0.0
        %5427 = vmatpush1.xpose.msra.mxu0 0.0
        %5428 = vmatprep.subr.mxu0 0.0
        %5429 = vmatpush1.xpose.msra.mxu0 0.0
        %5430 = vmatprep.subr.mxu0 0.0
        %5431 = vmatpush1.xpose.msra.mxu0 0.0
        %5432 = vmatprep.subr.mxu0 0.0
        %5433 = vmatpush1.xpose.msra.mxu0 0.0
        %5434 = vmatprep.subr.mxu0 0.0
        %5435 = vmatpush1.xpose.msra.mxu0 0.0
        %5436 = vmatprep.subr.mxu0 0.0
        %5437 = vmatpush1.xpose.msra.mxu0 0.0
        %5438 = vmatprep.subr.mxu0 0.0
        %5439 = vmatpush1.xpose.msra.mxu0 0.0
        %5440 = vmatprep.subr.mxu0 0.0
        %5441 = vmatpush1.xpose.msra.mxu0 0.0
        %5442 = vmatprep.subr.mxu0 0.0
        %5443 = vmatpush1.xpose.msra.mxu0 0.0
        %5444 = vmatprep.subr.mxu0 0.0
        %5445 = vmatpush1.xpose.msra.mxu0 0.0
        %5446 = vmatprep.subr.mxu0 0.0
        %5447 = vmatpush1.xpose.msra.mxu0 0.0
        %5448 = vmatprep.subr.mxu0 0.0
        %5449 = vmatpush1.xpose.msra.mxu0 0.0
        %5450 = vmatprep.mubr.f32.mxu0 0.0
        %5451 = vmatmul.mubr.f32.gmra.mrb[0].mxu0 %v5378
        %v5452 = vpop.f32.mrb[0].mxu0
        %v5453 = vadd.f32 0.0, %v5452
        %v5454 = vpop.f32.mrb[0].mxu0
        %5455 = vmatprep.mubr.f32.mxu0 0.0
        %5456 = vmatmul.mubr.f32.gmra.mrb[0].mxu0 %v5380
        %v5457 = vpop.f32.mrb[0].mxu0
        %v5458 = vadd.f32 0.0, %v5457
        %v5459 = vpop.f32.mrb[0].mxu0
        %5460 = vdwg.mxu0
        %5463 = vrot.lane.b32.xlu0 %v4592, 124
        %v5464 = vpop.permute.xlu0 %5463
        %5465 = vrot.lane.b32.xlu0 %v4597, 124
        %v5466 = vpop.permute.xlu0 %5465
        %v5467 = vsel %vm427, %v4592, 0
        %v5469 = vsel %vm427, %v4597, 0
        %v5471 = vsel %vm427, %v5464, 0
        %v5473 = vsel %vm427, %v5466, 0
        %5475 = vmatprep.subr.mxu0 0.0
        %5476 = vmatpush1.xpose.msra.mxu0 %v5471
        %5477 = vmatprep.subr.mxu0 0.0
        %5478 = vmatpush1.xpose.msra.mxu0 %v5473
        %5479 = vmatprep.subr.mxu0 0.0
        %5480 = vmatpush1.xpose.msra.mxu0 0.0
        %5481 = vmatprep.subr.mxu0 0.0
        %5482 = vmatpush1.xpose.msra.mxu0 0.0
        %5483 = vmatprep.subr.mxu0 0.0
        %5484 = vmatpush1.xpose.msra.mxu0 0.0
        %5485 = vmatprep.subr.mxu0 0.0
        %5486 = vmatpush1.xpose.msra.mxu0 0.0
        %5487 = vmatprep.subr.mxu0 0.0
        %5488 = vmatpush1.xpose.msra.mxu0 0.0
        %5489 = vmatprep.subr.mxu0 0.0
        %5490 = vmatpush1.xpose.msra.mxu0 0.0
        %5491 = vmatprep.subr.mxu0 0.0
        %5492 = vmatpush1.xpose.msra.mxu0 0.0
        %5493 = vmatprep.subr.mxu0 0.0
        %5494 = vmatpush1.xpose.msra.mxu0 0.0
        %5495 = vmatprep.subr.mxu0 0.0
        %5496 = vmatpush1.xpose.msra.mxu0 0.0
        %5497 = vmatprep.subr.mxu0 0.0
        %5498 = vmatpush1.xpose.msra.mxu0 0.0
        %5499 = vmatprep.subr.mxu0 0.0
        %5500 = vmatpush1.xpose.msra.mxu0 0.0
        %5501 = vmatprep.subr.mxu0 0.0
        %5502 = vmatpush1.xpose.msra.mxu0 0.0
        %5503 = vmatprep.subr.mxu0 0.0
        %5504 = vmatpush1.xpose.msra.mxu0 0.0
        %5505 = vmatprep.subr.mxu0 0.0
        %5506 = vmatpush1.xpose.msra.mxu0 0.0
        %5507 = vmatprep.subr.mxu0 0.0
        %5508 = vmatpush1.xpose.msra.mxu0 0.0
        %5509 = vmatprep.subr.mxu0 0.0
        %5510 = vmatpush1.xpose.msra.mxu0 0.0
        %5511 = vmatprep.subr.mxu0 0.0
        %5512 = vmatpush1.xpose.msra.mxu0 0.0
        %5513 = vmatprep.subr.mxu0 0.0
        %5514 = vmatpush1.xpose.msra.mxu0 0.0
        %5515 = vmatprep.subr.mxu0 0.0
        %5516 = vmatpush1.xpose.msra.mxu0 0.0
        %5517 = vmatprep.subr.mxu0 0.0
        %5518 = vmatpush1.xpose.msra.mxu0 0.0
        %5519 = vmatprep.subr.mxu0 0.0
        %5520 = vmatpush1.xpose.msra.mxu0 0.0
        %5521 = vmatprep.subr.mxu0 0.0
        %5522 = vmatpush1.xpose.msra.mxu0 0.0
        %5523 = vmatprep.subr.mxu0 0.0
        %5524 = vmatpush1.xpose.msra.mxu0 0.0
        %5525 = vmatprep.subr.mxu0 0.0
        %5526 = vmatpush1.xpose.msra.mxu0 0.0
        %5527 = vmatprep.subr.mxu0 0.0
        %5528 = vmatpush1.xpose.msra.mxu0 0.0
        %5529 = vmatprep.subr.mxu0 0.0
        %5530 = vmatpush1.xpose.msra.mxu0 0.0
        %5531 = vmatprep.subr.mxu0 0.0
        %5532 = vmatpush1.xpose.msra.mxu0 0.0
        %5533 = vmatprep.subr.mxu0 0.0
        %5534 = vmatpush1.xpose.msra.mxu0 0.0
        %5535 = vmatprep.subr.mxu0 0.0
        %5536 = vmatpush1.xpose.msra.mxu0 0.0
        %5537 = vmatprep.subr.mxu0 0.0
        %5538 = vmatpush1.xpose.msra.mxu0 0.0
        %5539 = vmatprep.mubr.f32.mxu0 0.0
        %5540 = vmatmul.mubr.f32.gmra.mrb[0].mxu0 %v5467
        %v5541 = vpop.f32.mrb[0].mxu0
        %v5542 = vadd.f32 0.0, %v5541
        %v5543 = vpop.f32.mrb[0].mxu0
        %5544 = vmatprep.mubr.f32.mxu0 0.0
        %5545 = vmatmul.mubr.f32.gmra.mrb[0].mxu0 %v5469
        %v5546 = vpop.f32.mrb[0].mxu0
        %v5547 = vadd.f32 0.0, %v5546
        %v5548 = vpop.f32.mrb[0].mxu0
        %5549 = vdwg.mxu0
        %5552 = vrot.lane.b32.xlu0 %v4602, 124
        %v5553 = vpop.permute.xlu0 %5552
        %5554 = vrot.lane.b32.xlu0 %v4607, 124
        %v5555 = vpop.permute.xlu0 %5554
        %v5556 = vsel %vm427, %v4602, 0
        %v5558 = vsel %vm427, %v4607, 0
        %v5560 = vsel %vm427, %v5553, 0
        %v5562 = vsel %vm427, %v5555, 0
        %5564 = vmatprep.subr.mxu0 0.0
        %5565 = vmatpush1.xpose.msra.mxu0 %v5560
        %5566 = vmatprep.subr.mxu0 0.0
        %5567 = vmatpush1.xpose.msra.mxu0 %v5562
        %5568 = vmatprep.subr.mxu0 0.0
        %5569 = vmatpush1.xpose.msra.mxu0 0.0
        %5570 = vmatprep.subr.mxu0 0.0
        %5571 = vmatpush1.xpose.msra.mxu0 0.0
        %5572 = vmatprep.subr.mxu0 0.0
        %5573 = vmatpush1.xpose.msra.mxu0 0.0
        %5574 = vmatprep.subr.mxu0 0.0
        %5575 = vmatpush1.xpose.msra.mxu0 0.0
        %5576 = vmatprep.subr.mxu0 0.0
        %5577 = vmatpush1.xpose.msra.mxu0 0.0
        %5578 = vmatprep.subr.mxu0 0.0
        %5579 = vmatpush1.xpose.msra.mxu0 0.0
        %5580 = vmatprep.subr.mxu0 0.0
        %5581 = vmatpush1.xpose.msra.mxu0 0.0
        %5582 = vmatprep.subr.mxu0 0.0
        %5583 = vmatpush1.xpose.msra.mxu0 0.0
        %5584 = vmatprep.subr.mxu0 0.0
        %5585 = vmatpush1.xpose.msra.mxu0 0.0
        %5586 = vmatprep.subr.mxu0 0.0
        %5587 = vmatpush1.xpose.msra.mxu0 0.0
        %5588 = vmatprep.subr.mxu0 0.0
        %5589 = vmatpush1.xpose.msra.mxu0 0.0
        %5590 = vmatprep.subr.mxu0 0.0
        %5591 = vmatpush1.xpose.msra.mxu0 0.0
        %5592 = vmatprep.subr.mxu0 0.0
        %5593 = vmatpush1.xpose.msra.mxu0 0.0
        %5594 = vmatprep.subr.mxu0 0.0
        %5595 = vmatpush1.xpose.msra.mxu0 0.0
        %5596 = vmatprep.subr.mxu0 0.0
        %5597 = vmatpush1.xpose.msra.mxu0 0.0
        %5598 = vmatprep.subr.mxu0 0.0
        %5599 = vmatpush1.xpose.msra.mxu0 0.0
        %5600 = vmatprep.subr.mxu0 0.0
        %5601 = vmatpush1.xpose.msra.mxu0 0.0
        %5602 = vmatprep.subr.mxu0 0.0
        %5603 = vmatpush1.xpose.msra.mxu0 0.0
        %5604 = vmatprep.subr.mxu0 0.0
        %5605 = vmatpush1.xpose.msra.mxu0 0.0
        %5606 = vmatprep.subr.mxu0 0.0
        %5607 = vmatpush1.xpose.msra.mxu0 0.0
        %5608 = vmatprep.subr.mxu0 0.0
        %5609 = vmatpush1.xpose.msra.mxu0 0.0
        %5610 = vmatprep.subr.mxu0 0.0
        %5611 = vmatpush1.xpose.msra.mxu0 0.0
        %5612 = vmatprep.subr.mxu0 0.0
        %5613 = vmatpush1.xpose.msra.mxu0 0.0
        %5614 = vmatprep.subr.mxu0 0.0
        %5615 = vmatpush1.xpose.msra.mxu0 0.0
        %5616 = vmatprep.subr.mxu0 0.0
        %5617 = vmatpush1.xpose.msra.mxu0 0.0
        %5618 = vmatprep.subr.mxu0 0.0
        %5619 = vmatpush1.xpose.msra.mxu0 0.0
        %5620 = vmatprep.subr.mxu0 0.0
        %5621 = vmatpush1.xpose.msra.mxu0 0.0
        %5622 = vmatprep.subr.mxu0 0.0
        %5623 = vmatpush1.xpose.msra.mxu0 0.0
        %5624 = vmatprep.subr.mxu0 0.0
        %5625 = vmatpush1.xpose.msra.mxu0 0.0
        %5626 = vmatprep.subr.mxu0 0.0
        %5627 = vmatpush1.xpose.msra.mxu0 0.0
        %5628 = vmatprep.mubr.f32.mxu0 0.0
        %5629 = vmatmul.mubr.f32.gmra.mrb[0].mxu0 %v5556
        %v5630 = vpop.f32.mrb[0].mxu0
        %v5631 = vadd.f32 0.0, %v5630
        %v5632 = vpop.f32.mrb[0].mxu0
        %5633 = vmatprep.mubr.f32.mxu0 0.0
        %5634 = vmatmul.mubr.f32.gmra.mrb[0].mxu0 %v5558
        %v5635 = vpop.f32.mrb[0].mxu0
        %v5636 = vadd.f32 0.0, %v5635
        %v5637 = vpop.f32.mrb[0].mxu0
        %5638 = vdwg.mxu0
        %5641 = vrot.lane.b32.xlu0 %v4612, 124
        %v5642 = vpop.permute.xlu0 %5641
        %5643 = vrot.lane.b32.xlu0 %v4617, 124
        %v5644 = vpop.permute.xlu0 %5643
        %v5645 = vsel %vm427, %v4612, 0
        %v5647 = vsel %vm427, %v4617, 0
        %v5649 = vsel %vm427, %v5642, 0
        %v5651 = vsel %vm427, %v5644, 0
        %5653 = vmatprep.subr.mxu0 0.0
        %5654 = vmatpush1.xpose.msra.mxu0 %v5649
        %5655 = vmatprep.subr.mxu0 0.0
        %5656 = vmatpush1.xpose.msra.mxu0 %v5651
        %5657 = vmatprep.subr.mxu0 0.0
        %5658 = vmatpush1.xpose.msra.mxu0 0.0
        %5659 = vmatprep.subr.mxu0 0.0
        %5660 = vmatpush1.xpose.msra.mxu0 0.0
        %5661 = vmatprep.subr.mxu0 0.0
        %5662 = vmatpush1.xpose.msra.mxu0 0.0
        %5663 = vmatprep.subr.mxu0 0.0
        %5664 = vmatpush1.xpose.msra.mxu0 0.0
        %5665 = vmatprep.subr.mxu0 0.0
        %5666 = vmatpush1.xpose.msra.mxu0 0.0
        %5667 = vmatprep.subr.mxu0 0.0
        %5668 = vmatpush1.xpose.msra.mxu0 0.0
        %5669 = vmatprep.subr.mxu0 0.0
        %5670 = vmatpush1.xpose.msra.mxu0 0.0
        %5671 = vmatprep.subr.mxu0 0.0
        %5672 = vmatpush1.xpose.msra.mxu0 0.0
        %5673 = vmatprep.subr.mxu0 0.0
        %5674 = vmatpush1.xpose.msra.mxu0 0.0
        %5675 = vmatprep.subr.mxu0 0.0
        %5676 = vmatpush1.xpose.msra.mxu0 0.0
        %5677 = vmatprep.subr.mxu0 0.0
        %5678 = vmatpush1.xpose.msra.mxu0 0.0
        %5679 = vmatprep.subr.mxu0 0.0
        %5680 = vmatpush1.xpose.msra.mxu0 0.0
        %5681 = vmatprep.subr.mxu0 0.0
        %5682 = vmatpush1.xpose.msra.mxu0 0.0
        %5683 = vmatprep.subr.mxu0 0.0
        %5684 = vmatpush1.xpose.msra.mxu0 0.0
        %5685 = vmatprep.subr.mxu0 0.0
        %5686 = vmatpush1.xpose.msra.mxu0 0.0
        %5687 = vmatprep.subr.mxu0 0.0
        %5688 = vmatpush1.xpose.msra.mxu0 0.0
        %5689 = vmatprep.subr.mxu0 0.0
        %5690 = vmatpush1.xpose.msra.mxu0 0.0
        %5691 = vmatprep.subr.mxu0 0.0
        %5692 = vmatpush1.xpose.msra.mxu0 0.0
        %5693 = vmatprep.subr.mxu0 0.0
        %5694 = vmatpush1.xpose.msra.mxu0 0.0
        %5695 = vmatprep.subr.mxu0 0.0
        %5696 = vmatpush1.xpose.msra.mxu0 0.0
        %5697 = vmatprep.subr.mxu0 0.0
        %5698 = vmatpush1.xpose.msra.mxu0 0.0
        %5699 = vmatprep.subr.mxu0 0.0
        %5700 = vmatpush1.xpose.msra.mxu0 0.0
        %5701 = vmatprep.subr.mxu0 0.0
        %5702 = vmatpush1.xpose.msra.mxu0 0.0
        %5703 = vmatprep.subr.mxu0 0.0
        %5704 = vmatpush1.xpose.msra.mxu0 0.0
        %5705 = vmatprep.subr.mxu0 0.0
        %5706 = vmatpush1.xpose.msra.mxu0 0.0
        %5707 = vmatprep.subr.mxu0 0.0
        %5708 = vmatpush1.xpose.msra.mxu0 0.0
        %5709 = vmatprep.subr.mxu0 0.0
        %5710 = vmatpush1.xpose.msra.mxu0 0.0
        %5711 = vmatprep.subr.mxu0 0.0
        %5712 = vmatpush1.xpose.msra.mxu0 0.0
        %5713 = vmatprep.subr.mxu0 0.0
        %5714 = vmatpush1.xpose.msra.mxu0 0.0
        %5715 = vmatprep.subr.mxu0 0.0
        %5716 = vmatpush1.xpose.msra.mxu0 0.0
        %5717 = vmatprep.mubr.f32.mxu0 0.0
        %5718 = vmatmul.mubr.f32.gmra.mrb[0].mxu0 %v5645
        %v5719 = vpop.f32.mrb[0].mxu0
        %v5720 = vadd.f32 0.0, %v5719
        %v5721 = vpop.f32.mrb[0].mxu0
        %5722 = vmatprep.mubr.f32.mxu0 0.0
        %5723 = vmatmul.mubr.f32.gmra.mrb[0].mxu0 %v5647
        %v5724 = vpop.f32.mrb[0].mxu0
        %v5725 = vadd.f32 0.0, %v5724
        %v5726 = vpop.f32.mrb[0].mxu0
        %5727 = vdwg.mxu0
        %5730 = vrot.lane.b32.xlu0 %v4622, 124
        %v5731 = vpop.permute.xlu0 %5730
        %5732 = vrot.lane.b32.xlu0 %v4627, 124
        %v5733 = vpop.permute.xlu0 %5732
        %v5734 = vsel %vm427, %v4622, 0
        %v5736 = vsel %vm427, %v4627, 0
        %v5738 = vsel %vm427, %v5731, 0
        %v5740 = vsel %vm427, %v5733, 0
        %5742 = vmatprep.subr.mxu0 0.0
        %5743 = vmatpush1.xpose.msra.mxu0 %v5738
        %5744 = vmatprep.subr.mxu0 0.0
        %5745 = vmatpush1.xpose.msra.mxu0 %v5740
        %5746 = vmatprep.subr.mxu0 0.0
        %5747 = vmatpush1.xpose.msra.mxu0 0.0
        %5748 = vmatprep.subr.mxu0 0.0
        %5749 = vmatpush1.xpose.msra.mxu0 0.0
        %5750 = vmatprep.subr.mxu0 0.0
        %5751 = vmatpush1.xpose.msra.mxu0 0.0
        %5752 = vmatprep.subr.mxu0 0.0
        %5753 = vmatpush1.xpose.msra.mxu0 0.0
        %5754 = vmatprep.subr.mxu0 0.0
        %5755 = vmatpush1.xpose.msra.mxu0 0.0
        %5756 = vmatprep.subr.mxu0 0.0
        %5757 = vmatpush1.xpose.msra.mxu0 0.0
        %5758 = vmatprep.subr.mxu0 0.0
        %5759 = vmatpush1.xpose.msra.mxu0 0.0
        %5760 = vmatprep.subr.mxu0 0.0
        %5761 = vmatpush1.xpose.msra.mxu0 0.0
        %5762 = vmatprep.subr.mxu0 0.0
        %5763 = vmatpush1.xpose.msra.mxu0 0.0
        %5764 = vmatprep.subr.mxu0 0.0
        %5765 = vmatpush1.xpose.msra.mxu0 0.0
        %5766 = vmatprep.subr.mxu0 0.0
        %5767 = vmatpush1.xpose.msra.mxu0 0.0
        %5768 = vmatprep.subr.mxu0 0.0
        %5769 = vmatpush1.xpose.msra.mxu0 0.0
        %5770 = vmatprep.subr.mxu0 0.0
        %5771 = vmatpush1.xpose.msra.mxu0 0.0
        %5772 = vmatprep.subr.mxu0 0.0
        %5773 = vmatpush1.xpose.msra.mxu0 0.0
        %5774 = vmatprep.subr.mxu0 0.0
        %5775 = vmatpush1.xpose.msra.mxu0 0.0
        %5776 = vmatprep.subr.mxu0 0.0
        %5777 = vmatpush1.xpose.msra.mxu0 0.0
        %5778 = vmatprep.subr.mxu0 0.0
        %5779 = vmatpush1.xpose.msra.mxu0 0.0
        %5780 = vmatprep.subr.mxu0 0.0
        %5781 = vmatpush1.xpose.msra.mxu0 0.0
        %5782 = vmatprep.subr.mxu0 0.0
        %5783 = vmatpush1.xpose.msra.mxu0 0.0
        %5784 = vmatprep.subr.mxu0 0.0
        %5785 = vmatpush1.xpose.msra.mxu0 0.0
        %5786 = vmatprep.subr.mxu0 0.0
        %5787 = vmatpush1.xpose.msra.mxu0 0.0
        %5788 = vmatprep.subr.mxu0 0.0
        %5789 = vmatpush1.xpose.msra.mxu0 0.0
        %5790 = vmatprep.subr.mxu0 0.0
        %5791 = vmatpush1.xpose.msra.mxu0 0.0
        %5792 = vmatprep.subr.mxu0 0.0
        %5793 = vmatpush1.xpose.msra.mxu0 0.0
        %5794 = vmatprep.subr.mxu0 0.0
        %5795 = vmatpush1.xpose.msra.mxu0 0.0
        %5796 = vmatprep.subr.mxu0 0.0
        %5797 = vmatpush1.xpose.msra.mxu0 0.0
        %5798 = vmatprep.subr.mxu0 0.0
        %5799 = vmatpush1.xpose.msra.mxu0 0.0
        %5800 = vmatprep.subr.mxu0 0.0
        %5801 = vmatpush1.xpose.msra.mxu0 0.0
        %5802 = vmatprep.subr.mxu0 0.0
        %5803 = vmatpush1.xpose.msra.mxu0 0.0
        %5804 = vmatprep.subr.mxu0 0.0
        %5805 = vmatpush1.xpose.msra.mxu0 0.0
        %5806 = vmatprep.mubr.f32.mxu0 0.0
        %5807 = vmatmul.mubr.f32.gmra.mrb[0].mxu0 %v5734
        %v5808 = vpop.f32.mrb[0].mxu0
        %v5809 = vadd.f32 0.0, %v5808
        %v5810 = vpop.f32.mrb[0].mxu0
        %5811 = vmatprep.mubr.f32.mxu0 0.0
        %5812 = vmatmul.mubr.f32.gmra.mrb[0].mxu0 %v5736
        %v5813 = vpop.f32.mrb[0].mxu0
        %v5814 = vadd.f32 0.0, %v5813
        %v5815 = vpop.f32.mrb[0].mxu0
        %5816 = vdwg.mxu0
        %5819 = vrot.lane.b32.xlu0 %v4632, 124
        %v5820 = vpop.permute.xlu0 %5819
        %5821 = vrot.lane.b32.xlu0 %v4637, 124
        %v5822 = vpop.permute.xlu0 %5821
        %v5823 = vsel %vm427, %v4632, 0
        %v5825 = vsel %vm427, %v4637, 0
        %v5827 = vsel %vm427, %v5820, 0
        %v5829 = vsel %vm427, %v5822, 0
        %5831 = vmatprep.subr.mxu0 0.0
        %5832 = vmatpush1.xpose.msra.mxu0 %v5827
        %5833 = vmatprep.subr.mxu0 0.0
        %5834 = vmatpush1.xpose.msra.mxu0 %v5829
        %5835 = vmatprep.subr.mxu0 0.0
        %5836 = vmatpush1.xpose.msra.mxu0 0.0
        %5837 = vmatprep.subr.mxu0 0.0
        %5838 = vmatpush1.xpose.msra.mxu0 0.0
        %5839 = vmatprep.subr.mxu0 0.0
        %5840 = vmatpush1.xpose.msra.mxu0 0.0
        %5841 = vmatprep.subr.mxu0 0.0
        %5842 = vmatpush1.xpose.msra.mxu0 0.0
        %5843 = vmatprep.subr.mxu0 0.0
        %5844 = vmatpush1.xpose.msra.mxu0 0.0
        %5845 = vmatprep.subr.mxu0 0.0
        %5846 = vmatpush1.xpose.msra.mxu0 0.0
        %5847 = vmatprep.subr.mxu0 0.0
        %5848 = vmatpush1.xpose.msra.mxu0 0.0
        %5849 = vmatprep.subr.mxu0 0.0
        %5850 = vmatpush1.xpose.msra.mxu0 0.0
        %5851 = vmatprep.subr.mxu0 0.0
        %5852 = vmatpush1.xpose.msra.mxu0 0.0
        %5853 = vmatprep.subr.mxu0 0.0
        %5854 = vmatpush1.xpose.msra.mxu0 0.0
        %5855 = vmatprep.subr.mxu0 0.0
        %5856 = vmatpush1.xpose.msra.mxu0 0.0
        %5857 = vmatprep.subr.mxu0 0.0
        %5858 = vmatpush1.xpose.msra.mxu0 0.0
        %5859 = vmatprep.subr.mxu0 0.0
        %5860 = vmatpush1.xpose.msra.mxu0 0.0
        %5861 = vmatprep.subr.mxu0 0.0
        %5862 = vmatpush1.xpose.msra.mxu0 0.0
        %5863 = vmatprep.subr.mxu0 0.0
        %5864 = vmatpush1.xpose.msra.mxu0 0.0
        %5865 = vmatprep.subr.mxu0 0.0
        %5866 = vmatpush1.xpose.msra.mxu0 0.0
        %5867 = vmatprep.subr.mxu0 0.0
        %5868 = vmatpush1.xpose.msra.mxu0 0.0
        %5869 = vmatprep.subr.mxu0 0.0
        %5870 = vmatpush1.xpose.msra.mxu0 0.0
        %5871 = vmatprep.subr.mxu0 0.0
        %5872 = vmatpush1.xpose.msra.mxu0 0.0
        %5873 = vmatprep.subr.mxu0 0.0
        %5874 = vmatpush1.xpose.msra.mxu0 0.0
        %5875 = vmatprep.subr.mxu0 0.0
        %5876 = vmatpush1.xpose.msra.mxu0 0.0
        %5877 = vmatprep.subr.mxu0 0.0
        %5878 = vmatpush1.xpose.msra.mxu0 0.0
        %5879 = vmatprep.subr.mxu0 0.0
        %5880 = vmatpush1.xpose.msra.mxu0 0.0
        %5881 = vmatprep.subr.mxu0 0.0
        %5882 = vmatpush1.xpose.msra.mxu0 0.0
        %5883 = vmatprep.subr.mxu0 0.0
        %5884 = vmatpush1.xpose.msra.mxu0 0.0
        %5885 = vmatprep.subr.mxu0 0.0
        %5886 = vmatpush1.xpose.msra.mxu0 0.0
        %5887 = vmatprep.subr.mxu0 0.0
        %5888 = vmatpush1.xpose.msra.mxu0 0.0
        %5889 = vmatprep.subr.mxu0 0.0
        %5890 = vmatpush1.xpose.msra.mxu0 0.0
        %5891 = vmatprep.subr.mxu0 0.0
        %5892 = vmatpush1.xpose.msra.mxu0 0.0
        %5893 = vmatprep.subr.mxu0 0.0
        %5894 = vmatpush1.xpose.msra.mxu0 0.0
        %5895 = vmatprep.mubr.f32.mxu0 0.0
        %5896 = vmatmul.mubr.f32.gmra.mrb[0].mxu0 %v5823
        %v5897 = vpop.f32.mrb[0].mxu0
        %v5898 = vadd.f32 0.0, %v5897
        %v5899 = vpop.f32.mrb[0].mxu0
        %5900 = vmatprep.mubr.f32.mxu0 0.0
        %5901 = vmatmul.mubr.f32.gmra.mrb[0].mxu0 %v5825
        %v5902 = vpop.f32.mrb[0].mxu0
        %v5903 = vadd.f32 0.0, %v5902
        %v5904 = vpop.f32.mrb[0].mxu0
        %5905 = vdwg.mxu0
        %5908 = vrot.lane.b32.xlu0 %v4642, 124
        %v5909 = vpop.permute.xlu0 %5908
        %5910 = vrot.lane.b32.xlu0 %v4647, 124
        %v5911 = vpop.permute.xlu0 %5910
        %v5912 = vsel %vm427, %v4642, 0
        %v5914 = vsel %vm427, %v4647, 0
        %v5916 = vsel %vm427, %v5909, 0
        %v5918 = vsel %vm427, %v5911, 0
        %5920 = vmatprep.subr.mxu0 0.0
        %5921 = vmatpush1.xpose.msra.mxu0 %v5916
        %5922 = vmatprep.subr.mxu0 0.0
        %5923 = vmatpush1.xpose.msra.mxu0 %v5918
        %5924 = vmatprep.subr.mxu0 0.0
        %5925 = vmatpush1.xpose.msra.mxu0 0.0
        %5926 = vmatprep.subr.mxu0 0.0
        %5927 = vmatpush1.xpose.msra.mxu0 0.0
        %5928 = vmatprep.subr.mxu0 0.0
        %5929 = vmatpush1.xpose.msra.mxu0 0.0
        %5930 = vmatprep.subr.mxu0 0.0
        %5931 = vmatpush1.xpose.msra.mxu0 0.0
        %5932 = vmatprep.subr.mxu0 0.0
        %5933 = vmatpush1.xpose.msra.mxu0 0.0
        %5934 = vmatprep.subr.mxu0 0.0
        %5935 = vmatpush1.xpose.msra.mxu0 0.0
        %5936 = vmatprep.subr.mxu0 0.0
        %5937 = vmatpush1.xpose.msra.mxu0 0.0
        %5938 = vmatprep.subr.mxu0 0.0
        %5939 = vmatpush1.xpose.msra.mxu0 0.0
        %5940 = vmatprep.subr.mxu0 0.0
        %5941 = vmatpush1.xpose.msra.mxu0 0.0
        %5942 = vmatprep.subr.mxu0 0.0
        %5943 = vmatpush1.xpose.msra.mxu0 0.0
        %5944 = vmatprep.subr.mxu0 0.0
        %5945 = vmatpush1.xpose.msra.mxu0 0.0
        %5946 = vmatprep.subr.mxu0 0.0
        %5947 = vmatpush1.xpose.msra.mxu0 0.0
        %5948 = vmatprep.subr.mxu0 0.0
        %5949 = vmatpush1.xpose.msra.mxu0 0.0
        %5950 = vmatprep.subr.mxu0 0.0
        %5951 = vmatpush1.xpose.msra.mxu0 0.0
        %5952 = vmatprep.subr.mxu0 0.0
        %5953 = vmatpush1.xpose.msra.mxu0 0.0
        %5954 = vmatprep.subr.mxu0 0.0
        %5955 = vmatpush1.xpose.msra.mxu0 0.0
        %5956 = vmatprep.subr.mxu0 0.0
        %5957 = vmatpush1.xpose.msra.mxu0 0.0
        %5958 = vmatprep.subr.mxu0 0.0
        %5959 = vmatpush1.xpose.msra.mxu0 0.0
        %5960 = vmatprep.subr.mxu0 0.0
        %5961 = vmatpush1.xpose.msra.mxu0 0.0
        %5962 = vmatprep.subr.mxu0 0.0
        %5963 = vmatpush1.xpose.msra.mxu0 0.0
        %5964 = vmatprep.subr.mxu0 0.0
        %5965 = vmatpush1.xpose.msra.mxu0 0.0
        %5966 = vmatprep.subr.mxu0 0.0
        %5967 = vmatpush1.xpose.msra.mxu0 0.0
        %5968 = vmatprep.subr.mxu0 0.0
        %5969 = vmatpush1.xpose.msra.mxu0 0.0
        %5970 = vmatprep.subr.mxu0 0.0
        %5971 = vmatpush1.xpose.msra.mxu0 0.0
        %5972 = vmatprep.subr.mxu0 0.0
        %5973 = vmatpush1.xpose.msra.mxu0 0.0
        %5974 = vmatprep.subr.mxu0 0.0
        %5975 = vmatpush1.xpose.msra.mxu0 0.0
        %5976 = vmatprep.subr.mxu0 0.0
        %5977 = vmatpush1.xpose.msra.mxu0 0.0
        %5978 = vmatprep.subr.mxu0 0.0
        %5979 = vmatpush1.xpose.msra.mxu0 0.0
        %5980 = vmatprep.subr.mxu0 0.0
        %5981 = vmatpush1.xpose.msra.mxu0 0.0
        %5982 = vmatprep.subr.mxu0 0.0
        %5983 = vmatpush1.xpose.msra.mxu0 0.0
        %5984 = vmatprep.mubr.f32.mxu0 0.0
        %5985 = vmatmul.mubr.f32.gmra.mrb[0].mxu0 %v5912
        %v5986 = vpop.f32.mrb[0].mxu0
        %v5987 = vadd.f32 0.0, %v5986
        %v5988 = vpop.f32.mrb[0].mxu0
        %5989 = vmatprep.mubr.f32.mxu0 0.0
        %5990 = vmatmul.mubr.f32.gmra.mrb[0].mxu0 %v5914
        %v5991 = vpop.f32.mrb[0].mxu0
        %v5992 = vadd.f32 0.0, %v5991
        %v5993 = vpop.f32.mrb[0].mxu0
        %5994 = vdwg.mxu0
        %5997 = vrot.lane.b32.xlu0 %v4652, 124
        %v5998 = vpop.permute.xlu0 %5997
        %5999 = vrot.lane.b32.xlu0 %v4657, 124
        %v6000 = vpop.permute.xlu0 %5999
        %v6001 = vsel %vm427, %v4652, 0
        %v6003 = vsel %vm427, %v4657, 0
        %v6005 = vsel %vm427, %v5998, 0
        %v6007 = vsel %vm427, %v6000, 0
        %6009 = vmatprep.subr.mxu0 0.0
        %6010 = vmatpush1.xpose.msra.mxu0 %v6005
        %6011 = vmatprep.subr.mxu0 0.0
        %6012 = vmatpush1.xpose.msra.mxu0 %v6007
        %6013 = vmatprep.subr.mxu0 0.0
        %6014 = vmatpush1.xpose.msra.mxu0 0.0
        %6015 = vmatprep.subr.mxu0 0.0
        %6016 = vmatpush1.xpose.msra.mxu0 0.0
        %6017 = vmatprep.subr.mxu0 0.0
        %6018 = vmatpush1.xpose.msra.mxu0 0.0
        %6019 = vmatprep.subr.mxu0 0.0
        %6020 = vmatpush1.xpose.msra.mxu0 0.0
        %6021 = vmatprep.subr.mxu0 0.0
        %6022 = vmatpush1.xpose.msra.mxu0 0.0
        %6023 = vmatprep.subr.mxu0 0.0
        %6024 = vmatpush1.xpose.msra.mxu0 0.0
        %6025 = vmatprep.subr.mxu0 0.0
        %6026 = vmatpush1.xpose.msra.mxu0 0.0
        %6027 = vmatprep.subr.mxu0 0.0
        %6028 = vmatpush1.xpose.msra.mxu0 0.0
        %6029 = vmatprep.subr.mxu0 0.0
        %6030 = vmatpush1.xpose.msra.mxu0 0.0
        %6031 = vmatprep.subr.mxu0 0.0
        %6032 = vmatpush1.xpose.msra.mxu0 0.0
        %6033 = vmatprep.subr.mxu0 0.0
        %6034 = vmatpush1.xpose.msra.mxu0 0.0
        %6035 = vmatprep.subr.mxu0 0.0
        %6036 = vmatpush1.xpose.msra.mxu0 0.0
        %6037 = vmatprep.subr.mxu0 0.0
        %6038 = vmatpush1.xpose.msra.mxu0 0.0
        %6039 = vmatprep.subr.mxu0 0.0
        %6040 = vmatpush1.xpose.msra.mxu0 0.0
        %6041 = vmatprep.subr.mxu0 0.0
        %6042 = vmatpush1.xpose.msra.mxu0 0.0
        %6043 = vmatprep.subr.mxu0 0.0
        %6044 = vmatpush1.xpose.msra.mxu0 0.0
        %6045 = vmatprep.subr.mxu0 0.0
        %6046 = vmatpush1.xpose.msra.mxu0 0.0
        %6047 = vmatprep.subr.mxu0 0.0
        %6048 = vmatpush1.xpose.msra.mxu0 0.0
        %6049 = vmatprep.subr.mxu0 0.0
        %6050 = vmatpush1.xpose.msra.mxu0 0.0
        %6051 = vmatprep.subr.mxu0 0.0
        %6052 = vmatpush1.xpose.msra.mxu0 0.0
        %6053 = vmatprep.subr.mxu0 0.0
        %6054 = vmatpush1.xpose.msra.mxu0 0.0
        %6055 = vmatprep.subr.mxu0 0.0
        %6056 = vmatpush1.xpose.msra.mxu0 0.0
        %6057 = vmatprep.subr.mxu0 0.0
        %6058 = vmatpush1.xpose.msra.mxu0 0.0
        %6059 = vmatprep.subr.mxu0 0.0
        %6060 = vmatpush1.xpose.msra.mxu0 0.0
        %6061 = vmatprep.subr.mxu0 0.0
        %6062 = vmatpush1.xpose.msra.mxu0 0.0
        %6063 = vmatprep.subr.mxu0 0.0
        %6064 = vmatpush1.xpose.msra.mxu0 0.0
        %6065 = vmatprep.subr.mxu0 0.0
        %6066 = vmatpush1.xpose.msra.mxu0 0.0
        %6067 = vmatprep.subr.mxu0 0.0
        %6068 = vmatpush1.xpose.msra.mxu0 0.0
        %6069 = vmatprep.subr.mxu0 0.0
        %6070 = vmatpush1.xpose.msra.mxu0 0.0
        %6071 = vmatprep.subr.mxu0 0.0
        %6072 = vmatpush1.xpose.msra.mxu0 0.0
        %6073 = vmatprep.mubr.f32.mxu0 0.0
        %6074 = vmatmul.mubr.f32.gmra.mrb[0].mxu0 %v6001
        %v6075 = vpop.f32.mrb[0].mxu0
        %v6076 = vadd.f32 0.0, %v6075
        %v6077 = vpop.f32.mrb[0].mxu0
        %6078 = vmatprep.mubr.f32.mxu0 0.0
        %6079 = vmatmul.mubr.f32.gmra.mrb[0].mxu0 %v6003
        %v6080 = vpop.f32.mrb[0].mxu0
        %v6081 = vadd.f32 0.0, %v6080
        %v6082 = vpop.f32.mrb[0].mxu0
        %6083 = vdwg.mxu0
        %vm6084 = vcmask 130048
        %v6085 = vsel %vm6084, %v4741, 0.0
        %v6086 = vsel %vm6084, %v4830, 0.0
        %v6087 = vadd.f32 %v6085, %v6086
        %v6088 = vsel %vm6084, %v4919, 0.0
        %v6089 = vadd.f32 %v6087, %v6088
        %v6090 = vsel %vm6084, %v5008, 0.0
        %v6091 = vadd.f32 %v6089, %v6090
        %v6092 = vsel %vm6084, %v5097, 0.0
        %v6093 = vadd.f32 %v6091, %v6092
        %v6094 = vsel %vm6084, %v5186, 0.0
        %v6095 = vadd.f32 %v6093, %v6094
        %v6096 = vsel %vm6084, %v5275, 0.0
        %v6097 = vadd.f32 %v6095, %v6096
        %v6098 = vsel %vm6084, %v5364, 0.0
        %v6099 = vadd.f32 %v6097, %v6098
        %v6100 = vsel %vm6084, %v5453, 0.0
        %v6101 = vadd.f32 %v6099, %v6100
        %v6102 = vsel %vm6084, %v5542, 0.0
        %v6103 = vadd.f32 %v6101, %v6102
        %v6104 = vsel %vm6084, %v5631, 0.0
        %v6105 = vadd.f32 %v6103, %v6104
        %v6106 = vsel %vm6084, %v5720, 0.0
        %v6107 = vadd.f32 %v6105, %v6106
        %v6108 = vsel %vm6084, %v5809, 0.0
        %v6109 = vadd.f32 %v6107, %v6108
        %v6110 = vsel %vm6084, %v5898, 0.0
        %v6111 = vadd.f32 %v6109, %v6110
        %v6112 = vsel %vm6084, %v5987, 0.0
        %v6113 = vadd.f32 %v6111, %v6112
        %v6114 = vsel %vm6084, %v6076, 0.0
        %v6115 = vadd.f32 %v6113, %v6114
        %v6116 = vsel %vm6084, %v4746, 0.0
        %v6117 = vsel %vm6084, %v4835, 0.0
        %v6118 = vadd.f32 %v6116, %v6117
        %v6119 = vsel %vm6084, %v4924, 0.0
        %v6120 = vadd.f32 %v6118, %v6119
        %v6121 = vsel %vm6084, %v5013, 0.0
        %v6122 = vadd.f32 %v6120, %v6121
        %v6123 = vsel %vm6084, %v5102, 0.0
        %v6124 = vadd.f32 %v6122, %v6123
        %v6125 = vsel %vm6084, %v5191, 0.0
        %v6126 = vadd.f32 %v6124, %v6125
        %v6127 = vsel %vm6084, %v5280, 0.0
        %v6128 = vadd.f32 %v6126, %v6127
        %v6129 = vsel %vm6084, %v5369, 0.0
        %v6130 = vadd.f32 %v6128, %v6129
        %v6131 = vsel %vm6084, %v5458, 0.0
        %v6132 = vadd.f32 %v6130, %v6131
        %v6133 = vsel %vm6084, %v5547, 0.0
        %v6134 = vadd.f32 %v6132, %v6133
        %v6135 = vsel %vm6084, %v5636, 0.0
        %v6136 = vadd.f32 %v6134, %v6135
        %v6137 = vsel %vm6084, %v5725, 0.0
        %v6138 = vadd.f32 %v6136, %v6137
        %v6139 = vsel %vm6084, %v5814, 0.0
        %v6140 = vadd.f32 %v6138, %v6139
        %v6141 = vsel %vm6084, %v5903, 0.0
        %v6142 = vadd.f32 %v6140, %v6141
        %v6143 = vsel %vm6084, %v5992, 0.0
        %v6144 = vadd.f32 %v6142, %v6143
        %v6145 = vsel %vm6084, %v6081, 0.0
        %v6146 = vadd.f32 %v6144, %v6145
        %v6147 = vsub.f32 0.0, %v6115
        %v6148 = vsub.f32 0.0, %v6146
        %v6149 = vmul.f32 %v6147, 1.442695
        %v6150 = vpow.pop %v6149
        %v6151 = vmul.f32 %v6148, 1.442695
        %v6152 = vpow.pop %v6151
        %v6153 = vadd.f32 %v6150, 1.0
        %v6154 = vadd.f32 %v6152, 1.0
        %v6155 = vrcp.pop %v6153
        %v6156 = vrcp.pop %v6154
        %6157 = vrot.lane.b32.xlu0 %v4502, 120
        %v6158 = vpop.permute.xlu0 %6157
        %6159 = vrot.lane.b32.xlu0 %v4507, 120
        %v6160 = vpop.permute.xlu0 %6159
        %v6164 = vsel %vm6084, %v6155, 0
        %v6167 = vsel %vm6084, %v6156, 0
        %6169 = vmatprep.subr.mxu0 0.0
        %6170 = vmatpush1.msra.mxu0 %v6158
        %6171 = vmatprep.subr.mxu0 0.0
        %6172 = vmatpush1.msra.mxu0 %v6160
        %6173 = vmatprep.subr.mxu0 0.0
        %6174 = vmatpush1.msra.mxu0 0.0
        %6175 = vmatprep.subr.mxu0 0.0
        %6176 = vmatpush1.msra.mxu0 0.0
        %6177 = vmatprep.subr.mxu0 0.0
        %6178 = vmatpush1.msra.mxu0 0.0
        %6179 = vmatprep.subr.mxu0 0.0
        %6180 = vmatpush1.msra.mxu0 0.0
        %6181 = vmatprep.subr.mxu0 0.0
        %6182 = vmatpush1.msra.mxu0 0.0
        %6183 = vmatprep.subr.mxu0 0.0
        %6184 = vmatpush1.msra.mxu0 0.0
        %6185 = vmatprep.subr.mxu0 0.0
        %6186 = vmatpush1.msra.mxu0 0.0
        %6187 = vmatprep.subr.mxu0 0.0
        %6188 = vmatpush1.msra.mxu0 0.0
        %6189 = vmatprep.subr.mxu0 0.0
        %6190 = vmatpush1.msra.mxu0 0.0
        %6191 = vmatprep.subr.mxu0 0.0
        %6192 = vmatpush1.msra.mxu0 0.0
        %6193 = vmatprep.subr.mxu0 0.0
        %6194 = vmatpush1.msra.mxu0 0.0
        %6195 = vmatprep.subr.mxu0 0.0
        %6196 = vmatpush1.msra.mxu0 0.0
        %6197 = vmatprep.subr.mxu0 0.0
        %6198 = vmatpush1.msra.mxu0 0.0
        %6199 = vmatprep.subr.mxu0 0.0
        %6200 = vmatpush1.msra.mxu0 0.0
        %6201 = vmatprep.subr.mxu0 0.0
        %6202 = vmatpush1.msra.mxu0 0.0
        %6203 = vmatprep.subr.mxu0 0.0
        %6204 = vmatpush1.msra.mxu0 0.0
        %6205 = vmatprep.subr.mxu0 0.0
        %6206 = vmatpush1.msra.mxu0 0.0
        %6207 = vmatprep.subr.mxu0 0.0
        %6208 = vmatpush1.msra.mxu0 0.0
        %6209 = vmatprep.subr.mxu0 0.0
        %6210 = vmatpush1.msra.mxu0 0.0
        %6211 = vmatprep.subr.mxu0 0.0
        %6212 = vmatpush1.msra.mxu0 0.0
        %6213 = vmatprep.subr.mxu0 0.0
        %6214 = vmatpush1.msra.mxu0 0.0
        %6215 = vmatprep.subr.mxu0 0.0
        %6216 = vmatpush1.msra.mxu0 0.0
        %6217 = vmatprep.subr.mxu0 0.0
        %6218 = vmatpush1.msra.mxu0 0.0
        %6219 = vmatprep.subr.mxu0 0.0
        %6220 = vmatpush1.msra.mxu0 0.0
        %6221 = vmatprep.subr.mxu0 0.0
        %6222 = vmatpush1.msra.mxu0 0.0
        %6223 = vmatprep.subr.mxu0 0.0
        %6224 = vmatpush1.msra.mxu0 0.0
        %6225 = vmatprep.subr.mxu0 0.0
        %6226 = vmatpush1.msra.mxu0 0.0
        %6227 = vmatprep.subr.mxu0 0.0
        %6228 = vmatpush1.msra.mxu0 0.0
        %6229 = vmatprep.subr.mxu0 0.0
        %6230 = vmatpush1.msra.mxu0 0.0
        %6231 = vmatprep.subr.mxu0 0.0
        %6232 = vmatpush1.msra.mxu0 0.0
        %6233 = vmatprep.mubr.f32.mxu0 0.0
        %6234 = vmatmul.mubr.f32.gmra.mrb[0].mxu0 %v6164
        %v6235 = vpop.f32.mrb[0].mxu0
        %v6236 = vadd.f32 0.0, %v6235
        %v6237 = vpop.f32.mrb[0].mxu0
        %6238 = vmatprep.mubr.f32.mxu0 0.0
        %6239 = vmatmul.mubr.f32.gmra.mrb[0].mxu0 %v6167
        %v6240 = vpop.f32.mrb[0].mxu0
        %v6241 = vadd.f32 0.0, %v6240
        %v6242 = vpop.f32.mrb[0].mxu0
        %6243 = vdwg.mxu0
        %6244 = vrot.lane.b32.xlu0 %v4512, 120
        %v6245 = vpop.permute.xlu0 %6244
        %6246 = vrot.lane.b32.xlu0 %v4517, 120
        %v6247 = vpop.permute.xlu0 %6246
        %6250 = vmatprep.subr.mxu0 0.0
        %6251 = vmatpush1.msra.mxu0 %v6245
        %6252 = vmatprep.subr.mxu0 0.0
        %6253 = vmatpush1.msra.mxu0 %v6247
        %6254 = vmatprep.subr.mxu0 0.0
        %6255 = vmatpush1.msra.mxu0 0.0
        %6256 = vmatprep.subr.mxu0 0.0
        %6257 = vmatpush1.msra.mxu0 0.0
        %6258 = vmatprep.subr.mxu0 0.0
        %6259 = vmatpush1.msra.mxu0 0.0
        %6260 = vmatprep.subr.mxu0 0.0
        %6261 = vmatpush1.msra.mxu0 0.0
        %6262 = vmatprep.subr.mxu0 0.0
        %6263 = vmatpush1.msra.mxu0 0.0
        %6264 = vmatprep.subr.mxu0 0.0
        %6265 = vmatpush1.msra.mxu0 0.0
        %6266 = vmatprep.subr.mxu0 0.0
        %6267 = vmatpush1.msra.mxu0 0.0
        %6268 = vmatprep.subr.mxu0 0.0
        %6269 = vmatpush1.msra.mxu0 0.0
        %6270 = vmatprep.subr.mxu0 0.0
        %6271 = vmatpush1.msra.mxu0 0.0
        %6272 = vmatprep.subr.mxu0 0.0
        %6273 = vmatpush1.msra.mxu0 0.0
        %6274 = vmatprep.subr.mxu0 0.0
        %6275 = vmatpush1.msra.mxu0 0.0
        %6276 = vmatprep.subr.mxu0 0.0
        %6277 = vmatpush1.msra.mxu0 0.0
        %6278 = vmatprep.subr.mxu0 0.0
        %6279 = vmatpush1.msra.mxu0 0.0
        %6280 = vmatprep.subr.mxu0 0.0
        %6281 = vmatpush1.msra.mxu0 0.0
        %6282 = vmatprep.subr.mxu0 0.0
        %6283 = vmatpush1.msra.mxu0 0.0
        %6284 = vmatprep.subr.mxu0 0.0
        %6285 = vmatpush1.msra.mxu0 0.0
        %6286 = vmatprep.subr.mxu0 0.0
        %6287 = vmatpush1.msra.mxu0 0.0
        %6288 = vmatprep.subr.mxu0 0.0
        %6289 = vmatpush1.msra.mxu0 0.0
        %6290 = vmatprep.subr.mxu0 0.0
        %6291 = vmatpush1.msra.mxu0 0.0
        %6292 = vmatprep.subr.mxu0 0.0
        %6293 = vmatpush1.msra.mxu0 0.0
        %6294 = vmatprep.subr.mxu0 0.0
        %6295 = vmatpush1.msra.mxu0 0.0
        %6296 = vmatprep.subr.mxu0 0.0
        %6297 = vmatpush1.msra.mxu0 0.0
        %6298 = vmatprep.subr.mxu0 0.0
        %6299 = vmatpush1.msra.mxu0 0.0
        %6300 = vmatprep.subr.mxu0 0.0
        %6301 = vmatpush1.msra.mxu0 0.0
        %6302 = vmatprep.subr.mxu0 0.0
        %6303 = vmatpush1.msra.mxu0 0.0
        %6304 = vmatprep.subr.mxu0 0.0
        %6305 = vmatpush1.msra.mxu0 0.0
        %6306 = vmatprep.subr.mxu0 0.0
        %6307 = vmatpush1.msra.mxu0 0.0
        %6308 = vmatprep.subr.mxu0 0.0
        %6309 = vmatpush1.msra.mxu0 0.0
        %6310 = vmatprep.subr.mxu0 0.0
        %6311 = vmatpush1.msra.mxu0 0.0
        %6312 = vmatprep.subr.mxu0 0.0
        %6313 = vmatpush1.msra.mxu0 0.0
        %6314 = vmatprep.mubr.f32.mxu0 0.0
        %6315 = vmatmul.mubr.f32.gmra.mrb[0].mxu0 %v6164
        %v6316 = vpop.f32.mrb[0].mxu0
        %v6317 = vadd.f32 0.0, %v6316
        %v6318 = vpop.f32.mrb[0].mxu0
        %6319 = vmatprep.mubr.f32.mxu0 0.0
        %6320 = vmatmul.mubr.f32.gmra.mrb[0].mxu0 %v6167
        %v6321 = vpop.f32.mrb[0].mxu0
        %v6322 = vadd.f32 0.0, %v6321
        %v6323 = vpop.f32.mrb[0].mxu0
        %6324 = vdwg.mxu0
        %6325 = vrot.lane.b32.xlu0 %v4522, 120
        %v6326 = vpop.permute.xlu0 %6325
        %6327 = vrot.lane.b32.xlu0 %v4527, 120
        %v6328 = vpop.permute.xlu0 %6327
        %6331 = vmatprep.subr.mxu0 0.0
        %6332 = vmatpush1.msra.mxu0 %v6326
        %6333 = vmatprep.subr.mxu0 0.0
        %6334 = vmatpush1.msra.mxu0 %v6328
        %6335 = vmatprep.subr.mxu0 0.0
        %6336 = vmatpush1.msra.mxu0 0.0
        %6337 = vmatprep.subr.mxu0 0.0
        %6338 = vmatpush1.msra.mxu0 0.0
        %6339 = vmatprep.subr.mxu0 0.0
        %6340 = vmatpush1.msra.mxu0 0.0
        %6341 = vmatprep.subr.mxu0 0.0
        %6342 = vmatpush1.msra.mxu0 0.0
        %6343 = vmatprep.subr.mxu0 0.0
        %6344 = vmatpush1.msra.mxu0 0.0
        %6345 = vmatprep.subr.mxu0 0.0
        %6346 = vmatpush1.msra.mxu0 0.0
        %6347 = vmatprep.subr.mxu0 0.0
        %6348 = vmatpush1.msra.mxu0 0.0
        %6349 = vmatprep.subr.mxu0 0.0
        %6350 = vmatpush1.msra.mxu0 0.0
        %6351 = vmatprep.subr.mxu0 0.0
        %6352 = vmatpush1.msra.mxu0 0.0
        %6353 = vmatprep.subr.mxu0 0.0
        %6354 = vmatpush1.msra.mxu0 0.0
        %6355 = vmatprep.subr.mxu0 0.0
        %6356 = vmatpush1.msra.mxu0 0.0
        %6357 = vmatprep.subr.mxu0 0.0
        %6358 = vmatpush1.msra.mxu0 0.0
        %6359 = vmatprep.subr.mxu0 0.0
        %6360 = vmatpush1.msra.mxu0 0.0
        %6361 = vmatprep.subr.mxu0 0.0
        %6362 = vmatpush1.msra.mxu0 0.0
        %6363 = vmatprep.subr.mxu0 0.0
        %6364 = vmatpush1.msra.mxu0 0.0
        %6365 = vmatprep.subr.mxu0 0.0
        %6366 = vmatpush1.msra.mxu0 0.0
        %6367 = vmatprep.subr.mxu0 0.0
        %6368 = vmatpush1.msra.mxu0 0.0
        %6369 = vmatprep.subr.mxu0 0.0
        %6370 = vmatpush1.msra.mxu0 0.0
        %6371 = vmatprep.subr.mxu0 0.0
        %6372 = vmatpush1.msra.mxu0 0.0
        %6373 = vmatprep.subr.mxu0 0.0
        %6374 = vmatpush1.msra.mxu0 0.0
        %6375 = vmatprep.subr.mxu0 0.0
        %6376 = vmatpush1.msra.mxu0 0.0
        %6377 = vmatprep.subr.mxu0 0.0
        %6378 = vmatpush1.msra.mxu0 0.0
        %6379 = vmatprep.subr.mxu0 0.0
        %6380 = vmatpush1.msra.mxu0 0.0
        %6381 = vmatprep.subr.mxu0 0.0
        %6382 = vmatpush1.msra.mxu0 0.0
        %6383 = vmatprep.subr.mxu0 0.0
        %6384 = vmatpush1.msra.mxu0 0.0
        %6385 = vmatprep.subr.mxu0 0.0
        %6386 = vmatpush1.msra.mxu0 0.0
        %6387 = vmatprep.subr.mxu0 0.0
        %6388 = vmatpush1.msra.mxu0 0.0
        %6389 = vmatprep.subr.mxu0 0.0
        %6390 = vmatpush1.msra.mxu0 0.0
        %6391 = vmatprep.subr.mxu0 0.0
        %6392 = vmatpush1.msra.mxu0 0.0
        %6393 = vmatprep.subr.mxu0 0.0
        %6394 = vmatpush1.msra.mxu0 0.0
        %6395 = vmatprep.mubr.f32.mxu0 0.0
        %6396 = vmatmul.mubr.f32.gmra.mrb[0].mxu0 %v6164
        %v6397 = vpop.f32.mrb[0].mxu0
        %v6398 = vadd.f32 0.0, %v6397
        %v6399 = vpop.f32.mrb[0].mxu0
        %6400 = vmatprep.mubr.f32.mxu0 0.0
        %6401 = vmatmul.mubr.f32.gmra.mrb[0].mxu0 %v6167
        %v6402 = vpop.f32.mrb[0].mxu0
        %v6403 = vadd.f32 0.0, %v6402
        %v6404 = vpop.f32.mrb[0].mxu0
        %6405 = vdwg.mxu0
        %6406 = vrot.lane.b32.xlu0 %v4532, 120
        %v6407 = vpop.permute.xlu0 %6406
        %6408 = vrot.lane.b32.xlu0 %v4537, 120
        %v6409 = vpop.permute.xlu0 %6408
        %6412 = vmatprep.subr.mxu0 0.0
        %6413 = vmatpush1.msra.mxu0 %v6407
        %6414 = vmatprep.subr.mxu0 0.0
        %6415 = vmatpush1.msra.mxu0 %v6409
        %6416 = vmatprep.subr.mxu0 0.0
        %6417 = vmatpush1.msra.mxu0 0.0
        %6418 = vmatprep.subr.mxu0 0.0
        %6419 = vmatpush1.msra.mxu0 0.0
        %6420 = vmatprep.subr.mxu0 0.0
        %6421 = vmatpush1.msra.mxu0 0.0
        %6422 = vmatprep.subr.mxu0 0.0
        %6423 = vmatpush1.msra.mxu0 0.0
        %6424 = vmatprep.subr.mxu0 0.0
        %6425 = vmatpush1.msra.mxu0 0.0
        %6426 = vmatprep.subr.mxu0 0.0
        %6427 = vmatpush1.msra.mxu0 0.0
        %6428 = vmatprep.subr.mxu0 0.0
        %6429 = vmatpush1.msra.mxu0 0.0
        %6430 = vmatprep.subr.mxu0 0.0
        %6431 = vmatpush1.msra.mxu0 0.0
        %6432 = vmatprep.subr.mxu0 0.0
        %6433 = vmatpush1.msra.mxu0 0.0
        %6434 = vmatprep.subr.mxu0 0.0
        %6435 = vmatpush1.msra.mxu0 0.0
        %6436 = vmatprep.subr.mxu0 0.0
        %6437 = vmatpush1.msra.mxu0 0.0
        %6438 = vmatprep.subr.mxu0 0.0
        %6439 = vmatpush1.msra.mxu0 0.0
        %6440 = vmatprep.subr.mxu0 0.0
        %6441 = vmatpush1.msra.mxu0 0.0
        %6442 = vmatprep.subr.mxu0 0.0
        %6443 = vmatpush1.msra.mxu0 0.0
        %6444 = vmatprep.subr.mxu0 0.0
        %6445 = vmatpush1.msra.mxu0 0.0
        %6446 = vmatprep.subr.mxu0 0.0
        %6447 = vmatpush1.msra.mxu0 0.0
        %6448 = vmatprep.subr.mxu0 0.0
        %6449 = vmatpush1.msra.mxu0 0.0
        %6450 = vmatprep.subr.mxu0 0.0
        %6451 = vmatpush1.msra.mxu0 0.0
        %6452 = vmatprep.subr.mxu0 0.0
        %6453 = vmatpush1.msra.mxu0 0.0
        %6454 = vmatprep.subr.mxu0 0.0
        %6455 = vmatpush1.msra.mxu0 0.0
        %6456 = vmatprep.subr.mxu0 0.0
        %6457 = vmatpush1.msra.mxu0 0.0
        %6458 = vmatprep.subr.mxu0 0.0
        %6459 = vmatpush1.msra.mxu0 0.0
        %6460 = vmatprep.subr.mxu0 0.0
        %6461 = vmatpush1.msra.mxu0 0.0
        %6462 = vmatprep.subr.mxu0 0.0
        %6463 = vmatpush1.msra.mxu0 0.0
        %6464 = vmatprep.subr.mxu0 0.0
        %6465 = vmatpush1.msra.mxu0 0.0
        %6466 = vmatprep.subr.mxu0 0.0
        %6467 = vmatpush1.msra.mxu0 0.0
        %6468 = vmatprep.subr.mxu0 0.0
        %6469 = vmatpush1.msra.mxu0 0.0
        %6470 = vmatprep.subr.mxu0 0.0
        %6471 = vmatpush1.msra.mxu0 0.0
        %6472 = vmatprep.subr.mxu0 0.0
        %6473 = vmatpush1.msra.mxu0 0.0
        %6474 = vmatprep.subr.mxu0 0.0
        %6475 = vmatpush1.msra.mxu0 0.0
        %6476 = vmatprep.mubr.f32.mxu0 0.0
        %6477 = vmatmul.mubr.f32.gmra.mrb[0].mxu0 %v6164
        %v6478 = vpop.f32.mrb[0].mxu0
        %v6479 = vadd.f32 0.0, %v6478
        %v6480 = vpop.f32.mrb[0].mxu0
        %6481 = vmatprep.mubr.f32.mxu0 0.0
        %6482 = vmatmul.mubr.f32.gmra.mrb[0].mxu0 %v6167
        %v6483 = vpop.f32.mrb[0].mxu0
        %v6484 = vadd.f32 0.0, %v6483
        %v6485 = vpop.f32.mrb[0].mxu0
        %6486 = vdwg.mxu0
        %6487 = vrot.lane.b32.xlu0 %v4542, 120
        %v6488 = vpop.permute.xlu0 %6487
        %6489 = vrot.lane.b32.xlu0 %v4547, 120
        %v6490 = vpop.permute.xlu0 %6489
        %6493 = vmatprep.subr.mxu0 0.0
        %6494 = vmatpush1.msra.mxu0 %v6488
        %6495 = vmatprep.subr.mxu0 0.0
        %6496 = vmatpush1.msra.mxu0 %v6490
        %6497 = vmatprep.subr.mxu0 0.0
        %6498 = vmatpush1.msra.mxu0 0.0
        %6499 = vmatprep.subr.mxu0 0.0
        %6500 = vmatpush1.msra.mxu0 0.0
        %6501 = vmatprep.subr.mxu0 0.0
        %6502 = vmatpush1.msra.mxu0 0.0
        %6503 = vmatprep.subr.mxu0 0.0
        %6504 = vmatpush1.msra.mxu0 0.0
        %6505 = vmatprep.subr.mxu0 0.0
        %6506 = vmatpush1.msra.mxu0 0.0
        %6507 = vmatprep.subr.mxu0 0.0
        %6508 = vmatpush1.msra.mxu0 0.0
        %6509 = vmatprep.subr.mxu0 0.0
        %6510 = vmatpush1.msra.mxu0 0.0
        %6511 = vmatprep.subr.mxu0 0.0
        %6512 = vmatpush1.msra.mxu0 0.0
        %6513 = vmatprep.subr.mxu0 0.0
        %6514 = vmatpush1.msra.mxu0 0.0
        %6515 = vmatprep.subr.mxu0 0.0
        %6516 = vmatpush1.msra.mxu0 0.0
        %6517 = vmatprep.subr.mxu0 0.0
        %6518 = vmatpush1.msra.mxu0 0.0
        %6519 = vmatprep.subr.mxu0 0.0
        %6520 = vmatpush1.msra.mxu0 0.0
        %6521 = vmatprep.subr.mxu0 0.0
        %6522 = vmatpush1.msra.mxu0 0.0
        %6523 = vmatprep.subr.mxu0 0.0
        %6524 = vmatpush1.msra.mxu0 0.0
        %6525 = vmatprep.subr.mxu0 0.0
        %6526 = vmatpush1.msra.mxu0 0.0
        %6527 = vmatprep.subr.mxu0 0.0
        %6528 = vmatpush1.msra.mxu0 0.0
        %6529 = vmatprep.subr.mxu0 0.0
        %6530 = vmatpush1.msra.mxu0 0.0
        %6531 = vmatprep.subr.mxu0 0.0
        %6532 = vmatpush1.msra.mxu0 0.0
        %6533 = vmatprep.subr.mxu0 0.0
        %6534 = vmatpush1.msra.mxu0 0.0
        %6535 = vmatprep.subr.mxu0 0.0
        %6536 = vmatpush1.msra.mxu0 0.0
        %6537 = vmatprep.subr.mxu0 0.0
        %6538 = vmatpush1.msra.mxu0 0.0
        %6539 = vmatprep.subr.mxu0 0.0
        %6540 = vmatpush1.msra.mxu0 0.0
        %6541 = vmatprep.subr.mxu0 0.0
        %6542 = vmatpush1.msra.mxu0 0.0
        %6543 = vmatprep.subr.mxu0 0.0
        %6544 = vmatpush1.msra.mxu0 0.0
        %6545 = vmatprep.subr.mxu0 0.0
        %6546 = vmatpush1.msra.mxu0 0.0
        %6547 = vmatprep.subr.mxu0 0.0
        %6548 = vmatpush1.msra.mxu0 0.0
        %6549 = vmatprep.subr.mxu0 0.0
        %6550 = vmatpush1.msra.mxu0 0.0
        %6551 = vmatprep.subr.mxu0 0.0
        %6552 = vmatpush1.msra.mxu0 0.0
        %6553 = vmatprep.subr.mxu0 0.0
        %6554 = vmatpush1.msra.mxu0 0.0
        %6555 = vmatprep.subr.mxu0 0.0
        %6556 = vmatpush1.msra.mxu0 0.0
        %6557 = vmatprep.mubr.f32.mxu0 0.0
        %6558 = vmatmul.mubr.f32.gmra.mrb[0].mxu0 %v6164
        %v6559 = vpop.f32.mrb[0].mxu0
        %v6560 = vadd.f32 0.0, %v6559
        %v6561 = vpop.f32.mrb[0].mxu0
        %6562 = vmatprep.mubr.f32.mxu0 0.0
        %6563 = vmatmul.mubr.f32.gmra.mrb[0].mxu0 %v6167
        %v6564 = vpop.f32.mrb[0].mxu0
        %v6565 = vadd.f32 0.0, %v6564
        %v6566 = vpop.f32.mrb[0].mxu0
        %6567 = vdwg.mxu0
        %6568 = vrot.lane.b32.xlu0 %v4552, 120
        %v6569 = vpop.permute.xlu0 %6568
        %6570 = vrot.lane.b32.xlu0 %v4557, 120
        %v6571 = vpop.permute.xlu0 %6570
        %6574 = vmatprep.subr.mxu0 0.0
        %6575 = vmatpush1.msra.mxu0 %v6569
        %6576 = vmatprep.subr.mxu0 0.0
        %6577 = vmatpush1.msra.mxu0 %v6571
        %6578 = vmatprep.subr.mxu0 0.0
        %6579 = vmatpush1.msra.mxu0 0.0
        %6580 = vmatprep.subr.mxu0 0.0
        %6581 = vmatpush1.msra.mxu0 0.0
        %6582 = vmatprep.subr.mxu0 0.0
        %6583 = vmatpush1.msra.mxu0 0.0
        %6584 = vmatprep.subr.mxu0 0.0
        %6585 = vmatpush1.msra.mxu0 0.0
        %6586 = vmatprep.subr.mxu0 0.0
        %6587 = vmatpush1.msra.mxu0 0.0
        %6588 = vmatprep.subr.mxu0 0.0
        %6589 = vmatpush1.msra.mxu0 0.0
        %6590 = vmatprep.subr.mxu0 0.0
        %6591 = vmatpush1.msra.mxu0 0.0
        %6592 = vmatprep.subr.mxu0 0.0
        %6593 = vmatpush1.msra.mxu0 0.0
        %6594 = vmatprep.subr.mxu0 0.0
        %6595 = vmatpush1.msra.mxu0 0.0
        %6596 = vmatprep.subr.mxu0 0.0
        %6597 = vmatpush1.msra.mxu0 0.0
        %6598 = vmatprep.subr.mxu0 0.0
        %6599 = vmatpush1.msra.mxu0 0.0
        %6600 = vmatprep.subr.mxu0 0.0
        %6601 = vmatpush1.msra.mxu0 0.0
        %6602 = vmatprep.subr.mxu0 0.0
        %6603 = vmatpush1.msra.mxu0 0.0
        %6604 = vmatprep.subr.mxu0 0.0
        %6605 = vmatpush1.msra.mxu0 0.0
        %6606 = vmatprep.subr.mxu0 0.0
        %6607 = vmatpush1.msra.mxu0 0.0
        %6608 = vmatprep.subr.mxu0 0.0
        %6609 = vmatpush1.msra.mxu0 0.0
        %6610 = vmatprep.subr.mxu0 0.0
        %6611 = vmatpush1.msra.mxu0 0.0
        %6612 = vmatprep.subr.mxu0 0.0
        %6613 = vmatpush1.msra.mxu0 0.0
        %6614 = vmatprep.subr.mxu0 0.0
        %6615 = vmatpush1.msra.mxu0 0.0
        %6616 = vmatprep.subr.mxu0 0.0
        %6617 = vmatpush1.msra.mxu0 0.0
        %6618 = vmatprep.subr.mxu0 0.0
        %6619 = vmatpush1.msra.mxu0 0.0
        %6620 = vmatprep.subr.mxu0 0.0
        %6621 = vmatpush1.msra.mxu0 0.0
        %6622 = vmatprep.subr.mxu0 0.0
        %6623 = vmatpush1.msra.mxu0 0.0
        %6624 = vmatprep.subr.mxu0 0.0
        %6625 = vmatpush1.msra.mxu0 0.0
        %6626 = vmatprep.subr.mxu0 0.0
        %6627 = vmatpush1.msra.mxu0 0.0
        %6628 = vmatprep.subr.mxu0 0.0
        %6629 = vmatpush1.msra.mxu0 0.0
        %6630 = vmatprep.subr.mxu0 0.0
        %6631 = vmatpush1.msra.mxu0 0.0
        %6632 = vmatprep.subr.mxu0 0.0
        %6633 = vmatpush1.msra.mxu0 0.0
        %6634 = vmatprep.subr.mxu0 0.0
        %6635 = vmatpush1.msra.mxu0 0.0
        %6636 = vmatprep.subr.mxu0 0.0
        %6637 = vmatpush1.msra.mxu0 0.0
        %6638 = vmatprep.mubr.f32.mxu0 0.0
        %6639 = vmatmul.mubr.f32.gmra.mrb[0].mxu0 %v6164
        %v6640 = vpop.f32.mrb[0].mxu0
        %v6641 = vadd.f32 0.0, %v6640
        %v6642 = vpop.f32.mrb[0].mxu0
        %6643 = vmatprep.mubr.f32.mxu0 0.0
        %6644 = vmatmul.mubr.f32.gmra.mrb[0].mxu0 %v6167
        %v6645 = vpop.f32.mrb[0].mxu0
        %v6646 = vadd.f32 0.0, %v6645
        %v6647 = vpop.f32.mrb[0].mxu0
        %6648 = vdwg.mxu0
        %6649 = vrot.lane.b32.xlu0 %v4562, 120
        %v6650 = vpop.permute.xlu0 %6649
        %6651 = vrot.lane.b32.xlu0 %v4567, 120
        %v6652 = vpop.permute.xlu0 %6651
        %6655 = vmatprep.subr.mxu0 0.0
        %6656 = vmatpush1.msra.mxu0 %v6650
        %6657 = vmatprep.subr.mxu0 0.0
        %6658 = vmatpush1.msra.mxu0 %v6652
        %6659 = vmatprep.subr.mxu0 0.0
        %6660 = vmatpush1.msra.mxu0 0.0
        %6661 = vmatprep.subr.mxu0 0.0
        %6662 = vmatpush1.msra.mxu0 0.0
        %6663 = vmatprep.subr.mxu0 0.0
        %6664 = vmatpush1.msra.mxu0 0.0
        %6665 = vmatprep.subr.mxu0 0.0
        %6666 = vmatpush1.msra.mxu0 0.0
        %6667 = vmatprep.subr.mxu0 0.0
        %6668 = vmatpush1.msra.mxu0 0.0
        %6669 = vmatprep.subr.mxu0 0.0
        %6670 = vmatpush1.msra.mxu0 0.0
        %6671 = vmatprep.subr.mxu0 0.0
        %6672 = vmatpush1.msra.mxu0 0.0
        %6673 = vmatprep.subr.mxu0 0.0
        %6674 = vmatpush1.msra.mxu0 0.0
        %6675 = vmatprep.subr.mxu0 0.0
        %6676 = vmatpush1.msra.mxu0 0.0
        %6677 = vmatprep.subr.mxu0 0.0
        %6678 = vmatpush1.msra.mxu0 0.0
        %6679 = vmatprep.subr.mxu0 0.0
        %6680 = vmatpush1.msra.mxu0 0.0
        %6681 = vmatprep.subr.mxu0 0.0
        %6682 = vmatpush1.msra.mxu0 0.0
        %6683 = vmatprep.subr.mxu0 0.0
        %6684 = vmatpush1.msra.mxu0 0.0
        %6685 = vmatprep.subr.mxu0 0.0
        %6686 = vmatpush1.msra.mxu0 0.0
        %6687 = vmatprep.subr.mxu0 0.0
        %6688 = vmatpush1.msra.mxu0 0.0
        %6689 = vmatprep.subr.mxu0 0.0
        %6690 = vmatpush1.msra.mxu0 0.0
        %6691 = vmatprep.subr.mxu0 0.0
        %6692 = vmatpush1.msra.mxu0 0.0
        %6693 = vmatprep.subr.mxu0 0.0
        %6694 = vmatpush1.msra.mxu0 0.0
        %6695 = vmatprep.subr.mxu0 0.0
        %6696 = vmatpush1.msra.mxu0 0.0
        %6697 = vmatprep.subr.mxu0 0.0
        %6698 = vmatpush1.msra.mxu0 0.0
        %6699 = vmatprep.subr.mxu0 0.0
        %6700 = vmatpush1.msra.mxu0 0.0
        %6701 = vmatprep.subr.mxu0 0.0
        %6702 = vmatpush1.msra.mxu0 0.0
        %6703 = vmatprep.subr.mxu0 0.0
        %6704 = vmatpush1.msra.mxu0 0.0
        %6705 = vmatprep.subr.mxu0 0.0
        %6706 = vmatpush1.msra.mxu0 0.0
        %6707 = vmatprep.subr.mxu0 0.0
        %6708 = vmatpush1.msra.mxu0 0.0
        %6709 = vmatprep.subr.mxu0 0.0
        %6710 = vmatpush1.msra.mxu0 0.0
        %6711 = vmatprep.subr.mxu0 0.0
        %6712 = vmatpush1.msra.mxu0 0.0
        %6713 = vmatprep.subr.mxu0 0.0
        %6714 = vmatpush1.msra.mxu0 0.0
        %6715 = vmatprep.subr.mxu0 0.0
        %6716 = vmatpush1.msra.mxu0 0.0
        %6717 = vmatprep.subr.mxu0 0.0
        %6718 = vmatpush1.msra.mxu0 0.0
        %6719 = vmatprep.mubr.f32.mxu0 0.0
        %6720 = vmatmul.mubr.f32.gmra.mrb[0].mxu0 %v6164
        %v6721 = vpop.f32.mrb[0].mxu0
        %v6722 = vadd.f32 0.0, %v6721
        %v6723 = vpop.f32.mrb[0].mxu0
        %6724 = vmatprep.mubr.f32.mxu0 0.0
        %6725 = vmatmul.mubr.f32.gmra.mrb[0].mxu0 %v6167
        %v6726 = vpop.f32.mrb[0].mxu0
        %v6727 = vadd.f32 0.0, %v6726
        %v6728 = vpop.f32.mrb[0].mxu0
        %6729 = vdwg.mxu0
        %6730 = vrot.lane.b32.xlu0 %v4572, 120
        %v6731 = vpop.permute.xlu0 %6730
        %6732 = vrot.lane.b32.xlu0 %v4577, 120
        %v6733 = vpop.permute.xlu0 %6732
        %6736 = vmatprep.subr.mxu0 0.0
        %6737 = vmatpush1.msra.mxu0 %v6731
        %6738 = vmatprep.subr.mxu0 0.0
        %6739 = vmatpush1.msra.mxu0 %v6733
        %6740 = vmatprep.subr.mxu0 0.0
        %6741 = vmatpush1.msra.mxu0 0.0
        %6742 = vmatprep.subr.mxu0 0.0
        %6743 = vmatpush1.msra.mxu0 0.0
        %6744 = vmatprep.subr.mxu0 0.0
        %6745 = vmatpush1.msra.mxu0 0.0
        %6746 = vmatprep.subr.mxu0 0.0
        %6747 = vmatpush1.msra.mxu0 0.0
        %6748 = vmatprep.subr.mxu0 0.0
        %6749 = vmatpush1.msra.mxu0 0.0
        %6750 = vmatprep.subr.mxu0 0.0
        %6751 = vmatpush1.msra.mxu0 0.0
        %6752 = vmatprep.subr.mxu0 0.0
        %6753 = vmatpush1.msra.mxu0 0.0
        %6754 = vmatprep.subr.mxu0 0.0
        %6755 = vmatpush1.msra.mxu0 0.0
        %6756 = vmatprep.subr.mxu0 0.0
        %6757 = vmatpush1.msra.mxu0 0.0
        %6758 = vmatprep.subr.mxu0 0.0
        %6759 = vmatpush1.msra.mxu0 0.0
        %6760 = vmatprep.subr.mxu0 0.0
        %6761 = vmatpush1.msra.mxu0 0.0
        %6762 = vmatprep.subr.mxu0 0.0
        %6763 = vmatpush1.msra.mxu0 0.0
        %6764 = vmatprep.subr.mxu0 0.0
        %6765 = vmatpush1.msra.mxu0 0.0
        %6766 = vmatprep.subr.mxu0 0.0
        %6767 = vmatpush1.msra.mxu0 0.0
        %6768 = vmatprep.subr.mxu0 0.0
        %6769 = vmatpush1.msra.mxu0 0.0
        %6770 = vmatprep.subr.mxu0 0.0
        %6771 = vmatpush1.msra.mxu0 0.0
        %6772 = vmatprep.subr.mxu0 0.0
        %6773 = vmatpush1.msra.mxu0 0.0
        %6774 = vmatprep.subr.mxu0 0.0
        %6775 = vmatpush1.msra.mxu0 0.0
        %6776 = vmatprep.subr.mxu0 0.0
        %6777 = vmatpush1.msra.mxu0 0.0
        %6778 = vmatprep.subr.mxu0 0.0
        %6779 = vmatpush1.msra.mxu0 0.0
        %6780 = vmatprep.subr.mxu0 0.0
        %6781 = vmatpush1.msra.mxu0 0.0
        %6782 = vmatprep.subr.mxu0 0.0
        %6783 = vmatpush1.msra.mxu0 0.0
        %6784 = vmatprep.subr.mxu0 0.0
        %6785 = vmatpush1.msra.mxu0 0.0
        %6786 = vmatprep.subr.mxu0 0.0
        %6787 = vmatpush1.msra.mxu0 0.0
        %6788 = vmatprep.subr.mxu0 0.0
        %6789 = vmatpush1.msra.mxu0 0.0
        %6790 = vmatprep.subr.mxu0 0.0
        %6791 = vmatpush1.msra.mxu0 0.0
        %6792 = vmatprep.subr.mxu0 0.0
        %6793 = vmatpush1.msra.mxu0 0.0
        %6794 = vmatprep.subr.mxu0 0.0
        %6795 = vmatpush1.msra.mxu0 0.0
        %6796 = vmatprep.subr.mxu0 0.0
        %6797 = vmatpush1.msra.mxu0 0.0
        %6798 = vmatprep.subr.mxu0 0.0
        %6799 = vmatpush1.msra.mxu0 0.0
        %6800 = vmatprep.mubr.f32.mxu0 0.0
        %6801 = vmatmul.mubr.f32.gmra.mrb[0].mxu0 %v6164
        %v6802 = vpop.f32.mrb[0].mxu0
        %v6803 = vadd.f32 0.0, %v6802
        %v6804 = vpop.f32.mrb[0].mxu0
        %6805 = vmatprep.mubr.f32.mxu0 0.0
        %6806 = vmatmul.mubr.f32.gmra.mrb[0].mxu0 %v6167
        %v6807 = vpop.f32.mrb[0].mxu0
        %v6808 = vadd.f32 0.0, %v6807
        %v6809 = vpop.f32.mrb[0].mxu0
        %6810 = vdwg.mxu0
        %6811 = vrot.lane.b32.xlu0 %v4582, 120
        %v6812 = vpop.permute.xlu0 %6811
        %6813 = vrot.lane.b32.xlu0 %v4587, 120
        %v6814 = vpop.permute.xlu0 %6813
        %6817 = vmatprep.subr.mxu0 0.0
        %6818 = vmatpush1.msra.mxu0 %v6812
        %6819 = vmatprep.subr.mxu0 0.0
        %6820 = vmatpush1.msra.mxu0 %v6814
        %6821 = vmatprep.subr.mxu0 0.0
        %6822 = vmatpush1.msra.mxu0 0.0
        %6823 = vmatprep.subr.mxu0 0.0
        %6824 = vmatpush1.msra.mxu0 0.0
        %6825 = vmatprep.subr.mxu0 0.0
        %6826 = vmatpush1.msra.mxu0 0.0
        %6827 = vmatprep.subr.mxu0 0.0
        %6828 = vmatpush1.msra.mxu0 0.0
        %6829 = vmatprep.subr.mxu0 0.0
        %6830 = vmatpush1.msra.mxu0 0.0
        %6831 = vmatprep.subr.mxu0 0.0
        %6832 = vmatpush1.msra.mxu0 0.0
        %6833 = vmatprep.subr.mxu0 0.0
        %6834 = vmatpush1.msra.mxu0 0.0
        %6835 = vmatprep.subr.mxu0 0.0
        %6836 = vmatpush1.msra.mxu0 0.0
        %6837 = vmatprep.subr.mxu0 0.0
        %6838 = vmatpush1.msra.mxu0 0.0
        %6839 = vmatprep.subr.mxu0 0.0
        %6840 = vmatpush1.msra.mxu0 0.0
        %6841 = vmatprep.subr.mxu0 0.0
        %6842 = vmatpush1.msra.mxu0 0.0
        %6843 = vmatprep.subr.mxu0 0.0
        %6844 = vmatpush1.msra.mxu0 0.0
        %6845 = vmatprep.subr.mxu0 0.0
        %6846 = vmatpush1.msra.mxu0 0.0
        %6847 = vmatprep.subr.mxu0 0.0
        %6848 = vmatpush1.msra.mxu0 0.0
        %6849 = vmatprep.subr.mxu0 0.0
        %6850 = vmatpush1.msra.mxu0 0.0
        %6851 = vmatprep.subr.mxu0 0.0
        %6852 = vmatpush1.msra.mxu0 0.0
        %6853 = vmatprep.subr.mxu0 0.0
        %6854 = vmatpush1.msra.mxu0 0.0
        %6855 = vmatprep.subr.mxu0 0.0
        %6856 = vmatpush1.msra.mxu0 0.0
        %6857 = vmatprep.subr.mxu0 0.0
        %6858 = vmatpush1.msra.mxu0 0.0
        %6859 = vmatprep.subr.mxu0 0.0
        %6860 = vmatpush1.msra.mxu0 0.0
        %6861 = vmatprep.subr.mxu0 0.0
        %6862 = vmatpush1.msra.mxu0 0.0
        %6863 = vmatprep.subr.mxu0 0.0
        %6864 = vmatpush1.msra.mxu0 0.0
        %6865 = vmatprep.subr.mxu0 0.0
        %6866 = vmatpush1.msra.mxu0 0.0
        %6867 = vmatprep.subr.mxu0 0.0
        %6868 = vmatpush1.msra.mxu0 0.0
        %6869 = vmatprep.subr.mxu0 0.0
        %6870 = vmatpush1.msra.mxu0 0.0
        %6871 = vmatprep.subr.mxu0 0.0
        %6872 = vmatpush1.msra.mxu0 0.0
        %6873 = vmatprep.subr.mxu0 0.0
        %6874 = vmatpush1.msra.mxu0 0.0
        %6875 = vmatprep.subr.mxu0 0.0
        %6876 = vmatpush1.msra.mxu0 0.0
        %6877 = vmatprep.subr.mxu0 0.0
        %6878 = vmatpush1.msra.mxu0 0.0
        %6879 = vmatprep.subr.mxu0 0.0
        %6880 = vmatpush1.msra.mxu0 0.0
        %6881 = vmatprep.mubr.f32.mxu0 0.0
        %6882 = vmatmul.mubr.f32.gmra.mrb[0].mxu0 %v6164
        %v6883 = vpop.f32.mrb[0].mxu0
        %v6884 = vadd.f32 0.0, %v6883
        %v6885 = vpop.f32.mrb[0].mxu0
        %6886 = vmatprep.mubr.f32.mxu0 0.0
        %6887 = vmatmul.mubr.f32.gmra.mrb[0].mxu0 %v6167
        %v6888 = vpop.f32.mrb[0].mxu0
        %v6889 = vadd.f32 0.0, %v6888
        %v6890 = vpop.f32.mrb[0].mxu0
        %6891 = vdwg.mxu0
        %6892 = vrot.lane.b32.xlu0 %v4592, 120
        %v6893 = vpop.permute.xlu0 %6892
        %6894 = vrot.lane.b32.xlu0 %v4597, 120
        %v6895 = vpop.permute.xlu0 %6894
        %6898 = vmatprep.subr.mxu0 0.0
        %6899 = vmatpush1.msra.mxu0 %v6893
        %6900 = vmatprep.subr.mxu0 0.0
        %6901 = vmatpush1.msra.mxu0 %v6895
        %6902 = vmatprep.subr.mxu0 0.0
        %6903 = vmatpush1.msra.mxu0 0.0
        %6904 = vmatprep.subr.mxu0 0.0
        %6905 = vmatpush1.msra.mxu0 0.0
        %6906 = vmatprep.subr.mxu0 0.0
        %6907 = vmatpush1.msra.mxu0 0.0
        %6908 = vmatprep.subr.mxu0 0.0
        %6909 = vmatpush1.msra.mxu0 0.0
        %6910 = vmatprep.subr.mxu0 0.0
        %6911 = vmatpush1.msra.mxu0 0.0
        %6912 = vmatprep.subr.mxu0 0.0
        %6913 = vmatpush1.msra.mxu0 0.0
        %6914 = vmatprep.subr.mxu0 0.0
        %6915 = vmatpush1.msra.mxu0 0.0
        %6916 = vmatprep.subr.mxu0 0.0
        %6917 = vmatpush1.msra.mxu0 0.0
        %6918 = vmatprep.subr.mxu0 0.0
        %6919 = vmatpush1.msra.mxu0 0.0
        %6920 = vmatprep.subr.mxu0 0.0
        %6921 = vmatpush1.msra.mxu0 0.0
        %6922 = vmatprep.subr.mxu0 0.0
        %6923 = vmatpush1.msra.mxu0 0.0
        %6924 = vmatprep.subr.mxu0 0.0
        %6925 = vmatpush1.msra.mxu0 0.0
        %6926 = vmatprep.subr.mxu0 0.0
        %6927 = vmatpush1.msra.mxu0 0.0
        %6928 = vmatprep.subr.mxu0 0.0
        %6929 = vmatpush1.msra.mxu0 0.0
        %6930 = vmatprep.subr.mxu0 0.0
        %6931 = vmatpush1.msra.mxu0 0.0
        %6932 = vmatprep.subr.mxu0 0.0
        %6933 = vmatpush1.msra.mxu0 0.0
        %6934 = vmatprep.subr.mxu0 0.0
        %6935 = vmatpush1.msra.mxu0 0.0
        %6936 = vmatprep.subr.mxu0 0.0
        %6937 = vmatpush1.msra.mxu0 0.0
        %6938 = vmatprep.subr.mxu0 0.0
        %6939 = vmatpush1.msra.mxu0 0.0
        %6940 = vmatprep.subr.mxu0 0.0
        %6941 = vmatpush1.msra.mxu0 0.0
        %6942 = vmatprep.subr.mxu0 0.0
        %6943 = vmatpush1.msra.mxu0 0.0
        %6944 = vmatprep.subr.mxu0 0.0
        %6945 = vmatpush1.msra.mxu0 0.0
        %6946 = vmatprep.subr.mxu0 0.0
        %6947 = vmatpush1.msra.mxu0 0.0
        %6948 = vmatprep.subr.mxu0 0.0
        %6949 = vmatpush1.msra.mxu0 0.0
        %6950 = vmatprep.subr.mxu0 0.0
        %6951 = vmatpush1.msra.mxu0 0.0
        %6952 = vmatprep.subr.mxu0 0.0
        %6953 = vmatpush1.msra.mxu0 0.0
        %6954 = vmatprep.subr.mxu0 0.0
        %6955 = vmatpush1.msra.mxu0 0.0
        %6956 = vmatprep.subr.mxu0 0.0
        %6957 = vmatpush1.msra.mxu0 0.0
        %6958 = vmatprep.subr.mxu0 0.0
        %6959 = vmatpush1.msra.mxu0 0.0
        %6960 = vmatprep.subr.mxu0 0.0
        %6961 = vmatpush1.msra.mxu0 0.0
        %6962 = vmatprep.mubr.f32.mxu0 0.0
        %6963 = vmatmul.mubr.f32.gmra.mrb[0].mxu0 %v6164
        %v6964 = vpop.f32.mrb[0].mxu0
        %v6965 = vadd.f32 0.0, %v6964
        %v6966 = vpop.f32.mrb[0].mxu0
        %6967 = vmatprep.mubr.f32.mxu0 0.0
        %6968 = vmatmul.mubr.f32.gmra.mrb[0].mxu0 %v6167
        %v6969 = vpop.f32.mrb[0].mxu0
        %v6970 = vadd.f32 0.0, %v6969
        %v6971 = vpop.f32.mrb[0].mxu0
        %6972 = vdwg.mxu0
        %6973 = vrot.lane.b32.xlu0 %v4602, 120
        %v6974 = vpop.permute.xlu0 %6973
        %6975 = vrot.lane.b32.xlu0 %v4607, 120
        %v6976 = vpop.permute.xlu0 %6975
        %6979 = vmatprep.subr.mxu0 0.0
        %6980 = vmatpush1.msra.mxu0 %v6974
        %6981 = vmatprep.subr.mxu0 0.0
        %6982 = vmatpush1.msra.mxu0 %v6976
        %6983 = vmatprep.subr.mxu0 0.0
        %6984 = vmatpush1.msra.mxu0 0.0
        %6985 = vmatprep.subr.mxu0 0.0
        %6986 = vmatpush1.msra.mxu0 0.0
        %6987 = vmatprep.subr.mxu0 0.0
        %6988 = vmatpush1.msra.mxu0 0.0
        %6989 = vmatprep.subr.mxu0 0.0
        %6990 = vmatpush1.msra.mxu0 0.0
        %6991 = vmatprep.subr.mxu0 0.0
        %6992 = vmatpush1.msra.mxu0 0.0
        %6993 = vmatprep.subr.mxu0 0.0
        %6994 = vmatpush1.msra.mxu0 0.0
        %6995 = vmatprep.subr.mxu0 0.0
        %6996 = vmatpush1.msra.mxu0 0.0
        %6997 = vmatprep.subr.mxu0 0.0
        %6998 = vmatpush1.msra.mxu0 0.0
        %6999 = vmatprep.subr.mxu0 0.0
        %7000 = vmatpush1.msra.mxu0 0.0
        %7001 = vmatprep.subr.mxu0 0.0
        %7002 = vmatpush1.msra.mxu0 0.0
        %7003 = vmatprep.subr.mxu0 0.0
        %7004 = vmatpush1.msra.mxu0 0.0
        %7005 = vmatprep.subr.mxu0 0.0
        %7006 = vmatpush1.msra.mxu0 0.0
        %7007 = vmatprep.subr.mxu0 0.0
        %7008 = vmatpush1.msra.mxu0 0.0
        %7009 = vmatprep.subr.mxu0 0.0
        %7010 = vmatpush1.msra.mxu0 0.0
        %7011 = vmatprep.subr.mxu0 0.0
        %7012 = vmatpush1.msra.mxu0 0.0
        %7013 = vmatprep.subr.mxu0 0.0
        %7014 = vmatpush1.msra.mxu0 0.0
        %7015 = vmatprep.subr.mxu0 0.0
        %7016 = vmatpush1.msra.mxu0 0.0
        %7017 = vmatprep.subr.mxu0 0.0
        %7018 = vmatpush1.msra.mxu0 0.0
        %7019 = vmatprep.subr.mxu0 0.0
        %7020 = vmatpush1.msra.mxu0 0.0
        %7021 = vmatprep.subr.mxu0 0.0
        %7022 = vmatpush1.msra.mxu0 0.0
        %7023 = vmatprep.subr.mxu0 0.0
        %7024 = vmatpush1.msra.mxu0 0.0
        %7025 = vmatprep.subr.mxu0 0.0
        %7026 = vmatpush1.msra.mxu0 0.0
        %7027 = vmatprep.subr.mxu0 0.0
        %7028 = vmatpush1.msra.mxu0 0.0
        %7029 = vmatprep.subr.mxu0 0.0
        %7030 = vmatpush1.msra.mxu0 0.0
        %7031 = vmatprep.subr.mxu0 0.0
        %7032 = vmatpush1.msra.mxu0 0.0
        %7033 = vmatprep.subr.mxu0 0.0
        %7034 = vmatpush1.msra.mxu0 0.0
        %7035 = vmatprep.subr.mxu0 0.0
        %7036 = vmatpush1.msra.mxu0 0.0
        %7037 = vmatprep.subr.mxu0 0.0
        %7038 = vmatpush1.msra.mxu0 0.0
        %7039 = vmatprep.subr.mxu0 0.0
        %7040 = vmatpush1.msra.mxu0 0.0
        %7041 = vmatprep.subr.mxu0 0.0
        %7042 = vmatpush1.msra.mxu0 0.0
        %7043 = vmatprep.mubr.f32.mxu0 0.0
        %7044 = vmatmul.mubr.f32.gmra.mrb[0].mxu0 %v6164
        %v7045 = vpop.f32.mrb[0].mxu0
        %v7046 = vadd.f32 0.0, %v7045
        %v7047 = vpop.f32.mrb[0].mxu0
        %7048 = vmatprep.mubr.f32.mxu0 0.0
        %7049 = vmatmul.mubr.f32.gmra.mrb[0].mxu0 %v6167
        %v7050 = vpop.f32.mrb[0].mxu0
        %v7051 = vadd.f32 0.0, %v7050
        %v7052 = vpop.f32.mrb[0].mxu0
        %7053 = vdwg.mxu0
        %7054 = vrot.lane.b32.xlu0 %v4612, 120
        %v7055 = vpop.permute.xlu0 %7054
        %7056 = vrot.lane.b32.xlu0 %v4617, 120
        %v7057 = vpop.permute.xlu0 %7056
        %7060 = vmatprep.subr.mxu0 0.0
        %7061 = vmatpush1.msra.mxu0 %v7055
        %7062 = vmatprep.subr.mxu0 0.0
        %7063 = vmatpush1.msra.mxu0 %v7057
        %7064 = vmatprep.subr.mxu0 0.0
        %7065 = vmatpush1.msra.mxu0 0.0
        %7066 = vmatprep.subr.mxu0 0.0
        %7067 = vmatpush1.msra.mxu0 0.0
        %7068 = vmatprep.subr.mxu0 0.0
        %7069 = vmatpush1.msra.mxu0 0.0
        %7070 = vmatprep.subr.mxu0 0.0
        %7071 = vmatpush1.msra.mxu0 0.0
        %7072 = vmatprep.subr.mxu0 0.0
        %7073 = vmatpush1.msra.mxu0 0.0
        %7074 = vmatprep.subr.mxu0 0.0
        %7075 = vmatpush1.msra.mxu0 0.0
        %7076 = vmatprep.subr.mxu0 0.0
        %7077 = vmatpush1.msra.mxu0 0.0
        %7078 = vmatprep.subr.mxu0 0.0
        %7079 = vmatpush1.msra.mxu0 0.0
        %7080 = vmatprep.subr.mxu0 0.0
        %7081 = vmatpush1.msra.mxu0 0.0
        %7082 = vmatprep.subr.mxu0 0.0
        %7083 = vmatpush1.msra.mxu0 0.0
        %7084 = vmatprep.subr.mxu0 0.0
        %7085 = vmatpush1.msra.mxu0 0.0
        %7086 = vmatprep.subr.mxu0 0.0
        %7087 = vmatpush1.msra.mxu0 0.0
        %7088 = vmatprep.subr.mxu0 0.0
        %7089 = vmatpush1.msra.mxu0 0.0
        %7090 = vmatprep.subr.mxu0 0.0
        %7091 = vmatpush1.msra.mxu0 0.0
        %7092 = vmatprep.subr.mxu0 0.0
        %7093 = vmatpush1.msra.mxu0 0.0
        %7094 = vmatprep.subr.mxu0 0.0
        %7095 = vmatpush1.msra.mxu0 0.0
        %7096 = vmatprep.subr.mxu0 0.0
        %7097 = vmatpush1.msra.mxu0 0.0
        %7098 = vmatprep.subr.mxu0 0.0
        %7099 = vmatpush1.msra.mxu0 0.0
        %7100 = vmatprep.subr.mxu0 0.0
        %7101 = vmatpush1.msra.mxu0 0.0
        %7102 = vmatprep.subr.mxu0 0.0
        %7103 = vmatpush1.msra.mxu0 0.0
        %7104 = vmatprep.subr.mxu0 0.0
        %7105 = vmatpush1.msra.mxu0 0.0
        %7106 = vmatprep.subr.mxu0 0.0
        %7107 = vmatpush1.msra.mxu0 0.0
        %7108 = vmatprep.subr.mxu0 0.0
        %7109 = vmatpush1.msra.mxu0 0.0
        %7110 = vmatprep.subr.mxu0 0.0
        %7111 = vmatpush1.msra.mxu0 0.0
        %7112 = vmatprep.subr.mxu0 0.0
        %7113 = vmatpush1.msra.mxu0 0.0
        %7114 = vmatprep.subr.mxu0 0.0
        %7115 = vmatpush1.msra.mxu0 0.0
        %7116 = vmatprep.subr.mxu0 0.0
        %7117 = vmatpush1.msra.mxu0 0.0
        %7118 = vmatprep.subr.mxu0 0.0
        %7119 = vmatpush1.msra.mxu0 0.0
        %7120 = vmatprep.subr.mxu0 0.0
        %7121 = vmatpush1.msra.mxu0 0.0
        %7122 = vmatprep.subr.mxu0 0.0
        %7123 = vmatpush1.msra.mxu0 0.0
        %7124 = vmatprep.mubr.f32.mxu0 0.0
        %7125 = vmatmul.mubr.f32.gmra.mrb[0].mxu0 %v6164
        %v7126 = vpop.f32.mrb[0].mxu0
        %v7127 = vadd.f32 0.0, %v7126
        %v7128 = vpop.f32.mrb[0].mxu0
        %7129 = vmatprep.mubr.f32.mxu0 0.0
        %7130 = vmatmul.mubr.f32.gmra.mrb[0].mxu0 %v6167
        %v7131 = vpop.f32.mrb[0].mxu0
        %v7132 = vadd.f32 0.0, %v7131
        %v7133 = vpop.f32.mrb[0].mxu0
        %7134 = vdwg.mxu0
        %7135 = vrot.lane.b32.xlu0 %v4622, 120
        %v7136 = vpop.permute.xlu0 %7135
        %7137 = vrot.lane.b32.xlu0 %v4627, 120
        %v7138 = vpop.permute.xlu0 %7137
        %7141 = vmatprep.subr.mxu0 0.0
        %7142 = vmatpush1.msra.mxu0 %v7136
        %7143 = vmatprep.subr.mxu0 0.0
        %7144 = vmatpush1.msra.mxu0 %v7138
        %7145 = vmatprep.subr.mxu0 0.0
        %7146 = vmatpush1.msra.mxu0 0.0
        %7147 = vmatprep.subr.mxu0 0.0
        %7148 = vmatpush1.msra.mxu0 0.0
        %7149 = vmatprep.subr.mxu0 0.0
        %7150 = vmatpush1.msra.mxu0 0.0
        %7151 = vmatprep.subr.mxu0 0.0
        %7152 = vmatpush1.msra.mxu0 0.0
        %7153 = vmatprep.subr.mxu0 0.0
        %7154 = vmatpush1.msra.mxu0 0.0
        %7155 = vmatprep.subr.mxu0 0.0
        %7156 = vmatpush1.msra.mxu0 0.0
        %7157 = vmatprep.subr.mxu0 0.0
        %7158 = vmatpush1.msra.mxu0 0.0
        %7159 = vmatprep.subr.mxu0 0.0
        %7160 = vmatpush1.msra.mxu0 0.0
        %7161 = vmatprep.subr.mxu0 0.0
        %7162 = vmatpush1.msra.mxu0 0.0
        %7163 = vmatprep.subr.mxu0 0.0
        %7164 = vmatpush1.msra.mxu0 0.0
        %7165 = vmatprep.subr.mxu0 0.0
        %7166 = vmatpush1.msra.mxu0 0.0
        %7167 = vmatprep.subr.mxu0 0.0
        %7168 = vmatpush1.msra.mxu0 0.0
        %7169 = vmatprep.subr.mxu0 0.0
        %7170 = vmatpush1.msra.mxu0 0.0
        %7171 = vmatprep.subr.mxu0 0.0
        %7172 = vmatpush1.msra.mxu0 0.0
        %7173 = vmatprep.subr.mxu0 0.0
        %7174 = vmatpush1.msra.mxu0 0.0
        %7175 = vmatprep.subr.mxu0 0.0
        %7176 = vmatpush1.msra.mxu0 0.0
        %7177 = vmatprep.subr.mxu0 0.0
        %7178 = vmatpush1.msra.mxu0 0.0
        %7179 = vmatprep.subr.mxu0 0.0
        %7180 = vmatpush1.msra.mxu0 0.0
        %7181 = vmatprep.subr.mxu0 0.0
        %7182 = vmatpush1.msra.mxu0 0.0
        %7183 = vmatprep.subr.mxu0 0.0
        %7184 = vmatpush1.msra.mxu0 0.0
        %7185 = vmatprep.subr.mxu0 0.0
        %7186 = vmatpush1.msra.mxu0 0.0
        %7187 = vmatprep.subr.mxu0 0.0
        %7188 = vmatpush1.msra.mxu0 0.0
        %7189 = vmatprep.subr.mxu0 0.0
        %7190 = vmatpush1.msra.mxu0 0.0
        %7191 = vmatprep.subr.mxu0 0.0
        %7192 = vmatpush1.msra.mxu0 0.0
        %7193 = vmatprep.subr.mxu0 0.0
        %7194 = vmatpush1.msra.mxu0 0.0
        %7195 = vmatprep.subr.mxu0 0.0
        %7196 = vmatpush1.msra.mxu0 0.0
        %7197 = vmatprep.subr.mxu0 0.0
        %7198 = vmatpush1.msra.mxu0 0.0
        %7199 = vmatprep.subr.mxu0 0.0
        %7200 = vmatpush1.msra.mxu0 0.0
        %7201 = vmatprep.subr.mxu0 0.0
        %7202 = vmatpush1.msra.mxu0 0.0
        %7203 = vmatprep.subr.mxu0 0.0
        %7204 = vmatpush1.msra.mxu0 0.0
        %7205 = vmatprep.mubr.f32.mxu0 0.0
        %7206 = vmatmul.mubr.f32.gmra.mrb[0].mxu0 %v6164
        %v7207 = vpop.f32.mrb[0].mxu0
        %v7208 = vadd.f32 0.0, %v7207
        %v7209 = vpop.f32.mrb[0].mxu0
        %7210 = vmatprep.mubr.f32.mxu0 0.0
        %7211 = vmatmul.mubr.f32.gmra.mrb[0].mxu0 %v6167
        %v7212 = vpop.f32.mrb[0].mxu0
        %v7213 = vadd.f32 0.0, %v7212
        %v7214 = vpop.f32.mrb[0].mxu0
        %7215 = vdwg.mxu0
        %7216 = vrot.lane.b32.xlu0 %v4632, 120
        %v7217 = vpop.permute.xlu0 %7216
        %7218 = vrot.lane.b32.xlu0 %v4637, 120
        %v7219 = vpop.permute.xlu0 %7218
        %7222 = vmatprep.subr.mxu0 0.0
        %7223 = vmatpush1.msra.mxu0 %v7217
        %7224 = vmatprep.subr.mxu0 0.0
        %7225 = vmatpush1.msra.mxu0 %v7219
        %7226 = vmatprep.subr.mxu0 0.0
        %7227 = vmatpush1.msra.mxu0 0.0
        %7228 = vmatprep.subr.mxu0 0.0
        %7229 = vmatpush1.msra.mxu0 0.0
        %7230 = vmatprep.subr.mxu0 0.0
        %7231 = vmatpush1.msra.mxu0 0.0
        %7232 = vmatprep.subr.mxu0 0.0
        %7233 = vmatpush1.msra.mxu0 0.0
        %7234 = vmatprep.subr.mxu0 0.0
        %7235 = vmatpush1.msra.mxu0 0.0
        %7236 = vmatprep.subr.mxu0 0.0
        %7237 = vmatpush1.msra.mxu0 0.0
        %7238 = vmatprep.subr.mxu0 0.0
        %7239 = vmatpush1.msra.mxu0 0.0
        %7240 = vmatprep.subr.mxu0 0.0
        %7241 = vmatpush1.msra.mxu0 0.0
        %7242 = vmatprep.subr.mxu0 0.0
        %7243 = vmatpush1.msra.mxu0 0.0
        %7244 = vmatprep.subr.mxu0 0.0
        %7245 = vmatpush1.msra.mxu0 0.0
        %7246 = vmatprep.subr.mxu0 0.0
        %7247 = vmatpush1.msra.mxu0 0.0
        %7248 = vmatprep.subr.mxu0 0.0
        %7249 = vmatpush1.msra.mxu0 0.0
        %7250 = vmatprep.subr.mxu0 0.0
        %7251 = vmatpush1.msra.mxu0 0.0
        %7252 = vmatprep.subr.mxu0 0.0
        %7253 = vmatpush1.msra.mxu0 0.0
        %7254 = vmatprep.subr.mxu0 0.0
        %7255 = vmatpush1.msra.mxu0 0.0
        %7256 = vmatprep.subr.mxu0 0.0
        %7257 = vmatpush1.msra.mxu0 0.0
        %7258 = vmatprep.subr.mxu0 0.0
        %7259 = vmatpush1.msra.mxu0 0.0
        %7260 = vmatprep.subr.mxu0 0.0
        %7261 = vmatpush1.msra.mxu0 0.0
        %7262 = vmatprep.subr.mxu0 0.0
        %7263 = vmatpush1.msra.mxu0 0.0
        %7264 = vmatprep.subr.mxu0 0.0
        %7265 = vmatpush1.msra.mxu0 0.0
        %7266 = vmatprep.subr.mxu0 0.0
        %7267 = vmatpush1.msra.mxu0 0.0
        %7268 = vmatprep.subr.mxu0 0.0
        %7269 = vmatpush1.msra.mxu0 0.0
        %7270 = vmatprep.subr.mxu0 0.0
        %7271 = vmatpush1.msra.mxu0 0.0
        %7272 = vmatprep.subr.mxu0 0.0
        %7273 = vmatpush1.msra.mxu0 0.0
        %7274 = vmatprep.subr.mxu0 0.0
        %7275 = vmatpush1.msra.mxu0 0.0
        %7276 = vmatprep.subr.mxu0 0.0
        %7277 = vmatpush1.msra.mxu0 0.0
        %7278 = vmatprep.subr.mxu0 0.0
        %7279 = vmatpush1.msra.mxu0 0.0
        %7280 = vmatprep.subr.mxu0 0.0
        %7281 = vmatpush1.msra.mxu0 0.0
        %7282 = vmatprep.subr.mxu0 0.0
        %7283 = vmatpush1.msra.mxu0 0.0
        %7284 = vmatprep.subr.mxu0 0.0
        %7285 = vmatpush1.msra.mxu0 0.0
        %7286 = vmatprep.mubr.f32.mxu0 0.0
        %7287 = vmatmul.mubr.f32.gmra.mrb[0].mxu0 %v6164
        %v7288 = vpop.f32.mrb[0].mxu0
        %v7289 = vadd.f32 0.0, %v7288
        %v7290 = vpop.f32.mrb[0].mxu0
        %7291 = vmatprep.mubr.f32.mxu0 0.0
        %7292 = vmatmul.mubr.f32.gmra.mrb[0].mxu0 %v6167
        %v7293 = vpop.f32.mrb[0].mxu0
        %v7294 = vadd.f32 0.0, %v7293
        %v7295 = vpop.f32.mrb[0].mxu0
        %7296 = vdwg.mxu0
        %7297 = vrot.lane.b32.xlu0 %v4642, 120
        %v7298 = vpop.permute.xlu0 %7297
        %7299 = vrot.lane.b32.xlu0 %v4647, 120
        %v7300 = vpop.permute.xlu0 %7299
        %7303 = vmatprep.subr.mxu0 0.0
        %7304 = vmatpush1.msra.mxu0 %v7298
        %7305 = vmatprep.subr.mxu0 0.0
        %7306 = vmatpush1.msra.mxu0 %v7300
        %7307 = vmatprep.subr.mxu0 0.0
        %7308 = vmatpush1.msra.mxu0 0.0
        %7309 = vmatprep.subr.mxu0 0.0
        %7310 = vmatpush1.msra.mxu0 0.0
        %7311 = vmatprep.subr.mxu0 0.0
        %7312 = vmatpush1.msra.mxu0 0.0
        %7313 = vmatprep.subr.mxu0 0.0
        %7314 = vmatpush1.msra.mxu0 0.0
        %7315 = vmatprep.subr.mxu0 0.0
        %7316 = vmatpush1.msra.mxu0 0.0
        %7317 = vmatprep.subr.mxu0 0.0
        %7318 = vmatpush1.msra.mxu0 0.0
        %7319 = vmatprep.subr.mxu0 0.0
        %7320 = vmatpush1.msra.mxu0 0.0
        %7321 = vmatprep.subr.mxu0 0.0
        %7322 = vmatpush1.msra.mxu0 0.0
        %7323 = vmatprep.subr.mxu0 0.0
        %7324 = vmatpush1.msra.mxu0 0.0
        %7325 = vmatprep.subr.mxu0 0.0
        %7326 = vmatpush1.msra.mxu0 0.0
        %7327 = vmatprep.subr.mxu0 0.0
        %7328 = vmatpush1.msra.mxu0 0.0
        %7329 = vmatprep.subr.mxu0 0.0
        %7330 = vmatpush1.msra.mxu0 0.0
        %7331 = vmatprep.subr.mxu0 0.0
        %7332 = vmatpush1.msra.mxu0 0.0
        %7333 = vmatprep.subr.mxu0 0.0
        %7334 = vmatpush1.msra.mxu0 0.0
        %7335 = vmatprep.subr.mxu0 0.0
        %7336 = vmatpush1.msra.mxu0 0.0
        %7337 = vmatprep.subr.mxu0 0.0
        %7338 = vmatpush1.msra.mxu0 0.0
        %7339 = vmatprep.subr.mxu0 0.0
        %7340 = vmatpush1.msra.mxu0 0.0
        %7341 = vmatprep.subr.mxu0 0.0
        %7342 = vmatpush1.msra.mxu0 0.0
        %7343 = vmatprep.subr.mxu0 0.0
        %7344 = vmatpush1.msra.mxu0 0.0
        %7345 = vmatprep.subr.mxu0 0.0
        %7346 = vmatpush1.msra.mxu0 0.0
        %7347 = vmatprep.subr.mxu0 0.0
        %7348 = vmatpush1.msra.mxu0 0.0
        %7349 = vmatprep.subr.mxu0 0.0
        %7350 = vmatpush1.msra.mxu0 0.0
        %7351 = vmatprep.subr.mxu0 0.0
        %7352 = vmatpush1.msra.mxu0 0.0
        %7353 = vmatprep.subr.mxu0 0.0
        %7354 = vmatpush1.msra.mxu0 0.0
        %7355 = vmatprep.subr.mxu0 0.0
        %7356 = vmatpush1.msra.mxu0 0.0
        %7357 = vmatprep.subr.mxu0 0.0
        %7358 = vmatpush1.msra.mxu0 0.0
        %7359 = vmatprep.subr.mxu0 0.0
        %7360 = vmatpush1.msra.mxu0 0.0
        %7361 = vmatprep.subr.mxu0 0.0
        %7362 = vmatpush1.msra.mxu0 0.0
        %7363 = vmatprep.subr.mxu0 0.0
        %7364 = vmatpush1.msra.mxu0 0.0
        %7365 = vmatprep.subr.mxu0 0.0
        %7366 = vmatpush1.msra.mxu0 0.0
        %7367 = vmatprep.mubr.f32.mxu0 0.0
        %7368 = vmatmul.mubr.f32.gmra.mrb[0].mxu0 %v6164
        %v7369 = vpop.f32.mrb[0].mxu0
        %v7370 = vadd.f32 0.0, %v7369
        %v7371 = vpop.f32.mrb[0].mxu0
        %7372 = vmatprep.mubr.f32.mxu0 0.0
        %7373 = vmatmul.mubr.f32.gmra.mrb[0].mxu0 %v6167
        %v7374 = vpop.f32.mrb[0].mxu0
        %v7375 = vadd.f32 0.0, %v7374
        %v7376 = vpop.f32.mrb[0].mxu0
        %7377 = vdwg.mxu0
        %7378 = vrot.lane.b32.xlu0 %v4652, 120
        %v7379 = vpop.permute.xlu0 %7378
        %7380 = vrot.lane.b32.xlu0 %v4657, 120
        %v7381 = vpop.permute.xlu0 %7380
        %7384 = vmatprep.subr.mxu0 0.0
        %7385 = vmatpush1.msra.mxu0 %v7379
        %7386 = vmatprep.subr.mxu0 0.0
        %7387 = vmatpush1.msra.mxu0 %v7381
        %7388 = vmatprep.subr.mxu0 0.0
        %7389 = vmatpush1.msra.mxu0 0.0
        %7390 = vmatprep.subr.mxu0 0.0
        %7391 = vmatpush1.msra.mxu0 0.0
        %7392 = vmatprep.subr.mxu0 0.0
        %7393 = vmatpush1.msra.mxu0 0.0
        %7394 = vmatprep.subr.mxu0 0.0
        %7395 = vmatpush1.msra.mxu0 0.0
        %7396 = vmatprep.subr.mxu0 0.0
        %7397 = vmatpush1.msra.mxu0 0.0
        %7398 = vmatprep.subr.mxu0 0.0
        %7399 = vmatpush1.msra.mxu0 0.0
        %7400 = vmatprep.subr.mxu0 0.0
        %7401 = vmatpush1.msra.mxu0 0.0
        %7402 = vmatprep.subr.mxu0 0.0
        %7403 = vmatpush1.msra.mxu0 0.0
        %7404 = vmatprep.subr.mxu0 0.0
        %7405 = vmatpush1.msra.mxu0 0.0
        %7406 = vmatprep.subr.mxu0 0.0
        %7407 = vmatpush1.msra.mxu0 0.0
        %7408 = vmatprep.subr.mxu0 0.0
        %7409 = vmatpush1.msra.mxu0 0.0
        %7410 = vmatprep.subr.mxu0 0.0
        %7411 = vmatpush1.msra.mxu0 0.0
        %7412 = vmatprep.subr.mxu0 0.0
        %7413 = vmatpush1.msra.mxu0 0.0
        %7414 = vmatprep.subr.mxu0 0.0
        %7415 = vmatpush1.msra.mxu0 0.0
        %7416 = vmatprep.subr.mxu0 0.0
        %7417 = vmatpush1.msra.mxu0 0.0
        %7418 = vmatprep.subr.mxu0 0.0
        %7419 = vmatpush1.msra.mxu0 0.0
        %7420 = vmatprep.subr.mxu0 0.0
        %7421 = vmatpush1.msra.mxu0 0.0
        %7422 = vmatprep.subr.mxu0 0.0
        %7423 = vmatpush1.msra.mxu0 0.0
        %7424 = vmatprep.subr.mxu0 0.0
        %7425 = vmatpush1.msra.mxu0 0.0
        %7426 = vmatprep.subr.mxu0 0.0
        %7427 = vmatpush1.msra.mxu0 0.0
        %7428 = vmatprep.subr.mxu0 0.0
        %7429 = vmatpush1.msra.mxu0 0.0
        %7430 = vmatprep.subr.mxu0 0.0
        %7431 = vmatpush1.msra.mxu0 0.0
        %7432 = vmatprep.subr.mxu0 0.0
        %7433 = vmatpush1.msra.mxu0 0.0
        %7434 = vmatprep.subr.mxu0 0.0
        %7435 = vmatpush1.msra.mxu0 0.0
        %7436 = vmatprep.subr.mxu0 0.0
        %7437 = vmatpush1.msra.mxu0 0.0
        %7438 = vmatprep.subr.mxu0 0.0
        %7439 = vmatpush1.msra.mxu0 0.0
        %7440 = vmatprep.subr.mxu0 0.0
        %7441 = vmatpush1.msra.mxu0 0.0
        %7442 = vmatprep.subr.mxu0 0.0
        %7443 = vmatpush1.msra.mxu0 0.0
        %7444 = vmatprep.subr.mxu0 0.0
        %7445 = vmatpush1.msra.mxu0 0.0
        %7446 = vmatprep.subr.mxu0 0.0
        %7447 = vmatpush1.msra.mxu0 0.0
        %7448 = vmatprep.mubr.f32.mxu0 0.0
        %7449 = vmatmul.mubr.f32.gmra.mrb[0].mxu0 %v6164
        %v7450 = vpop.f32.mrb[0].mxu0
        %v7451 = vadd.f32 0.0, %v7450
        %v7452 = vpop.f32.mrb[0].mxu0
        %7453 = vmatprep.mubr.f32.mxu0 0.0
        %7454 = vmatmul.mubr.f32.gmra.mrb[0].mxu0 %v6167
        %v7455 = vpop.f32.mrb[0].mxu0
        %v7456 = vadd.f32 0.0, %v7455
        %v7457 = vpop.f32.mrb[0].mxu0
        %7458 = vdwg.mxu0
        %v7459 = vstv %s4332
        %v7460 = vmul.f32 %v7459, %v6236
        %v7461 = vmul.f32 %v7459, %v6241
        %v7462 = vmul.f32 %v7459, %v6317
        %v7463 = vmul.f32 %v7459, %v6322
        %v7464 = vmul.f32 %v7459, %v6398
        %v7465 = vmul.f32 %v7459, %v6403
        %v7466 = vmul.f32 %v7459, %v6479
        %v7467 = vmul.f32 %v7459, %v6484
        %v7468 = vmul.f32 %v7459, %v6560
        %v7469 = vmul.f32 %v7459, %v6565
        %v7470 = vmul.f32 %v7459, %v6641
        %v7471 = vmul.f32 %v7459, %v6646
        %v7472 = vmul.f32 %v7459, %v6722
        %v7473 = vmul.f32 %v7459, %v6727
        %v7474 = vmul.f32 %v7459, %v6803
        %v7475 = vmul.f32 %v7459, %v6808
        %v7476 = vmul.f32 %v7459, %v6884
        %v7477 = vmul.f32 %v7459, %v6889
        %v7478 = vmul.f32 %v7459, %v6965
        %v7479 = vmul.f32 %v7459, %v6970
        %v7480 = vmul.f32 %v7459, %v7046
        %v7481 = vmul.f32 %v7459, %v7051
        %v7482 = vmul.f32 %v7459, %v7127
        %v7483 = vmul.f32 %v7459, %v7132
        %v7484 = vmul.f32 %v7459, %v7208
        %v7485 = vmul.f32 %v7459, %v7213
        %v7486 = vmul.f32 %v7459, %v7289
        %v7487 = vmul.f32 %v7459, %v7294
        %v7488 = vmul.f32 %v7459, %v7370
        %v7489 = vmul.f32 %v7459, %v7375
        %v7490 = vmul.f32 %v7459, %v7451
        %v7491 = vmul.f32 %v7459, %v7456
        %v7492 = vadd.f32 %v7460, %v4295
        %v7493 = vadd.f32 %v7461, %v4296
        %v7494 = vadd.f32 %v7462, %v4297
        %v7495 = vadd.f32 %v7463, %v4298
        %v7496 = vadd.f32 %v7464, %v4299
        %v7497 = vadd.f32 %v7465, %v4300
        %v7498 = vadd.f32 %v7466, %v4301
        %v7499 = vadd.f32 %v7467, %v4302
        %v7500 = vadd.f32 %v7468, %v4303
        %v7501 = vadd.f32 %v7469, %v4304
        %v7502 = vadd.f32 %v7470, %v4305
        %v7503 = vadd.f32 %v7471, %v4306
        %v7504 = vadd.f32 %v7472, %v4307
        %v7505 = vadd.f32 %v7473, %v4308
        %v7506 = vadd.f32 %v7474, %v4309
        %v7507 = vadd.f32 %v7475, %v4310
        %v7508 = vadd.f32 %v7476, %v4311
        %v7509 = vadd.f32 %v7477, %v4312
        %v7510 = vadd.f32 %v7478, %v4313
        %v7511 = vadd.f32 %v7479, %v4314
        %v7512 = vadd.f32 %v7480, %v4315
        %v7513 = vadd.f32 %v7481, %v4316
        %v7514 = vadd.f32 %v7482, %v4317
        %v7515 = vadd.f32 %v7483, %v4318
        %v7516 = vadd.f32 %v7484, %v4319
        %v7517 = vadd.f32 %v7485, %v4320
        %v7518 = vadd.f32 %v7486, %v4321
        %v7519 = vadd.f32 %v7487, %v4322
        %v7520 = vadd.f32 %v7488, %v4323
        %v7521 = vadd.f32 %v7489, %v4324
        %v7522 = vadd.f32 %v7490, %v4325
        %v7523 = vadd.f32 %v7491, %v4326
        %v7524 = vld [vmem:[%s8] sm:$0xff]
        %v7525 = vld [vmem:[%s8 + $0x8] sm:$0xff]
        %v7526 = vld [vmem:[%s8 + $0x10] sm:$0xff]
        %v7527 = vld [vmem:[%s8 + $0x18] sm:$0xff]
        %v7528 = vld [vmem:[%s9] sm:$0x1]
        %s7529 = sld [smem:[#allocation4]]
        %v7531 = vlaneseq
        %v7532 = vshrl.u32 %v7531, 7
        %v7533 = vsub.s32 0, %v7532
        %v7534 = vrot.slane %v7528, %v7533
        %v7537 = vsel %vm753, %v7492, 0
        %v7540 = vsel %vm753, %v7493, 0
        %v7543 = vsel %vm753, %v7494, 0
        %v7546 = vsel %vm753, %v7495, 0
        %v7549 = vsel %vm753, %v7496, 0
        %v7552 = vsel %vm753, %v7497, 0
        %v7555 = vsel %vm753, %v7498, 0
        %v7558 = vsel %vm753, %v7499, 0
        %v7561 = vsel %vm753, %v7500, 0
        %v7564 = vsel %vm753, %v7501, 0
        %v7567 = vsel %vm753, %v7502, 0
        %v7570 = vsel %vm753, %v7503, 0
        %v7573 = vsel %vm753, %v7504, 0
        %v7576 = vsel %vm753, %v7505, 0
        %v7579 = vsel %vm753, %v7506, 0
        %v7582 = vsel %vm753, %v7507, 0
        %v7585 = vsel %vm753, %v7508, 0
        %v7588 = vsel %vm753, %v7509, 0
        %v7591 = vsel %vm753, %v7510, 0
        %v7594 = vsel %vm753, %v7511, 0
        %v7597 = vsel %vm753, %v7512, 0
        %v7600 = vsel %vm753, %v7513, 0
        %v7603 = vsel %vm753, %v7514, 0
        %v7606 = vsel %vm753, %v7515, 0
        %v7609 = vsel %vm753, %v7516, 0
        %v7612 = vsel %vm753, %v7517, 0
        %v7615 = vsel %vm753, %v7518, 0
        %v7618 = vsel %vm753, %v7519, 0
        %v7621 = vsel %vm753, %v7520, 0
        %v7624 = vsel %vm753, %v7521, 0
        %v7627 = vsel %vm753, %v7522, 0
        %v7630 = vsel %vm753, %v7523, 0
        %7632 = vmatprep.subr.mxu0 0.0
        %7633 = vmatpush1.msra.mxu0 %v7524
        %7634 = vmatprep.subr.mxu0 0.0
        %7635 = vmatpush1.msra.mxu0 %v7525
        %7636 = vmatprep.subr.mxu0 0.0
        %7637 = vmatpush1.msra.mxu0 %v7526
        %7638 = vmatprep.subr.mxu0 0.0
        %7639 = vmatpush1.msra.mxu0 %v7527
        %7640 = vmatprep.subr.mxu0 0.0
        %7641 = vmatpush1.msra.mxu0 0.0
        %7642 = vmatprep.subr.mxu0 0.0
        %7643 = vmatpush1.msra.mxu0 0.0
        %7644 = vmatprep.subr.mxu0 0.0
        %7645 = vmatpush1.msra.mxu0 0.0
        %7646 = vmatprep.subr.mxu0 0.0
        %7647 = vmatpush1.msra.mxu0 0.0
        %7648 = vmatprep.subr.mxu0 0.0
        %7649 = vmatpush1.msra.mxu0 0.0
        %7650 = vmatprep.subr.mxu0 0.0
        %7651 = vmatpush1.msra.mxu0 0.0
        %7652 = vmatprep.subr.mxu0 0.0
        %7653 = vmatpush1.msra.mxu0 0.0
        %7654 = vmatprep.subr.mxu0 0.0
        %7655 = vmatpush1.msra.mxu0 0.0
        %7656 = vmatprep.subr.mxu0 0.0
        %7657 = vmatpush1.msra.mxu0 0.0
        %7658 = vmatprep.subr.mxu0 0.0
        %7659 = vmatpush1.msra.mxu0 0.0
        %7660 = vmatprep.subr.mxu0 0.0
        %7661 = vmatpush1.msra.mxu0 0.0
        %7662 = vmatprep.subr.mxu0 0.0
        %7663 = vmatpush1.msra.mxu0 0.0
        %7664 = vmatprep.subr.mxu0 0.0
        %7665 = vmatpush1.msra.mxu0 0.0
        %7666 = vmatprep.subr.mxu0 0.0
        %7667 = vmatpush1.msra.mxu0 0.0
        %7668 = vmatprep.subr.mxu0 0.0
        %7669 = vmatpush1.msra.mxu0 0.0
        %7670 = vmatprep.subr.mxu0 0.0
        %7671 = vmatpush1.msra.mxu0 0.0
        %7672 = vmatprep.subr.mxu0 0.0
        %7673 = vmatpush1.msra.mxu0 0.0
        %7674 = vmatprep.subr.mxu0 0.0
        %7675 = vmatpush1.msra.mxu0 0.0
        %7676 = vmatprep.subr.mxu0 0.0
        %7677 = vmatpush1.msra.mxu0 0.0
        %7678 = vmatprep.subr.mxu0 0.0
        %7679 = vmatpush1.msra.mxu0 0.0
        %7680 = vmatprep.subr.mxu0 0.0
        %7681 = vmatpush1.msra.mxu0 0.0
        %7682 = vmatprep.subr.mxu0 0.0
        %7683 = vmatpush1.msra.mxu0 0.0
        %7684 = vmatprep.subr.mxu0 0.0
        %7685 = vmatpush1.msra.mxu0 0.0
        %7686 = vmatprep.subr.mxu0 0.0
        %7687 = vmatpush1.msra.mxu0 0.0
        %7688 = vmatprep.subr.mxu0 0.0
        %7689 = vmatpush1.msra.mxu0 0.0
        %7690 = vmatprep.subr.mxu0 0.0
        %7691 = vmatpush1.msra.mxu0 0.0
        %7692 = vmatprep.subr.mxu0 0.0
        %7693 = vmatpush1.msra.mxu0 0.0
        %7694 = vmatprep.subr.mxu0 0.0
        %7695 = vmatpush1.msra.mxu0 0.0
        %7696 = vmatprep.mubr.f32.mxu0 0.0
        %7697 = vmatmul.mubr.f32.gmra.mrb[0].mxu0 %v7537
        %v7698 = vpop.f32.mrb[0].mxu0
        %v7699 = vadd.f32 %v7534, %v7698
        %v7700 = vpop.f32.mrb[0].mxu0
        %7701 = vmatprep.mubr.f32.mxu0 0.0
        %7702 = vmatmul.mubr.f32.gmra.mrb[0].mxu0 %v7540
        %v7703 = vpop.f32.mrb[0].mxu0
        %v7704 = vadd.f32 %v7534, %v7703
        %v7705 = vpop.f32.mrb[0].mxu0
        %7706 = vmatprep.mubr.f32.mxu0 0.0
        %7707 = vmatmul.mubr.f32.gmra.mrb[0].mxu0 %v7543
        %v7708 = vpop.f32.mrb[0].mxu0
        %v7709 = vadd.f32 %v7534, %v7708
        %v7710 = vpop.f32.mrb[0].mxu0
        %7711 = vmatprep.mubr.f32.mxu0 0.0
        %7712 = vmatmul.mubr.f32.gmra.mrb[0].mxu0 %v7546
        %v7713 = vpop.f32.mrb[0].mxu0
        %v7714 = vadd.f32 %v7534, %v7713
        %v7715 = vpop.f32.mrb[0].mxu0
        %7716 = vmatprep.mubr.f32.mxu0 0.0
        %7717 = vmatmul.mubr.f32.gmra.mrb[0].mxu0 %v7549
        %v7718 = vpop.f32.mrb[0].mxu0
        %v7719 = vadd.f32 %v7534, %v7718
        %v7720 = vpop.f32.mrb[0].mxu0
        %7721 = vmatprep.mubr.f32.mxu0 0.0
        %7722 = vmatmul.mubr.f32.gmra.mrb[0].mxu0 %v7552
        %v7723 = vpop.f32.mrb[0].mxu0
        %v7724 = vadd.f32 %v7534, %v7723
        %v7725 = vpop.f32.mrb[0].mxu0
        %7726 = vmatprep.mubr.f32.mxu0 0.0
        %7727 = vmatmul.mubr.f32.gmra.mrb[0].mxu0 %v7555
        %v7728 = vpop.f32.mrb[0].mxu0
        %v7729 = vadd.f32 %v7534, %v7728
        %v7730 = vpop.f32.mrb[0].mxu0
        %7731 = vmatprep.mubr.f32.mxu0 0.0
        %7732 = vmatmul.mubr.f32.gmra.mrb[0].mxu0 %v7558
        %v7733 = vpop.f32.mrb[0].mxu0
        %v7734 = vadd.f32 %v7534, %v7733
        %v7735 = vpop.f32.mrb[0].mxu0
        %7736 = vmatprep.mubr.f32.mxu0 0.0
        %7737 = vmatmul.mubr.f32.gmra.mrb[0].mxu0 %v7561
        %v7738 = vpop.f32.mrb[0].mxu0
        %v7739 = vadd.f32 %v7534, %v7738
        %v7740 = vpop.f32.mrb[0].mxu0
        %7741 = vmatprep.mubr.f32.mxu0 0.0
        %7742 = vmatmul.mubr.f32.gmra.mrb[0].mxu0 %v7564
        %v7743 = vpop.f32.mrb[0].mxu0
        %v7744 = vadd.f32 %v7534, %v7743
        %v7745 = vpop.f32.mrb[0].mxu0
        %7746 = vmatprep.mubr.f32.mxu0 0.0
        %7747 = vmatmul.mubr.f32.gmra.mrb[0].mxu0 %v7567
        %v7748 = vpop.f32.mrb[0].mxu0
        %v7749 = vadd.f32 %v7534, %v7748
        %v7750 = vpop.f32.mrb[0].mxu0
        %7751 = vmatprep.mubr.f32.mxu0 0.0
        %7752 = vmatmul.mubr.f32.gmra.mrb[0].mxu0 %v7570
        %v7753 = vpop.f32.mrb[0].mxu0
        %v7754 = vadd.f32 %v7534, %v7753
        %v7755 = vpop.f32.mrb[0].mxu0
        %7756 = vmatprep.mubr.f32.mxu0 0.0
        %7757 = vmatmul.mubr.f32.gmra.mrb[0].mxu0 %v7573
        %v7758 = vpop.f32.mrb[0].mxu0
        %v7759 = vadd.f32 %v7534, %v7758
        %v7760 = vpop.f32.mrb[0].mxu0
        %7761 = vmatprep.mubr.f32.mxu0 0.0
        %7762 = vmatmul.mubr.f32.gmra.mrb[0].mxu0 %v7576
        %v7763 = vpop.f32.mrb[0].mxu0
        %v7764 = vadd.f32 %v7534, %v7763
        %v7765 = vpop.f32.mrb[0].mxu0
        %7766 = vmatprep.mubr.f32.mxu0 0.0
        %7767 = vmatmul.mubr.f32.gmra.mrb[0].mxu0 %v7579
        %v7768 = vpop.f32.mrb[0].mxu0
        %v7769 = vadd.f32 %v7534, %v7768
        %v7770 = vpop.f32.mrb[0].mxu0
        %7771 = vmatprep.mubr.f32.mxu0 0.0
        %7772 = vmatmul.mubr.f32.gmra.mrb[0].mxu0 %v7582
        %v7773 = vpop.f32.mrb[0].mxu0
        %v7774 = vadd.f32 %v7534, %v7773
        %v7775 = vpop.f32.mrb[0].mxu0
        %7776 = vmatprep.mubr.f32.mxu0 0.0
        %7777 = vmatmul.mubr.f32.gmra.mrb[0].mxu0 %v7585
        %v7778 = vpop.f32.mrb[0].mxu0
        %v7779 = vadd.f32 %v7534, %v7778
        %v7780 = vpop.f32.mrb[0].mxu0
        %7781 = vmatprep.mubr.f32.mxu0 0.0
        %7782 = vmatmul.mubr.f32.gmra.mrb[0].mxu0 %v7588
        %v7783 = vpop.f32.mrb[0].mxu0
        %v7784 = vadd.f32 %v7534, %v7783
        %v7785 = vpop.f32.mrb[0].mxu0
        %7786 = vmatprep.mubr.f32.mxu0 0.0
        %7787 = vmatmul.mubr.f32.gmra.mrb[0].mxu0 %v7591
        %v7788 = vpop.f32.mrb[0].mxu0
        %v7789 = vadd.f32 %v7534, %v7788
        %v7790 = vpop.f32.mrb[0].mxu0
        %7791 = vmatprep.mubr.f32.mxu0 0.0
        %7792 = vmatmul.mubr.f32.gmra.mrb[0].mxu0 %v7594
        %v7793 = vpop.f32.mrb[0].mxu0
        %v7794 = vadd.f32 %v7534, %v7793
        %v7795 = vpop.f32.mrb[0].mxu0
        %7796 = vmatprep.mubr.f32.mxu0 0.0
        %7797 = vmatmul.mubr.f32.gmra.mrb[0].mxu0 %v7597
        %v7798 = vpop.f32.mrb[0].mxu0
        %v7799 = vadd.f32 %v7534, %v7798
        %v7800 = vpop.f32.mrb[0].mxu0
        %7801 = vmatprep.mubr.f32.mxu0 0.0
        %7802 = vmatmul.mubr.f32.gmra.mrb[0].mxu0 %v7600
        %v7803 = vpop.f32.mrb[0].mxu0
        %v7804 = vadd.f32 %v7534, %v7803
        %v7805 = vpop.f32.mrb[0].mxu0
        %7806 = vmatprep.mubr.f32.mxu0 0.0
        %7807 = vmatmul.mubr.f32.gmra.mrb[0].mxu0 %v7603
        %v7808 = vpop.f32.mrb[0].mxu0
        %v7809 = vadd.f32 %v7534, %v7808
        %v7810 = vpop.f32.mrb[0].mxu0
        %7811 = vmatprep.mubr.f32.mxu0 0.0
        %7812 = vmatmul.mubr.f32.gmra.mrb[0].mxu0 %v7606
        %v7813 = vpop.f32.mrb[0].mxu0
        %v7814 = vadd.f32 %v7534, %v7813
        %v7815 = vpop.f32.mrb[0].mxu0
        %7816 = vmatprep.mubr.f32.mxu0 0.0
        %7817 = vmatmul.mubr.f32.gmra.mrb[0].mxu0 %v7609
        %v7818 = vpop.f32.mrb[0].mxu0
        %v7819 = vadd.f32 %v7534, %v7818
        %v7820 = vpop.f32.mrb[0].mxu0
        %7821 = vmatprep.mubr.f32.mxu0 0.0
        %7822 = vmatmul.mubr.f32.gmra.mrb[0].mxu0 %v7612
        %v7823 = vpop.f32.mrb[0].mxu0
        %v7824 = vadd.f32 %v7534, %v7823
        %v7825 = vpop.f32.mrb[0].mxu0
        %7826 = vmatprep.mubr.f32.mxu0 0.0
        %7827 = vmatmul.mubr.f32.gmra.mrb[0].mxu0 %v7615
        %v7828 = vpop.f32.mrb[0].mxu0
        %v7829 = vadd.f32 %v7534, %v7828
        %v7830 = vpop.f32.mrb[0].mxu0
        %7831 = vmatprep.mubr.f32.mxu0 0.0
        %7832 = vmatmul.mubr.f32.gmra.mrb[0].mxu0 %v7618
        %v7833 = vpop.f32.mrb[0].mxu0
        %v7834 = vadd.f32 %v7534, %v7833
        %v7835 = vpop.f32.mrb[0].mxu0
        %7836 = vmatprep.mubr.f32.mxu0 0.0
        %7837 = vmatmul.mubr.f32.gmra.mrb[0].mxu0 %v7621
        %v7838 = vpop.f32.mrb[0].mxu0
        %v7839 = vadd.f32 %v7534, %v7838
        %v7840 = vpop.f32.mrb[0].mxu0
        %7841 = vmatprep.mubr.f32.mxu0 0.0
        %7842 = vmatmul.mubr.f32.gmra.mrb[0].mxu0 %v7624
        %v7843 = vpop.f32.mrb[0].mxu0
        %v7844 = vadd.f32 %v7534, %v7843
        %v7845 = vpop.f32.mrb[0].mxu0
        %7846 = vmatprep.mubr.f32.mxu0 0.0
        %7847 = vmatmul.mubr.f32.gmra.mrb[0].mxu0 %v7627
        %v7848 = vpop.f32.mrb[0].mxu0
        %v7849 = vadd.f32 %v7534, %v7848
        %v7850 = vpop.f32.mrb[0].mxu0
        %7851 = vmatprep.mubr.f32.mxu0 0.0
        %7852 = vmatmul.mubr.f32.gmra.mrb[0].mxu0 %v7630
        %v7853 = vpop.f32.mrb[0].mxu0
        %v7854 = vadd.f32 %v7534, %v7853
        %v7855 = vpop.f32.mrb[0].mxu0
        %7856 = vdwg.mxu0
        %7859 = vrot.lane.b32.xlu0 %v7699, 124
        %v7860 = vpop.permute.xlu0 %7859
        %7861 = vrot.lane.b32.xlu0 %v7704, 124
        %v7862 = vpop.permute.xlu0 %7861
        %v7863 = vsel %vm427, %v7699, 0
        %v7865 = vsel %vm427, %v7704, 0
        %v7867 = vsel %vm427, %v7860, 0
        %v7869 = vsel %vm427, %v7862, 0
        %7871 = vmatprep.subr.mxu0 0.0
        %7872 = vmatpush1.xpose.msra.mxu0 %v7867
        %7873 = vmatprep.subr.mxu0 0.0
        %7874 = vmatpush1.xpose.msra.mxu0 %v7869
        %7875 = vmatprep.subr.mxu0 0.0
        %7876 = vmatpush1.xpose.msra.mxu0 0.0
        %7877 = vmatprep.subr.mxu0 0.0
        %7878 = vmatpush1.xpose.msra.mxu0 0.0
        %7879 = vmatprep.subr.mxu0 0.0
        %7880 = vmatpush1.xpose.msra.mxu0 0.0
        %7881 = vmatprep.subr.mxu0 0.0
        %7882 = vmatpush1.xpose.msra.mxu0 0.0
        %7883 = vmatprep.subr.mxu0 0.0
        %7884 = vmatpush1.xpose.msra.mxu0 0.0
        %7885 = vmatprep.subr.mxu0 0.0
        %7886 = vmatpush1.xpose.msra.mxu0 0.0
        %7887 = vmatprep.subr.mxu0 0.0
        %7888 = vmatpush1.xpose.msra.mxu0 0.0
        %7889 = vmatprep.subr.mxu0 0.0
        %7890 = vmatpush1.xpose.msra.mxu0 0.0
        %7891 = vmatprep.subr.mxu0 0.0
        %7892 = vmatpush1.xpose.msra.mxu0 0.0
        %7893 = vmatprep.subr.mxu0 0.0
        %7894 = vmatpush1.xpose.msra.mxu0 0.0
        %7895 = vmatprep.subr.mxu0 0.0
        %7896 = vmatpush1.xpose.msra.mxu0 0.0
        %7897 = vmatprep.subr.mxu0 0.0
        %7898 = vmatpush1.xpose.msra.mxu0 0.0
        %7899 = vmatprep.subr.mxu0 0.0
        %7900 = vmatpush1.xpose.msra.mxu0 0.0
        %7901 = vmatprep.subr.mxu0 0.0
        %7902 = vmatpush1.xpose.msra.mxu0 0.0
        %7903 = vmatprep.subr.mxu0 0.0
        %7904 = vmatpush1.xpose.msra.mxu0 0.0
        %7905 = vmatprep.subr.mxu0 0.0
        %7906 = vmatpush1.xpose.msra.mxu0 0.0
        %7907 = vmatprep.subr.mxu0 0.0
        %7908 = vmatpush1.xpose.msra.mxu0 0.0
        %7909 = vmatprep.subr.mxu0 0.0
        %7910 = vmatpush1.xpose.msra.mxu0 0.0
        %7911 = vmatprep.subr.mxu0 0.0
        %7912 = vmatpush1.xpose.msra.mxu0 0.0
        %7913 = vmatprep.subr.mxu0 0.0
        %7914 = vmatpush1.xpose.msra.mxu0 0.0
        %7915 = vmatprep.subr.mxu0 0.0
        %7916 = vmatpush1.xpose.msra.mxu0 0.0
        %7917 = vmatprep.subr.mxu0 0.0
        %7918 = vmatpush1.xpose.msra.mxu0 0.0
        %7919 = vmatprep.subr.mxu0 0.0
        %7920 = vmatpush1.xpose.msra.mxu0 0.0
        %7921 = vmatprep.subr.mxu0 0.0
        %7922 = vmatpush1.xpose.msra.mxu0 0.0
        %7923 = vmatprep.subr.mxu0 0.0
        %7924 = vmatpush1.xpose.msra.mxu0 0.0
        %7925 = vmatprep.subr.mxu0 0.0
        %7926 = vmatpush1.xpose.msra.mxu0 0.0
        %7927 = vmatprep.subr.mxu0 0.0
        %7928 = vmatpush1.xpose.msra.mxu0 0.0
        %7929 = vmatprep.subr.mxu0 0.0
        %7930 = vmatpush1.xpose.msra.mxu0 0.0
        %7931 = vmatprep.subr.mxu0 0.0
        %7932 = vmatpush1.xpose.msra.mxu0 0.0
        %7933 = vmatprep.subr.mxu0 0.0
        %7934 = vmatpush1.xpose.msra.mxu0 0.0
        %7935 = vmatprep.mubr.f32.mxu0 0.0
        %7936 = vmatmul.mubr.f32.gmra.mrb[0].mxu0 %v7863
        %v7937 = vpop.f32.mrb[0].mxu0
        %v7938 = vadd.f32 0.0, %v7937
        %v7939 = vpop.f32.mrb[0].mxu0
        %7940 = vmatprep.mubr.f32.mxu0 0.0
        %7941 = vmatmul.mubr.f32.gmra.mrb[0].mxu0 %v7865
        %v7942 = vpop.f32.mrb[0].mxu0
        %v7943 = vadd.f32 0.0, %v7942
        %v7944 = vpop.f32.mrb[0].mxu0
        %7945 = vdwg.mxu0
        %7948 = vrot.lane.b32.xlu0 %v7709, 124
        %v7949 = vpop.permute.xlu0 %7948
        %7950 = vrot.lane.b32.xlu0 %v7714, 124
        %v7951 = vpop.permute.xlu0 %7950
        %v7952 = vsel %vm427, %v7709, 0
        %v7954 = vsel %vm427, %v7714, 0
        %v7956 = vsel %vm427, %v7949, 0
        %v7958 = vsel %vm427, %v7951, 0
        %7960 = vmatprep.subr.mxu0 0.0
        %7961 = vmatpush1.xpose.msra.mxu0 %v7956
        %7962 = vmatprep.subr.mxu0 0.0
        %7963 = vmatpush1.xpose.msra.mxu0 %v7958
        %7964 = vmatprep.subr.mxu0 0.0
        %7965 = vmatpush1.xpose.msra.mxu0 0.0
        %7966 = vmatprep.subr.mxu0 0.0
        %7967 = vmatpush1.xpose.msra.mxu0 0.0
        %7968 = vmatprep.subr.mxu0 0.0
        %7969 = vmatpush1.xpose.msra.mxu0 0.0
        %7970 = vmatprep.subr.mxu0 0.0
        %7971 = vmatpush1.xpose.msra.mxu0 0.0
        %7972 = vmatprep.subr.mxu0 0.0
        %7973 = vmatpush1.xpose.msra.mxu0 0.0
        %7974 = vmatprep.subr.mxu0 0.0
        %7975 = vmatpush1.xpose.msra.mxu0 0.0
        %7976 = vmatprep.subr.mxu0 0.0
        %7977 = vmatpush1.xpose.msra.mxu0 0.0
        %7978 = vmatprep.subr.mxu0 0.0
        %7979 = vmatpush1.xpose.msra.mxu0 0.0
        %7980 = vmatprep.subr.mxu0 0.0
        %7981 = vmatpush1.xpose.msra.mxu0 0.0
        %7982 = vmatprep.subr.mxu0 0.0
        %7983 = vmatpush1.xpose.msra.mxu0 0.0
        %7984 = vmatprep.subr.mxu0 0.0
        %7985 = vmatpush1.xpose.msra.mxu0 0.0
        %7986 = vmatprep.subr.mxu0 0.0
        %7987 = vmatpush1.xpose.msra.mxu0 0.0
        %7988 = vmatprep.subr.mxu0 0.0
        %7989 = vmatpush1.xpose.msra.mxu0 0.0
        %7990 = vmatprep.subr.mxu0 0.0
        %7991 = vmatpush1.xpose.msra.mxu0 0.0
        %7992 = vmatprep.subr.mxu0 0.0
        %7993 = vmatpush1.xpose.msra.mxu0 0.0
        %7994 = vmatprep.subr.mxu0 0.0
        %7995 = vmatpush1.xpose.msra.mxu0 0.0
        %7996 = vmatprep.subr.mxu0 0.0
        %7997 = vmatpush1.xpose.msra.mxu0 0.0
        %7998 = vmatprep.subr.mxu0 0.0
        %7999 = vmatpush1.xpose.msra.mxu0 0.0
        %8000 = vmatprep.subr.mxu0 0.0
        %8001 = vmatpush1.xpose.msra.mxu0 0.0
        %8002 = vmatprep.subr.mxu0 0.0
        %8003 = vmatpush1.xpose.msra.mxu0 0.0
        %8004 = vmatprep.subr.mxu0 0.0
        %8005 = vmatpush1.xpose.msra.mxu0 0.0
        %8006 = vmatprep.subr.mxu0 0.0
        %8007 = vmatpush1.xpose.msra.mxu0 0.0
        %8008 = vmatprep.subr.mxu0 0.0
        %8009 = vmatpush1.xpose.msra.mxu0 0.0
        %8010 = vmatprep.subr.mxu0 0.0
        %8011 = vmatpush1.xpose.msra.mxu0 0.0
        %8012 = vmatprep.subr.mxu0 0.0
        %8013 = vmatpush1.xpose.msra.mxu0 0.0
        %8014 = vmatprep.subr.mxu0 0.0
        %8015 = vmatpush1.xpose.msra.mxu0 0.0
        %8016 = vmatprep.subr.mxu0 0.0
        %8017 = vmatpush1.xpose.msra.mxu0 0.0
        %8018 = vmatprep.subr.mxu0 0.0
        %8019 = vmatpush1.xpose.msra.mxu0 0.0
        %8020 = vmatprep.subr.mxu0 0.0
        %8021 = vmatpush1.xpose.msra.mxu0 0.0
        %8022 = vmatprep.subr.mxu0 0.0
        %8023 = vmatpush1.xpose.msra.mxu0 0.0
        %8024 = vmatprep.mubr.f32.mxu0 0.0
        %8025 = vmatmul.mubr.f32.gmra.mrb[0].mxu0 %v7952
        %v8026 = vpop.f32.mrb[0].mxu0
        %v8027 = vadd.f32 0.0, %v8026
        %v8028 = vpop.f32.mrb[0].mxu0
        %8029 = vmatprep.mubr.f32.mxu0 0.0
        %8030 = vmatmul.mubr.f32.gmra.mrb[0].mxu0 %v7954
        %v8031 = vpop.f32.mrb[0].mxu0
        %v8032 = vadd.f32 0.0, %v8031
        %v8033 = vpop.f32.mrb[0].mxu0
        %8034 = vdwg.mxu0
        %8037 = vrot.lane.b32.xlu0 %v7719, 124
        %v8038 = vpop.permute.xlu0 %8037
        %8039 = vrot.lane.b32.xlu0 %v7724, 124
        %v8040 = vpop.permute.xlu0 %8039
        %v8041 = vsel %vm427, %v7719, 0
        %v8043 = vsel %vm427, %v7724, 0
        %v8045 = vsel %vm427, %v8038, 0
        %v8047 = vsel %vm427, %v8040, 0
        %8049 = vmatprep.subr.mxu0 0.0
        %8050 = vmatpush1.xpose.msra.mxu0 %v8045
        %8051 = vmatprep.subr.mxu0 0.0
        %8052 = vmatpush1.xpose.msra.mxu0 %v8047
        %8053 = vmatprep.subr.mxu0 0.0
        %8054 = vmatpush1.xpose.msra.mxu0 0.0
        %8055 = vmatprep.subr.mxu0 0.0
        %8056 = vmatpush1.xpose.msra.mxu0 0.0
        %8057 = vmatprep.subr.mxu0 0.0
        %8058 = vmatpush1.xpose.msra.mxu0 0.0
        %8059 = vmatprep.subr.mxu0 0.0
        %8060 = vmatpush1.xpose.msra.mxu0 0.0
        %8061 = vmatprep.subr.mxu0 0.0
        %8062 = vmatpush1.xpose.msra.mxu0 0.0
        %8063 = vmatprep.subr.mxu0 0.0
        %8064 = vmatpush1.xpose.msra.mxu0 0.0
        %8065 = vmatprep.subr.mxu0 0.0
        %8066 = vmatpush1.xpose.msra.mxu0 0.0
        %8067 = vmatprep.subr.mxu0 0.0
        %8068 = vmatpush1.xpose.msra.mxu0 0.0
        %8069 = vmatprep.subr.mxu0 0.0
        %8070 = vmatpush1.xpose.msra.mxu0 0.0
        %8071 = vmatprep.subr.mxu0 0.0
        %8072 = vmatpush1.xpose.msra.mxu0 0.0
        %8073 = vmatprep.subr.mxu0 0.0
        %8074 = vmatpush1.xpose.msra.mxu0 0.0
        %8075 = vmatprep.subr.mxu0 0.0
        %8076 = vmatpush1.xpose.msra.mxu0 0.0
        %8077 = vmatprep.subr.mxu0 0.0
        %8078 = vmatpush1.xpose.msra.mxu0 0.0
        %8079 = vmatprep.subr.mxu0 0.0
        %8080 = vmatpush1.xpose.msra.mxu0 0.0
        %8081 = vmatprep.subr.mxu0 0.0
        %8082 = vmatpush1.xpose.msra.mxu0 0.0
        %8083 = vmatprep.subr.mxu0 0.0
        %8084 = vmatpush1.xpose.msra.mxu0 0.0
        %8085 = vmatprep.subr.mxu0 0.0
        %8086 = vmatpush1.xpose.msra.mxu0 0.0
        %8087 = vmatprep.subr.mxu0 0.0
        %8088 = vmatpush1.xpose.msra.mxu0 0.0
        %8089 = vmatprep.subr.mxu0 0.0
        %8090 = vmatpush1.xpose.msra.mxu0 0.0
        %8091 = vmatprep.subr.mxu0 0.0
        %8092 = vmatpush1.xpose.msra.mxu0 0.0
        %8093 = vmatprep.subr.mxu0 0.0
        %8094 = vmatpush1.xpose.msra.mxu0 0.0
        %8095 = vmatprep.subr.mxu0 0.0
        %8096 = vmatpush1.xpose.msra.mxu0 0.0
        %8097 = vmatprep.subr.mxu0 0.0
        %8098 = vmatpush1.xpose.msra.mxu0 0.0
        %8099 = vmatprep.subr.mxu0 0.0
        %8100 = vmatpush1.xpose.msra.mxu0 0.0
        %8101 = vmatprep.subr.mxu0 0.0
        %8102 = vmatpush1.xpose.msra.mxu0 0.0
        %8103 = vmatprep.subr.mxu0 0.0
        %8104 = vmatpush1.xpose.msra.mxu0 0.0
        %8105 = vmatprep.subr.mxu0 0.0
        %8106 = vmatpush1.xpose.msra.mxu0 0.0
        %8107 = vmatprep.subr.mxu0 0.0
        %8108 = vmatpush1.xpose.msra.mxu0 0.0
        %8109 = vmatprep.subr.mxu0 0.0
        %8110 = vmatpush1.xpose.msra.mxu0 0.0
        %8111 = vmatprep.subr.mxu0 0.0
        %8112 = vmatpush1.xpose.msra.mxu0 0.0
        %8113 = vmatprep.mubr.f32.mxu0 0.0
        %8114 = vmatmul.mubr.f32.gmra.mrb[0].mxu0 %v8041
        %v8115 = vpop.f32.mrb[0].mxu0
        %v8116 = vadd.f32 0.0, %v8115
        %v8117 = vpop.f32.mrb[0].mxu0
        %8118 = vmatprep.mubr.f32.mxu0 0.0
        %8119 = vmatmul.mubr.f32.gmra.mrb[0].mxu0 %v8043
        %v8120 = vpop.f32.mrb[0].mxu0
        %v8121 = vadd.f32 0.0, %v8120
        %v8122 = vpop.f32.mrb[0].mxu0
        %8123 = vdwg.mxu0
        %8126 = vrot.lane.b32.xlu0 %v7729, 124
        %v8127 = vpop.permute.xlu0 %8126
        %8128 = vrot.lane.b32.xlu0 %v7734, 124
        %v8129 = vpop.permute.xlu0 %8128
        %v8130 = vsel %vm427, %v7729, 0
        %v8132 = vsel %vm427, %v7734, 0
        %v8134 = vsel %vm427, %v8127, 0
        %v8136 = vsel %vm427, %v8129, 0
        %8138 = vmatprep.subr.mxu0 0.0
        %8139 = vmatpush1.xpose.msra.mxu0 %v8134
        %8140 = vmatprep.subr.mxu0 0.0
        %8141 = vmatpush1.xpose.msra.mxu0 %v8136
        %8142 = vmatprep.subr.mxu0 0.0
        %8143 = vmatpush1.xpose.msra.mxu0 0.0
        %8144 = vmatprep.subr.mxu0 0.0
        %8145 = vmatpush1.xpose.msra.mxu0 0.0
        %8146 = vmatprep.subr.mxu0 0.0
        %8147 = vmatpush1.xpose.msra.mxu0 0.0
        %8148 = vmatprep.subr.mxu0 0.0
        %8149 = vmatpush1.xpose.msra.mxu0 0.0
        %8150 = vmatprep.subr.mxu0 0.0
        %8151 = vmatpush1.xpose.msra.mxu0 0.0
        %8152 = vmatprep.subr.mxu0 0.0
        %8153 = vmatpush1.xpose.msra.mxu0 0.0
        %8154 = vmatprep.subr.mxu0 0.0
        %8155 = vmatpush1.xpose.msra.mxu0 0.0
        %8156 = vmatprep.subr.mxu0 0.0
        %8157 = vmatpush1.xpose.msra.mxu0 0.0
        %8158 = vmatprep.subr.mxu0 0.0
        %8159 = vmatpush1.xpose.msra.mxu0 0.0
        %8160 = vmatprep.subr.mxu0 0.0
        %8161 = vmatpush1.xpose.msra.mxu0 0.0
        %8162 = vmatprep.subr.mxu0 0.0
        %8163 = vmatpush1.xpose.msra.mxu0 0.0
        %8164 = vmatprep.subr.mxu0 0.0
        %8165 = vmatpush1.xpose.msra.mxu0 0.0
        %8166 = vmatprep.subr.mxu0 0.0
        %8167 = vmatpush1.xpose.msra.mxu0 0.0
        %8168 = vmatprep.subr.mxu0 0.0
        %8169 = vmatpush1.xpose.msra.mxu0 0.0
        %8170 = vmatprep.subr.mxu0 0.0
        %8171 = vmatpush1.xpose.msra.mxu0 0.0
        %8172 = vmatprep.subr.mxu0 0.0
        %8173 = vmatpush1.xpose.msra.mxu0 0.0
        %8174 = vmatprep.subr.mxu0 0.0
        %8175 = vmatpush1.xpose.msra.mxu0 0.0
        %8176 = vmatprep.subr.mxu0 0.0
        %8177 = vmatpush1.xpose.msra.mxu0 0.0
        %8178 = vmatprep.subr.mxu0 0.0
        %8179 = vmatpush1.xpose.msra.mxu0 0.0
        %8180 = vmatprep.subr.mxu0 0.0
        %8181 = vmatpush1.xpose.msra.mxu0 0.0
        %8182 = vmatprep.subr.mxu0 0.0
        %8183 = vmatpush1.xpose.msra.mxu0 0.0
        %8184 = vmatprep.subr.mxu0 0.0
        %8185 = vmatpush1.xpose.msra.mxu0 0.0
        %8186 = vmatprep.subr.mxu0 0.0
        %8187 = vmatpush1.xpose.msra.mxu0 0.0
        %8188 = vmatprep.subr.mxu0 0.0
        %8189 = vmatpush1.xpose.msra.mxu0 0.0
        %8190 = vmatprep.subr.mxu0 0.0
        %8191 = vmatpush1.xpose.msra.mxu0 0.0
        %8192 = vmatprep.subr.mxu0 0.0
        %8193 = vmatpush1.xpose.msra.mxu0 0.0
        %8194 = vmatprep.subr.mxu0 0.0
        %8195 = vmatpush1.xpose.msra.mxu0 0.0
        %8196 = vmatprep.subr.mxu0 0.0
        %8197 = vmatpush1.xpose.msra.mxu0 0.0
        %8198 = vmatprep.subr.mxu0 0.0
        %8199 = vmatpush1.xpose.msra.mxu0 0.0
        %8200 = vmatprep.subr.mxu0 0.0
        %8201 = vmatpush1.xpose.msra.mxu0 0.0
        %8202 = vmatprep.mubr.f32.mxu0 0.0
        %8203 = vmatmul.mubr.f32.gmra.mrb[0].mxu0 %v8130
        %v8204 = vpop.f32.mrb[0].mxu0
        %v8205 = vadd.f32 0.0, %v8204
        %v8206 = vpop.f32.mrb[0].mxu0
        %8207 = vmatprep.mubr.f32.mxu0 0.0
        %8208 = vmatmul.mubr.f32.gmra.mrb[0].mxu0 %v8132
        %v8209 = vpop.f32.mrb[0].mxu0
        %v8210 = vadd.f32 0.0, %v8209
        %v8211 = vpop.f32.mrb[0].mxu0
        %8212 = vdwg.mxu0
        %8215 = vrot.lane.b32.xlu0 %v7739, 124
        %v8216 = vpop.permute.xlu0 %8215
        %8217 = vrot.lane.b32.xlu0 %v7744, 124
        %v8218 = vpop.permute.xlu0 %8217
        %v8219 = vsel %vm427, %v7739, 0
        %v8221 = vsel %vm427, %v7744, 0
        %v8223 = vsel %vm427, %v8216, 0
        %v8225 = vsel %vm427, %v8218, 0
        %8227 = vmatprep.subr.mxu0 0.0
        %8228 = vmatpush1.xpose.msra.mxu0 %v8223
        %8229 = vmatprep.subr.mxu0 0.0
        %8230 = vmatpush1.xpose.msra.mxu0 %v8225
        %8231 = vmatprep.subr.mxu0 0.0
        %8232 = vmatpush1.xpose.msra.mxu0 0.0
        %8233 = vmatprep.subr.mxu0 0.0
        %8234 = vmatpush1.xpose.msra.mxu0 0.0
        %8235 = vmatprep.subr.mxu0 0.0
        %8236 = vmatpush1.xpose.msra.mxu0 0.0
        %8237 = vmatprep.subr.mxu0 0.0
        %8238 = vmatpush1.xpose.msra.mxu0 0.0
        %8239 = vmatprep.subr.mxu0 0.0
        %8240 = vmatpush1.xpose.msra.mxu0 0.0
        %8241 = vmatprep.subr.mxu0 0.0
        %8242 = vmatpush1.xpose.msra.mxu0 0.0
        %8243 = vmatprep.subr.mxu0 0.0
        %8244 = vmatpush1.xpose.msra.mxu0 0.0
        %8245 = vmatprep.subr.mxu0 0.0
        %8246 = vmatpush1.xpose.msra.mxu0 0.0
        %8247 = vmatprep.subr.mxu0 0.0
        %8248 = vmatpush1.xpose.msra.mxu0 0.0
        %8249 = vmatprep.subr.mxu0 0.0
        %8250 = vmatpush1.xpose.msra.mxu0 0.0
        %8251 = vmatprep.subr.mxu0 0.0
        %8252 = vmatpush1.xpose.msra.mxu0 0.0
        %8253 = vmatprep.subr.mxu0 0.0
        %8254 = vmatpush1.xpose.msra.mxu0 0.0
        %8255 = vmatprep.subr.mxu0 0.0
        %8256 = vmatpush1.xpose.msra.mxu0 0.0
        %8257 = vmatprep.subr.mxu0 0.0
        %8258 = vmatpush1.xpose.msra.mxu0 0.0
        %8259 = vmatprep.subr.mxu0 0.0
        %8260 = vmatpush1.xpose.msra.mxu0 0.0
        %8261 = vmatprep.subr.mxu0 0.0
        %8262 = vmatpush1.xpose.msra.mxu0 0.0
        %8263 = vmatprep.subr.mxu0 0.0
        %8264 = vmatpush1.xpose.msra.mxu0 0.0
        %8265 = vmatprep.subr.mxu0 0.0
        %8266 = vmatpush1.xpose.msra.mxu0 0.0
        %8267 = vmatprep.subr.mxu0 0.0
        %8268 = vmatpush1.xpose.msra.mxu0 0.0
        %8269 = vmatprep.subr.mxu0 0.0
        %8270 = vmatpush1.xpose.msra.mxu0 0.0
        %8271 = vmatprep.subr.mxu0 0.0
        %8272 = vmatpush1.xpose.msra.mxu0 0.0
        %8273 = vmatprep.subr.mxu0 0.0
        %8274 = vmatpush1.xpose.msra.mxu0 0.0
        %8275 = vmatprep.subr.mxu0 0.0
        %8276 = vmatpush1.xpose.msra.mxu0 0.0
        %8277 = vmatprep.subr.mxu0 0.0
        %8278 = vmatpush1.xpose.msra.mxu0 0.0
        %8279 = vmatprep.subr.mxu0 0.0
        %8280 = vmatpush1.xpose.msra.mxu0 0.0
        %8281 = vmatprep.subr.mxu0 0.0
        %8282 = vmatpush1.xpose.msra.mxu0 0.0
        %8283 = vmatprep.subr.mxu0 0.0
        %8284 = vmatpush1.xpose.msra.mxu0 0.0
        %8285 = vmatprep.subr.mxu0 0.0
        %8286 = vmatpush1.xpose.msra.mxu0 0.0
        %8287 = vmatprep.subr.mxu0 0.0
        %8288 = vmatpush1.xpose.msra.mxu0 0.0
        %8289 = vmatprep.subr.mxu0 0.0
        %8290 = vmatpush1.xpose.msra.mxu0 0.0
        %8291 = vmatprep.mubr.f32.mxu0 0.0
        %8292 = vmatmul.mubr.f32.gmra.mrb[0].mxu0 %v8219
        %v8293 = vpop.f32.mrb[0].mxu0
        %v8294 = vadd.f32 0.0, %v8293
        %v8295 = vpop.f32.mrb[0].mxu0
        %8296 = vmatprep.mubr.f32.mxu0 0.0
        %8297 = vmatmul.mubr.f32.gmra.mrb[0].mxu0 %v8221
        %v8298 = vpop.f32.mrb[0].mxu0
        %v8299 = vadd.f32 0.0, %v8298
        %v8300 = vpop.f32.mrb[0].mxu0
        %8301 = vdwg.mxu0
        %8304 = vrot.lane.b32.xlu0 %v7749, 124
        %v8305 = vpop.permute.xlu0 %8304
        %8306 = vrot.lane.b32.xlu0 %v7754, 124
        %v8307 = vpop.permute.xlu0 %8306
        %v8308 = vsel %vm427, %v7749, 0
        %v8310 = vsel %vm427, %v7754, 0
        %v8312 = vsel %vm427, %v8305, 0
        %v8314 = vsel %vm427, %v8307, 0
        %8316 = vmatprep.subr.mxu0 0.0
        %8317 = vmatpush1.xpose.msra.mxu0 %v8312
        %8318 = vmatprep.subr.mxu0 0.0
        %8319 = vmatpush1.xpose.msra.mxu0 %v8314
        %8320 = vmatprep.subr.mxu0 0.0
        %8321 = vmatpush1.xpose.msra.mxu0 0.0
        %8322 = vmatprep.subr.mxu0 0.0
        %8323 = vmatpush1.xpose.msra.mxu0 0.0
        %8324 = vmatprep.subr.mxu0 0.0
        %8325 = vmatpush1.xpose.msra.mxu0 0.0
        %8326 = vmatprep.subr.mxu0 0.0
        %8327 = vmatpush1.xpose.msra.mxu0 0.0
        %8328 = vmatprep.subr.mxu0 0.0
        %8329 = vmatpush1.xpose.msra.mxu0 0.0
        %8330 = vmatprep.subr.mxu0 0.0
        %8331 = vmatpush1.xpose.msra.mxu0 0.0
        %8332 = vmatprep.subr.mxu0 0.0
        %8333 = vmatpush1.xpose.msra.mxu0 0.0
        %8334 = vmatprep.subr.mxu0 0.0
        %8335 = vmatpush1.xpose.msra.mxu0 0.0
        %8336 = vmatprep.subr.mxu0 0.0
        %8337 = vmatpush1.xpose.msra.mxu0 0.0
        %8338 = vmatprep.subr.mxu0 0.0
        %8339 = vmatpush1.xpose.msra.mxu0 0.0
        %8340 = vmatprep.subr.mxu0 0.0
        %8341 = vmatpush1.xpose.msra.mxu0 0.0
        %8342 = vmatprep.subr.mxu0 0.0
        %8343 = vmatpush1.xpose.msra.mxu0 0.0
        %8344 = vmatprep.subr.mxu0 0.0
        %8345 = vmatpush1.xpose.msra.mxu0 0.0
        %8346 = vmatprep.subr.mxu0 0.0
        %8347 = vmatpush1.xpose.msra.mxu0 0.0
        %8348 = vmatprep.subr.mxu0 0.0
        %8349 = vmatpush1.xpose.msra.mxu0 0.0
        %8350 = vmatprep.subr.mxu0 0.0
        %8351 = vmatpush1.xpose.msra.mxu0 0.0
        %8352 = vmatprep.subr.mxu0 0.0
        %8353 = vmatpush1.xpose.msra.mxu0 0.0
        %8354 = vmatprep.subr.mxu0 0.0
        %8355 = vmatpush1.xpose.msra.mxu0 0.0
        %8356 = vmatprep.subr.mxu0 0.0
        %8357 = vmatpush1.xpose.msra.mxu0 0.0
        %8358 = vmatprep.subr.mxu0 0.0
        %8359 = vmatpush1.xpose.msra.mxu0 0.0
        %8360 = vmatprep.subr.mxu0 0.0
        %8361 = vmatpush1.xpose.msra.mxu0 0.0
        %8362 = vmatprep.subr.mxu0 0.0
        %8363 = vmatpush1.xpose.msra.mxu0 0.0
        %8364 = vmatprep.subr.mxu0 0.0
        %8365 = vmatpush1.xpose.msra.mxu0 0.0
        %8366 = vmatprep.subr.mxu0 0.0
        %8367 = vmatpush1.xpose.msra.mxu0 0.0
        %8368 = vmatprep.subr.mxu0 0.0
        %8369 = vmatpush1.xpose.msra.mxu0 0.0
        %8370 = vmatprep.subr.mxu0 0.0
        %8371 = vmatpush1.xpose.msra.mxu0 0.0
        %8372 = vmatprep.subr.mxu0 0.0
        %8373 = vmatpush1.xpose.msra.mxu0 0.0
        %8374 = vmatprep.subr.mxu0 0.0
        %8375 = vmatpush1.xpose.msra.mxu0 0.0
        %8376 = vmatprep.subr.mxu0 0.0
        %8377 = vmatpush1.xpose.msra.mxu0 0.0
        %8378 = vmatprep.subr.mxu0 0.0
        %8379 = vmatpush1.xpose.msra.mxu0 0.0
        %8380 = vmatprep.mubr.f32.mxu0 0.0
        %8381 = vmatmul.mubr.f32.gmra.mrb[0].mxu0 %v8308
        %v8382 = vpop.f32.mrb[0].mxu0
        %v8383 = vadd.f32 0.0, %v8382
        %v8384 = vpop.f32.mrb[0].mxu0
        %8385 = vmatprep.mubr.f32.mxu0 0.0
        %8386 = vmatmul.mubr.f32.gmra.mrb[0].mxu0 %v8310
        %v8387 = vpop.f32.mrb[0].mxu0
        %v8388 = vadd.f32 0.0, %v8387
        %v8389 = vpop.f32.mrb[0].mxu0
        %8390 = vdwg.mxu0
        %8393 = vrot.lane.b32.xlu0 %v7759, 124
        %v8394 = vpop.permute.xlu0 %8393
        %8395 = vrot.lane.b32.xlu0 %v7764, 124
        %v8396 = vpop.permute.xlu0 %8395
        %v8397 = vsel %vm427, %v7759, 0
        %v8399 = vsel %vm427, %v7764, 0
        %v8401 = vsel %vm427, %v8394, 0
        %v8403 = vsel %vm427, %v8396, 0
        %8405 = vmatprep.subr.mxu0 0.0
        %8406 = vmatpush1.xpose.msra.mxu0 %v8401
        %8407 = vmatprep.subr.mxu0 0.0
        %8408 = vmatpush1.xpose.msra.mxu0 %v8403
        %8409 = vmatprep.subr.mxu0 0.0
        %8410 = vmatpush1.xpose.msra.mxu0 0.0
        %8411 = vmatprep.subr.mxu0 0.0
        %8412 = vmatpush1.xpose.msra.mxu0 0.0
        %8413 = vmatprep.subr.mxu0 0.0
        %8414 = vmatpush1.xpose.msra.mxu0 0.0
        %8415 = vmatprep.subr.mxu0 0.0
        %8416 = vmatpush1.xpose.msra.mxu0 0.0
        %8417 = vmatprep.subr.mxu0 0.0
        %8418 = vmatpush1.xpose.msra.mxu0 0.0
        %8419 = vmatprep.subr.mxu0 0.0
        %8420 = vmatpush1.xpose.msra.mxu0 0.0
        %8421 = vmatprep.subr.mxu0 0.0
        %8422 = vmatpush1.xpose.msra.mxu0 0.0
        %8423 = vmatprep.subr.mxu0 0.0
        %8424 = vmatpush1.xpose.msra.mxu0 0.0
        %8425 = vmatprep.subr.mxu0 0.0
        %8426 = vmatpush1.xpose.msra.mxu0 0.0
        %8427 = vmatprep.subr.mxu0 0.0
        %8428 = vmatpush1.xpose.msra.mxu0 0.0
        %8429 = vmatprep.subr.mxu0 0.0
        %8430 = vmatpush1.xpose.msra.mxu0 0.0
        %8431 = vmatprep.subr.mxu0 0.0
        %8432 = vmatpush1.xpose.msra.mxu0 0.0
        %8433 = vmatprep.subr.mxu0 0.0
        %8434 = vmatpush1.xpose.msra.mxu0 0.0
        %8435 = vmatprep.subr.mxu0 0.0
        %8436 = vmatpush1.xpose.msra.mxu0 0.0
        %8437 = vmatprep.subr.mxu0 0.0
        %8438 = vmatpush1.xpose.msra.mxu0 0.0
        %8439 = vmatprep.subr.mxu0 0.0
        %8440 = vmatpush1.xpose.msra.mxu0 0.0
        %8441 = vmatprep.subr.mxu0 0.0
        %8442 = vmatpush1.xpose.msra.mxu0 0.0
        %8443 = vmatprep.subr.mxu0 0.0
        %8444 = vmatpush1.xpose.msra.mxu0 0.0
        %8445 = vmatprep.subr.mxu0 0.0
        %8446 = vmatpush1.xpose.msra.mxu0 0.0
        %8447 = vmatprep.subr.mxu0 0.0
        %8448 = vmatpush1.xpose.msra.mxu0 0.0
        %8449 = vmatprep.subr.mxu0 0.0
        %8450 = vmatpush1.xpose.msra.mxu0 0.0
        %8451 = vmatprep.subr.mxu0 0.0
        %8452 = vmatpush1.xpose.msra.mxu0 0.0
        %8453 = vmatprep.subr.mxu0 0.0
        %8454 = vmatpush1.xpose.msra.mxu0 0.0
        %8455 = vmatprep.subr.mxu0 0.0
        %8456 = vmatpush1.xpose.msra.mxu0 0.0
        %8457 = vmatprep.subr.mxu0 0.0
        %8458 = vmatpush1.xpose.msra.mxu0 0.0
        %8459 = vmatprep.subr.mxu0 0.0
        %8460 = vmatpush1.xpose.msra.mxu0 0.0
        %8461 = vmatprep.subr.mxu0 0.0
        %8462 = vmatpush1.xpose.msra.mxu0 0.0
        %8463 = vmatprep.subr.mxu0 0.0
        %8464 = vmatpush1.xpose.msra.mxu0 0.0
        %8465 = vmatprep.subr.mxu0 0.0
        %8466 = vmatpush1.xpose.msra.mxu0 0.0
        %8467 = vmatprep.subr.mxu0 0.0
        %8468 = vmatpush1.xpose.msra.mxu0 0.0
        %8469 = vmatprep.mubr.f32.mxu0 0.0
        %8470 = vmatmul.mubr.f32.gmra.mrb[0].mxu0 %v8397
        %v8471 = vpop.f32.mrb[0].mxu0
        %v8472 = vadd.f32 0.0, %v8471
        %v8473 = vpop.f32.mrb[0].mxu0
        %8474 = vmatprep.mubr.f32.mxu0 0.0
        %8475 = vmatmul.mubr.f32.gmra.mrb[0].mxu0 %v8399
        %v8476 = vpop.f32.mrb[0].mxu0
        %v8477 = vadd.f32 0.0, %v8476
        %v8478 = vpop.f32.mrb[0].mxu0
        %8479 = vdwg.mxu0
        %8482 = vrot.lane.b32.xlu0 %v7769, 124
        %v8483 = vpop.permute.xlu0 %8482
        %8484 = vrot.lane.b32.xlu0 %v7774, 124
        %v8485 = vpop.permute.xlu0 %8484
        %v8486 = vsel %vm427, %v7769, 0
        %v8488 = vsel %vm427, %v7774, 0
        %v8490 = vsel %vm427, %v8483, 0
        %v8492 = vsel %vm427, %v8485, 0
        %8494 = vmatprep.subr.mxu0 0.0
        %8495 = vmatpush1.xpose.msra.mxu0 %v8490
        %8496 = vmatprep.subr.mxu0 0.0
        %8497 = vmatpush1.xpose.msra.mxu0 %v8492
        %8498 = vmatprep.subr.mxu0 0.0
        %8499 = vmatpush1.xpose.msra.mxu0 0.0
        %8500 = vmatprep.subr.mxu0 0.0
        %8501 = vmatpush1.xpose.msra.mxu0 0.0
        %8502 = vmatprep.subr.mxu0 0.0
        %8503 = vmatpush1.xpose.msra.mxu0 0.0
        %8504 = vmatprep.subr.mxu0 0.0
        %8505 = vmatpush1.xpose.msra.mxu0 0.0
        %8506 = vmatprep.subr.mxu0 0.0
        %8507 = vmatpush1.xpose.msra.mxu0 0.0
        %8508 = vmatprep.subr.mxu0 0.0
        %8509 = vmatpush1.xpose.msra.mxu0 0.0
        %8510 = vmatprep.subr.mxu0 0.0
        %8511 = vmatpush1.xpose.msra.mxu0 0.0
        %8512 = vmatprep.subr.mxu0 0.0
        %8513 = vmatpush1.xpose.msra.mxu0 0.0
        %8514 = vmatprep.subr.mxu0 0.0
        %8515 = vmatpush1.xpose.msra.mxu0 0.0
        %8516 = vmatprep.subr.mxu0 0.0
        %8517 = vmatpush1.xpose.msra.mxu0 0.0
        %8518 = vmatprep.subr.mxu0 0.0
        %8519 = vmatpush1.xpose.msra.mxu0 0.0
        %8520 = vmatprep.subr.mxu0 0.0
        %8521 = vmatpush1.xpose.msra.mxu0 0.0
        %8522 = vmatprep.subr.mxu0 0.0
        %8523 = vmatpush1.xpose.msra.mxu0 0.0
        %8524 = vmatprep.subr.mxu0 0.0
        %8525 = vmatpush1.xpose.msra.mxu0 0.0
        %8526 = vmatprep.subr.mxu0 0.0
        %8527 = vmatpush1.xpose.msra.mxu0 0.0
        %8528 = vmatprep.subr.mxu0 0.0
        %8529 = vmatpush1.xpose.msra.mxu0 0.0
        %8530 = vmatprep.subr.mxu0 0.0
        %8531 = vmatpush1.xpose.msra.mxu0 0.0
        %8532 = vmatprep.subr.mxu0 0.0
        %8533 = vmatpush1.xpose.msra.mxu0 0.0
        %8534 = vmatprep.subr.mxu0 0.0
        %8535 = vmatpush1.xpose.msra.mxu0 0.0
        %8536 = vmatprep.subr.mxu0 0.0
        %8537 = vmatpush1.xpose.msra.mxu0 0.0
        %8538 = vmatprep.subr.mxu0 0.0
        %8539 = vmatpush1.xpose.msra.mxu0 0.0
        %8540 = vmatprep.subr.mxu0 0.0
        %8541 = vmatpush1.xpose.msra.mxu0 0.0
        %8542 = vmatprep.subr.mxu0 0.0
        %8543 = vmatpush1.xpose.msra.mxu0 0.0
        %8544 = vmatprep.subr.mxu0 0.0
        %8545 = vmatpush1.xpose.msra.mxu0 0.0
        %8546 = vmatprep.subr.mxu0 0.0
        %8547 = vmatpush1.xpose.msra.mxu0 0.0
        %8548 = vmatprep.subr.mxu0 0.0
        %8549 = vmatpush1.xpose.msra.mxu0 0.0
        %8550 = vmatprep.subr.mxu0 0.0
        %8551 = vmatpush1.xpose.msra.mxu0 0.0
        %8552 = vmatprep.subr.mxu0 0.0
        %8553 = vmatpush1.xpose.msra.mxu0 0.0
        %8554 = vmatprep.subr.mxu0 0.0
        %8555 = vmatpush1.xpose.msra.mxu0 0.0
        %8556 = vmatprep.subr.mxu0 0.0
        %8557 = vmatpush1.xpose.msra.mxu0 0.0
        %8558 = vmatprep.mubr.f32.mxu0 0.0
        %8559 = vmatmul.mubr.f32.gmra.mrb[0].mxu0 %v8486
        %v8560 = vpop.f32.mrb[0].mxu0
        %v8561 = vadd.f32 0.0, %v8560
        %v8562 = vpop.f32.mrb[0].mxu0
        %8563 = vmatprep.mubr.f32.mxu0 0.0
        %8564 = vmatmul.mubr.f32.gmra.mrb[0].mxu0 %v8488
        %v8565 = vpop.f32.mrb[0].mxu0
        %v8566 = vadd.f32 0.0, %v8565
        %v8567 = vpop.f32.mrb[0].mxu0
        %8568 = vdwg.mxu0
        %8571 = vrot.lane.b32.xlu0 %v7779, 124
        %v8572 = vpop.permute.xlu0 %8571
        %8573 = vrot.lane.b32.xlu0 %v7784, 124
        %v8574 = vpop.permute.xlu0 %8573
        %v8575 = vsel %vm427, %v7779, 0
        %v8577 = vsel %vm427, %v7784, 0
        %v8579 = vsel %vm427, %v8572, 0
        %v8581 = vsel %vm427, %v8574, 0
        %8583 = vmatprep.subr.mxu0 0.0
        %8584 = vmatpush1.xpose.msra.mxu0 %v8579
        %8585 = vmatprep.subr.mxu0 0.0
        %8586 = vmatpush1.xpose.msra.mxu0 %v8581
        %8587 = vmatprep.subr.mxu0 0.0
        %8588 = vmatpush1.xpose.msra.mxu0 0.0
        %8589 = vmatprep.subr.mxu0 0.0
        %8590 = vmatpush1.xpose.msra.mxu0 0.0
        %8591 = vmatprep.subr.mxu0 0.0
        %8592 = vmatpush1.xpose.msra.mxu0 0.0
        %8593 = vmatprep.subr.mxu0 0.0
        %8594 = vmatpush1.xpose.msra.mxu0 0.0
        %8595 = vmatprep.subr.mxu0 0.0
        %8596 = vmatpush1.xpose.msra.mxu0 0.0
        %8597 = vmatprep.subr.mxu0 0.0
        %8598 = vmatpush1.xpose.msra.mxu0 0.0
        %8599 = vmatprep.subr.mxu0 0.0
        %8600 = vmatpush1.xpose.msra.mxu0 0.0
        %8601 = vmatprep.subr.mxu0 0.0
        %8602 = vmatpush1.xpose.msra.mxu0 0.0
        %8603 = vmatprep.subr.mxu0 0.0
        %8604 = vmatpush1.xpose.msra.mxu0 0.0
        %8605 = vmatprep.subr.mxu0 0.0
        %8606 = vmatpush1.xpose.msra.mxu0 0.0
        %8607 = vmatprep.subr.mxu0 0.0
        %8608 = vmatpush1.xpose.msra.mxu0 0.0
        %8609 = vmatprep.subr.mxu0 0.0
        %8610 = vmatpush1.xpose.msra.mxu0 0.0
        %8611 = vmatprep.subr.mxu0 0.0
        %8612 = vmatpush1.xpose.msra.mxu0 0.0
        %8613 = vmatprep.subr.mxu0 0.0
        %8614 = vmatpush1.xpose.msra.mxu0 0.0
        %8615 = vmatprep.subr.mxu0 0.0
        %8616 = vmatpush1.xpose.msra.mxu0 0.0
        %8617 = vmatprep.subr.mxu0 0.0
        %8618 = vmatpush1.xpose.msra.mxu0 0.0
        %8619 = vmatprep.subr.mxu0 0.0
        %8620 = vmatpush1.xpose.msra.mxu0 0.0
        %8621 = vmatprep.subr.mxu0 0.0
        %8622 = vmatpush1.xpose.msra.mxu0 0.0
        %8623 = vmatprep.subr.mxu0 0.0
        %8624 = vmatpush1.xpose.msra.mxu0 0.0
        %8625 = vmatprep.subr.mxu0 0.0
        %8626 = vmatpush1.xpose.msra.mxu0 0.0
        %8627 = vmatprep.subr.mxu0 0.0
        %8628 = vmatpush1.xpose.msra.mxu0 0.0
        %8629 = vmatprep.subr.mxu0 0.0
        %8630 = vmatpush1.xpose.msra.mxu0 0.0
        %8631 = vmatprep.subr.mxu0 0.0
        %8632 = vmatpush1.xpose.msra.mxu0 0.0
        %8633 = vmatprep.subr.mxu0 0.0
        %8634 = vmatpush1.xpose.msra.mxu0 0.0
        %8635 = vmatprep.subr.mxu0 0.0
        %8636 = vmatpush1.xpose.msra.mxu0 0.0
        %8637 = vmatprep.subr.mxu0 0.0
        %8638 = vmatpush1.xpose.msra.mxu0 0.0
        %8639 = vmatprep.subr.mxu0 0.0
        %8640 = vmatpush1.xpose.msra.mxu0 0.0
        %8641 = vmatprep.subr.mxu0 0.0
        %8642 = vmatpush1.xpose.msra.mxu0 0.0
        %8643 = vmatprep.subr.mxu0 0.0
        %8644 = vmatpush1.xpose.msra.mxu0 0.0
        %8645 = vmatprep.subr.mxu0 0.0
        %8646 = vmatpush1.xpose.msra.mxu0 0.0
        %8647 = vmatprep.mubr.f32.mxu0 0.0
        %8648 = vmatmul.mubr.f32.gmra.mrb[0].mxu0 %v8575
        %v8649 = vpop.f32.mrb[0].mxu0
        %v8650 = vadd.f32 0.0, %v8649
        %v8651 = vpop.f32.mrb[0].mxu0
        %8652 = vmatprep.mubr.f32.mxu0 0.0
        %8653 = vmatmul.mubr.f32.gmra.mrb[0].mxu0 %v8577
        %v8654 = vpop.f32.mrb[0].mxu0
        %v8655 = vadd.f32 0.0, %v8654
        %v8656 = vpop.f32.mrb[0].mxu0
        %8657 = vdwg.mxu0
        %8660 = vrot.lane.b32.xlu0 %v7789, 124
        %v8661 = vpop.permute.xlu0 %8660
        %8662 = vrot.lane.b32.xlu0 %v7794, 124
        %v8663 = vpop.permute.xlu0 %8662
        %v8664 = vsel %vm427, %v7789, 0
        %v8666 = vsel %vm427, %v7794, 0
        %v8668 = vsel %vm427, %v8661, 0
        %v8670 = vsel %vm427, %v8663, 0
        %8672 = vmatprep.subr.mxu0 0.0
        %8673 = vmatpush1.xpose.msra.mxu0 %v8668
        %8674 = vmatprep.subr.mxu0 0.0
        %8675 = vmatpush1.xpose.msra.mxu0 %v8670
        %8676 = vmatprep.subr.mxu0 0.0
        %8677 = vmatpush1.xpose.msra.mxu0 0.0
        %8678 = vmatprep.subr.mxu0 0.0
        %8679 = vmatpush1.xpose.msra.mxu0 0.0
        %8680 = vmatprep.subr.mxu0 0.0
        %8681 = vmatpush1.xpose.msra.mxu0 0.0
        %8682 = vmatprep.subr.mxu0 0.0
        %8683 = vmatpush1.xpose.msra.mxu0 0.0
        %8684 = vmatprep.subr.mxu0 0.0
        %8685 = vmatpush1.xpose.msra.mxu0 0.0
        %8686 = vmatprep.subr.mxu0 0.0
        %8687 = vmatpush1.xpose.msra.mxu0 0.0
        %8688 = vmatprep.subr.mxu0 0.0
        %8689 = vmatpush1.xpose.msra.mxu0 0.0
        %8690 = vmatprep.subr.mxu0 0.0
        %8691 = vmatpush1.xpose.msra.mxu0 0.0
        %8692 = vmatprep.subr.mxu0 0.0
        %8693 = vmatpush1.xpose.msra.mxu0 0.0
        %8694 = vmatprep.subr.mxu0 0.0
        %8695 = vmatpush1.xpose.msra.mxu0 0.0
        %8696 = vmatprep.subr.mxu0 0.0
        %8697 = vmatpush1.xpose.msra.mxu0 0.0
        %8698 = vmatprep.subr.mxu0 0.0
        %8699 = vmatpush1.xpose.msra.mxu0 0.0
        %8700 = vmatprep.subr.mxu0 0.0
        %8701 = vmatpush1.xpose.msra.mxu0 0.0
        %8702 = vmatprep.subr.mxu0 0.0
        %8703 = vmatpush1.xpose.msra.mxu0 0.0
        %8704 = vmatprep.subr.mxu0 0.0
        %8705 = vmatpush1.xpose.msra.mxu0 0.0
        %8706 = vmatprep.subr.mxu0 0.0
        %8707 = vmatpush1.xpose.msra.mxu0 0.0
        %8708 = vmatprep.subr.mxu0 0.0
        %8709 = vmatpush1.xpose.msra.mxu0 0.0
        %8710 = vmatprep.subr.mxu0 0.0
        %8711 = vmatpush1.xpose.msra.mxu0 0.0
        %8712 = vmatprep.subr.mxu0 0.0
        %8713 = vmatpush1.xpose.msra.mxu0 0.0
        %8714 = vmatprep.subr.mxu0 0.0
        %8715 = vmatpush1.xpose.msra.mxu0 0.0
        %8716 = vmatprep.subr.mxu0 0.0
        %8717 = vmatpush1.xpose.msra.mxu0 0.0
        %8718 = vmatprep.subr.mxu0 0.0
        %8719 = vmatpush1.xpose.msra.mxu0 0.0
        %8720 = vmatprep.subr.mxu0 0.0
        %8721 = vmatpush1.xpose.msra.mxu0 0.0
        %8722 = vmatprep.subr.mxu0 0.0
        %8723 = vmatpush1.xpose.msra.mxu0 0.0
        %8724 = vmatprep.subr.mxu0 0.0
        %8725 = vmatpush1.xpose.msra.mxu0 0.0
        %8726 = vmatprep.subr.mxu0 0.0
        %8727 = vmatpush1.xpose.msra.mxu0 0.0
        %8728 = vmatprep.subr.mxu0 0.0
        %8729 = vmatpush1.xpose.msra.mxu0 0.0
        %8730 = vmatprep.subr.mxu0 0.0
        %8731 = vmatpush1.xpose.msra.mxu0 0.0
        %8732 = vmatprep.subr.mxu0 0.0
        %8733 = vmatpush1.xpose.msra.mxu0 0.0
        %8734 = vmatprep.subr.mxu0 0.0
        %8735 = vmatpush1.xpose.msra.mxu0 0.0
        %8736 = vmatprep.mubr.f32.mxu0 0.0
        %8737 = vmatmul.mubr.f32.gmra.mrb[0].mxu0 %v8664
        %v8738 = vpop.f32.mrb[0].mxu0
        %v8739 = vadd.f32 0.0, %v8738
        %v8740 = vpop.f32.mrb[0].mxu0
        %8741 = vmatprep.mubr.f32.mxu0 0.0
        %8742 = vmatmul.mubr.f32.gmra.mrb[0].mxu0 %v8666
        %v8743 = vpop.f32.mrb[0].mxu0
        %v8744 = vadd.f32 0.0, %v8743
        %v8745 = vpop.f32.mrb[0].mxu0
        %8746 = vdwg.mxu0
        %8749 = vrot.lane.b32.xlu0 %v7799, 124
        %v8750 = vpop.permute.xlu0 %8749
        %8751 = vrot.lane.b32.xlu0 %v7804, 124
        %v8752 = vpop.permute.xlu0 %8751
        %v8753 = vsel %vm427, %v7799, 0
        %v8755 = vsel %vm427, %v7804, 0
        %v8757 = vsel %vm427, %v8750, 0
        %v8759 = vsel %vm427, %v8752, 0
        %8761 = vmatprep.subr.mxu0 0.0
        %8762 = vmatpush1.xpose.msra.mxu0 %v8757
        %8763 = vmatprep.subr.mxu0 0.0
        %8764 = vmatpush1.xpose.msra.mxu0 %v8759
        %8765 = vmatprep.subr.mxu0 0.0
        %8766 = vmatpush1.xpose.msra.mxu0 0.0
        %8767 = vmatprep.subr.mxu0 0.0
        %8768 = vmatpush1.xpose.msra.mxu0 0.0
        %8769 = vmatprep.subr.mxu0 0.0
        %8770 = vmatpush1.xpose.msra.mxu0 0.0
        %8771 = vmatprep.subr.mxu0 0.0
        %8772 = vmatpush1.xpose.msra.mxu0 0.0
        %8773 = vmatprep.subr.mxu0 0.0
        %8774 = vmatpush1.xpose.msra.mxu0 0.0
        %8775 = vmatprep.subr.mxu0 0.0
        %8776 = vmatpush1.xpose.msra.mxu0 0.0
        %8777 = vmatprep.subr.mxu0 0.0
        %8778 = vmatpush1.xpose.msra.mxu0 0.0
        %8779 = vmatprep.subr.mxu0 0.0
        %8780 = vmatpush1.xpose.msra.mxu0 0.0
        %8781 = vmatprep.subr.mxu0 0.0
        %8782 = vmatpush1.xpose.msra.mxu0 0.0
        %8783 = vmatprep.subr.mxu0 0.0
        %8784 = vmatpush1.xpose.msra.mxu0 0.0
        %8785 = vmatprep.subr.mxu0 0.0
        %8786 = vmatpush1.xpose.msra.mxu0 0.0
        %8787 = vmatprep.subr.mxu0 0.0
        %8788 = vmatpush1.xpose.msra.mxu0 0.0
        %8789 = vmatprep.subr.mxu0 0.0
        %8790 = vmatpush1.xpose.msra.mxu0 0.0
        %8791 = vmatprep.subr.mxu0 0.0
        %8792 = vmatpush1.xpose.msra.mxu0 0.0
        %8793 = vmatprep.subr.mxu0 0.0
        %8794 = vmatpush1.xpose.msra.mxu0 0.0
        %8795 = vmatprep.subr.mxu0 0.0
        %8796 = vmatpush1.xpose.msra.mxu0 0.0
        %8797 = vmatprep.subr.mxu0 0.0
        %8798 = vmatpush1.xpose.msra.mxu0 0.0
        %8799 = vmatprep.subr.mxu0 0.0
        %8800 = vmatpush1.xpose.msra.mxu0 0.0
        %8801 = vmatprep.subr.mxu0 0.0
        %8802 = vmatpush1.xpose.msra.mxu0 0.0
        %8803 = vmatprep.subr.mxu0 0.0
        %8804 = vmatpush1.xpose.msra.mxu0 0.0
        %8805 = vmatprep.subr.mxu0 0.0
        %8806 = vmatpush1.xpose.msra.mxu0 0.0
        %8807 = vmatprep.subr.mxu0 0.0
        %8808 = vmatpush1.xpose.msra.mxu0 0.0
        %8809 = vmatprep.subr.mxu0 0.0
        %8810 = vmatpush1.xpose.msra.mxu0 0.0
        %8811 = vmatprep.subr.mxu0 0.0
        %8812 = vmatpush1.xpose.msra.mxu0 0.0
        %8813 = vmatprep.subr.mxu0 0.0
        %8814 = vmatpush1.xpose.msra.mxu0 0.0
        %8815 = vmatprep.subr.mxu0 0.0
        %8816 = vmatpush1.xpose.msra.mxu0 0.0
        %8817 = vmatprep.subr.mxu0 0.0
        %8818 = vmatpush1.xpose.msra.mxu0 0.0
        %8819 = vmatprep.subr.mxu0 0.0
        %8820 = vmatpush1.xpose.msra.mxu0 0.0
        %8821 = vmatprep.subr.mxu0 0.0
        %8822 = vmatpush1.xpose.msra.mxu0 0.0
        %8823 = vmatprep.subr.mxu0 0.0
        %8824 = vmatpush1.xpose.msra.mxu0 0.0
        %8825 = vmatprep.mubr.f32.mxu0 0.0
        %8826 = vmatmul.mubr.f32.gmra.mrb[0].mxu0 %v8753
        %v8827 = vpop.f32.mrb[0].mxu0
        %v8828 = vadd.f32 0.0, %v8827
        %v8829 = vpop.f32.mrb[0].mxu0
        %8830 = vmatprep.mubr.f32.mxu0 0.0
        %8831 = vmatmul.mubr.f32.gmra.mrb[0].mxu0 %v8755
        %v8832 = vpop.f32.mrb[0].mxu0
        %v8833 = vadd.f32 0.0, %v8832
        %v8834 = vpop.f32.mrb[0].mxu0
        %8835 = vdwg.mxu0
        %8838 = vrot.lane.b32.xlu0 %v7809, 124
        %v8839 = vpop.permute.xlu0 %8838
        %8840 = vrot.lane.b32.xlu0 %v7814, 124
        %v8841 = vpop.permute.xlu0 %8840
        %v8842 = vsel %vm427, %v7809, 0
        %v8844 = vsel %vm427, %v7814, 0
        %v8846 = vsel %vm427, %v8839, 0
        %v8848 = vsel %vm427, %v8841, 0
        %8850 = vmatprep.subr.mxu0 0.0
        %8851 = vmatpush1.xpose.msra.mxu0 %v8846
        %8852 = vmatprep.subr.mxu0 0.0
        %8853 = vmatpush1.xpose.msra.mxu0 %v8848
        %8854 = vmatprep.subr.mxu0 0.0
        %8855 = vmatpush1.xpose.msra.mxu0 0.0
        %8856 = vmatprep.subr.mxu0 0.0
        %8857 = vmatpush1.xpose.msra.mxu0 0.0
        %8858 = vmatprep.subr.mxu0 0.0
        %8859 = vmatpush1.xpose.msra.mxu0 0.0
        %8860 = vmatprep.subr.mxu0 0.0
        %8861 = vmatpush1.xpose.msra.mxu0 0.0
        %8862 = vmatprep.subr.mxu0 0.0
        %8863 = vmatpush1.xpose.msra.mxu0 0.0
        %8864 = vmatprep.subr.mxu0 0.0
        %8865 = vmatpush1.xpose.msra.mxu0 0.0
        %8866 = vmatprep.subr.mxu0 0.0
        %8867 = vmatpush1.xpose.msra.mxu0 0.0
        %8868 = vmatprep.subr.mxu0 0.0
        %8869 = vmatpush1.xpose.msra.mxu0 0.0
        %8870 = vmatprep.subr.mxu0 0.0
        %8871 = vmatpush1.xpose.msra.mxu0 0.0
        %8872 = vmatprep.subr.mxu0 0.0
        %8873 = vmatpush1.xpose.msra.mxu0 0.0
        %8874 = vmatprep.subr.mxu0 0.0
        %8875 = vmatpush1.xpose.msra.mxu0 0.0
        %8876 = vmatprep.subr.mxu0 0.0
        %8877 = vmatpush1.xpose.msra.mxu0 0.0
        %8878 = vmatprep.subr.mxu0 0.0
        %8879 = vmatpush1.xpose.msra.mxu0 0.0
        %8880 = vmatprep.subr.mxu0 0.0
        %8881 = vmatpush1.xpose.msra.mxu0 0.0
        %8882 = vmatprep.subr.mxu0 0.0
        %8883 = vmatpush1.xpose.msra.mxu0 0.0
        %8884 = vmatprep.subr.mxu0 0.0
        %8885 = vmatpush1.xpose.msra.mxu0 0.0
        %8886 = vmatprep.subr.mxu0 0.0
        %8887 = vmatpush1.xpose.msra.mxu0 0.0
        %8888 = vmatprep.subr.mxu0 0.0
        %8889 = vmatpush1.xpose.msra.mxu0 0.0
        %8890 = vmatprep.subr.mxu0 0.0
        %8891 = vmatpush1.xpose.msra.mxu0 0.0
        %8892 = vmatprep.subr.mxu0 0.0
        %8893 = vmatpush1.xpose.msra.mxu0 0.0
        %8894 = vmatprep.subr.mxu0 0.0
        %8895 = vmatpush1.xpose.msra.mxu0 0.0
        %8896 = vmatprep.subr.mxu0 0.0
        %8897 = vmatpush1.xpose.msra.mxu0 0.0
        %8898 = vmatprep.subr.mxu0 0.0
        %8899 = vmatpush1.xpose.msra.mxu0 0.0
        %8900 = vmatprep.subr.mxu0 0.0
        %8901 = vmatpush1.xpose.msra.mxu0 0.0
        %8902 = vmatprep.subr.mxu0 0.0
        %8903 = vmatpush1.xpose.msra.mxu0 0.0
        %8904 = vmatprep.subr.mxu0 0.0
        %8905 = vmatpush1.xpose.msra.mxu0 0.0
        %8906 = vmatprep.subr.mxu0 0.0
        %8907 = vmatpush1.xpose.msra.mxu0 0.0
        %8908 = vmatprep.subr.mxu0 0.0
        %8909 = vmatpush1.xpose.msra.mxu0 0.0
        %8910 = vmatprep.subr.mxu0 0.0
        %8911 = vmatpush1.xpose.msra.mxu0 0.0
        %8912 = vmatprep.subr.mxu0 0.0
        %8913 = vmatpush1.xpose.msra.mxu0 0.0
        %8914 = vmatprep.mubr.f32.mxu0 0.0
        %8915 = vmatmul.mubr.f32.gmra.mrb[0].mxu0 %v8842
        %v8916 = vpop.f32.mrb[0].mxu0
        %v8917 = vadd.f32 0.0, %v8916
        %v8918 = vpop.f32.mrb[0].mxu0
        %8919 = vmatprep.mubr.f32.mxu0 0.0
        %8920 = vmatmul.mubr.f32.gmra.mrb[0].mxu0 %v8844
        %v8921 = vpop.f32.mrb[0].mxu0
        %v8922 = vadd.f32 0.0, %v8921
        %v8923 = vpop.f32.mrb[0].mxu0
        %8924 = vdwg.mxu0
        %8927 = vrot.lane.b32.xlu0 %v7819, 124
        %v8928 = vpop.permute.xlu0 %8927
        %8929 = vrot.lane.b32.xlu0 %v7824, 124
        %v8930 = vpop.permute.xlu0 %8929
        %v8931 = vsel %vm427, %v7819, 0
        %v8933 = vsel %vm427, %v7824, 0
        %v8935 = vsel %vm427, %v8928, 0
        %v8937 = vsel %vm427, %v8930, 0
        %8939 = vmatprep.subr.mxu0 0.0
        %8940 = vmatpush1.xpose.msra.mxu0 %v8935
        %8941 = vmatprep.subr.mxu0 0.0
        %8942 = vmatpush1.xpose.msra.mxu0 %v8937
        %8943 = vmatprep.subr.mxu0 0.0
        %8944 = vmatpush1.xpose.msra.mxu0 0.0
        %8945 = vmatprep.subr.mxu0 0.0
        %8946 = vmatpush1.xpose.msra.mxu0 0.0
        %8947 = vmatprep.subr.mxu0 0.0
        %8948 = vmatpush1.xpose.msra.mxu0 0.0
        %8949 = vmatprep.subr.mxu0 0.0
        %8950 = vmatpush1.xpose.msra.mxu0 0.0
        %8951 = vmatprep.subr.mxu0 0.0
        %8952 = vmatpush1.xpose.msra.mxu0 0.0
        %8953 = vmatprep.subr.mxu0 0.0
        %8954 = vmatpush1.xpose.msra.mxu0 0.0
        %8955 = vmatprep.subr.mxu0 0.0
        %8956 = vmatpush1.xpose.msra.mxu0 0.0
        %8957 = vmatprep.subr.mxu0 0.0
        %8958 = vmatpush1.xpose.msra.mxu0 0.0
        %8959 = vmatprep.subr.mxu0 0.0
        %8960 = vmatpush1.xpose.msra.mxu0 0.0
        %8961 = vmatprep.subr.mxu0 0.0
        %8962 = vmatpush1.xpose.msra.mxu0 0.0
        %8963 = vmatprep.subr.mxu0 0.0
        %8964 = vmatpush1.xpose.msra.mxu0 0.0
        %8965 = vmatprep.subr.mxu0 0.0
        %8966 = vmatpush1.xpose.msra.mxu0 0.0
        %8967 = vmatprep.subr.mxu0 0.0
        %8968 = vmatpush1.xpose.msra.mxu0 0.0
        %8969 = vmatprep.subr.mxu0 0.0
        %8970 = vmatpush1.xpose.msra.mxu0 0.0
        %8971 = vmatprep.subr.mxu0 0.0
        %8972 = vmatpush1.xpose.msra.mxu0 0.0
        %8973 = vmatprep.subr.mxu0 0.0
        %8974 = vmatpush1.xpose.msra.mxu0 0.0
        %8975 = vmatprep.subr.mxu0 0.0
        %8976 = vmatpush1.xpose.msra.mxu0 0.0
        %8977 = vmatprep.subr.mxu0 0.0
        %8978 = vmatpush1.xpose.msra.mxu0 0.0
        %8979 = vmatprep.subr.mxu0 0.0
        %8980 = vmatpush1.xpose.msra.mxu0 0.0
        %8981 = vmatprep.subr.mxu0 0.0
        %8982 = vmatpush1.xpose.msra.mxu0 0.0
        %8983 = vmatprep.subr.mxu0 0.0
        %8984 = vmatpush1.xpose.msra.mxu0 0.0
        %8985 = vmatprep.subr.mxu0 0.0
        %8986 = vmatpush1.xpose.msra.mxu0 0.0
        %8987 = vmatprep.subr.mxu0 0.0
        %8988 = vmatpush1.xpose.msra.mxu0 0.0
        %8989 = vmatprep.subr.mxu0 0.0
        %8990 = vmatpush1.xpose.msra.mxu0 0.0
        %8991 = vmatprep.subr.mxu0 0.0
        %8992 = vmatpush1.xpose.msra.mxu0 0.0
        %8993 = vmatprep.subr.mxu0 0.0
        %8994 = vmatpush1.xpose.msra.mxu0 0.0
        %8995 = vmatprep.subr.mxu0 0.0
        %8996 = vmatpush1.xpose.msra.mxu0 0.0
        %8997 = vmatprep.subr.mxu0 0.0
        %8998 = vmatpush1.xpose.msra.mxu0 0.0
        %8999 = vmatprep.subr.mxu0 0.0
        %9000 = vmatpush1.xpose.msra.mxu0 0.0
        %9001 = vmatprep.subr.mxu0 0.0
        %9002 = vmatpush1.xpose.msra.mxu0 0.0
        %9003 = vmatprep.mubr.f32.mxu0 0.0
        %9004 = vmatmul.mubr.f32.gmra.mrb[0].mxu0 %v8931
        %v9005 = vpop.f32.mrb[0].mxu0
        %v9006 = vadd.f32 0.0, %v9005
        %v9007 = vpop.f32.mrb[0].mxu0
        %9008 = vmatprep.mubr.f32.mxu0 0.0
        %9009 = vmatmul.mubr.f32.gmra.mrb[0].mxu0 %v8933
        %v9010 = vpop.f32.mrb[0].mxu0
        %v9011 = vadd.f32 0.0, %v9010
        %v9012 = vpop.f32.mrb[0].mxu0
        %9013 = vdwg.mxu0
        %9016 = vrot.lane.b32.xlu0 %v7829, 124
        %v9017 = vpop.permute.xlu0 %9016
        %9018 = vrot.lane.b32.xlu0 %v7834, 124
        %v9019 = vpop.permute.xlu0 %9018
        %v9020 = vsel %vm427, %v7829, 0
        %v9022 = vsel %vm427, %v7834, 0
        %v9024 = vsel %vm427, %v9017, 0
        %v9026 = vsel %vm427, %v9019, 0
        %9028 = vmatprep.subr.mxu0 0.0
        %9029 = vmatpush1.xpose.msra.mxu0 %v9024
        %9030 = vmatprep.subr.mxu0 0.0
        %9031 = vmatpush1.xpose.msra.mxu0 %v9026
        %9032 = vmatprep.subr.mxu0 0.0
        %9033 = vmatpush1.xpose.msra.mxu0 0.0
        %9034 = vmatprep.subr.mxu0 0.0
        %9035 = vmatpush1.xpose.msra.mxu0 0.0
        %9036 = vmatprep.subr.mxu0 0.0
        %9037 = vmatpush1.xpose.msra.mxu0 0.0
        %9038 = vmatprep.subr.mxu0 0.0
        %9039 = vmatpush1.xpose.msra.mxu0 0.0
        %9040 = vmatprep.subr.mxu0 0.0
        %9041 = vmatpush1.xpose.msra.mxu0 0.0
        %9042 = vmatprep.subr.mxu0 0.0
        %9043 = vmatpush1.xpose.msra.mxu0 0.0
        %9044 = vmatprep.subr.mxu0 0.0
        %9045 = vmatpush1.xpose.msra.mxu0 0.0
        %9046 = vmatprep.subr.mxu0 0.0
        %9047 = vmatpush1.xpose.msra.mxu0 0.0
        %9048 = vmatprep.subr.mxu0 0.0
        %9049 = vmatpush1.xpose.msra.mxu0 0.0
        %9050 = vmatprep.subr.mxu0 0.0
        %9051 = vmatpush1.xpose.msra.mxu0 0.0
        %9052 = vmatprep.subr.mxu0 0.0
        %9053 = vmatpush1.xpose.msra.mxu0 0.0
        %9054 = vmatprep.subr.mxu0 0.0
        %9055 = vmatpush1.xpose.msra.mxu0 0.0
        %9056 = vmatprep.subr.mxu0 0.0
        %9057 = vmatpush1.xpose.msra.mxu0 0.0
        %9058 = vmatprep.subr.mxu0 0.0
        %9059 = vmatpush1.xpose.msra.mxu0 0.0
        %9060 = vmatprep.subr.mxu0 0.0
        %9061 = vmatpush1.xpose.msra.mxu0 0.0
        %9062 = vmatprep.subr.mxu0 0.0
        %9063 = vmatpush1.xpose.msra.mxu0 0.0
        %9064 = vmatprep.subr.mxu0 0.0
        %9065 = vmatpush1.xpose.msra.mxu0 0.0
        %9066 = vmatprep.subr.mxu0 0.0
        %9067 = vmatpush1.xpose.msra.mxu0 0.0
        %9068 = vmatprep.subr.mxu0 0.0
        %9069 = vmatpush1.xpose.msra.mxu0 0.0
        %9070 = vmatprep.subr.mxu0 0.0
        %9071 = vmatpush1.xpose.msra.mxu0 0.0
        %9072 = vmatprep.subr.mxu0 0.0
        %9073 = vmatpush1.xpose.msra.mxu0 0.0
        %9074 = vmatprep.subr.mxu0 0.0
        %9075 = vmatpush1.xpose.msra.mxu0 0.0
        %9076 = vmatprep.subr.mxu0 0.0
        %9077 = vmatpush1.xpose.msra.mxu0 0.0
        %9078 = vmatprep.subr.mxu0 0.0
        %9079 = vmatpush1.xpose.msra.mxu0 0.0
        %9080 = vmatprep.subr.mxu0 0.0
        %9081 = vmatpush1.xpose.msra.mxu0 0.0
        %9082 = vmatprep.subr.mxu0 0.0
        %9083 = vmatpush1.xpose.msra.mxu0 0.0
        %9084 = vmatprep.subr.mxu0 0.0
        %9085 = vmatpush1.xpose.msra.mxu0 0.0
        %9086 = vmatprep.subr.mxu0 0.0
        %9087 = vmatpush1.xpose.msra.mxu0 0.0
        %9088 = vmatprep.subr.mxu0 0.0
        %9089 = vmatpush1.xpose.msra.mxu0 0.0
        %9090 = vmatprep.subr.mxu0 0.0
        %9091 = vmatpush1.xpose.msra.mxu0 0.0
        %9092 = vmatprep.mubr.f32.mxu0 0.0
        %9093 = vmatmul.mubr.f32.gmra.mrb[0].mxu0 %v9020
        %v9094 = vpop.f32.mrb[0].mxu0
        %v9095 = vadd.f32 0.0, %v9094
        %v9096 = vpop.f32.mrb[0].mxu0
        %9097 = vmatprep.mubr.f32.mxu0 0.0
        %9098 = vmatmul.mubr.f32.gmra.mrb[0].mxu0 %v9022
        %v9099 = vpop.f32.mrb[0].mxu0
        %v9100 = vadd.f32 0.0, %v9099
        %v9101 = vpop.f32.mrb[0].mxu0
        %9102 = vdwg.mxu0
        %9105 = vrot.lane.b32.xlu0 %v7839, 124
        %v9106 = vpop.permute.xlu0 %9105
        %9107 = vrot.lane.b32.xlu0 %v7844, 124
        %v9108 = vpop.permute.xlu0 %9107
        %v9109 = vsel %vm427, %v7839, 0
        %v9111 = vsel %vm427, %v7844, 0
        %v9113 = vsel %vm427, %v9106, 0
        %v9115 = vsel %vm427, %v9108, 0
        %9117 = vmatprep.subr.mxu0 0.0
        %9118 = vmatpush1.xpose.msra.mxu0 %v9113
        %9119 = vmatprep.subr.mxu0 0.0
        %9120 = vmatpush1.xpose.msra.mxu0 %v9115
        %9121 = vmatprep.subr.mxu0 0.0
        %9122 = vmatpush1.xpose.msra.mxu0 0.0
        %9123 = vmatprep.subr.mxu0 0.0
        %9124 = vmatpush1.xpose.msra.mxu0 0.0
        %9125 = vmatprep.subr.mxu0 0.0
        %9126 = vmatpush1.xpose.msra.mxu0 0.0
        %9127 = vmatprep.subr.mxu0 0.0
        %9128 = vmatpush1.xpose.msra.mxu0 0.0
        %9129 = vmatprep.subr.mxu0 0.0
        %9130 = vmatpush1.xpose.msra.mxu0 0.0
        %9131 = vmatprep.subr.mxu0 0.0
        %9132 = vmatpush1.xpose.msra.mxu0 0.0
        %9133 = vmatprep.subr.mxu0 0.0
        %9134 = vmatpush1.xpose.msra.mxu0 0.0
        %9135 = vmatprep.subr.mxu0 0.0
        %9136 = vmatpush1.xpose.msra.mxu0 0.0
        %9137 = vmatprep.subr.mxu0 0.0
        %9138 = vmatpush1.xpose.msra.mxu0 0.0
        %9139 = vmatprep.subr.mxu0 0.0
        %9140 = vmatpush1.xpose.msra.mxu0 0.0
        %9141 = vmatprep.subr.mxu0 0.0
        %9142 = vmatpush1.xpose.msra.mxu0 0.0
        %9143 = vmatprep.subr.mxu0 0.0
        %9144 = vmatpush1.xpose.msra.mxu0 0.0
        %9145 = vmatprep.subr.mxu0 0.0
        %9146 = vmatpush1.xpose.msra.mxu0 0.0
        %9147 = vmatprep.subr.mxu0 0.0
        %9148 = vmatpush1.xpose.msra.mxu0 0.0
        %9149 = vmatprep.subr.mxu0 0.0
        %9150 = vmatpush1.xpose.msra.mxu0 0.0
        %9151 = vmatprep.subr.mxu0 0.0
        %9152 = vmatpush1.xpose.msra.mxu0 0.0
        %9153 = vmatprep.subr.mxu0 0.0
        %9154 = vmatpush1.xpose.msra.mxu0 0.0
        %9155 = vmatprep.subr.mxu0 0.0
        %9156 = vmatpush1.xpose.msra.mxu0 0.0
        %9157 = vmatprep.subr.mxu0 0.0
        %9158 = vmatpush1.xpose.msra.mxu0 0.0
        %9159 = vmatprep.subr.mxu0 0.0
        %9160 = vmatpush1.xpose.msra.mxu0 0.0
        %9161 = vmatprep.subr.mxu0 0.0
        %9162 = vmatpush1.xpose.msra.mxu0 0.0
        %9163 = vmatprep.subr.mxu0 0.0
        %9164 = vmatpush1.xpose.msra.mxu0 0.0
        %9165 = vmatprep.subr.mxu0 0.0
        %9166 = vmatpush1.xpose.msra.mxu0 0.0
        %9167 = vmatprep.subr.mxu0 0.0
        %9168 = vmatpush1.xpose.msra.mxu0 0.0
        %9169 = vmatprep.subr.mxu0 0.0
        %9170 = vmatpush1.xpose.msra.mxu0 0.0
        %9171 = vmatprep.subr.mxu0 0.0
        %9172 = vmatpush1.xpose.msra.mxu0 0.0
        %9173 = vmatprep.subr.mxu0 0.0
        %9174 = vmatpush1.xpose.msra.mxu0 0.0
        %9175 = vmatprep.subr.mxu0 0.0
        %9176 = vmatpush1.xpose.msra.mxu0 0.0
        %9177 = vmatprep.subr.mxu0 0.0
        %9178 = vmatpush1.xpose.msra.mxu0 0.0
        %9179 = vmatprep.subr.mxu0 0.0
        %9180 = vmatpush1.xpose.msra.mxu0 0.0
        %9181 = vmatprep.mubr.f32.mxu0 0.0
        %9182 = vmatmul.mubr.f32.gmra.mrb[0].mxu0 %v9109
        %v9183 = vpop.f32.mrb[0].mxu0
        %v9184 = vadd.f32 0.0, %v9183
        %v9185 = vpop.f32.mrb[0].mxu0
        %9186 = vmatprep.mubr.f32.mxu0 0.0
        %9187 = vmatmul.mubr.f32.gmra.mrb[0].mxu0 %v9111
        %v9188 = vpop.f32.mrb[0].mxu0
        %v9189 = vadd.f32 0.0, %v9188
        %v9190 = vpop.f32.mrb[0].mxu0
        %9191 = vdwg.mxu0
        %9194 = vrot.lane.b32.xlu0 %v7849, 124
        %v9195 = vpop.permute.xlu0 %9194
        %9196 = vrot.lane.b32.xlu0 %v7854, 124
        %v9197 = vpop.permute.xlu0 %9196
        %v9198 = vsel %vm427, %v7849, 0
        %v9200 = vsel %vm427, %v7854, 0
        %v9202 = vsel %vm427, %v9195, 0
        %v9204 = vsel %vm427, %v9197, 0
        %9206 = vmatprep.subr.mxu0 0.0
        %9207 = vmatpush1.xpose.msra.mxu0 %v9202
        %9208 = vmatprep.subr.mxu0 0.0
        %9209 = vmatpush1.xpose.msra.mxu0 %v9204
        %9210 = vmatprep.subr.mxu0 0.0
        %9211 = vmatpush1.xpose.msra.mxu0 0.0
        %9212 = vmatprep.subr.mxu0 0.0
        %9213 = vmatpush1.xpose.msra.mxu0 0.0
        %9214 = vmatprep.subr.mxu0 0.0
        %9215 = vmatpush1.xpose.msra.mxu0 0.0
        %9216 = vmatprep.subr.mxu0 0.0
        %9217 = vmatpush1.xpose.msra.mxu0 0.0
        %9218 = vmatprep.subr.mxu0 0.0
        %9219 = vmatpush1.xpose.msra.mxu0 0.0
        %9220 = vmatprep.subr.mxu0 0.0
        %9221 = vmatpush1.xpose.msra.mxu0 0.0
        %9222 = vmatprep.subr.mxu0 0.0
        %9223 = vmatpush1.xpose.msra.mxu0 0.0
        %9224 = vmatprep.subr.mxu0 0.0
        %9225 = vmatpush1.xpose.msra.mxu0 0.0
        %9226 = vmatprep.subr.mxu0 0.0
        %9227 = vmatpush1.xpose.msra.mxu0 0.0
        %9228 = vmatprep.subr.mxu0 0.0
        %9229 = vmatpush1.xpose.msra.mxu0 0.0
        %9230 = vmatprep.subr.mxu0 0.0
        %9231 = vmatpush1.xpose.msra.mxu0 0.0
        %9232 = vmatprep.subr.mxu0 0.0
        %9233 = vmatpush1.xpose.msra.mxu0 0.0
        %9234 = vmatprep.subr.mxu0 0.0
        %9235 = vmatpush1.xpose.msra.mxu0 0.0
        %9236 = vmatprep.subr.mxu0 0.0
        %9237 = vmatpush1.xpose.msra.mxu0 0.0
        %9238 = vmatprep.subr.mxu0 0.0
        %9239 = vmatpush1.xpose.msra.mxu0 0.0
        %9240 = vmatprep.subr.mxu0 0.0
        %9241 = vmatpush1.xpose.msra.mxu0 0.0
        %9242 = vmatprep.subr.mxu0 0.0
        %9243 = vmatpush1.xpose.msra.mxu0 0.0
        %9244 = vmatprep.subr.mxu0 0.0
        %9245 = vmatpush1.xpose.msra.mxu0 0.0
        %9246 = vmatprep.subr.mxu0 0.0
        %9247 = vmatpush1.xpose.msra.mxu0 0.0
        %9248 = vmatprep.subr.mxu0 0.0
        %9249 = vmatpush1.xpose.msra.mxu0 0.0
        %9250 = vmatprep.subr.mxu0 0.0
        %9251 = vmatpush1.xpose.msra.mxu0 0.0
        %9252 = vmatprep.subr.mxu0 0.0
        %9253 = vmatpush1.xpose.msra.mxu0 0.0
        %9254 = vmatprep.subr.mxu0 0.0
        %9255 = vmatpush1.xpose.msra.mxu0 0.0
        %9256 = vmatprep.subr.mxu0 0.0
        %9257 = vmatpush1.xpose.msra.mxu0 0.0
        %9258 = vmatprep.subr.mxu0 0.0
        %9259 = vmatpush1.xpose.msra.mxu0 0.0
        %9260 = vmatprep.subr.mxu0 0.0
        %9261 = vmatpush1.xpose.msra.mxu0 0.0
        %9262 = vmatprep.subr.mxu0 0.0
        %9263 = vmatpush1.xpose.msra.mxu0 0.0
        %9264 = vmatprep.subr.mxu0 0.0
        %9265 = vmatpush1.xpose.msra.mxu0 0.0
        %9266 = vmatprep.subr.mxu0 0.0
        %9267 = vmatpush1.xpose.msra.mxu0 0.0
        %9268 = vmatprep.subr.mxu0 0.0
        %9269 = vmatpush1.xpose.msra.mxu0 0.0
        %9270 = vmatprep.mubr.f32.mxu0 0.0
        %9271 = vmatmul.mubr.f32.gmra.mrb[0].mxu0 %v9198
        %v9272 = vpop.f32.mrb[0].mxu0
        %v9273 = vadd.f32 0.0, %v9272
        %v9274 = vpop.f32.mrb[0].mxu0
        %9275 = vmatprep.mubr.f32.mxu0 0.0
        %9276 = vmatmul.mubr.f32.gmra.mrb[0].mxu0 %v9200
        %v9277 = vpop.f32.mrb[0].mxu0
        %v9278 = vadd.f32 0.0, %v9277
        %v9279 = vpop.f32.mrb[0].mxu0
        %9280 = vdwg.mxu0
        %v9281 = vsel %vm6084, %v7938, 0.0
        %v9282 = vsel %vm6084, %v8027, 0.0
        %v9283 = vadd.f32 %v9281, %v9282
        %v9284 = vsel %vm6084, %v8116, 0.0
        %v9285 = vadd.f32 %v9283, %v9284
        %v9286 = vsel %vm6084, %v8205, 0.0
        %v9287 = vadd.f32 %v9285, %v9286
        %v9288 = vsel %vm6084, %v8294, 0.0
        %v9289 = vadd.f32 %v9287, %v9288
        %v9290 = vsel %vm6084, %v8383, 0.0
        %v9291 = vadd.f32 %v9289, %v9290
        %v9292 = vsel %vm6084, %v8472, 0.0
        %v9293 = vadd.f32 %v9291, %v9292
        %v9294 = vsel %vm6084, %v8561, 0.0
        %v9295 = vadd.f32 %v9293, %v9294
        %v9296 = vsel %vm6084, %v8650, 0.0
        %v9297 = vadd.f32 %v9295, %v9296
        %v9298 = vsel %vm6084, %v8739, 0.0
        %v9299 = vadd.f32 %v9297, %v9298
        %v9300 = vsel %vm6084, %v8828, 0.0
        %v9301 = vadd.f32 %v9299, %v9300
        %v9302 = vsel %vm6084, %v8917, 0.0
        %v9303 = vadd.f32 %v9301, %v9302
        %v9304 = vsel %vm6084, %v9006, 0.0
        %v9305 = vadd.f32 %v9303, %v9304
        %v9306 = vsel %vm6084, %v9095, 0.0
        %v9307 = vadd.f32 %v9305, %v9306
        %v9308 = vsel %vm6084, %v9184, 0.0
        %v9309 = vadd.f32 %v9307, %v9308
        %v9310 = vsel %vm6084, %v9273, 0.0
        %v9311 = vadd.f32 %v9309, %v9310
        %v9312 = vsel %vm6084, %v7943, 0.0
        %v9313 = vsel %vm6084, %v8032, 0.0
        %v9314 = vadd.f32 %v9312, %v9313
        %v9315 = vsel %vm6084, %v8121, 0.0
        %v9316 = vadd.f32 %v9314, %v9315
        %v9317 = vsel %vm6084, %v8210, 0.0
        %v9318 = vadd.f32 %v9316, %v9317
        %v9319 = vsel %vm6084, %v8299, 0.0
        %v9320 = vadd.f32 %v9318, %v9319
        %v9321 = vsel %vm6084, %v8388, 0.0
        %v9322 = vadd.f32 %v9320, %v9321
        %v9323 = vsel %vm6084, %v8477, 0.0
        %v9324 = vadd.f32 %v9322, %v9323
        %v9325 = vsel %vm6084, %v8566, 0.0
        %v9326 = vadd.f32 %v9324, %v9325
        %v9327 = vsel %vm6084, %v8655, 0.0
        %v9328 = vadd.f32 %v9326, %v9327
        %v9329 = vsel %vm6084, %v8744, 0.0
        %v9330 = vadd.f32 %v9328, %v9329
        %v9331 = vsel %vm6084, %v8833, 0.0
        %v9332 = vadd.f32 %v9330, %v9331
        %v9333 = vsel %vm6084, %v8922, 0.0
        %v9334 = vadd.f32 %v9332, %v9333
        %v9335 = vsel %vm6084, %v9011, 0.0
        %v9336 = vadd.f32 %v9334, %v9335
        %v9337 = vsel %vm6084, %v9100, 0.0
        %v9338 = vadd.f32 %v9336, %v9337
        %v9339 = vsel %vm6084, %v9189, 0.0
        %v9340 = vadd.f32 %v9338, %v9339
        %v9341 = vsel %vm6084, %v9278, 0.0
        %v9342 = vadd.f32 %v9340, %v9341
        %v9343 = vsub.f32 0.0, %v9311
        %v9344 = vsub.f32 0.0, %v9342
        %v9345 = vmul.f32 %v9343, 1.442695
        %v9346 = vpow.pop %v9345
        %v9347 = vmul.f32 %v9344, 1.442695
        %v9348 = vpow.pop %v9347
        %v9349 = vadd.f32 %v9346, 1.0
        %v9350 = vadd.f32 %v9348, 1.0
        %v9351 = vrcp.pop %v9349
        %v9352 = vrcp.pop %v9350
        %9353 = vrot.lane.b32.xlu0 %v7699, 120
        %v9354 = vpop.permute.xlu0 %9353
        %9355 = vrot.lane.b32.xlu0 %v7704, 120
        %v9356 = vpop.permute.xlu0 %9355
        %v9360 = vsel %vm6084, %v9351, 0
        %v9363 = vsel %vm6084, %v9352, 0
        %9365 = vmatprep.subr.mxu0 0.0
        %9366 = vmatpush1.msra.mxu0 %v9354
        %9367 = vmatprep.subr.mxu0 0.0
        %9368 = vmatpush1.msra.mxu0 %v9356
        %9369 = vmatprep.subr.mxu0 0.0
        %9370 = vmatpush1.msra.mxu0 0.0
        %9371 = vmatprep.subr.mxu0 0.0
        %9372 = vmatpush1.msra.mxu0 0.0
        %9373 = vmatprep.subr.mxu0 0.0
        %9374 = vmatpush1.msra.mxu0 0.0
        %9375 = vmatprep.subr.mxu0 0.0
        %9376 = vmatpush1.msra.mxu0 0.0
        %9377 = vmatprep.subr.mxu0 0.0
        %9378 = vmatpush1.msra.mxu0 0.0
        %9379 = vmatprep.subr.mxu0 0.0
        %9380 = vmatpush1.msra.mxu0 0.0
        %9381 = vmatprep.subr.mxu0 0.0
        %9382 = vmatpush1.msra.mxu0 0.0
        %9383 = vmatprep.subr.mxu0 0.0
        %9384 = vmatpush1.msra.mxu0 0.0
        %9385 = vmatprep.subr.mxu0 0.0
        %9386 = vmatpush1.msra.mxu0 0.0
        %9387 = vmatprep.subr.mxu0 0.0
        %9388 = vmatpush1.msra.mxu0 0.0
        %9389 = vmatprep.subr.mxu0 0.0
        %9390 = vmatpush1.msra.mxu0 0.0
        %9391 = vmatprep.subr.mxu0 0.0
        %9392 = vmatpush1.msra.mxu0 0.0
        %9393 = vmatprep.subr.mxu0 0.0
        %9394 = vmatpush1.msra.mxu0 0.0
        %9395 = vmatprep.subr.mxu0 0.0
        %9396 = vmatpush1.msra.mxu0 0.0
        %9397 = vmatprep.subr.mxu0 0.0
        %9398 = vmatpush1.msra.mxu0 0.0
        %9399 = vmatprep.subr.mxu0 0.0
        %9400 = vmatpush1.msra.mxu0 0.0
        %9401 = vmatprep.subr.mxu0 0.0
        %9402 = vmatpush1.msra.mxu0 0.0
        %9403 = vmatprep.subr.mxu0 0.0
        %9404 = vmatpush1.msra.mxu0 0.0
        %9405 = vmatprep.subr.mxu0 0.0
        %9406 = vmatpush1.msra.mxu0 0.0
        %9407 = vmatprep.subr.mxu0 0.0
        %9408 = vmatpush1.msra.mxu0 0.0
        %9409 = vmatprep.subr.mxu0 0.0
        %9410 = vmatpush1.msra.mxu0 0.0
        %9411 = vmatprep.subr.mxu0 0.0
        %9412 = vmatpush1.msra.mxu0 0.0
        %9413 = vmatprep.subr.mxu0 0.0
        %9414 = vmatpush1.msra.mxu0 0.0
        %9415 = vmatprep.subr.mxu0 0.0
        %9416 = vmatpush1.msra.mxu0 0.0
        %9417 = vmatprep.subr.mxu0 0.0
        %9418 = vmatpush1.msra.mxu0 0.0
        %9419 = vmatprep.subr.mxu0 0.0
        %9420 = vmatpush1.msra.mxu0 0.0
        %9421 = vmatprep.subr.mxu0 0.0
        %9422 = vmatpush1.msra.mxu0 0.0
        %9423 = vmatprep.subr.mxu0 0.0
        %9424 = vmatpush1.msra.mxu0 0.0
        %9425 = vmatprep.subr.mxu0 0.0
        %9426 = vmatpush1.msra.mxu0 0.0
        %9427 = vmatprep.subr.mxu0 0.0
        %9428 = vmatpush1.msra.mxu0 0.0
        %9429 = vmatprep.mubr.f32.mxu0 0.0
        %9430 = vmatmul.mubr.f32.gmra.mrb[0].mxu0 %v9360
        %v9431 = vpop.f32.mrb[0].mxu0
        %v9432 = vadd.f32 0.0, %v9431
        %v9433 = vpop.f32.mrb[0].mxu0
        %9434 = vmatprep.mubr.f32.mxu0 0.0
        %9435 = vmatmul.mubr.f32.gmra.mrb[0].mxu0 %v9363
        %v9436 = vpop.f32.mrb[0].mxu0
        %v9437 = vadd.f32 0.0, %v9436
        %v9438 = vpop.f32.mrb[0].mxu0
        %9439 = vdwg.mxu0
        %9440 = vrot.lane.b32.xlu0 %v7709, 120
        %v9441 = vpop.permute.xlu0 %9440
        %9442 = vrot.lane.b32.xlu0 %v7714, 120
        %v9443 = vpop.permute.xlu0 %9442
        %9446 = vmatprep.subr.mxu0 0.0
        %9447 = vmatpush1.msra.mxu0 %v9441
        %9448 = vmatprep.subr.mxu0 0.0
        %9449 = vmatpush1.msra.mxu0 %v9443
        %9450 = vmatprep.subr.mxu0 0.0
        %9451 = vmatpush1.msra.mxu0 0.0
        %9452 = vmatprep.subr.mxu0 0.0
        %9453 = vmatpush1.msra.mxu0 0.0
        %9454 = vmatprep.subr.mxu0 0.0
        %9455 = vmatpush1.msra.mxu0 0.0
        %9456 = vmatprep.subr.mxu0 0.0
        %9457 = vmatpush1.msra.mxu0 0.0
        %9458 = vmatprep.subr.mxu0 0.0
        %9459 = vmatpush1.msra.mxu0 0.0
        %9460 = vmatprep.subr.mxu0 0.0
        %9461 = vmatpush1.msra.mxu0 0.0
        %9462 = vmatprep.subr.mxu0 0.0
        %9463 = vmatpush1.msra.mxu0 0.0
        %9464 = vmatprep.subr.mxu0 0.0
        %9465 = vmatpush1.msra.mxu0 0.0
        %9466 = vmatprep.subr.mxu0 0.0
        %9467 = vmatpush1.msra.mxu0 0.0
        %9468 = vmatprep.subr.mxu0 0.0
        %9469 = vmatpush1.msra.mxu0 0.0
        %9470 = vmatprep.subr.mxu0 0.0
        %9471 = vmatpush1.msra.mxu0 0.0
        %9472 = vmatprep.subr.mxu0 0.0
        %9473 = vmatpush1.msra.mxu0 0.0
        %9474 = vmatprep.subr.mxu0 0.0
        %9475 = vmatpush1.msra.mxu0 0.0
        %9476 = vmatprep.subr.mxu0 0.0
        %9477 = vmatpush1.msra.mxu0 0.0
        %9478 = vmatprep.subr.mxu0 0.0
        %9479 = vmatpush1.msra.mxu0 0.0
        %9480 = vmatprep.subr.mxu0 0.0
        %9481 = vmatpush1.msra.mxu0 0.0
        %9482 = vmatprep.subr.mxu0 0.0
        %9483 = vmatpush1.msra.mxu0 0.0
        %9484 = vmatprep.subr.mxu0 0.0
        %9485 = vmatpush1.msra.mxu0 0.0
        %9486 = vmatprep.subr.mxu0 0.0
        %9487 = vmatpush1.msra.mxu0 0.0
        %9488 = vmatprep.subr.mxu0 0.0
        %9489 = vmatpush1.msra.mxu0 0.0
        %9490 = vmatprep.subr.mxu0 0.0
        %9491 = vmatpush1.msra.mxu0 0.0
        %9492 = vmatprep.subr.mxu0 0.0
        %9493 = vmatpush1.msra.mxu0 0.0
        %9494 = vmatprep.subr.mxu0 0.0
        %9495 = vmatpush1.msra.mxu0 0.0
        %9496 = vmatprep.subr.mxu0 0.0
        %9497 = vmatpush1.msra.mxu0 0.0
        %9498 = vmatprep.subr.mxu0 0.0
        %9499 = vmatpush1.msra.mxu0 0.0
        %9500 = vmatprep.subr.mxu0 0.0
        %9501 = vmatpush1.msra.mxu0 0.0
        %9502 = vmatprep.subr.mxu0 0.0
        %9503 = vmatpush1.msra.mxu0 0.0
        %9504 = vmatprep.subr.mxu0 0.0
        %9505 = vmatpush1.msra.mxu0 0.0
        %9506 = vmatprep.subr.mxu0 0.0
        %9507 = vmatpush1.msra.mxu0 0.0
        %9508 = vmatprep.subr.mxu0 0.0
        %9509 = vmatpush1.msra.mxu0 0.0
        %9510 = vmatprep.mubr.f32.mxu0 0.0
        %9511 = vmatmul.mubr.f32.gmra.mrb[0].mxu0 %v9360
        %v9512 = vpop.f32.mrb[0].mxu0
        %v9513 = vadd.f32 0.0, %v9512
        %v9514 = vpop.f32.mrb[0].mxu0
        %9515 = vmatprep.mubr.f32.mxu0 0.0
        %9516 = vmatmul.mubr.f32.gmra.mrb[0].mxu0 %v9363
        %v9517 = vpop.f32.mrb[0].mxu0
        %v9518 = vadd.f32 0.0, %v9517
        %v9519 = vpop.f32.mrb[0].mxu0
        %9520 = vdwg.mxu0
        %9521 = vrot.lane.b32.xlu0 %v7719, 120
        %v9522 = vpop.permute.xlu0 %9521
        %9523 = vrot.lane.b32.xlu0 %v7724, 120
        %v9524 = vpop.permute.xlu0 %9523
        %9527 = vmatprep.subr.mxu0 0.0
        %9528 = vmatpush1.msra.mxu0 %v9522
        %9529 = vmatprep.subr.mxu0 0.0
        %9530 = vmatpush1.msra.mxu0 %v9524
        %9531 = vmatprep.subr.mxu0 0.0
        %9532 = vmatpush1.msra.mxu0 0.0
        %9533 = vmatprep.subr.mxu0 0.0
        %9534 = vmatpush1.msra.mxu0 0.0
        %9535 = vmatprep.subr.mxu0 0.0
        %9536 = vmatpush1.msra.mxu0 0.0
        %9537 = vmatprep.subr.mxu0 0.0
        %9538 = vmatpush1.msra.mxu0 0.0
        %9539 = vmatprep.subr.mxu0 0.0
        %9540 = vmatpush1.msra.mxu0 0.0
        %9541 = vmatprep.subr.mxu0 0.0
        %9542 = vmatpush1.msra.mxu0 0.0
        %9543 = vmatprep.subr.mxu0 0.0
        %9544 = vmatpush1.msra.mxu0 0.0
        %9545 = vmatprep.subr.mxu0 0.0
        %9546 = vmatpush1.msra.mxu0 0.0
        %9547 = vmatprep.subr.mxu0 0.0
        %9548 = vmatpush1.msra.mxu0 0.0
        %9549 = vmatprep.subr.mxu0 0.0
        %9550 = vmatpush1.msra.mxu0 0.0
        %9551 = vmatprep.subr.mxu0 0.0
        %9552 = vmatpush1.msra.mxu0 0.0
        %9553 = vmatprep.subr.mxu0 0.0
        %9554 = vmatpush1.msra.mxu0 0.0
        %9555 = vmatprep.subr.mxu0 0.0
        %9556 = vmatpush1.msra.mxu0 0.0
        %9557 = vmatprep.subr.mxu0 0.0
        %9558 = vmatpush1.msra.mxu0 0.0
        %9559 = vmatprep.subr.mxu0 0.0
        %9560 = vmatpush1.msra.mxu0 0.0
        %9561 = vmatprep.subr.mxu0 0.0
        %9562 = vmatpush1.msra.mxu0 0.0
        %9563 = vmatprep.subr.mxu0 0.0
        %9564 = vmatpush1.msra.mxu0 0.0
        %9565 = vmatprep.subr.mxu0 0.0
        %9566 = vmatpush1.msra.mxu0 0.0
        %9567 = vmatprep.subr.mxu0 0.0
        %9568 = vmatpush1.msra.mxu0 0.0
        %9569 = vmatprep.subr.mxu0 0.0
        %9570 = vmatpush1.msra.mxu0 0.0
        %9571 = vmatprep.subr.mxu0 0.0
        %9572 = vmatpush1.msra.mxu0 0.0
        %9573 = vmatprep.subr.mxu0 0.0
        %9574 = vmatpush1.msra.mxu0 0.0
        %9575 = vmatprep.subr.mxu0 0.0
        %9576 = vmatpush1.msra.mxu0 0.0
        %9577 = vmatprep.subr.mxu0 0.0
        %9578 = vmatpush1.msra.mxu0 0.0
        %9579 = vmatprep.subr.mxu0 0.0
        %9580 = vmatpush1.msra.mxu0 0.0
        %9581 = vmatprep.subr.mxu0 0.0
        %9582 = vmatpush1.msra.mxu0 0.0
        %9583 = vmatprep.subr.mxu0 0.0
        %9584 = vmatpush1.msra.mxu0 0.0
        %9585 = vmatprep.subr.mxu0 0.0
        %9586 = vmatpush1.msra.mxu0 0.0
        %9587 = vmatprep.subr.mxu0 0.0
        %9588 = vmatpush1.msra.mxu0 0.0
        %9589 = vmatprep.subr.mxu0 0.0
        %9590 = vmatpush1.msra.mxu0 0.0
        %9591 = vmatprep.mubr.f32.mxu0 0.0
        %9592 = vmatmul.mubr.f32.gmra.mrb[0].mxu0 %v9360
        %v9593 = vpop.f32.mrb[0].mxu0
        %v9594 = vadd.f32 0.0, %v9593
        %v9595 = vpop.f32.mrb[0].mxu0
        %9596 = vmatprep.mubr.f32.mxu0 0.0
        %9597 = vmatmul.mubr.f32.gmra.mrb[0].mxu0 %v9363
        %v9598 = vpop.f32.mrb[0].mxu0
        %v9599 = vadd.f32 0.0, %v9598
        %v9600 = vpop.f32.mrb[0].mxu0
        %9601 = vdwg.mxu0
        %9602 = vrot.lane.b32.xlu0 %v7729, 120
        %v9603 = vpop.permute.xlu0 %9602
        %9604 = vrot.lane.b32.xlu0 %v7734, 120
        %v9605 = vpop.permute.xlu0 %9604
        %9608 = vmatprep.subr.mxu0 0.0
        %9609 = vmatpush1.msra.mxu0 %v9603
        %9610 = vmatprep.subr.mxu0 0.0
        %9611 = vmatpush1.msra.mxu0 %v9605
        %9612 = vmatprep.subr.mxu0 0.0
        %9613 = vmatpush1.msra.mxu0 0.0
        %9614 = vmatprep.subr.mxu0 0.0
        %9615 = vmatpush1.msra.mxu0 0.0
        %9616 = vmatprep.subr.mxu0 0.0
        %9617 = vmatpush1.msra.mxu0 0.0
        %9618 = vmatprep.subr.mxu0 0.0
        %9619 = vmatpush1.msra.mxu0 0.0
        %9620 = vmatprep.subr.mxu0 0.0
        %9621 = vmatpush1.msra.mxu0 0.0
        %9622 = vmatprep.subr.mxu0 0.0
        %9623 = vmatpush1.msra.mxu0 0.0
        %9624 = vmatprep.subr.mxu0 0.0
        %9625 = vmatpush1.msra.mxu0 0.0
        %9626 = vmatprep.subr.mxu0 0.0
        %9627 = vmatpush1.msra.mxu0 0.0
        %9628 = vmatprep.subr.mxu0 0.0
        %9629 = vmatpush1.msra.mxu0 0.0
        %9630 = vmatprep.subr.mxu0 0.0
        %9631 = vmatpush1.msra.mxu0 0.0
        %9632 = vmatprep.subr.mxu0 0.0
        %9633 = vmatpush1.msra.mxu0 0.0
        %9634 = vmatprep.subr.mxu0 0.0
        %9635 = vmatpush1.msra.mxu0 0.0
        %9636 = vmatprep.subr.mxu0 0.0
        %9637 = vmatpush1.msra.mxu0 0.0
        %9638 = vmatprep.subr.mxu0 0.0
        %9639 = vmatpush1.msra.mxu0 0.0
        %9640 = vmatprep.subr.mxu0 0.0
        %9641 = vmatpush1.msra.mxu0 0.0
        %9642 = vmatprep.subr.mxu0 0.0
        %9643 = vmatpush1.msra.mxu0 0.0
        %9644 = vmatprep.subr.mxu0 0.0
        %9645 = vmatpush1.msra.mxu0 0.0
        %9646 = vmatprep.subr.mxu0 0.0
        %9647 = vmatpush1.msra.mxu0 0.0
        %9648 = vmatprep.subr.mxu0 0.0
        %9649 = vmatpush1.msra.mxu0 0.0
        %9650 = vmatprep.subr.mxu0 0.0
        %9651 = vmatpush1.msra.mxu0 0.0
        %9652 = vmatprep.subr.mxu0 0.0
        %9653 = vmatpush1.msra.mxu0 0.0
        %9654 = vmatprep.subr.mxu0 0.0
        %9655 = vmatpush1.msra.mxu0 0.0
        %9656 = vmatprep.subr.mxu0 0.0
        %9657 = vmatpush1.msra.mxu0 0.0
        %9658 = vmatprep.subr.mxu0 0.0
        %9659 = vmatpush1.msra.mxu0 0.0
        %9660 = vmatprep.subr.mxu0 0.0
        %9661 = vmatpush1.msra.mxu0 0.0
        %9662 = vmatprep.subr.mxu0 0.0
        %9663 = vmatpush1.msra.mxu0 0.0
        %9664 = vmatprep.subr.mxu0 0.0
        %9665 = vmatpush1.msra.mxu0 0.0
        %9666 = vmatprep.subr.mxu0 0.0
        %9667 = vmatpush1.msra.mxu0 0.0
        %9668 = vmatprep.subr.mxu0 0.0
        %9669 = vmatpush1.msra.mxu0 0.0
        %9670 = vmatprep.subr.mxu0 0.0
        %9671 = vmatpush1.msra.mxu0 0.0
        %9672 = vmatprep.mubr.f32.mxu0 0.0
        %9673 = vmatmul.mubr.f32.gmra.mrb[0].mxu0 %v9360
        %v9674 = vpop.f32.mrb[0].mxu0
        %v9675 = vadd.f32 0.0, %v9674
        %v9676 = vpop.f32.mrb[0].mxu0
        %9677 = vmatprep.mubr.f32.mxu0 0.0
        %9678 = vmatmul.mubr.f32.gmra.mrb[0].mxu0 %v9363
        %v9679 = vpop.f32.mrb[0].mxu0
        %v9680 = vadd.f32 0.0, %v9679
        %v9681 = vpop.f32.mrb[0].mxu0
        %9682 = vdwg.mxu0
        %9683 = vrot.lane.b32.xlu0 %v7739, 120
        %v9684 = vpop.permute.xlu0 %9683
        %9685 = vrot.lane.b32.xlu0 %v7744, 120
        %v9686 = vpop.permute.xlu0 %9685
        %9689 = vmatprep.subr.mxu0 0.0
        %9690 = vmatpush1.msra.mxu0 %v9684
        %9691 = vmatprep.subr.mxu0 0.0
        %9692 = vmatpush1.msra.mxu0 %v9686
        %9693 = vmatprep.subr.mxu0 0.0
        %9694 = vmatpush1.msra.mxu0 0.0
        %9695 = vmatprep.subr.mxu0 0.0
        %9696 = vmatpush1.msra.mxu0 0.0
        %9697 = vmatprep.subr.mxu0 0.0
        %9698 = vmatpush1.msra.mxu0 0.0
        %9699 = vmatprep.subr.mxu0 0.0
        %9700 = vmatpush1.msra.mxu0 0.0
        %9701 = vmatprep.subr.mxu0 0.0
        %9702 = vmatpush1.msra.mxu0 0.0
        %9703 = vmatprep.subr.mxu0 0.0
        %9704 = vmatpush1.msra.mxu0 0.0
        %9705 = vmatprep.subr.mxu0 0.0
        %9706 = vmatpush1.msra.mxu0 0.0
        %9707 = vmatprep.subr.mxu0 0.0
        %9708 = vmatpush1.msra.mxu0 0.0
        %9709 = vmatprep.subr.mxu0 0.0
        %9710 = vmatpush1.msra.mxu0 0.0
        %9711 = vmatprep.subr.mxu0 0.0
        %9712 = vmatpush1.msra.mxu0 0.0
        %9713 = vmatprep.subr.mxu0 0.0
        %9714 = vmatpush1.msra.mxu0 0.0
        %9715 = vmatprep.subr.mxu0 0.0
        %9716 = vmatpush1.msra.mxu0 0.0
        %9717 = vmatprep.subr.mxu0 0.0
        %9718 = vmatpush1.msra.mxu0 0.0
        %9719 = vmatprep.subr.mxu0 0.0
        %9720 = vmatpush1.msra.mxu0 0.0
        %9721 = vmatprep.subr.mxu0 0.0
        %9722 = vmatpush1.msra.mxu0 0.0
        %9723 = vmatprep.subr.mxu0 0.0
        %9724 = vmatpush1.msra.mxu0 0.0
        %9725 = vmatprep.subr.mxu0 0.0
        %9726 = vmatpush1.msra.mxu0 0.0
        %9727 = vmatprep.subr.mxu0 0.0
        %9728 = vmatpush1.msra.mxu0 0.0
        %9729 = vmatprep.subr.mxu0 0.0
        %9730 = vmatpush1.msra.mxu0 0.0
        %9731 = vmatprep.subr.mxu0 0.0
        %9732 = vmatpush1.msra.mxu0 0.0
        %9733 = vmatprep.subr.mxu0 0.0
        %9734 = vmatpush1.msra.mxu0 0.0
        %9735 = vmatprep.subr.mxu0 0.0
        %9736 = vmatpush1.msra.mxu0 0.0
        %9737 = vmatprep.subr.mxu0 0.0
        %9738 = vmatpush1.msra.mxu0 0.0
        %9739 = vmatprep.subr.mxu0 0.0
        %9740 = vmatpush1.msra.mxu0 0.0
        %9741 = vmatprep.subr.mxu0 0.0
        %9742 = vmatpush1.msra.mxu0 0.0
        %9743 = vmatprep.subr.mxu0 0.0
        %9744 = vmatpush1.msra.mxu0 0.0
        %9745 = vmatprep.subr.mxu0 0.0
        %9746 = vmatpush1.msra.mxu0 0.0
        %9747 = vmatprep.subr.mxu0 0.0
        %9748 = vmatpush1.msra.mxu0 0.0
        %9749 = vmatprep.subr.mxu0 0.0
        %9750 = vmatpush1.msra.mxu0 0.0
        %9751 = vmatprep.subr.mxu0 0.0
        %9752 = vmatpush1.msra.mxu0 0.0
        %9753 = vmatprep.mubr.f32.mxu0 0.0
        %9754 = vmatmul.mubr.f32.gmra.mrb[0].mxu0 %v9360
        %v9755 = vpop.f32.mrb[0].mxu0
        %v9756 = vadd.f32 0.0, %v9755
        %v9757 = vpop.f32.mrb[0].mxu0
        %9758 = vmatprep.mubr.f32.mxu0 0.0
        %9759 = vmatmul.mubr.f32.gmra.mrb[0].mxu0 %v9363
        %v9760 = vpop.f32.mrb[0].mxu0
        %v9761 = vadd.f32 0.0, %v9760
        %v9762 = vpop.f32.mrb[0].mxu0
        %9763 = vdwg.mxu0
        %9764 = vrot.lane.b32.xlu0 %v7749, 120
        %v9765 = vpop.permute.xlu0 %9764
        %9766 = vrot.lane.b32.xlu0 %v7754, 120
        %v9767 = vpop.permute.xlu0 %9766
        %9770 = vmatprep.subr.mxu0 0.0
        %9771 = vmatpush1.msra.mxu0 %v9765
        %9772 = vmatprep.subr.mxu0 0.0
        %9773 = vmatpush1.msra.mxu0 %v9767
        %9774 = vmatprep.subr.mxu0 0.0
        %9775 = vmatpush1.msra.mxu0 0.0
        %9776 = vmatprep.subr.mxu0 0.0
        %9777 = vmatpush1.msra.mxu0 0.0
        %9778 = vmatprep.subr.mxu0 0.0
        %9779 = vmatpush1.msra.mxu0 0.0
        %9780 = vmatprep.subr.mxu0 0.0
        %9781 = vmatpush1.msra.mxu0 0.0
        %9782 = vmatprep.subr.mxu0 0.0
        %9783 = vmatpush1.msra.mxu0 0.0
        %9784 = vmatprep.subr.mxu0 0.0
        %9785 = vmatpush1.msra.mxu0 0.0
        %9786 = vmatprep.subr.mxu0 0.0
        %9787 = vmatpush1.msra.mxu0 0.0
        %9788 = vmatprep.subr.mxu0 0.0
        %9789 = vmatpush1.msra.mxu0 0.0
        %9790 = vmatprep.subr.mxu0 0.0
        %9791 = vmatpush1.msra.mxu0 0.0
        %9792 = vmatprep.subr.mxu0 0.0
        %9793 = vmatpush1.msra.mxu0 0.0
        %9794 = vmatprep.subr.mxu0 0.0
        %9795 = vmatpush1.msra.mxu0 0.0
        %9796 = vmatprep.subr.mxu0 0.0
        %9797 = vmatpush1.msra.mxu0 0.0
        %9798 = vmatprep.subr.mxu0 0.0
        %9799 = vmatpush1.msra.mxu0 0.0
        %9800 = vmatprep.subr.mxu0 0.0
        %9801 = vmatpush1.msra.mxu0 0.0
        %9802 = vmatprep.subr.mxu0 0.0
        %9803 = vmatpush1.msra.mxu0 0.0
        %9804 = vmatprep.subr.mxu0 0.0
        %9805 = vmatpush1.msra.mxu0 0.0
        %9806 = vmatprep.subr.mxu0 0.0
        %9807 = vmatpush1.msra.mxu0 0.0
        %9808 = vmatprep.subr.mxu0 0.0
        %9809 = vmatpush1.msra.mxu0 0.0
        %9810 = vmatprep.subr.mxu0 0.0
        %9811 = vmatpush1.msra.mxu0 0.0
        %9812 = vmatprep.subr.mxu0 0.0
        %9813 = vmatpush1.msra.mxu0 0.0
        %9814 = vmatprep.subr.mxu0 0.0
        %9815 = vmatpush1.msra.mxu0 0.0
        %9816 = vmatprep.subr.mxu0 0.0
        %9817 = vmatpush1.msra.mxu0 0.0
        %9818 = vmatprep.subr.mxu0 0.0
        %9819 = vmatpush1.msra.mxu0 0.0
        %9820 = vmatprep.subr.mxu0 0.0
        %9821 = vmatpush1.msra.mxu0 0.0
        %9822 = vmatprep.subr.mxu0 0.0
        %9823 = vmatpush1.msra.mxu0 0.0
        %9824 = vmatprep.subr.mxu0 0.0
        %9825 = vmatpush1.msra.mxu0 0.0
        %9826 = vmatprep.subr.mxu0 0.0
        %9827 = vmatpush1.msra.mxu0 0.0
        %9828 = vmatprep.subr.mxu0 0.0
        %9829 = vmatpush1.msra.mxu0 0.0
        %9830 = vmatprep.subr.mxu0 0.0
        %9831 = vmatpush1.msra.mxu0 0.0
        %9832 = vmatprep.subr.mxu0 0.0
        %9833 = vmatpush1.msra.mxu0 0.0
        %9834 = vmatprep.mubr.f32.mxu0 0.0
        %9835 = vmatmul.mubr.f32.gmra.mrb[0].mxu0 %v9360
        %v9836 = vpop.f32.mrb[0].mxu0
        %v9837 = vadd.f32 0.0, %v9836
        %v9838 = vpop.f32.mrb[0].mxu0
        %9839 = vmatprep.mubr.f32.mxu0 0.0
        %9840 = vmatmul.mubr.f32.gmra.mrb[0].mxu0 %v9363
        %v9841 = vpop.f32.mrb[0].mxu0
        %v9842 = vadd.f32 0.0, %v9841
        %v9843 = vpop.f32.mrb[0].mxu0
        %9844 = vdwg.mxu0
        %9845 = vrot.lane.b32.xlu0 %v7759, 120
        %v9846 = vpop.permute.xlu0 %9845
        %9847 = vrot.lane.b32.xlu0 %v7764, 120
        %v9848 = vpop.permute.xlu0 %9847
        %9851 = vmatprep.subr.mxu0 0.0
        %9852 = vmatpush1.msra.mxu0 %v9846
        %9853 = vmatprep.subr.mxu0 0.0
        %9854 = vmatpush1.msra.mxu0 %v9848
        %9855 = vmatprep.subr.mxu0 0.0
        %9856 = vmatpush1.msra.mxu0 0.0
        %9857 = vmatprep.subr.mxu0 0.0
        %9858 = vmatpush1.msra.mxu0 0.0
        %9859 = vmatprep.subr.mxu0 0.0
        %9860 = vmatpush1.msra.mxu0 0.0
        %9861 = vmatprep.subr.mxu0 0.0
        %9862 = vmatpush1.msra.mxu0 0.0
        %9863 = vmatprep.subr.mxu0 0.0
        %9864 = vmatpush1.msra.mxu0 0.0
        %9865 = vmatprep.subr.mxu0 0.0
        %9866 = vmatpush1.msra.mxu0 0.0
        %9867 = vmatprep.subr.mxu0 0.0
        %9868 = vmatpush1.msra.mxu0 0.0
        %9869 = vmatprep.subr.mxu0 0.0
        %9870 = vmatpush1.msra.mxu0 0.0
        %9871 = vmatprep.subr.mxu0 0.0
        %9872 = vmatpush1.msra.mxu0 0.0
        %9873 = vmatprep.subr.mxu0 0.0
        %9874 = vmatpush1.msra.mxu0 0.0
        %9875 = vmatprep.subr.mxu0 0.0
        %9876 = vmatpush1.msra.mxu0 0.0
        %9877 = vmatprep.subr.mxu0 0.0
        %9878 = vmatpush1.msra.mxu0 0.0
        %9879 = vmatprep.subr.mxu0 0.0
        %9880 = vmatpush1.msra.mxu0 0.0
        %9881 = vmatprep.subr.mxu0 0.0
        %9882 = vmatpush1.msra.mxu0 0.0
        %9883 = vmatprep.subr.mxu0 0.0
        %9884 = vmatpush1.msra.mxu0 0.0
        %9885 = vmatprep.subr.mxu0 0.0
        %9886 = vmatpush1.msra.mxu0 0.0
        %9887 = vmatprep.subr.mxu0 0.0
        %9888 = vmatpush1.msra.mxu0 0.0
        %9889 = vmatprep.subr.mxu0 0.0
        %9890 = vmatpush1.msra.mxu0 0.0
        %9891 = vmatprep.subr.mxu0 0.0
        %9892 = vmatpush1.msra.mxu0 0.0
        %9893 = vmatprep.subr.mxu0 0.0
        %9894 = vmatpush1.msra.mxu0 0.0
        %9895 = vmatprep.subr.mxu0 0.0
        %9896 = vmatpush1.msra.mxu0 0.0
        %9897 = vmatprep.subr.mxu0 0.0
        %9898 = vmatpush1.msra.mxu0 0.0
        %9899 = vmatprep.subr.mxu0 0.0
        %9900 = vmatpush1.msra.mxu0 0.0
        %9901 = vmatprep.subr.mxu0 0.0
        %9902 = vmatpush1.msra.mxu0 0.0
        %9903 = vmatprep.subr.mxu0 0.0
        %9904 = vmatpush1.msra.mxu0 0.0
        %9905 = vmatprep.subr.mxu0 0.0
        %9906 = vmatpush1.msra.mxu0 0.0
        %9907 = vmatprep.subr.mxu0 0.0
        %9908 = vmatpush1.msra.mxu0 0.0
        %9909 = vmatprep.subr.mxu0 0.0
        %9910 = vmatpush1.msra.mxu0 0.0
        %9911 = vmatprep.subr.mxu0 0.0
        %9912 = vmatpush1.msra.mxu0 0.0
        %9913 = vmatprep.subr.mxu0 0.0
        %9914 = vmatpush1.msra.mxu0 0.0
        %9915 = vmatprep.mubr.f32.mxu0 0.0
        %9916 = vmatmul.mubr.f32.gmra.mrb[0].mxu0 %v9360
        %v9917 = vpop.f32.mrb[0].mxu0
        %v9918 = vadd.f32 0.0, %v9917
        %v9919 = vpop.f32.mrb[0].mxu0
        %9920 = vmatprep.mubr.f32.mxu0 0.0
        %9921 = vmatmul.mubr.f32.gmra.mrb[0].mxu0 %v9363
        %v9922 = vpop.f32.mrb[0].mxu0
        %v9923 = vadd.f32 0.0, %v9922
        %v9924 = vpop.f32.mrb[0].mxu0
        %9925 = vdwg.mxu0
        %9926 = vrot.lane.b32.xlu0 %v7769, 120
        %v9927 = vpop.permute.xlu0 %9926
        %9928 = vrot.lane.b32.xlu0 %v7774, 120
        %v9929 = vpop.permute.xlu0 %9928
        %9932 = vmatprep.subr.mxu0 0.0
        %9933 = vmatpush1.msra.mxu0 %v9927
        %9934 = vmatprep.subr.mxu0 0.0
        %9935 = vmatpush1.msra.mxu0 %v9929
        %9936 = vmatprep.subr.mxu0 0.0
        %9937 = vmatpush1.msra.mxu0 0.0
        %9938 = vmatprep.subr.mxu0 0.0
        %9939 = vmatpush1.msra.mxu0 0.0
        %9940 = vmatprep.subr.mxu0 0.0
        %9941 = vmatpush1.msra.mxu0 0.0
        %9942 = vmatprep.subr.mxu0 0.0
        %9943 = vmatpush1.msra.mxu0 0.0
        %9944 = vmatprep.subr.mxu0 0.0
        %9945 = vmatpush1.msra.mxu0 0.0
        %9946 = vmatprep.subr.mxu0 0.0
        %9947 = vmatpush1.msra.mxu0 0.0
        %9948 = vmatprep.subr.mxu0 0.0
        %9949 = vmatpush1.msra.mxu0 0.0
        %9950 = vmatprep.subr.mxu0 0.0
        %9951 = vmatpush1.msra.mxu0 0.0
        %9952 = vmatprep.subr.mxu0 0.0
        %9953 = vmatpush1.msra.mxu0 0.0
        %9954 = vmatprep.subr.mxu0 0.0
        %9955 = vmatpush1.msra.mxu0 0.0
        %9956 = vmatprep.subr.mxu0 0.0
        %9957 = vmatpush1.msra.mxu0 0.0
        %9958 = vmatprep.subr.mxu0 0.0
        %9959 = vmatpush1.msra.mxu0 0.0
        %9960 = vmatprep.subr.mxu0 0.0
        %9961 = vmatpush1.msra.mxu0 0.0
        %9962 = vmatprep.subr.mxu0 0.0
        %9963 = vmatpush1.msra.mxu0 0.0
        %9964 = vmatprep.subr.mxu0 0.0
        %9965 = vmatpush1.msra.mxu0 0.0
        %9966 = vmatprep.subr.mxu0 0.0
        %9967 = vmatpush1.msra.mxu0 0.0
        %9968 = vmatprep.subr.mxu0 0.0
        %9969 = vmatpush1.msra.mxu0 0.0
        %9970 = vmatprep.subr.mxu0 0.0
        %9971 = vmatpush1.msra.mxu0 0.0
        %9972 = vmatprep.subr.mxu0 0.0
        %9973 = vmatpush1.msra.mxu0 0.0
        %9974 = vmatprep.subr.mxu0 0.0
        %9975 = vmatpush1.msra.mxu0 0.0
        %9976 = vmatprep.subr.mxu0 0.0
        %9977 = vmatpush1.msra.mxu0 0.0
        %9978 = vmatprep.subr.mxu0 0.0
        %9979 = vmatpush1.msra.mxu0 0.0
        %9980 = vmatprep.subr.mxu0 0.0
        %9981 = vmatpush1.msra.mxu0 0.0
        %9982 = vmatprep.subr.mxu0 0.0
        %9983 = vmatpush1.msra.mxu0 0.0
        %9984 = vmatprep.subr.mxu0 0.0
        %9985 = vmatpush1.msra.mxu0 0.0
        %9986 = vmatprep.subr.mxu0 0.0
        %9987 = vmatpush1.msra.mxu0 0.0
        %9988 = vmatprep.subr.mxu0 0.0
        %9989 = vmatpush1.msra.mxu0 0.0
        %9990 = vmatprep.subr.mxu0 0.0
        %9991 = vmatpush1.msra.mxu0 0.0
        %9992 = vmatprep.subr.mxu0 0.0
        %9993 = vmatpush1.msra.mxu0 0.0
        %9994 = vmatprep.subr.mxu0 0.0
        %9995 = vmatpush1.msra.mxu0 0.0
        %9996 = vmatprep.mubr.f32.mxu0 0.0
        %9997 = vmatmul.mubr.f32.gmra.mrb[0].mxu0 %v9360
        %v9998 = vpop.f32.mrb[0].mxu0
        %v9999 = vadd.f32 0.0, %v9998
        %v10000 = vpop.f32.mrb[0].mxu0
        %10001 = vmatprep.mubr.f32.mxu0 0.0
        %10002 = vmatmul.mubr.f32.gmra.mrb[0].mxu0 %v9363
        %v10003 = vpop.f32.mrb[0].mxu0
        %v10004 = vadd.f32 0.0, %v10003
        %v10005 = vpop.f32.mrb[0].mxu0
        %10006 = vdwg.mxu0
        %10007 = vrot.lane.b32.xlu0 %v7779, 120
        %v10008 = vpop.permute.xlu0 %10007
        %10009 = vrot.lane.b32.xlu0 %v7784, 120
        %v10010 = vpop.permute.xlu0 %10009
        %10013 = vmatprep.subr.mxu0 0.0
        %10014 = vmatpush1.msra.mxu0 %v10008
        %10015 = vmatprep.subr.mxu0 0.0
        %10016 = vmatpush1.msra.mxu0 %v10010
        %10017 = vmatprep.subr.mxu0 0.0
        %10018 = vmatpush1.msra.mxu0 0.0
        %10019 = vmatprep.subr.mxu0 0.0
        %10020 = vmatpush1.msra.mxu0 0.0
        %10021 = vmatprep.subr.mxu0 0.0
        %10022 = vmatpush1.msra.mxu0 0.0
        %10023 = vmatprep.subr.mxu0 0.0
        %10024 = vmatpush1.msra.mxu0 0.0
        %10025 = vmatprep.subr.mxu0 0.0
        %10026 = vmatpush1.msra.mxu0 0.0
        %10027 = vmatprep.subr.mxu0 0.0
        %10028 = vmatpush1.msra.mxu0 0.0
        %10029 = vmatprep.subr.mxu0 0.0
        %10030 = vmatpush1.msra.mxu0 0.0
        %10031 = vmatprep.subr.mxu0 0.0
        %10032 = vmatpush1.msra.mxu0 0.0
        %10033 = vmatprep.subr.mxu0 0.0
        %10034 = vmatpush1.msra.mxu0 0.0
        %10035 = vmatprep.subr.mxu0 0.0
        %10036 = vmatpush1.msra.mxu0 0.0
        %10037 = vmatprep.subr.mxu0 0.0
        %10038 = vmatpush1.msra.mxu0 0.0
        %10039 = vmatprep.subr.mxu0 0.0
        %10040 = vmatpush1.msra.mxu0 0.0
        %10041 = vmatprep.subr.mxu0 0.0
        %10042 = vmatpush1.msra.mxu0 0.0
        %10043 = vmatprep.subr.mxu0 0.0
        %10044 = vmatpush1.msra.mxu0 0.0
        %10045 = vmatprep.subr.mxu0 0.0
        %10046 = vmatpush1.msra.mxu0 0.0
        %10047 = vmatprep.subr.mxu0 0.0
        %10048 = vmatpush1.msra.mxu0 0.0
        %10049 = vmatprep.subr.mxu0 0.0
        %10050 = vmatpush1.msra.mxu0 0.0
        %10051 = vmatprep.subr.mxu0 0.0
        %10052 = vmatpush1.msra.mxu0 0.0
        %10053 = vmatprep.subr.mxu0 0.0
        %10054 = vmatpush1.msra.mxu0 0.0
        %10055 = vmatprep.subr.mxu0 0.0
        %10056 = vmatpush1.msra.mxu0 0.0
        %10057 = vmatprep.subr.mxu0 0.0
        %10058 = vmatpush1.msra.mxu0 0.0
        %10059 = vmatprep.subr.mxu0 0.0
        %10060 = vmatpush1.msra.mxu0 0.0
        %10061 = vmatprep.subr.mxu0 0.0
        %10062 = vmatpush1.msra.mxu0 0.0
        %10063 = vmatprep.subr.mxu0 0.0
        %10064 = vmatpush1.msra.mxu0 0.0
        %10065 = vmatprep.subr.mxu0 0.0
        %10066 = vmatpush1.msra.mxu0 0.0
        %10067 = vmatprep.subr.mxu0 0.0
        %10068 = vmatpush1.msra.mxu0 0.0
        %10069 = vmatprep.subr.mxu0 0.0
        %10070 = vmatpush1.msra.mxu0 0.0
        %10071 = vmatprep.subr.mxu0 0.0
        %10072 = vmatpush1.msra.mxu0 0.0
        %10073 = vmatprep.subr.mxu0 0.0
        %10074 = vmatpush1.msra.mxu0 0.0
        %10075 = vmatprep.subr.mxu0 0.0
        %10076 = vmatpush1.msra.mxu0 0.0
        %10077 = vmatprep.mubr.f32.mxu0 0.0
        %10078 = vmatmul.mubr.f32.gmra.mrb[0].mxu0 %v9360
        %v10079 = vpop.f32.mrb[0].mxu0
        %v10080 = vadd.f32 0.0, %v10079
        %v10081 = vpop.f32.mrb[0].mxu0
        %10082 = vmatprep.mubr.f32.mxu0 0.0
        %10083 = vmatmul.mubr.f32.gmra.mrb[0].mxu0 %v9363
        %v10084 = vpop.f32.mrb[0].mxu0
        %v10085 = vadd.f32 0.0, %v10084
        %v10086 = vpop.f32.mrb[0].mxu0
        %10087 = vdwg.mxu0
        %10088 = vrot.lane.b32.xlu0 %v7789, 120
        %v10089 = vpop.permute.xlu0 %10088
        %10090 = vrot.lane.b32.xlu0 %v7794, 120
        %v10091 = vpop.permute.xlu0 %10090
        %10094 = vmatprep.subr.mxu0 0.0
        %10095 = vmatpush1.msra.mxu0 %v10089
        %10096 = vmatprep.subr.mxu0 0.0
        %10097 = vmatpush1.msra.mxu0 %v10091
        %10098 = vmatprep.subr.mxu0 0.0
        %10099 = vmatpush1.msra.mxu0 0.0
        %10100 = vmatprep.subr.mxu0 0.0
        %10101 = vmatpush1.msra.mxu0 0.0
        %10102 = vmatprep.subr.mxu0 0.0
        %10103 = vmatpush1.msra.mxu0 0.0
        %10104 = vmatprep.subr.mxu0 0.0
        %10105 = vmatpush1.msra.mxu0 0.0
        %10106 = vmatprep.subr.mxu0 0.0
        %10107 = vmatpush1.msra.mxu0 0.0
        %10108 = vmatprep.subr.mxu0 0.0
        %10109 = vmatpush1.msra.mxu0 0.0
        %10110 = vmatprep.subr.mxu0 0.0
        %10111 = vmatpush1.msra.mxu0 0.0
        %10112 = vmatprep.subr.mxu0 0.0
        %10113 = vmatpush1.msra.mxu0 0.0
        %10114 = vmatprep.subr.mxu0 0.0
        %10115 = vmatpush1.msra.mxu0 0.0
        %10116 = vmatprep.subr.mxu0 0.0
        %10117 = vmatpush1.msra.mxu0 0.0
        %10118 = vmatprep.subr.mxu0 0.0
        %10119 = vmatpush1.msra.mxu0 0.0
        %10120 = vmatprep.subr.mxu0 0.0
        %10121 = vmatpush1.msra.mxu0 0.0
        %10122 = vmatprep.subr.mxu0 0.0
        %10123 = vmatpush1.msra.mxu0 0.0
        %10124 = vmatprep.subr.mxu0 0.0
        %10125 = vmatpush1.msra.mxu0 0.0
        %10126 = vmatprep.subr.mxu0 0.0
        %10127 = vmatpush1.msra.mxu0 0.0
        %10128 = vmatprep.subr.mxu0 0.0
        %10129 = vmatpush1.msra.mxu0 0.0
        %10130 = vmatprep.subr.mxu0 0.0
        %10131 = vmatpush1.msra.mxu0 0.0
        %10132 = vmatprep.subr.mxu0 0.0
        %10133 = vmatpush1.msra.mxu0 0.0
        %10134 = vmatprep.subr.mxu0 0.0
        %10135 = vmatpush1.msra.mxu0 0.0
        %10136 = vmatprep.subr.mxu0 0.0
        %10137 = vmatpush1.msra.mxu0 0.0
        %10138 = vmatprep.subr.mxu0 0.0
        %10139 = vmatpush1.msra.mxu0 0.0
        %10140 = vmatprep.subr.mxu0 0.0
        %10141 = vmatpush1.msra.mxu0 0.0
        %10142 = vmatprep.subr.mxu0 0.0
        %10143 = vmatpush1.msra.mxu0 0.0
        %10144 = vmatprep.subr.mxu0 0.0
        %10145 = vmatpush1.msra.mxu0 0.0
        %10146 = vmatprep.subr.mxu0 0.0
        %10147 = vmatpush1.msra.mxu0 0.0
        %10148 = vmatprep.subr.mxu0 0.0
        %10149 = vmatpush1.msra.mxu0 0.0
        %10150 = vmatprep.subr.mxu0 0.0
        %10151 = vmatpush1.msra.mxu0 0.0
        %10152 = vmatprep.subr.mxu0 0.0
        %10153 = vmatpush1.msra.mxu0 0.0
        %10154 = vmatprep.subr.mxu0 0.0
        %10155 = vmatpush1.msra.mxu0 0.0
        %10156 = vmatprep.subr.mxu0 0.0
        %10157 = vmatpush1.msra.mxu0 0.0
        %10158 = vmatprep.mubr.f32.mxu0 0.0
        %10159 = vmatmul.mubr.f32.gmra.mrb[0].mxu0 %v9360
        %v10160 = vpop.f32.mrb[0].mxu0
        %v10161 = vadd.f32 0.0, %v10160
        %v10162 = vpop.f32.mrb[0].mxu0
        %10163 = vmatprep.mubr.f32.mxu0 0.0
        %10164 = vmatmul.mubr.f32.gmra.mrb[0].mxu0 %v9363
        %v10165 = vpop.f32.mrb[0].mxu0
        %v10166 = vadd.f32 0.0, %v10165
        %v10167 = vpop.f32.mrb[0].mxu0
        %10168 = vdwg.mxu0
        %10169 = vrot.lane.b32.xlu0 %v7799, 120
        %v10170 = vpop.permute.xlu0 %10169
        %10171 = vrot.lane.b32.xlu0 %v7804, 120
        %v10172 = vpop.permute.xlu0 %10171
        %10175 = vmatprep.subr.mxu0 0.0
        %10176 = vmatpush1.msra.mxu0 %v10170
        %10177 = vmatprep.subr.mxu0 0.0
        %10178 = vmatpush1.msra.mxu0 %v10172
        %10179 = vmatprep.subr.mxu0 0.0
        %10180 = vmatpush1.msra.mxu0 0.0
        %10181 = vmatprep.subr.mxu0 0.0
        %10182 = vmatpush1.msra.mxu0 0.0
        %10183 = vmatprep.subr.mxu0 0.0
        %10184 = vmatpush1.msra.mxu0 0.0
        %10185 = vmatprep.subr.mxu0 0.0
        %10186 = vmatpush1.msra.mxu0 0.0
        %10187 = vmatprep.subr.mxu0 0.0
        %10188 = vmatpush1.msra.mxu0 0.0
        %10189 = vmatprep.subr.mxu0 0.0
        %10190 = vmatpush1.msra.mxu0 0.0
        %10191 = vmatprep.subr.mxu0 0.0
        %10192 = vmatpush1.msra.mxu0 0.0
        %10193 = vmatprep.subr.mxu0 0.0
        %10194 = vmatpush1.msra.mxu0 0.0
        %10195 = vmatprep.subr.mxu0 0.0
        %10196 = vmatpush1.msra.mxu0 0.0
        %10197 = vmatprep.subr.mxu0 0.0
        %10198 = vmatpush1.msra.mxu0 0.0
        %10199 = vmatprep.subr.mxu0 0.0
        %10200 = vmatpush1.msra.mxu0 0.0
        %10201 = vmatprep.subr.mxu0 0.0
        %10202 = vmatpush1.msra.mxu0 0.0
        %10203 = vmatprep.subr.mxu0 0.0
        %10204 = vmatpush1.msra.mxu0 0.0
        %10205 = vmatprep.subr.mxu0 0.0
        %10206 = vmatpush1.msra.mxu0 0.0
        %10207 = vmatprep.subr.mxu0 0.0
        %10208 = vmatpush1.msra.mxu0 0.0
        %10209 = vmatprep.subr.mxu0 0.0
        %10210 = vmatpush1.msra.mxu0 0.0
        %10211 = vmatprep.subr.mxu0 0.0
        %10212 = vmatpush1.msra.mxu0 0.0
        %10213 = vmatprep.subr.mxu0 0.0
        %10214 = vmatpush1.msra.mxu0 0.0
        %10215 = vmatprep.subr.mxu0 0.0
        %10216 = vmatpush1.msra.mxu0 0.0
        %10217 = vmatprep.subr.mxu0 0.0
        %10218 = vmatpush1.msra.mxu0 0.0
        %10219 = vmatprep.subr.mxu0 0.0
        %10220 = vmatpush1.msra.mxu0 0.0
        %10221 = vmatprep.subr.mxu0 0.0
        %10222 = vmatpush1.msra.mxu0 0.0
        %10223 = vmatprep.subr.mxu0 0.0
        %10224 = vmatpush1.msra.mxu0 0.0
        %10225 = vmatprep.subr.mxu0 0.0
        %10226 = vmatpush1.msra.mxu0 0.0
        %10227 = vmatprep.subr.mxu0 0.0
        %10228 = vmatpush1.msra.mxu0 0.0
        %10229 = vmatprep.subr.mxu0 0.0
        %10230 = vmatpush1.msra.mxu0 0.0
        %10231 = vmatprep.subr.mxu0 0.0
        %10232 = vmatpush1.msra.mxu0 0.0
        %10233 = vmatprep.subr.mxu0 0.0
        %10234 = vmatpush1.msra.mxu0 0.0
        %10235 = vmatprep.subr.mxu0 0.0
        %10236 = vmatpush1.msra.mxu0 0.0
        %10237 = vmatprep.subr.mxu0 0.0
        %10238 = vmatpush1.msra.mxu0 0.0
        %10239 = vmatprep.mubr.f32.mxu0 0.0
        %10240 = vmatmul.mubr.f32.gmra.mrb[0].mxu0 %v9360
        %v10241 = vpop.f32.mrb[0].mxu0
        %v10242 = vadd.f32 0.0, %v10241
        %v10243 = vpop.f32.mrb[0].mxu0
        %10244 = vmatprep.mubr.f32.mxu0 0.0
        %10245 = vmatmul.mubr.f32.gmra.mrb[0].mxu0 %v9363
        %v10246 = vpop.f32.mrb[0].mxu0
        %v10247 = vadd.f32 0.0, %v10246
        %v10248 = vpop.f32.mrb[0].mxu0
        %10249 = vdwg.mxu0
        %10250 = vrot.lane.b32.xlu0 %v7809, 120
        %v10251 = vpop.permute.xlu0 %10250
        %10252 = vrot.lane.b32.xlu0 %v7814, 120
        %v10253 = vpop.permute.xlu0 %10252
        %10256 = vmatprep.subr.mxu0 0.0
        %10257 = vmatpush1.msra.mxu0 %v10251
        %10258 = vmatprep.subr.mxu0 0.0
        %10259 = vmatpush1.msra.mxu0 %v10253
        %10260 = vmatprep.subr.mxu0 0.0
        %10261 = vmatpush1.msra.mxu0 0.0
        %10262 = vmatprep.subr.mxu0 0.0
        %10263 = vmatpush1.msra.mxu0 0.0
        %10264 = vmatprep.subr.mxu0 0.0
        %10265 = vmatpush1.msra.mxu0 0.0
        %10266 = vmatprep.subr.mxu0 0.0
        %10267 = vmatpush1.msra.mxu0 0.0
        %10268 = vmatprep.subr.mxu0 0.0
        %10269 = vmatpush1.msra.mxu0 0.0
        %10270 = vmatprep.subr.mxu0 0.0
        %10271 = vmatpush1.msra.mxu0 0.0
        %10272 = vmatprep.subr.mxu0 0.0
        %10273 = vmatpush1.msra.mxu0 0.0
        %10274 = vmatprep.subr.mxu0 0.0
        %10275 = vmatpush1.msra.mxu0 0.0
        %10276 = vmatprep.subr.mxu0 0.0
        %10277 = vmatpush1.msra.mxu0 0.0
        %10278 = vmatprep.subr.mxu0 0.0
        %10279 = vmatpush1.msra.mxu0 0.0
        %10280 = vmatprep.subr.mxu0 0.0
        %10281 = vmatpush1.msra.mxu0 0.0
        %10282 = vmatprep.subr.mxu0 0.0
        %10283 = vmatpush1.msra.mxu0 0.0
        %10284 = vmatprep.subr.mxu0 0.0
        %10285 = vmatpush1.msra.mxu0 0.0
        %10286 = vmatprep.subr.mxu0 0.0
        %10287 = vmatpush1.msra.mxu0 0.0
        %10288 = vmatprep.subr.mxu0 0.0
        %10289 = vmatpush1.msra.mxu0 0.0
        %10290 = vmatprep.subr.mxu0 0.0
        %10291 = vmatpush1.msra.mxu0 0.0
        %10292 = vmatprep.subr.mxu0 0.0
        %10293 = vmatpush1.msra.mxu0 0.0
        %10294 = vmatprep.subr.mxu0 0.0
        %10295 = vmatpush1.msra.mxu0 0.0
        %10296 = vmatprep.subr.mxu0 0.0
        %10297 = vmatpush1.msra.mxu0 0.0
        %10298 = vmatprep.subr.mxu0 0.0
        %10299 = vmatpush1.msra.mxu0 0.0
        %10300 = vmatprep.subr.mxu0 0.0
        %10301 = vmatpush1.msra.mxu0 0.0
        %10302 = vmatprep.subr.mxu0 0.0
        %10303 = vmatpush1.msra.mxu0 0.0
        %10304 = vmatprep.subr.mxu0 0.0
        %10305 = vmatpush1.msra.mxu0 0.0
        %10306 = vmatprep.subr.mxu0 0.0
        %10307 = vmatpush1.msra.mxu0 0.0
        %10308 = vmatprep.subr.mxu0 0.0
        %10309 = vmatpush1.msra.mxu0 0.0
        %10310 = vmatprep.subr.mxu0 0.0
        %10311 = vmatpush1.msra.mxu0 0.0
        %10312 = vmatprep.subr.mxu0 0.0
        %10313 = vmatpush1.msra.mxu0 0.0
        %10314 = vmatprep.subr.mxu0 0.0
        %10315 = vmatpush1.msra.mxu0 0.0
        %10316 = vmatprep.subr.mxu0 0.0
        %10317 = vmatpush1.msra.mxu0 0.0
        %10318 = vmatprep.subr.mxu0 0.0
        %10319 = vmatpush1.msra.mxu0 0.0
        %10320 = vmatprep.mubr.f32.mxu0 0.0
        %10321 = vmatmul.mubr.f32.gmra.mrb[0].mxu0 %v9360
        %v10322 = vpop.f32.mrb[0].mxu0
        %v10323 = vadd.f32 0.0, %v10322
        %v10324 = vpop.f32.mrb[0].mxu0
        %10325 = vmatprep.mubr.f32.mxu0 0.0
        %10326 = vmatmul.mubr.f32.gmra.mrb[0].mxu0 %v9363
        %v10327 = vpop.f32.mrb[0].mxu0
        %v10328 = vadd.f32 0.0, %v10327
        %v10329 = vpop.f32.mrb[0].mxu0
        %10330 = vdwg.mxu0
        %10331 = vrot.lane.b32.xlu0 %v7819, 120
        %v10332 = vpop.permute.xlu0 %10331
        %10333 = vrot.lane.b32.xlu0 %v7824, 120
        %v10334 = vpop.permute.xlu0 %10333
        %10337 = vmatprep.subr.mxu0 0.0
        %10338 = vmatpush1.msra.mxu0 %v10332
        %10339 = vmatprep.subr.mxu0 0.0
        %10340 = vmatpush1.msra.mxu0 %v10334
        %10341 = vmatprep.subr.mxu0 0.0
        %10342 = vmatpush1.msra.mxu0 0.0
        %10343 = vmatprep.subr.mxu0 0.0
        %10344 = vmatpush1.msra.mxu0 0.0
        %10345 = vmatprep.subr.mxu0 0.0
        %10346 = vmatpush1.msra.mxu0 0.0
        %10347 = vmatprep.subr.mxu0 0.0
        %10348 = vmatpush1.msra.mxu0 0.0
        %10349 = vmatprep.subr.mxu0 0.0
        %10350 = vmatpush1.msra.mxu0 0.0
        %10351 = vmatprep.subr.mxu0 0.0
        %10352 = vmatpush1.msra.mxu0 0.0
        %10353 = vmatprep.subr.mxu0 0.0
        %10354 = vmatpush1.msra.mxu0 0.0
        %10355 = vmatprep.subr.mxu0 0.0
        %10356 = vmatpush1.msra.mxu0 0.0
        %10357 = vmatprep.subr.mxu0 0.0
        %10358 = vmatpush1.msra.mxu0 0.0
        %10359 = vmatprep.subr.mxu0 0.0
        %10360 = vmatpush1.msra.mxu0 0.0
        %10361 = vmatprep.subr.mxu0 0.0
        %10362 = vmatpush1.msra.mxu0 0.0
        %10363 = vmatprep.subr.mxu0 0.0
        %10364 = vmatpush1.msra.mxu0 0.0
        %10365 = vmatprep.subr.mxu0 0.0
        %10366 = vmatpush1.msra.mxu0 0.0
        %10367 = vmatprep.subr.mxu0 0.0
        %10368 = vmatpush1.msra.mxu0 0.0
        %10369 = vmatprep.subr.mxu0 0.0
        %10370 = vmatpush1.msra.mxu0 0.0
        %10371 = vmatprep.subr.mxu0 0.0
        %10372 = vmatpush1.msra.mxu0 0.0
        %10373 = vmatprep.subr.mxu0 0.0
        %10374 = vmatpush1.msra.mxu0 0.0
        %10375 = vmatprep.subr.mxu0 0.0
        %10376 = vmatpush1.msra.mxu0 0.0
        %10377 = vmatprep.subr.mxu0 0.0
        %10378 = vmatpush1.msra.mxu0 0.0
        %10379 = vmatprep.subr.mxu0 0.0
        %10380 = vmatpush1.msra.mxu0 0.0
        %10381 = vmatprep.subr.mxu0 0.0
        %10382 = vmatpush1.msra.mxu0 0.0
        %10383 = vmatprep.subr.mxu0 0.0
        %10384 = vmatpush1.msra.mxu0 0.0
        %10385 = vmatprep.subr.mxu0 0.0
        %10386 = vmatpush1.msra.mxu0 0.0
        %10387 = vmatprep.subr.mxu0 0.0
        %10388 = vmatpush1.msra.mxu0 0.0
        %10389 = vmatprep.subr.mxu0 0.0
        %10390 = vmatpush1.msra.mxu0 0.0
        %10391 = vmatprep.subr.mxu0 0.0
        %10392 = vmatpush1.msra.mxu0 0.0
        %10393 = vmatprep.subr.mxu0 0.0
        %10394 = vmatpush1.msra.mxu0 0.0
        %10395 = vmatprep.subr.mxu0 0.0
        %10396 = vmatpush1.msra.mxu0 0.0
        %10397 = vmatprep.subr.mxu0 0.0
        %10398 = vmatpush1.msra.mxu0 0.0
        %10399 = vmatprep.subr.mxu0 0.0
        %10400 = vmatpush1.msra.mxu0 0.0
        %10401 = vmatprep.mubr.f32.mxu0 0.0
        %10402 = vmatmul.mubr.f32.gmra.mrb[0].mxu0 %v9360
        %v10403 = vpop.f32.mrb[0].mxu0
        %v10404 = vadd.f32 0.0, %v10403
        %v10405 = vpop.f32.mrb[0].mxu0
        %10406 = vmatprep.mubr.f32.mxu0 0.0
        %10407 = vmatmul.mubr.f32.gmra.mrb[0].mxu0 %v9363
        %v10408 = vpop.f32.mrb[0].mxu0
        %v10409 = vadd.f32 0.0, %v10408
        %v10410 = vpop.f32.mrb[0].mxu0
        %10411 = vdwg.mxu0
        %10412 = vrot.lane.b32.xlu0 %v7829, 120
        %v10413 = vpop.permute.xlu0 %10412
        %10414 = vrot.lane.b32.xlu0 %v7834, 120
        %v10415 = vpop.permute.xlu0 %10414
        %10418 = vmatprep.subr.mxu0 0.0
        %10419 = vmatpush1.msra.mxu0 %v10413
        %10420 = vmatprep.subr.mxu0 0.0
        %10421 = vmatpush1.msra.mxu0 %v10415
        %10422 = vmatprep.subr.mxu0 0.0
        %10423 = vmatpush1.msra.mxu0 0.0
        %10424 = vmatprep.subr.mxu0 0.0
        %10425 = vmatpush1.msra.mxu0 0.0
        %10426 = vmatprep.subr.mxu0 0.0
        %10427 = vmatpush1.msra.mxu0 0.0
        %10428 = vmatprep.subr.mxu0 0.0
        %10429 = vmatpush1.msra.mxu0 0.0
        %10430 = vmatprep.subr.mxu0 0.0
        %10431 = vmatpush1.msra.mxu0 0.0
        %10432 = vmatprep.subr.mxu0 0.0
        %10433 = vmatpush1.msra.mxu0 0.0
        %10434 = vmatprep.subr.mxu0 0.0
        %10435 = vmatpush1.msra.mxu0 0.0
        %10436 = vmatprep.subr.mxu0 0.0
        %10437 = vmatpush1.msra.mxu0 0.0
        %10438 = vmatprep.subr.mxu0 0.0
        %10439 = vmatpush1.msra.mxu0 0.0
        %10440 = vmatprep.subr.mxu0 0.0
        %10441 = vmatpush1.msra.mxu0 0.0
        %10442 = vmatprep.subr.mxu0 0.0
        %10443 = vmatpush1.msra.mxu0 0.0
        %10444 = vmatprep.subr.mxu0 0.0
        %10445 = vmatpush1.msra.mxu0 0.0
        %10446 = vmatprep.subr.mxu0 0.0
        %10447 = vmatpush1.msra.mxu0 0.0
        %10448 = vmatprep.subr.mxu0 0.0
        %10449 = vmatpush1.msra.mxu0 0.0
        %10450 = vmatprep.subr.mxu0 0.0
        %10451 = vmatpush1.msra.mxu0 0.0
        %10452 = vmatprep.subr.mxu0 0.0
        %10453 = vmatpush1.msra.mxu0 0.0
        %10454 = vmatprep.subr.mxu0 0.0
        %10455 = vmatpush1.msra.mxu0 0.0
        %10456 = vmatprep.subr.mxu0 0.0
        %10457 = vmatpush1.msra.mxu0 0.0
        %10458 = vmatprep.subr.mxu0 0.0
        %10459 = vmatpush1.msra.mxu0 0.0
        %10460 = vmatprep.subr.mxu0 0.0
        %10461 = vmatpush1.msra.mxu0 0.0
        %10462 = vmatprep.subr.mxu0 0.0
        %10463 = vmatpush1.msra.mxu0 0.0
        %10464 = vmatprep.subr.mxu0 0.0
        %10465 = vmatpush1.msra.mxu0 0.0
        %10466 = vmatprep.subr.mxu0 0.0
        %10467 = vmatpush1.msra.mxu0 0.0
        %10468 = vmatprep.subr.mxu0 0.0
        %10469 = vmatpush1.msra.mxu0 0.0
        %10470 = vmatprep.subr.mxu0 0.0
        %10471 = vmatpush1.msra.mxu0 0.0
        %10472 = vmatprep.subr.mxu0 0.0
        %10473 = vmatpush1.msra.mxu0 0.0
        %10474 = vmatprep.subr.mxu0 0.0
        %10475 = vmatpush1.msra.mxu0 0.0
        %10476 = vmatprep.subr.mxu0 0.0
        %10477 = vmatpush1.msra.mxu0 0.0
        %10478 = vmatprep.subr.mxu0 0.0
        %10479 = vmatpush1.msra.mxu0 0.0
        %10480 = vmatprep.subr.mxu0 0.0
        %10481 = vmatpush1.msra.mxu0 0.0
        %10482 = vmatprep.mubr.f32.mxu0 0.0
        %10483 = vmatmul.mubr.f32.gmra.mrb[0].mxu0 %v9360
        %v10484 = vpop.f32.mrb[0].mxu0
        %v10485 = vadd.f32 0.0, %v10484
        %v10486 = vpop.f32.mrb[0].mxu0
        %10487 = vmatprep.mubr.f32.mxu0 0.0
        %10488 = vmatmul.mubr.f32.gmra.mrb[0].mxu0 %v9363
        %v10489 = vpop.f32.mrb[0].mxu0
        %v10490 = vadd.f32 0.0, %v10489
        %v10491 = vpop.f32.mrb[0].mxu0
        %10492 = vdwg.mxu0
        %10493 = vrot.lane.b32.xlu0 %v7839, 120
        %v10494 = vpop.permute.xlu0 %10493
        %10495 = vrot.lane.b32.xlu0 %v7844, 120
        %v10496 = vpop.permute.xlu0 %10495
        %10499 = vmatprep.subr.mxu0 0.0
        %10500 = vmatpush1.msra.mxu0 %v10494
        %10501 = vmatprep.subr.mxu0 0.0
        %10502 = vmatpush1.msra.mxu0 %v10496
        %10503 = vmatprep.subr.mxu0 0.0
        %10504 = vmatpush1.msra.mxu0 0.0
        %10505 = vmatprep.subr.mxu0 0.0
        %10506 = vmatpush1.msra.mxu0 0.0
        %10507 = vmatprep.subr.mxu0 0.0
        %10508 = vmatpush1.msra.mxu0 0.0
        %10509 = vmatprep.subr.mxu0 0.0
        %10510 = vmatpush1.msra.mxu0 0.0
        %10511 = vmatprep.subr.mxu0 0.0
        %10512 = vmatpush1.msra.mxu0 0.0
        %10513 = vmatprep.subr.mxu0 0.0
        %10514 = vmatpush1.msra.mxu0 0.0
        %10515 = vmatprep.subr.mxu0 0.0
        %10516 = vmatpush1.msra.mxu0 0.0
        %10517 = vmatprep.subr.mxu0 0.0
        %10518 = vmatpush1.msra.mxu0 0.0
        %10519 = vmatprep.subr.mxu0 0.0
        %10520 = vmatpush1.msra.mxu0 0.0
        %10521 = vmatprep.subr.mxu0 0.0
        %10522 = vmatpush1.msra.mxu0 0.0
        %10523 = vmatprep.subr.mxu0 0.0
        %10524 = vmatpush1.msra.mxu0 0.0
        %10525 = vmatprep.subr.mxu0 0.0
        %10526 = vmatpush1.msra.mxu0 0.0
        %10527 = vmatprep.subr.mxu0 0.0
        %10528 = vmatpush1.msra.mxu0 0.0
        %10529 = vmatprep.subr.mxu0 0.0
        %10530 = vmatpush1.msra.mxu0 0.0
        %10531 = vmatprep.subr.mxu0 0.0
        %10532 = vmatpush1.msra.mxu0 0.0
        %10533 = vmatprep.subr.mxu0 0.0
        %10534 = vmatpush1.msra.mxu0 0.0
        %10535 = vmatprep.subr.mxu0 0.0
        %10536 = vmatpush1.msra.mxu0 0.0
        %10537 = vmatprep.subr.mxu0 0.0
        %10538 = vmatpush1.msra.mxu0 0.0
        %10539 = vmatprep.subr.mxu0 0.0
        %10540 = vmatpush1.msra.mxu0 0.0
        %10541 = vmatprep.subr.mxu0 0.0
        %10542 = vmatpush1.msra.mxu0 0.0
        %10543 = vmatprep.subr.mxu0 0.0
        %10544 = vmatpush1.msra.mxu0 0.0
        %10545 = vmatprep.subr.mxu0 0.0
        %10546 = vmatpush1.msra.mxu0 0.0
        %10547 = vmatprep.subr.mxu0 0.0
        %10548 = vmatpush1.msra.mxu0 0.0
        %10549 = vmatprep.subr.mxu0 0.0
        %10550 = vmatpush1.msra.mxu0 0.0
        %10551 = vmatprep.subr.mxu0 0.0
        %10552 = vmatpush1.msra.mxu0 0.0
        %10553 = vmatprep.subr.mxu0 0.0
        %10554 = vmatpush1.msra.mxu0 0.0
        %10555 = vmatprep.subr.mxu0 0.0
        %10556 = vmatpush1.msra.mxu0 0.0
        %10557 = vmatprep.subr.mxu0 0.0
        %10558 = vmatpush1.msra.mxu0 0.0
        %10559 = vmatprep.subr.mxu0 0.0
        %10560 = vmatpush1.msra.mxu0 0.0
        %10561 = vmatprep.subr.mxu0 0.0
        %10562 = vmatpush1.msra.mxu0 0.0
        %10563 = vmatprep.mubr.f32.mxu0 0.0
        %10564 = vmatmul.mubr.f32.gmra.mrb[0].mxu0 %v9360
        %v10565 = vpop.f32.mrb[0].mxu0
        %v10566 = vadd.f32 0.0, %v10565
        %v10567 = vpop.f32.mrb[0].mxu0
        %10568 = vmatprep.mubr.f32.mxu0 0.0
        %10569 = vmatmul.mubr.f32.gmra.mrb[0].mxu0 %v9363
        %v10570 = vpop.f32.mrb[0].mxu0
        %v10571 = vadd.f32 0.0, %v10570
        %v10572 = vpop.f32.mrb[0].mxu0
        %10573 = vdwg.mxu0
        %10574 = vrot.lane.b32.xlu0 %v7849, 120
        %v10575 = vpop.permute.xlu0 %10574
        %10576 = vrot.lane.b32.xlu0 %v7854, 120
        %v10577 = vpop.permute.xlu0 %10576
        %10580 = vmatprep.subr.mxu0 0.0
        %10581 = vmatpush1.msra.mxu0 %v10575
        %10582 = vmatprep.subr.mxu0 0.0
        %10583 = vmatpush1.msra.mxu0 %v10577
        %10584 = vmatprep.subr.mxu0 0.0
        %10585 = vmatpush1.msra.mxu0 0.0
        %10586 = vmatprep.subr.mxu0 0.0
        %10587 = vmatpush1.msra.mxu0 0.0
        %10588 = vmatprep.subr.mxu0 0.0
        %10589 = vmatpush1.msra.mxu0 0.0
        %10590 = vmatprep.subr.mxu0 0.0
        %10591 = vmatpush1.msra.mxu0 0.0
        %10592 = vmatprep.subr.mxu0 0.0
        %10593 = vmatpush1.msra.mxu0 0.0
        %10594 = vmatprep.subr.mxu0 0.0
        %10595 = vmatpush1.msra.mxu0 0.0
        %10596 = vmatprep.subr.mxu0 0.0
        %10597 = vmatpush1.msra.mxu0 0.0
        %10598 = vmatprep.subr.mxu0 0.0
        %10599 = vmatpush1.msra.mxu0 0.0
        %10600 = vmatprep.subr.mxu0 0.0
        %10601 = vmatpush1.msra.mxu0 0.0
        %10602 = vmatprep.subr.mxu0 0.0
        %10603 = vmatpush1.msra.mxu0 0.0
        %10604 = vmatprep.subr.mxu0 0.0
        %10605 = vmatpush1.msra.mxu0 0.0
        %10606 = vmatprep.subr.mxu0 0.0
        %10607 = vmatpush1.msra.mxu0 0.0
        %10608 = vmatprep.subr.mxu0 0.0
        %10609 = vmatpush1.msra.mxu0 0.0
        %10610 = vmatprep.subr.mxu0 0.0
        %10611 = vmatpush1.msra.mxu0 0.0
        %10612 = vmatprep.subr.mxu0 0.0
        %10613 = vmatpush1.msra.mxu0 0.0
        %10614 = vmatprep.subr.mxu0 0.0
        %10615 = vmatpush1.msra.mxu0 0.0
        %10616 = vmatprep.subr.mxu0 0.0
        %10617 = vmatpush1.msra.mxu0 0.0
        %10618 = vmatprep.subr.mxu0 0.0
        %10619 = vmatpush1.msra.mxu0 0.0
        %10620 = vmatprep.subr.mxu0 0.0
        %10621 = vmatpush1.msra.mxu0 0.0
        %10622 = vmatprep.subr.mxu0 0.0
        %10623 = vmatpush1.msra.mxu0 0.0
        %10624 = vmatprep.subr.mxu0 0.0
        %10625 = vmatpush1.msra.mxu0 0.0
        %10626 = vmatprep.subr.mxu0 0.0
        %10627 = vmatpush1.msra.mxu0 0.0
        %10628 = vmatprep.subr.mxu0 0.0
        %10629 = vmatpush1.msra.mxu0 0.0
        %10630 = vmatprep.subr.mxu0 0.0
        %10631 = vmatpush1.msra.mxu0 0.0
        %10632 = vmatprep.subr.mxu0 0.0
        %10633 = vmatpush1.msra.mxu0 0.0
        %10634 = vmatprep.subr.mxu0 0.0
        %10635 = vmatpush1.msra.mxu0 0.0
        %10636 = vmatprep.subr.mxu0 0.0
        %10637 = vmatpush1.msra.mxu0 0.0
        %10638 = vmatprep.subr.mxu0 0.0
        %10639 = vmatpush1.msra.mxu0 0.0
        %10640 = vmatprep.subr.mxu0 0.0
        %10641 = vmatpush1.msra.mxu0 0.0
        %10642 = vmatprep.subr.mxu0 0.0
        %10643 = vmatpush1.msra.mxu0 0.0
        %10644 = vmatprep.mubr.f32.mxu0 0.0
        %10645 = vmatmul.mubr.f32.gmra.mrb[0].mxu0 %v9360
        %v10646 = vpop.f32.mrb[0].mxu0
        %v10647 = vadd.f32 0.0, %v10646
        %v10648 = vpop.f32.mrb[0].mxu0
        %10649 = vmatprep.mubr.f32.mxu0 0.0
        %10650 = vmatmul.mubr.f32.gmra.mrb[0].mxu0 %v9363
        %v10651 = vpop.f32.mrb[0].mxu0
        %v10652 = vadd.f32 0.0, %v10651
        %v10653 = vpop.f32.mrb[0].mxu0
        %10654 = vdwg.mxu0
        %v10655 = vstv %s7529
        %v10656 = vmul.f32 %v10655, %v9432
        %v10657 = vmul.f32 %v10655, %v9437
        %v10658 = vmul.f32 %v10655, %v9513
        %v10659 = vmul.f32 %v10655, %v9518
        %v10660 = vmul.f32 %v10655, %v9594
        %v10661 = vmul.f32 %v10655, %v9599
        %v10662 = vmul.f32 %v10655, %v9675
        %v10663 = vmul.f32 %v10655, %v9680
        %v10664 = vmul.f32 %v10655, %v9756
        %v10665 = vmul.f32 %v10655, %v9761
        %v10666 = vmul.f32 %v10655, %v9837
        %v10667 = vmul.f32 %v10655, %v9842
        %v10668 = vmul.f32 %v10655, %v9918
        %v10669 = vmul.f32 %v10655, %v9923
        %v10670 = vmul.f32 %v10655, %v9999
        %v10671 = vmul.f32 %v10655, %v10004
        %v10672 = vmul.f32 %v10655, %v10080
        %v10673 = vmul.f32 %v10655, %v10085
        %v10674 = vmul.f32 %v10655, %v10161
        %v10675 = vmul.f32 %v10655, %v10166
        %v10676 = vmul.f32 %v10655, %v10242
        %v10677 = vmul.f32 %v10655, %v10247
        %v10678 = vmul.f32 %v10655, %v10323
        %v10679 = vmul.f32 %v10655, %v10328
        %v10680 = vmul.f32 %v10655, %v10404
        %v10681 = vmul.f32 %v10655, %v10409
        %v10682 = vmul.f32 %v10655, %v10485
        %v10683 = vmul.f32 %v10655, %v10490
        %v10684 = vmul.f32 %v10655, %v10566
        %v10685 = vmul.f32 %v10655, %v10571
        %v10686 = vmul.f32 %v10655, %v10647
        %v10687 = vmul.f32 %v10655, %v10652
        %v10688 = vadd.f32 %v10656, %v7492
        %v10689 = vadd.f32 %v10657, %v7493
        %v10690 = vadd.f32 %v10658, %v7494
        %v10691 = vadd.f32 %v10659, %v7495
        %v10692 = vadd.f32 %v10660, %v7496
        %v10693 = vadd.f32 %v10661, %v7497
        %v10694 = vadd.f32 %v10662, %v7498
        %v10695 = vadd.f32 %v10663, %v7499
        %v10696 = vadd.f32 %v10664, %v7500
        %v10697 = vadd.f32 %v10665, %v7501
        %v10698 = vadd.f32 %v10666, %v7502
        %v10699 = vadd.f32 %v10667, %v7503
        %v10700 = vadd.f32 %v10668, %v7504
        %v10701 = vadd.f32 %v10669, %v7505
        %v10702 = vadd.f32 %v10670, %v7506
        %v10703 = vadd.f32 %v10671, %v7507
        %v10704 = vadd.f32 %v10672, %v7508
        %v10705 = vadd.f32 %v10673, %v7509
        %v10706 = vadd.f32 %v10674, %v7510
        %v10707 = vadd.f32 %v10675, %v7511
        %v10708 = vadd.f32 %v10676, %v7512
        %v10709 = vadd.f32 %v10677, %v7513
        %v10710 = vadd.f32 %v10678, %v7514
        %v10711 = vadd.f32 %v10679, %v7515
        %v10712 = vadd.f32 %v10680, %v7516
        %v10713 = vadd.f32 %v10681, %v7517
        %v10714 = vadd.f32 %v10682, %v7518
        %v10715 = vadd.f32 %v10683, %v7519
        %v10716 = vadd.f32 %v10684, %v7520
        %v10717 = vadd.f32 %v10685, %v7521
        %v10718 = vadd.f32 %v10686, %v7522
        %v10719 = vadd.f32 %v10687, %v7523
        %10720 = vst.msk [vmem:[%s381] sm:$0xff] %vm753, %v10688
        %10721 = vst.msk [vmem:[%s381 + $0x8] sm:$0xff] %vm753, %v10689
        %10722 = vst.msk [vmem:[%s381 + $0x10] sm:$0xff] %vm753, %v10690
        %10723 = vst.msk [vmem:[%s381 + $0x18] sm:$0xff] %vm753, %v10691
        %10724 = vst.msk [vmem:[%s381 + $0x20] sm:$0xff] %vm753, %v10692
        %10725 = vst.msk [vmem:[%s381 + $0x28] sm:$0xff] %vm753, %v10693
        %10726 = vst.msk [vmem:[%s381 + $0x30] sm:$0xff] %vm753, %v10694
        %10727 = vst.msk [vmem:[%s381 + $0x38] sm:$0xff] %vm753, %v10695
        %10728 = vst.msk [vmem:[%s381 + $0x40] sm:$0xff] %vm753, %v10696
        %10729 = vst.msk [vmem:[%s381 + $0x48] sm:$0xff] %vm753, %v10697
        %10730 = vst.msk [vmem:[%s381 + $0x50] sm:$0xff] %vm753, %v10698
        %10731 = vst.msk [vmem:[%s381 + $0x58] sm:$0xff] %vm753, %v10699
        %10732 = vst.msk [vmem:[%s381 + $0x60] sm:$0xff] %vm753, %v10700
        %10733 = vst.msk [vmem:[%s381 + $0x68] sm:$0xff] %vm753, %v10701
        %10734 = vst.msk [vmem:[%s381 + $0x70] sm:$0xff] %vm753, %v10702
        %10735 = vst.msk [vmem:[%s381 + $0x78] sm:$0xff] %vm753, %v10703
        %10736 = vst.msk [vmem:[%s381 + $0x80] sm:$0xff] %vm753, %v10704
        %10737 = vst.msk [vmem:[%s381 + $0x88] sm:$0xff] %vm753, %v10705
        %10738 = vst.msk [vmem:[%s381 + $0x90] sm:$0xff] %vm753, %v10706
        %10739 = vst.msk [vmem:[%s381 + $0x98] sm:$0xff] %vm753, %v10707
        %10740 = vst.msk [vmem:[%s381 + $0xa0] sm:$0xff] %vm753, %v10708
        %10741 = vst.msk [vmem:[%s381 + $0xa8] sm:$0xff] %vm753, %v10709
        %10742 = vst.msk [vmem:[%s381 + $0xb0] sm:$0xff] %vm753, %v10710
        %10743 = vst.msk [vmem:[%s381 + $0xb8] sm:$0xff] %vm753, %v10711
        %10744 = vst.msk [vmem:[%s381 + $0xc0] sm:$0xff] %vm753, %v10712
        %10745 = vst.msk [vmem:[%s381 + $0xc8] sm:$0xff] %vm753, %v10713
        %10746 = vst.msk [vmem:[%s381 + $0xd0] sm:$0xff] %vm753, %v10714
        %10747 = vst.msk [vmem:[%s381 + $0xd8] sm:$0xff] %vm753, %v10715
        %10748 = vst.msk [vmem:[%s381 + $0xe0] sm:$0xff] %vm753, %v10716
        %10749 = vst.msk [vmem:[%s381 + $0xe8] sm:$0xff] %vm753, %v10717
        %10750 = vst.msk [vmem:[%s381 + $0xf0] sm:$0xff] %vm753, %v10718
        %10751 = vst.msk [vmem:[%s381 + $0xf8] sm:$0xff] %vm753, %v10719
        %s10752 = sand.u32 %s271, 1
        %s10753 = scalar_lea.sflag [#allocation6], %s10752
        %s10754 = sand.u32 %s271, 1
        %s10755 = smul.addr %s10754, 256
        %s10756 = scalar_lea.vmem [#allocation5], %s10755
        // Predicated region
        $region65: #{axial_attention.1} parent=63 // pred_check
          %p10757 = pneg %p281
        $region66: #{axial_attention.1} parent=63 // pred_check_branch
          %10759 = sbr.rel (%p10757) target = $region68
        $region67: #{axial_attention.1} parent=63 // pred_region
          %s10761 = ssub.s32 4096, 4096
          %10762 = vsyncadd %s10753, %s10761
          %s10763 = smul.addr %s27, 32
          %s10764 = smul.addr %s10763, 128
          %s10765 = scalar_lea.hbm %s11, %s10764
          %s10766 = sshll.u32 %s10756, 4
          %s10767 = int_to_ptr.vmem [resolvable:$true] %s10766
          %10772 = dma.vmem_to_hbm [thread:$0]  %s10767, 4096, %s10765, %s10753, 128, 128, 8
        $region68: #{axial_attention.1} parent=63 // pred_fallthru
          _
      $region64: #{axial_attention.1} parent=5 // pred_fallthru
        _
      %p10773 = scmp.le.s32.totalorder 2, %s22
      // Predicated region
      $region69: #{axial_attention.1} parent=5 // pred_check
        %p10774 = pneg %p10773
      $region70: #{axial_attention.1} parent=5 // pred_check_branch
        %10776 = sbr.rel (%p10774) target = $region72
      $region71: #{axial_attention.1} parent=5 // pred_region
        %s10777 = ssub.s32 %s22, 2
        // Predicated region
        $region73: #{axial_attention.1} parent=71 // pred_check
          %p10778 = pneg %p287
        $region74: #{axial_attention.1} parent=71 // pred_check_branch
          %10780 = sbr.rel (%p10778) target = $region76
        $region75: #{axial_attention.1} parent=71 // pred_region
          %s10781 = sand.u32 %s272, 1
          %s10782 = scalar_lea.sflag [#allocation6], %s10781
          %s10783 = sand.u32 %s272, 1
          %s10784 = smul.addr %s10783, 256
          %s10785 = scalar_lea.vmem [#allocation5], %s10784
          %10786 = dma.done %s10782, 4096
        $region76: #{axial_attention.1} parent=71 // pred_fallthru
          _
      $region72: #{axial_attention.1} parent=5 // pred_fallthru
        _
    $region6: #{axial_attention.1} parent=1 // loop_footer
      %s26 = sadd.s32 1, %s22
    $region7: #{axial_attention.1} parent=1 // loop_footer_branch
      %21 = sbr.rel target = $region3
    $region8: #{axial_attention.1} parent=1 // loop_exit
      _
    %10787 = vsyncpa [#allocation6], 1
    %s10788 = scalar_lea.sflag [#allocation6], 1
    %10789 = vsyncpa %s10788, 1

</llo_original>
